<compile_context>
chip_gen: v5e
topology: v5e:2x2
jax: 0.10.0
libtpu: 0.0.40
codegen_flags: <defaults>
</compile_context>

<pallas_src>
import functools

import jax
import jax.numpy as jnp
from jax.experimental import pallas as pl
from jax.experimental.pallas import tpu as pltpu

EPS = 1e-5        # nn.GroupNorm default eps
LANE = 128


def _round_up(n, m):
    return (n + m - 1) // m * m


def _vmem_limit_bytes():
    """Generation-aware scoped-VMEM limit: 3/4 of physical, capped at 96 MiB."""
    cap = 64 * 1024 * 1024                       # conservative fallback (v7x-sized)
    try:
        cap = int(pltpu.get_tpu_info().vmem_capacity_bytes)
    except Exception:
        pass
    return min((cap * 3) // 4, 96 * 1024 * 1024)


# ---------------------------------------------------------------------------
# In-kernel helpers
# ---------------------------------------------------------------------------
def _gn_swish(x, gamma, beta, member, cnt):
    """Centered GroupNorm followed by Swish.

    x: (HW, Cp) f32, gamma/beta: (1, Cp) f32, member: (Cp, Cp) 0/1 f32
    group-membership matrix (padded channels belong to no group, so they stay
    exactly zero). cnt = HW * channels_per_group.
    """
    s = jnp.sum(x, axis=0, keepdims=True)                               # (1, Cp)
    gmean = jnp.dot(s, member, preferred_element_type=jnp.float32) / cnt
    xc = x - gmean
    ssq = jnp.sum(xc * xc, axis=0, keepdims=True)                       # (1, Cp)
    gvar = jnp.dot(ssq, member, preferred_element_type=jnp.float32) / cnt
    y = xc * jax.lax.rsqrt(gvar + EPS)
    y = y * gamma + beta
    return y * jax.nn.sigmoid(y)                                         # Swish


def _store_spatially_padded(o_ref, y, h, w):
    """Store y (HW, Cp) into the (1, H+2, Wp, Cp) block with a zero halo."""
    hp, wp, cp = o_ref.shape[1], o_ref.shape[2], o_ref.shape[3]
    o_ref[0] = jnp.zeros((hp, wp, cp), o_ref.dtype)
    o_ref[0, 1:h + 1, 1:w + 1, :] = y.reshape(h, w, cp).astype(o_ref.dtype)


def _conv3x3_accum(win_ref, w_ref, th, wd, acc):
    """9 bf16 MXU dots from a halo window, dx-outer / dy-inner.

    win_ref: (th+2, Wp, Cin_p) bf16 VMEM scratch (zero halo already included),
    w_ref:   (9, Cin_p, Cout_p) bf16 taps (k = dy*3 + dx),
    acc:     (th*wd, Cout_p) f32 accumulator.
    Only 3 slice+reshape copies per tile (one per dx); the dy slices of the
    reshaped column buffer are contiguous row ranges.
    """
    cin_p = win_ref.shape[-1]
    for dx in range(3):
        col = win_ref[:, dx:dx + wd, :].reshape((th + 2) * wd, cin_p)
        for dy in range(3):
            patch = col[dy * wd:(dy + th) * wd, :]
            acc = acc + jnp.dot(patch, w_ref[dy * 3 + dx],
                                preferred_element_type=jnp.float32)
    return acc


def _fetch_window(xp_hbm, win_ref, sem, th):
    """Start the DMA for this tile's (th+2)-row halo window from HBM."""
    b = pl.program_id(0)
    r = pl.program_id(1)
    copy = pltpu.make_async_copy(xp_hbm.at[b, pl.ds(r * th, th + 2)],
                                 win_ref, sem)
    copy.start()
    return copy


# ---------------------------------------------------------------------------
# Kernels
# ---------------------------------------------------------------------------
def gn_swish_pad_kernel(x_ref, gamma_ref, beta_ref, member_ref, o_ref, *,
                        cnt, h, w):
    cp = x_ref.shape[-1]
    x = x_ref[0].reshape(h * w, cp)
    y = _gn_swish(x, gamma_ref[...], beta_ref[...], member_ref[...], cnt)
    _store_spatially_padded(o_ref, y, h, w)


def add_temb_gn_swish_pad_kernel(x_ref, temb_ref, gamma_ref, beta_ref,
                                 member_ref, o_ref, *, cnt, h, w):
    cp = x_ref.shape[-1]
    x = x_ref[0].reshape(h * w, cp) + temb_ref[0]        # (HW,Cp) + (1,Cp) bcast
    y = _gn_swish(x, gamma_ref[...], beta_ref[...], member_ref[...], cnt)
    _store_spatially_padded(o_ref, y, h, w)


def conv3x3_kernel(xp_hbm, w_ref, b_ref, o_ref, win_ref, sem, *, th, wd):
    copy = _fetch_window(xp_hbm, win_ref, sem, th)
    copy.wait()
    cout_p = o_ref.shape[-1]
    acc = jnp.zeros((th * wd, cout_p), jnp.float32)
    acc = _conv3x3_accum(win_ref, w_ref, th, wd, acc)
    o_ref[0] = (acc + b_ref[...]).reshape(th, wd, cout_p)


def conv3x3_adjust_kernel(xp_hbm, w_ref, b_ref, xres_ref, wa_ref, o_ref,
                          win_ref, sem, *, th, wd):
    copy = _fetch_window(xp_hbm, win_ref, sem, th)
    cout_p = o_ref.shape[-1]
    # fused 1x1 residual conv (its bias folded into b_ref on the host),
    # issued while the halo-window DMA is in flight.
    res = xres_ref[0].reshape(th * wd, xres_ref.shape[-1]).astype(jnp.bfloat16)
    acc = jnp.dot(res, wa_ref[...], preferred_element_type=jnp.float32)
    copy.wait()
    acc = _conv3x3_accum(win_ref, w_ref, th, wd, acc)
    o_ref[0] = (acc + b_ref[...]).reshape(th, wd, cout_p)


def conv3x3_identity_kernel(xp_hbm, w_ref, b_ref, xres_ref, o_ref,
                            win_ref, sem, *, th, wd):
    copy = _fetch_window(xp_hbm, win_ref, sem, th)
    cout_p = o_ref.shape[-1]
    acc = xres_ref[0].reshape(th * wd, cout_p)           # identity residual (f32)
    copy.wait()
    acc = _conv3x3_accum(win_ref, w_ref, th, wd, acc)
    o_ref[0] = (acc + b_ref[...]).reshape(th, wd, cout_p)


# ---------------------------------------------------------------------------
# pallas_call wrappers
# ---------------------------------------------------------------------------
def groupnorm_swish_pad(x, gamma, beta, member, cnt, wp, vmem_limit):
    """x: (B, H, W, Cp) f32 -> (B, H+2, Wp, Cp) bf16, spatially zero-padded."""
    b, h, w, cp = x.shape
    kern = functools.partial(gn_swish_pad_kernel, cnt=cnt, h=h, w=w)
    return pl.pallas_call(
        kern,
        out_shape=jax.ShapeDtypeStruct((b, h + 2, wp, cp), jnp.bfloat16),
        grid=(b,),
        in_specs=[
            pl.BlockSpec((1, h, w, cp), lambda i: (i, 0, 0, 0)),
            pl.BlockSpec((1, cp), lambda i: (0, 0)),
            pl.BlockSpec((1, cp), lambda i: (0, 0)),
            pl.BlockSpec((cp, cp), lambda i: (0, 0)),
        ],
        out_specs=pl.BlockSpec((1, h + 2, wp, cp), lambda i: (i, 0, 0, 0)),
        compiler_params=pltpu.CompilerParams(
            dimension_semantics=("parallel",), vmem_limit_bytes=vmem_limit),
    )(x, gamma, beta, member)


def add_temb_groupnorm_swish_pad(x, temb, gamma, beta, member, cnt, wp,
                                 vmem_limit):
    """x: (B,H,W,Cp) f32, temb: (B,1,Cp) f32 -> (B, H+2, Wp, Cp) bf16 padded."""
    b, h, w, cp = x.shape
    kern = functools.partial(add_temb_gn_swish_pad_kernel, cnt=cnt, h=h, w=w)
    return pl.pallas_call(
        kern,
        out_shape=jax.ShapeDtypeStruct((b, h + 2, wp, cp), jnp.bfloat16),
        grid=(b,),
        in_specs=[
            pl.BlockSpec((1, h, w, cp), lambda i: (i, 0, 0, 0)),
            pl.BlockSpec((1, 1, cp), lambda i: (i, 0, 0)),
            pl.BlockSpec((1, cp), lambda i: (0, 0)),
            pl.BlockSpec((1, cp), lambda i: (0, 0)),
            pl.BlockSpec((cp, cp), lambda i: (0, 0)),
        ],
        out_specs=pl.BlockSpec((1, h + 2, wp, cp), lambda i: (i, 0, 0, 0)),
        compiler_params=pltpu.CompilerParams(
            dimension_semantics=("parallel",), vmem_limit_bytes=vmem_limit),
    )(x, temb, gamma, beta, member)


def _pick_tile_h(h, w, wp, cin_p, cout_p, res_cp, taps_bytes, vmem_limit):
    """Largest divisor of H whose VMEM working set fits: single-buffered bf16
    halo window scratch + double-buffered f32 output / residual blocks +
    resident taps (assumed double-buffered) + headroom."""
    best, headroom = 1, 2 * 1024 * 1024
    for th in range(1, h + 1):
        if h % th:
            continue
        win = (th + 2) * wp * cin_p * 2           # bf16 halo window (1 buffer)
        out = 2 * th * w * cout_p * 4             # f32 output block
        res = 2 * th * w * res_cp * 4             # f32 residual block (0 if none)
        if win + out + res + 2 * taps_bytes + headroom <= vmem_limit:
            best = th
    return best


def conv3x3(xpad, w_taps, bias, tile_h, h, w, vmem_limit, *, xres=None, wa=None):
    """3x3 conv (padding 1) over a spatially padded bf16 activation.

    xpad: (B, H+2, Wp, Cin_p) bf16 in HBM; halo row windows are DMA'd in-kernel.
    w_taps: (9, Cin_p, Cout_p) bf16; bias: (1, Cout_p) f32 (adj bias folded in).
    Optional fused residual: xres (B, H, W, Cres_p) f32 with wa (Cres_p, Cout_p)
    bf16 for a 1x1 adjust, or wa=None for an identity add.
    Returns (B, H, W, Cout_p) f32.
    """
    bsz, _, wp, cin_p = xpad.shape
    cout_p = w_taps.shape[-1]
    n = h // tile_h

    in_specs = [
        pl.BlockSpec(memory_space=pl.ANY),                      # padded act (HBM)
        pl.BlockSpec(w_taps.shape, lambda i, r: (0, 0, 0)),     # resident taps
        pl.BlockSpec((1, cout_p), lambda i, r: (0, 0)),
    ]
    args = [xpad, w_taps, bias]
    if xres is None:
        kern = functools.partial(conv3x3_kernel, th=tile_h, wd=w)
    else:
        in_specs.append(pl.BlockSpec((1, tile_h, w, xres.shape[-1]),
                                     lambda i, r: (i, r, 0, 0)))
        args.append(xres)
        if wa is not None:
            in_specs.append(pl.BlockSpec(wa.shape, lambda i, r: (0, 0)))
            args.append(wa)
            kern = functools.partial(conv3x3_adjust_kernel, th=tile_h, wd=w)
        else:
            kern = functools.partial(conv3x3_identity_kernel, th=tile_h, wd=w)

    return pl.pallas_call(
        kern,
        out_shape=jax.ShapeDtypeStruct((bsz, h, w, cout_p), jnp.float32),
        grid=(bsz, n),
        in_specs=in_specs,
        out_specs=pl.BlockSpec((1, tile_h, w, cout_p), lambda i, r: (i, r, 0, 0)),
        scratch_shapes=[pltpu.VMEM((tile_h + 2, wp, cin_p), jnp.bfloat16),
                        pltpu.SemaphoreType.DMA(())],
        compiler_params=pltpu.CompilerParams(
            dimension_semantics=("parallel", "parallel"),
            vmem_limit_bytes=vmem_limit),
    )(*args)


# ---------------------------------------------------------------------------
# Host-side parameter / layout prep (plain JAX, layout only)
# ---------------------------------------------------------------------------
def _group_membership(c, cp, n_groups):
    cg = c // n_groups
    idx = jnp.arange(cp)
    g = jnp.where(idx < c, idx // cg, -1)          # padded channels: no group
    member = (g[:, None] == g[None, :]) & (g[:, None] >= 0)
    return member.astype(jnp.float32)              # (cp, cp)


# ---------------------------------------------------------------------------
# Full ResidualBlock forward
# ---------------------------------------------------------------------------
def residual_block_forward(x_nchw, t, p, n_groups):
    """x_nchw: (B, Cin, H, W), t: (B, time_channels). Returns (B, Cout, H, W)."""
    b, cin, h, w = x_nchw.shape
    cout = p["conv1_w"].shape[0]
    hw = h * w

    cin_p = _round_up(cin, LANE)
    cout_p = _round_up(cout, LANE)
    wp = _round_up(w + 2, 8)                 # sublane-aligned padded width
    f32, bf16 = jnp.float32, jnp.bfloat16

    # channels-last, lane-padded input; kept f32 (GN-1 source + residual input)
    x_nhwc = jnp.transpose(x_nchw, (0, 2, 3, 1)).astype(f32)
    x_nhwc = jnp.pad(x_nhwc, ((0, 0), (0, 0), (0, 0), (0, cin_p - cin)))

    def pad_vec(v, cp):
        return jnp.pad(v.astype(f32), (0, cp - v.shape[0])).reshape(1, cp)

    g1, be1 = pad_vec(p["gn1_gamma"], cin_p), pad_vec(p["gn1_beta"], cin_p)
    g2, be2 = pad_vec(p["gn2_gamma"], cout_p), pad_vec(p["gn2_beta"], cout_p)
    member1 = _group_membership(cin, cin_p, n_groups)
    member2 = _group_membership(cout, cout_p, n_groups)
    cnt1 = float(hw * (cin // n_groups))
    cnt2 = float(hw * (cout // n_groups))

    def conv_taps(wgt, ci, cip, co, cop):
        # PyTorch (Cout, Cin, 3, 3) -> (9, Cin_p, Cout_p), k = dy*3+dx, bf16
        taps = jnp.transpose(wgt.astype(f32), (2, 3, 1, 0)).reshape(9, ci, co)
        taps = jnp.pad(taps, ((0, 0), (0, cip - ci), (0, cop - co)))
        return taps.astype(bf16)

    w1_taps = conv_taps(p["conv1_w"], cin, cin_p, cout, cout_p)
    w2_taps = conv_taps(p["conv2_w"], cout, cout_p, cout, cout_p)
    b1c = pad_vec(p["conv1_b"], cout_p)

    # time embedding hoisted out of the kernels: Swish(t) @ W_t^T + b_t
    tt = t.astype(f32)
    tt = tt * jax.nn.sigmoid(tt)
    temb = tt @ jnp.transpose(p["time_w"].astype(f32)) + p["time_b"].astype(f32)
    temb = jnp.pad(temb, ((0, 0), (0, cout_p - cout))).reshape(b, 1, cout_p)

    if cin == cout:
        wa = None
        b2c = pad_vec(p["conv2_b"], cout_p)
        taps2_extra = 0
    else:
        wa_m = jnp.transpose(p["adj_w"].reshape(cout, cin)).astype(f32)
        wa = jnp.pad(wa_m, ((0, cin_p - cin), (0, cout_p - cout))).astype(bf16)
        b2c = pad_vec(p["conv2_b"] + p["adj_b"], cout_p)     # fold adj bias
        taps2_extra = cin_p * cout_p * 2

    vmem_limit = _vmem_limit_bytes()
    taps1_bytes = 9 * cin_p * cout_p * 2
    taps2_bytes = 9 * cout_p * cout_p * 2 + taps2_extra
    tile_h1 = _pick_tile_h(h, w, wp, cin_p, cout_p, 0, taps1_bytes, vmem_limit)
    tile_h2 = _pick_tile_h(h, w, wp, cout_p, cout_p, cin_p, taps2_bytes,
                           vmem_limit)

    # norm_1 -> Swish, written directly into spatially padded bf16 layout
    h0p = groupnorm_swish_pad(x_nhwc, g1, be1, member1, cnt1, wp, vmem_limit)

    # conv_1 (3x3, pad 1), halo windows fetched in-kernel
    h1 = conv3x3(h0p, w1_taps, b1c, tile_h1, h, w, vmem_limit)

    # += time_emb(Swish(t)); norm_2 -> Swish (padded bf16 layout)
    h2p = add_temb_groupnorm_swish_pad(h1, temb, g2, be2, member2, cnt2, wp,
                                       vmem_limit)

    # conv_2 (3x3, pad 1) + fused residual adjust (1x1 conv or identity)
    out = conv3x3(h2p, w2_taps, b2c, tile_h2, h, w, vmem_limit,
                  xres=x_nhwc, wa=wa)                        # (B, H, W, Cout_p)

    out = out[..., :cout]
    return jnp.transpose(out, (0, 3, 1, 2))                  # NCHW


# ---------------------------------------------------------------------------
# Pure-JAX reference (loose-tolerance self-check)
# ---------------------------------------------------------------------------
def residual_block_reference(x, t, p, n_groups):
    def group_norm(v, gamma, beta):
        bb, c, hh, ww = v.shape
        vg = v.reshape(bb, n_groups, c // n_groups, hh, ww)
        mean = vg.mean(axis=(2, 3, 4), keepdims=True)
        var = ((vg - mean) ** 2).mean(axis=(2, 3, 4), keepdims=True)
        vn = ((vg - mean) / jnp.sqrt(var + EPS)).reshape(bb, c, hh, ww)
        return vn * gamma[None, :, None, None] + beta[None, :, None, None]

    def swish(v):
        return v * jax.nn.sigmoid(v)

    def conv3(v, wgt, bias):
        o = jax.lax.conv_general_dilated(
            v, wgt, (1, 1), ((1, 1), (1, 1)),
            dimension_numbers=("NCHW", "OIHW", "NCHW"))
        return o + bias[None, :, None, None]

    hh = conv3(swish(group_norm(x, p["gn1_gamma"], p["gn1_beta"])),
               p["conv1_w"], p["conv1_b"])
    temb = swish(t) @ p["time_w"].T + p["time_b"]
    hh = hh + temb[:, :, None, None]
    hh = conv3(swish(group_norm(hh, p["gn2_gamma"], p["gn2_beta"])),
               p["conv2_w"], p["conv2_b"])
    if x.shape[1] != hh.shape[1]:
        res = jax.lax.conv_general_dilated(
            x, p["adj_w"], (1, 1), "VALID",
            dimension_numbers=("NCHW", "OIHW", "NCHW"))
        res = res + p["adj_b"][None, :, None, None]
    else:
        res = x
    return hh + res


# ---------------------------------------------------------------------------
# Driver
# ---------------------------------------------------------------------------
if __name__ == "__main__":
    B, C_IN, C_OUT, H, W, T_CH, N_GROUPS = 2, 8, 16, 16, 16, 32, 4

    key = jax.random.PRNGKey(0)
    keys = jax.random.split(key, 16)
    f32 = jnp.float32

    params = {
        "gn1_gamma": 1.0 + 0.1 * jax.random.normal(keys[0], (C_IN,), f32),
        "gn1_beta": 0.1 * jax.random.normal(keys[1], (C_IN,), f32),
        "conv1_w": 0.1 * jax.random.normal(keys[2], (C_OUT, C_IN, 3, 3), f32),
        "conv1_b": 0.1 * jax.random.normal(keys[3], (C_OUT,), f32),
        "gn2_gamma": 1.0 + 0.1 * jax.random.normal(keys[4], (C_OUT,), f32),
        "gn2_beta": 0.1 * jax.random.normal(keys[5], (C_OUT,), f32),
        "conv2_w": 0.1 * jax.random.normal(keys[6], (C_OUT, C_OUT, 3, 3), f32),
        "conv2_b": 0.1 * jax.random.normal(keys[7], (C_OUT,), f32),
        "adj_w": 0.1 * jax.random.normal(keys[8], (C_OUT, C_IN, 1, 1), f32),
        "adj_b": 0.1 * jax.random.normal(keys[9], (C_OUT,), f32),
        "time_w": 0.1 * jax.random.normal(keys[10], (C_OUT, T_CH), f32),
        "time_b": 0.1 * jax.random.normal(keys[11], (C_OUT,), f32),
    }

    x = jax.random.normal(keys[12], (B, C_IN, H, W), f32)
    t = jax.random.normal(keys[13], (B, T_CH), f32)

    fwd = jax.jit(residual_block_forward, static_argnums=(3,))
    out = jax.block_until_ready(fwd(x, t, params, N_GROUPS))

    assert out.shape == (B, C_OUT, H, W), out.shape
    assert bool(jnp.all(jnp.isfinite(out)))

    ref = residual_block_reference(x, t, params, N_GROUPS)
    err = float(jnp.max(jnp.abs(out - ref)))
    assert err < 7.5e-2, f"max |kernel - ref| = {err}"   # bf16 MXU tolerance

    print("KERNEL_OK")
</pallas_src>

<mosaic_0001>
module attributes {stable_mosaic.version = 11 : i64} {
  func.func @conv3x3_kernel(%arg0: i32, %arg1: i32, %arg2: memref<2x18x24x128xbf16, #tpu.memory_space<any>>, %arg3: memref<9x128x128xbf16, #tpu.memory_space<vmem>>, %arg4: memref<1x128xf32, #tpu.memory_space<vmem>>, %arg5: memref<1x16x16x128xf32, #tpu.memory_space<vmem>>, %arg6: memref<18x24x128xbf16, #tpu.memory_space<vmem>>, %arg7: memref<!tpu.dma_semaphore, #tpu.memory_space<semaphore_mem>>) attributes {dimension_semantics = [#tpu.dimension_semantics<parallel>, #tpu.dimension_semantics<parallel>], iteration_bounds = array<i64: 2, 1>, scalar_prefetch = 0 : i64, scratch_operands = 2 : i64, tpu.core_type = #tpu.core_type<tc>, window_params = [{}, {pipeline_mode = #tpu.pipeline_mode<synchronous>, transform_indices = @transform_1, window_bounds = array<i64: 9, 128, 128>}, {pipeline_mode = #tpu.pipeline_mode<synchronous>, transform_indices = @transform_2, window_bounds = array<i64: 1, 128>}, {transform_indices = @transform_3, window_bounds = array<i64: 1, 16, 16, 128>}]} {
    %c16_i32 = arith.constant 16 : i32
    %0 = arith.muli %arg1, %c16_i32 : i32
    %c0_i32 = arith.constant 0 : i32
    %c0_i32_0 = arith.constant 0 : i32
    %1 = tpu.memref_slice %arg2[%arg0, %0, %c0_i32, %c0_i32_0] : memref<2x18x24x128xbf16, #tpu.memory_space<any>> -> memref<1x18x24x128xbf16, #tpu.memory_space<any>>
    %2 = tpu.memref_squeeze %1 : memref<1x18x24x128xbf16, #tpu.memory_space<any>> -> memref<18x24x128xbf16, #tpu.memory_space<any>>
    tpu.enqueue_dma source(%2 : memref<18x24x128xbf16, #tpu.memory_space<any>>) target(%arg6 : memref<18x24x128xbf16, #tpu.memory_space<vmem>>) target_semaphore(%arg7 : memref<!tpu.dma_semaphore, #tpu.memory_space<semaphore_mem>>)
    %c0_i32_1 = arith.constant 0 : i32
    %c0_i32_2 = arith.constant 0 : i32
    %3 = tpu.memref_slice %arg2[%arg0, %0, %c0_i32_1, %c0_i32_2] : memref<2x18x24x128xbf16, #tpu.memory_space<any>> -> memref<1x18x24x128xbf16, #tpu.memory_space<any>>
    %4 = tpu.memref_squeeze %3 : memref<1x18x24x128xbf16, #tpu.memory_space<any>> -> memref<18x24x128xbf16, #tpu.memory_space<any>>
    tpu.wait_dma2 semaphore(%arg7 : memref<!tpu.dma_semaphore, #tpu.memory_space<semaphore_mem>>) src(%4 : memref<18x24x128xbf16, #tpu.memory_space<any>>) dst(%arg6 : memref<18x24x128xbf16, #tpu.memory_space<vmem>>)
    %cst = arith.constant 0.000000e+00 : f32
    %5 = vector.broadcast %cst : f32 to vector<256x128xf32>
    %c0 = arith.constant 0 : index
    %c0_3 = arith.constant 0 : index
    %c0_4 = arith.constant 0 : index
    %6 = vector.load %arg6[%c0, %c0_3, %c0_4] : memref<18x24x128xbf16, #tpu.memory_space<vmem>>, vector<18x16x128xbf16>
    %7 = vector.shape_cast %6 : vector<18x16x128xbf16> to vector<288x128xbf16>
    %8 = vector.extract_strided_slice %7 {offsets = [0, 0], sizes = [256, 128], strides = [1, 1]} : vector<288x128xbf16> to vector<256x128xbf16>
    %c0_5 = arith.constant 0 : index
    %c0_6 = arith.constant 0 : index
    %c0_7 = arith.constant 0 : index
    %9 = vector.load %arg3[%c0_5, %c0_6, %c0_7] : memref<9x128x128xbf16, #tpu.memory_space<vmem>>, vector<1x128x128xbf16>
    %10 = vector.shape_cast %9 : vector<1x128x128xbf16> to vector<128x128xbf16>
    %cst_8 = arith.constant dense<0.000000e+00> : vector<256x128xf32>
    %11 = tpu.matmul %8, %10, %cst_8 {dimension_numbers = #tpu.dot_dimension_numbers<[1], [0], [0], [1], [0, 0, 1, 1], [], []>} : vector<256x128xbf16>, vector<128x128xbf16>, vector<256x128xf32> -> vector<256x128xf32>
    %12 = arith.addf %5, %11 : vector<256x128xf32>
    %13 = vector.extract_strided_slice %7 {offsets = [16, 0], sizes = [256, 128], strides = [1, 1]} : vector<288x128xbf16> to vector<256x128xbf16>
    %c3 = arith.constant 3 : index
    %c0_9 = arith.constant 0 : index
    %c0_10 = arith.constant 0 : index
    %14 = vector.load %arg3[%c3, %c0_9, %c0_10] : memref<9x128x128xbf16, #tpu.memory_space<vmem>>, vector<1x128x128xbf16>
    %15 = vector.shape_cast %14 : vector<1x128x128xbf16> to vector<128x128xbf16>
    %cst_11 = arith.constant dense<0.000000e+00> : vector<256x128xf32>
    %16 = tpu.matmul %13, %15, %cst_11 {dimension_numbers = #tpu.dot_dimension_numbers<[1], [0], [0], [1], [0, 0, 1, 1], [], []>} : vector<256x128xbf16>, vector<128x128xbf16>, vector<256x128xf32> -> vector<256x128xf32>
    %17 = arith.addf %12, %16 : vector<256x128xf32>
    %18 = vector.extract_strided_slice %7 {offsets = [32, 0], sizes = [256, 128], strides = [1, 1]} : vector<288x128xbf16> to vector<256x128xbf16>
    %c6 = arith.constant 6 : index
    %c0_12 = arith.constant 0 : index
    %c0_13 = arith.constant 0 : index
    %19 = vector.load %arg3[%c6, %c0_12, %c0_13] : memref<9x128x128xbf16, #tpu.memory_space<vmem>>, vector<1x128x128xbf16>
    %20 = vector.shape_cast %19 : vector<1x128x128xbf16> to vector<128x128xbf16>
    %cst_14 = arith.constant dense<0.000000e+00> : vector<256x128xf32>
    %21 = tpu.matmul %18, %20, %cst_14 {dimension_numbers = #tpu.dot_dimension_numbers<[1], [0], [0], [1], [0, 0, 1, 1], [], []>} : vector<256x128xbf16>, vector<128x128xbf16>, vector<256x128xf32> -> vector<256x128xf32>
    %22 = arith.addf %17, %21 : vector<256x128xf32>
    %c0_15 = arith.constant 0 : index
    %c1 = arith.constant 1 : index
    %c0_16 = arith.constant 0 : index
    %23 = vector.load %arg6[%c0_15, %c1, %c0_16] : memref<18x24x128xbf16, #tpu.memory_space<vmem>>, vector<18x16x128xbf16>
    %24 = vector.shape_cast %23 : vector<18x16x128xbf16> to vector<288x128xbf16>
    %25 = vector.extract_strided_slice %24 {offsets = [0, 0], sizes = [256, 128], strides = [1, 1]} : vector<288x128xbf16> to vector<256x128xbf16>
    %c1_17 = arith.constant 1 : index
    %c0_18 = arith.constant 0 : index
    %c0_19 = arith.constant 0 : index
    %26 = vector.load %arg3[%c1_17, %c0_18, %c0_19] : memref<9x128x128xbf16, #tpu.memory_space<vmem>>, vector<1x128x128xbf16>
    %27 = vector.shape_cast %26 : vector<1x128x128xbf16> to vector<128x128xbf16>
    %cst_20 = arith.constant dense<0.000000e+00> : vector<256x128xf32>
    %28 = tpu.matmul %25, %27, %cst_20 {dimension_numbers = #tpu.dot_dimension_numbers<[1], [0], [0], [1], [0, 0, 1, 1], [], []>} : vector<256x128xbf16>, vector<128x128xbf16>, vector<256x128xf32> -> vector<256x128xf32>
    %29 = arith.addf %22, %28 : vector<256x128xf32>
    %30 = vector.extract_strided_slice %24 {offsets = [16, 0], sizes = [256, 128], strides = [1, 1]} : vector<288x128xbf16> to vector<256x128xbf16>
    %c4 = arith.constant 4 : index
    %c0_21 = arith.constant 0 : index
    %c0_22 = arith.constant 0 : index
    %31 = vector.load %arg3[%c4, %c0_21, %c0_22] : memref<9x128x128xbf16, #tpu.memory_space<vmem>>, vector<1x128x128xbf16>
    %32 = vector.shape_cast %31 : vector<1x128x128xbf16> to vector<128x128xbf16>
    %cst_23 = arith.constant dense<0.000000e+00> : vector<256x128xf32>
    %33 = tpu.matmul %30, %32, %cst_23 {dimension_numbers = #tpu.dot_dimension_numbers<[1], [0], [0], [1], [0, 0, 1, 1], [], []>} : vector<256x128xbf16>, vector<128x128xbf16>, vector<256x128xf32> -> vector<256x128xf32>
    %34 = arith.addf %29, %33 : vector<256x128xf32>
    %35 = vector.extract_strided_slice %24 {offsets = [32, 0], sizes = [256, 128], strides = [1, 1]} : vector<288x128xbf16> to vector<256x128xbf16>
    %c7 = arith.constant 7 : index
    %c0_24 = arith.constant 0 : index
    %c0_25 = arith.constant 0 : index
    %36 = vector.load %arg3[%c7, %c0_24, %c0_25] : memref<9x128x128xbf16, #tpu.memory_space<vmem>>, vector<1x128x128xbf16>
    %37 = vector.shape_cast %36 : vector<1x128x128xbf16> to vector<128x128xbf16>
    %cst_26 = arith.constant dense<0.000000e+00> : vector<256x128xf32>
    %38 = tpu.matmul %35, %37, %cst_26 {dimension_numbers = #tpu.dot_dimension_numbers<[1], [0], [0], [1], [0, 0, 1, 1], [], []>} : vector<256x128xbf16>, vector<128x128xbf16>, vector<256x128xf32> -> vector<256x128xf32>
    %39 = arith.addf %34, %38 : vector<256x128xf32>
    %c0_27 = arith.constant 0 : index
    %c2 = arith.constant 2 : index
    %c0_28 = arith.constant 0 : index
    %40 = vector.load %arg6[%c0_27, %c2, %c0_28] : memref<18x24x128xbf16, #tpu.memory_space<vmem>>, vector<18x16x128xbf16>
    %41 = vector.shape_cast %40 : vector<18x16x128xbf16> to vector<288x128xbf16>
    %42 = vector.extract_strided_slice %41 {offsets = [0, 0], sizes = [256, 128], strides = [1, 1]} : vector<288x128xbf16> to vector<256x128xbf16>
    %c2_29 = arith.constant 2 : index
    %c0_30 = arith.constant 0 : index
    %c0_31 = arith.constant 0 : index
    %43 = vector.load %arg3[%c2_29, %c0_30, %c0_31] : memref<9x128x128xbf16, #tpu.memory_space<vmem>>, vector<1x128x128xbf16>
    %44 = vector.shape_cast %43 : vector<1x128x128xbf16> to vector<128x128xbf16>
    %cst_32 = arith.constant dense<0.000000e+00> : vector<256x128xf32>
    %45 = tpu.matmul %42, %44, %cst_32 {dimension_numbers = #tpu.dot_dimension_numbers<[1], [0], [0], [1], [0, 0, 1, 1], [], []>} : vector<256x128xbf16>, vector<128x128xbf16>, vector<256x128xf32> -> vector<256x128xf32>
    %46 = arith.addf %39, %45 : vector<256x128xf32>
    %47 = vector.extract_strided_slice %41 {offsets = [16, 0], sizes = [256, 128], strides = [1, 1]} : vector<288x128xbf16> to vector<256x128xbf16>
    %c5 = arith.constant 5 : index
    %c0_33 = arith.constant 0 : index
    %c0_34 = arith.constant 0 : index
    %48 = vector.load %arg3[%c5, %c0_33, %c0_34] : memref<9x128x128xbf16, #tpu.memory_space<vmem>>, vector<1x128x128xbf16>
    %49 = vector.shape_cast %48 : vector<1x128x128xbf16> to vector<128x128xbf16>
    %cst_35 = arith.constant dense<0.000000e+00> : vector<256x128xf32>
    %50 = tpu.matmul %47, %49, %cst_35 {dimension_numbers = #tpu.dot_dimension_numbers<[1], [0], [0], [1], [0, 0, 1, 1], [], []>} : vector<256x128xbf16>, vector<128x128xbf16>, vector<256x128xf32> -> vector<256x128xf32>
    %51 = arith.addf %46, %50 : vector<256x128xf32>
    %52 = vector.extract_strided_slice %41 {offsets = [32, 0], sizes = [256, 128], strides = [1, 1]} : vector<288x128xbf16> to vector<256x128xbf16>
    %c8 = arith.constant 8 : index
    %c0_36 = arith.constant 0 : index
    %c0_37 = arith.constant 0 : index
    %53 = vector.load %arg3[%c8, %c0_36, %c0_37] : memref<9x128x128xbf16, #tpu.memory_space<vmem>>, vector<1x128x128xbf16>
    %54 = vector.shape_cast %53 : vector<1x128x128xbf16> to vector<128x128xbf16>
    %cst_38 = arith.constant dense<0.000000e+00> : vector<256x128xf32>
    %55 = tpu.matmul %52, %54, %cst_38 {dimension_numbers = #tpu.dot_dimension_numbers<[1], [0], [0], [1], [0, 0, 1, 1], [], []>} : vector<256x128xbf16>, vector<128x128xbf16>, vector<256x128xf32> -> vector<256x128xf32>
    %56 = arith.addf %51, %55 : vector<256x128xf32>
    %c0_39 = arith.constant 0 : index
    %c0_40 = arith.constant 0 : index
    %57 = vector.load %arg4[%c0_39, %c0_40] : memref<1x128xf32, #tpu.memory_space<vmem>>, vector<1x128xf32>
    %58 = vector.broadcast %57 : vector<1x128xf32> to vector<256x128xf32>
    %59 = arith.addf %56, %58 : vector<256x128xf32>
    %60 = vector.shape_cast %59 : vector<256x128xf32> to vector<16x16x128xf32>
    %c0_41 = arith.constant 0 : index
    %c0_42 = arith.constant 0 : index
    %c0_43 = arith.constant 0 : index
    %c0_44 = arith.constant 0 : index
    %61 = vector.load %arg5[%c0_41, %c0_42, %c0_43, %c0_44] : memref<1x16x16x128xf32, #tpu.memory_space<vmem>>, vector<1x16x16x128xf32>
    %62 = vector.shape_cast %61 : vector<1x16x16x128xf32> to vector<16x16x128xf32>
    %63 = vector.shape_cast %60 : vector<16x16x128xf32> to vector<1x16x16x128xf32>
    tpu.vector_store %arg5[%c0_41, %c0_42, %c0_43, %c0_44], %63 {strides = array<i32>} : memref<1x16x16x128xf32, #tpu.memory_space<vmem>>, vector<1x16x16x128xf32>,
    return
  }
  func.func @transform_1(%arg0: i32, %arg1: i32) -> (i32, i32, i32) {
    %c0_i32 = arith.constant 0 : i32
    %c0_i32_0 = arith.constant 0 : i32
    %c0_i32_1 = arith.constant 0 : i32
    %c0_i32_2 = arith.constant 0 : i32
    return %c0_i32, %c0_i32_0, %c0_i32_1 : i32, i32, i32
  }
  func.func @transform_2(%arg0: i32, %arg1: i32) -> (i32, i32) {
    %c0_i32 = arith.constant 0 : i32
    %c0_i32_0 = arith.constant 0 : i32
    %c0_i32_1 = arith.constant 0 : i32
    return %c0_i32, %c0_i32_0 : i32, i32
  }
  func.func @transform_3(%arg0: i32, %arg1: i32) -> (i32, i32, i32, i32) {
    %c0_i32 = arith.constant 0 : i32
    %c0_i32_0 = arith.constant 0 : i32
    %c0_i32_1 = arith.constant 0 : i32
    return %arg0, %arg1, %c0_i32, %c0_i32_0 : i32, i32, i32, i32
  }
}

module attributes {stable_mosaic.version = 11 : i64} {
  func.func @gn_swish_pad_kernel(%arg0: i32, %arg1: memref<1x16x16x128xf32, #tpu.memory_space<vmem>>, %arg2: memref<1x128xf32, #tpu.memory_space<vmem>>, %arg3: memref<1x128xf32, #tpu.memory_space<vmem>>, %arg4: memref<128x128xf32, #tpu.memory_space<vmem>>, %arg5: memref<1x18x24x128xbf16, #tpu.memory_space<vmem>>) attributes {dimension_semantics = [#tpu.dimension_semantics<parallel>], iteration_bounds = array<i64: 2>, scalar_prefetch = 0 : i64, scratch_operands = 0 : i64, tpu.core_type = #tpu.core_type<tc>, window_params = [{transform_indices = @transform_0, window_bounds = array<i64: 1, 16, 16, 128>}, {pipeline_mode = #tpu.pipeline_mode<synchronous>, transform_indices = @transform_1, window_bounds = array<i64: 1, 128>}, {pipeline_mode = #tpu.pipeline_mode<synchronous>, transform_indices = @transform_2, window_bounds = array<i64: 1, 128>}, {pipeline_mode = #tpu.pipeline_mode<synchronous>, transform_indices = @transform_3, window_bounds = array<i64: 128, 128>}, {transform_indices = @transform_4, window_bounds = array<i64: 1, 18, 24, 128>}]} {
    %c0 = arith.constant 0 : index
    %c0_0 = arith.constant 0 : index
    %c0_1 = arith.constant 0 : index
    %c0_2 = arith.constant 0 : index
    %0 = vector.load %arg1[%c0, %c0_0, %c0_1, %c0_2] : memref<1x16x16x128xf32, #tpu.memory_space<vmem>>, vector<1x16x16x128xf32>
    %1 = vector.shape_cast %0 : vector<1x16x16x128xf32> to vector<16x16x128xf32>
    %2 = vector.shape_cast %1 : vector<16x16x128xf32> to vector<256x128xf32>
    %c0_3 = arith.constant 0 : index
    %c0_4 = arith.constant 0 : index
    %3 = vector.load %arg2[%c0_3, %c0_4] : memref<1x128xf32, #tpu.memory_space<vmem>>, vector<1x128xf32>
    %c0_5 = arith.constant 0 : index
    %c0_6 = arith.constant 0 : index
    %4 = vector.load %arg3[%c0_5, %c0_6] : memref<1x128xf32, #tpu.memory_space<vmem>>, vector<1x128xf32>
    %c0_7 = arith.constant 0 : index
    %c0_8 = arith.constant 0 : index
    %5 = vector.load %arg4[%c0_7, %c0_8] : memref<128x128xf32, #tpu.memory_space<vmem>>, vector<128x128xf32>
    %cst = arith.constant dense<0.000000e+00> : vector<128xf32>
    %6 = vector.multi_reduction <add>, %2, %cst [0] : vector<256x128xf32> to vector<128xf32>
    %7 = vector.shape_cast %6 : vector<128xf32> to vector<1x128xf32>
    %cst_9 = arith.constant dense<0.000000e+00> : vector<1x128xf32>
    %8 = tpu.matmul %7, %5, %cst_9 {dimension_numbers = #tpu.dot_dimension_numbers<[1], [0], [0], [1], [0, 0, 1, 1], [], []>} : vector<1x128xf32>, vector<128x128xf32>, vector<1x128xf32> -> vector<1x128xf32>
    %cst_10 = arith.constant 5.120000e+02 : f32
    %9 = vector.broadcast %cst_10 : f32 to vector<1x128xf32>
    %10 = arith.divf %8, %9 : vector<1x128xf32>
    %11 = vector.broadcast %10 : vector<1x128xf32> to vector<256x128xf32>
    %12 = arith.subf %2, %11 : vector<256x128xf32>
    %13 = arith.mulf %12, %12 : vector<256x128xf32>
    %cst_11 = arith.constant dense<0.000000e+00> : vector<128xf32>
    %14 = vector.multi_reduction <add>, %13, %cst_11 [0] : vector<256x128xf32> to vector<128xf32>
    %15 = vector.shape_cast %14 : vector<128xf32> to vector<1x128xf32>
    %cst_12 = arith.constant dense<0.000000e+00> : vector<1x128xf32>
    %16 = tpu.matmul %15, %5, %cst_12 {dimension_numbers = #tpu.dot_dimension_numbers<[1], [0], [0], [1], [0, 0, 1, 1], [], []>} : vector<1x128xf32>, vector<128x128xf32>, vector<1x128xf32> -> vector<1x128xf32>
    %cst_13 = arith.constant 5.120000e+02 : f32
    %17 = vector.broadcast %cst_13 : f32 to vector<1x128xf32>
    %18 = arith.divf %16, %17 : vector<1x128xf32>
    %cst_14 = arith.constant 9.99999974E-6 : f32
    %19 = vector.broadcast %cst_14 : f32 to vector<1x128xf32>
    %20 = arith.addf %18, %19 : vector<1x128xf32>
    %21 = math.rsqrt %20 : vector<1x128xf32>
    %22 = vector.broadcast %21 : vector<1x128xf32> to vector<256x128xf32>
    %23 = arith.mulf %12, %22 : vector<256x128xf32>
    %24 = vector.broadcast %3 : vector<1x128xf32> to vector<256x128xf32>
    %25 = arith.mulf %23, %24 : vector<256x128xf32>
    %26 = vector.broadcast %4 : vector<1x128xf32> to vector<256x128xf32>
    %27 = arith.addf %25, %26 : vector<256x128xf32>
    %28 = arith.negf %27 : vector<256x128xf32>
    %29 = math.exp %28 : vector<256x128xf32>
    %cst_15 = arith.constant 1.000000e+00 : f32
    %30 = vector.broadcast %cst_15 : f32 to vector<256x128xf32>
    %31 = arith.addf %30, %29 : vector<256x128xf32>
    %32 = arith.divf %30, %31 : vector<256x128xf32>
    %33 = arith.mulf %27, %32 : vector<256x128xf32>
    %cst_16 = arith.constant 0.000000e+00 : bf16
    %34 = vector.broadcast %cst_16 : bf16 to vector<18x24x128xbf16>
    %c0_17 = arith.constant 0 : index
    %c0_18 = arith.constant 0 : index
    %c0_19 = arith.constant 0 : index
    %c0_20 = arith.constant 0 : index
    %35 = vector.load %arg5[%c0_17, %c0_18, %c0_19, %c0_20] : memref<1x18x24x128xbf16, #tpu.memory_space<vmem>>, vector<1x18x24x128xbf16>
    %36 = vector.shape_cast %35 : vector<1x18x24x128xbf16> to vector<18x24x128xbf16>
    %37 = vector.shape_cast %34 : vector<18x24x128xbf16> to vector<1x18x24x128xbf16>
    tpu.vector_store %arg5[%c0_17, %c0_18, %c0_19, %c0_20], %37 {strides = array<i32>} : memref<1x18x24x128xbf16, #tpu.memory_space<vmem>>, vector<1x18x24x128xbf16>,
    %38 = vector.shape_cast %33 : vector<256x128xf32> to vector<16x16x128xf32>
    %39 = arith.truncf %38 : vector<16x16x128xf32> to vector<16x16x128xbf16>
    %c0_21 = arith.constant 0 : index
    %c1 = arith.constant 1 : index
    %c1_22 = arith.constant 1 : index
    %c0_23 = arith.constant 0 : index
    %40 = vector.load %arg5[%c0_21, %c1, %c1_22, %c0_23] : memref<1x18x24x128xbf16, #tpu.memory_space<vmem>>, vector<1x16x16x128xbf16>
    %41 = vector.shape_cast %40 : vector<1x16x16x128xbf16> to vector<16x16x128xbf16>
    %42 = vector.shape_cast %39 : vector<16x16x128xbf16> to vector<1x16x16x128xbf16>
    tpu.vector_store %arg5[%c0_21, %c1, %c1_22, %c0_23], %42 {strides = array<i32>} : memref<1x18x24x128xbf16, #tpu.memory_space<vmem>>, vector<1x16x16x128xbf16>,
    return
  }
  func.func @transform_0(%arg0: i32) -> (i32, i32, i32, i32) {
    %c0_i32 = arith.constant 0 : i32
    %c0_i32_0 = arith.constant 0 : i32
    %c0_i32_1 = arith.constant 0 : i32
    %c0_i32_2 = arith.constant 0 : i32
    return %arg0, %c0_i32, %c0_i32_0, %c0_i32_1 : i32, i32, i32, i32
  }
  func.func @transform_1(%arg0: i32) -> (i32, i32) {
    %c0_i32 = arith.constant 0 : i32
    %c0_i32_0 = arith.constant 0 : i32
    %c0_i32_1 = arith.constant 0 : i32
    return %c0_i32, %c0_i32_0 : i32, i32
  }
  func.func @transform_2(%arg0: i32) -> (i32, i32) {
    %c0_i32 = arith.constant 0 : i32
    %c0_i32_0 = arith.constant 0 : i32
    %c0_i32_1 = arith.constant 0 : i32
    return %c0_i32, %c0_i32_0 : i32, i32
  }
  func.func @transform_3(%arg0: i32) -> (i32, i32) {
    %c0_i32 = arith.constant 0 : i32
    %c0_i32_0 = arith.constant 0 : i32
    %c0_i32_1 = arith.constant 0 : i32
    return %c0_i32, %c0_i32_0 : i32, i32
  }
  func.func @transform_4(%arg0: i32) -> (i32, i32, i32, i32) {
    %c0_i32 = arith.constant 0 : i32
    %c0_i32_0 = arith.constant 0 : i32
    %c0_i32_1 = arith.constant 0 : i32
    %c0_i32_2 = arith.constant 0 : i32
    return %arg0, %c0_i32, %c0_i32_0, %c0_i32_1 : i32, i32, i32, i32
  }
}

module attributes {stable_mosaic.version = 11 : i64} {
  func.func @add_temb_gn_swish_pad_kernel(%arg0: i32, %arg1: memref<1x16x16x128xf32, #tpu.memory_space<vmem>>, %arg2: memref<1x1x128xf32, #tpu.memory_space<vmem>>, %arg3: memref<1x128xf32, #tpu.memory_space<vmem>>, %arg4: memref<1x128xf32, #tpu.memory_space<vmem>>, %arg5: memref<128x128xf32, #tpu.memory_space<vmem>>, %arg6: memref<1x18x24x128xbf16, #tpu.memory_space<vmem>>) attributes {dimension_semantics = [#tpu.dimension_semantics<parallel>], iteration_bounds = array<i64: 2>, scalar_prefetch = 0 : i64, scratch_operands = 0 : i64, tpu.core_type = #tpu.core_type<tc>, window_params = [{transform_indices = @transform_0, window_bounds = array<i64: 1, 16, 16, 128>}, {transform_indices = @transform_1, window_bounds = array<i64: 1, 1, 128>}, {pipeline_mode = #tpu.pipeline_mode<synchronous>, transform_indices = @transform_2, window_bounds = array<i64: 1, 128>}, {pipeline_mode = #tpu.pipeline_mode<synchronous>, transform_indices = @transform_3, window_bounds = array<i64: 1, 128>}, {pipeline_mode = #tpu.pipeline_mode<synchronous>, transform_indices = @transform_4, window_bounds = array<i64: 128, 128>}, {transform_indices = @transform_5, window_bounds = array<i64: 1, 18, 24, 128>}]} {
    %c0 = arith.constant 0 : index
    %c0_0 = arith.constant 0 : index
    %c0_1 = arith.constant 0 : index
    %c0_2 = arith.constant 0 : index
    %0 = vector.load %arg1[%c0, %c0_0, %c0_1, %c0_2] : memref<1x16x16x128xf32, #tpu.memory_space<vmem>>, vector<1x16x16x128xf32>
    %1 = vector.shape_cast %0 : vector<1x16x16x128xf32> to vector<16x16x128xf32>
    %2 = vector.shape_cast %1 : vector<16x16x128xf32> to vector<256x128xf32>
    %c0_3 = arith.constant 0 : index
    %c0_4 = arith.constant 0 : index
    %c0_5 = arith.constant 0 : index
    %3 = vector.load %arg2[%c0_3, %c0_4, %c0_5] : memref<1x1x128xf32, #tpu.memory_space<vmem>>, vector<1x1x128xf32>
    %4 = vector.shape_cast %3 : vector<1x1x128xf32> to vector<1x128xf32>
    %5 = vector.broadcast %4 : vector<1x128xf32> to vector<256x128xf32>
    %6 = arith.addf %2, %5 : vector<256x128xf32>
    %c0_6 = arith.constant 0 : index
    %c0_7 = arith.constant 0 : index
    %7 = vector.load %arg3[%c0_6, %c0_7] : memref<1x128xf32, #tpu.memory_space<vmem>>, vector<1x128xf32>
    %c0_8 = arith.constant 0 : index
    %c0_9 = arith.constant 0 : index
    %8 = vector.load %arg4[%c0_8, %c0_9] : memref<1x128xf32, #tpu.memory_space<vmem>>, vector<1x128xf32>
    %c0_10 = arith.constant 0 : index
    %c0_11 = arith.constant 0 : index
    %9 = vector.load %arg5[%c0_10, %c0_11] : memref<128x128xf32, #tpu.memory_space<vmem>>, vector<128x128xf32>
    %cst = arith.constant dense<0.000000e+00> : vector<128xf32>
    %10 = vector.multi_reduction <add>, %6, %cst [0] : vector<256x128xf32> to vector<128xf32>
    %11 = vector.shape_cast %10 : vector<128xf32> to vector<1x128xf32>
    %cst_12 = arith.constant dense<0.000000e+00> : vector<1x128xf32>
    %12 = tpu.matmul %11, %9, %cst_12 {dimension_numbers = #tpu.dot_dimension_numbers<[1], [0], [0], [1], [0, 0, 1, 1], [], []>} : vector<1x128xf32>, vector<128x128xf32>, vector<1x128xf32> -> vector<1x128xf32>
    %cst_13 = arith.constant 1.024000e+03 : f32
    %13 = vector.broadcast %cst_13 : f32 to vector<1x128xf32>
    %14 = arith.divf %12, %13 : vector<1x128xf32>
    %15 = vector.broadcast %14 : vector<1x128xf32> to vector<256x128xf32>
    %16 = arith.subf %6, %15 : vector<256x128xf32>
    %17 = arith.mulf %16, %16 : vector<256x128xf32>
    %cst_14 = arith.constant dense<0.000000e+00> : vector<128xf32>
    %18 = vector.multi_reduction <add>, %17, %cst_14 [0] : vector<256x128xf32> to vector<128xf32>
    %19 = vector.shape_cast %18 : vector<128xf32> to vector<1x128xf32>
    %cst_15 = arith.constant dense<0.000000e+00> : vector<1x128xf32>
    %20 = tpu.matmul %19, %9, %cst_15 {dimension_numbers = #tpu.dot_dimension_numbers<[1], [0], [0], [1], [0, 0, 1, 1], [], []>} : vector<1x128xf32>, vector<128x128xf32>, vector<1x128xf32> -> vector<1x128xf32>
    %cst_16 = arith.constant 1.024000e+03 : f32
    %21 = vector.broadcast %cst_16 : f32 to vector<1x128xf32>
    %22 = arith.divf %20, %21 : vector<1x128xf32>
    %cst_17 = arith.constant 9.99999974E-6 : f32
    %23 = vector.broadcast %cst_17 : f32 to vector<1x128xf32>
    %24 = arith.addf %22, %23 : vector<1x128xf32>
    %25 = math.rsqrt %24 : vector<1x128xf32>
    %26 = vector.broadcast %25 : vector<1x128xf32> to vector<256x128xf32>
    %27 = arith.mulf %16, %26 : vector<256x128xf32>
    %28 = vector.broadcast %7 : vector<1x128xf32> to vector<256x128xf32>
    %29 = arith.mulf %27, %28 : vector<256x128xf32>
    %30 = vector.broadcast %8 : vector<1x128xf32> to vector<256x128xf32>
    %31 = arith.addf %29, %30 : vector<256x128xf32>
    %32 = arith.negf %31 : vector<256x128xf32>
    %33 = math.exp %32 : vector<256x128xf32>
    %cst_18 = arith.constant 1.000000e+00 : f32
    %34 = vector.broadcast %cst_18 : f32 to vector<256x128xf32>
    %35 = arith.addf %34, %33 : vector<256x128xf32>
    %36 = arith.divf %34, %35 : vector<256x128xf32>
    %37 = arith.mulf %31, %36 : vector<256x128xf32>
    %cst_19 = arith.constant 0.000000e+00 : bf16
    %38 = vector.broadcast %cst_19 : bf16 to vector<18x24x128xbf16>
    %c0_20 = arith.constant 0 : index
    %c0_21 = arith.constant 0 : index
    %c0_22 = arith.constant 0 : index
    %c0_23 = arith.constant 0 : index
    %39 = vector.load %arg6[%c0_20, %c0_21, %c0_22, %c0_23] : memref<1x18x24x128xbf16, #tpu.memory_space<vmem>>, vector<1x18x24x128xbf16>
    %40 = vector.shape_cast %39 : vector<1x18x24x128xbf16> to vector<18x24x128xbf16>
    %41 = vector.shape_cast %38 : vector<18x24x128xbf16> to vector<1x18x24x128xbf16>
    tpu.vector_store %arg6[%c0_20, %c0_21, %c0_22, %c0_23], %41 {strides = array<i32>} : memref<1x18x24x128xbf16, #tpu.memory_space<vmem>>, vector<1x18x24x128xbf16>,
    %42 = vector.shape_cast %37 : vector<256x128xf32> to vector<16x16x128xf32>
    %43 = arith.truncf %42 : vector<16x16x128xf32> to vector<16x16x128xbf16>
    %c0_24 = arith.constant 0 : index
    %c1 = arith.constant 1 : index
    %c1_25 = arith.constant 1 : index
    %c0_26 = arith.constant 0 : index
    %44 = vector.load %arg6[%c0_24, %c1, %c1_25, %c0_26] : memref<1x18x24x128xbf16, #tpu.memory_space<vmem>>, vector<1x16x16x128xbf16>
    %45 = vector.shape_cast %44 : vector<1x16x16x128xbf16> to vector<16x16x128xbf16>
    %46 = vector.shape_cast %43 : vector<16x16x128xbf16> to vector<1x16x16x128xbf16>
    tpu.vector_store %arg6[%c0_24, %c1, %c1_25, %c0_26], %46 {strides = array<i32>} : memref<1x18x24x128xbf16, #tpu.memory_space<vmem>>, vector<1x16x16x128xbf16>,
    return
  }
  func.func @transform_0(%arg0: i32) -> (i32, i32, i32, i32) {
    %c0_i32 = arith.constant 0 : i32
    %c0_i32_0 = arith.constant 0 : i32
    %c0_i32_1 = arith.constant 0 : i32
    %c0_i32_2 = arith.constant 0 : i32
    return %arg0, %c0_i32, %c0_i32_0, %c0_i32_1 : i32, i32, i32, i32
  }
  func.func @transform_1(%arg0: i32) -> (i32, i32, i32) {
    %c0_i32 = arith.constant 0 : i32
    %c0_i32_0 = arith.constant 0 : i32
    %c0_i32_1 = arith.constant 0 : i32
    return %arg0, %c0_i32, %c0_i32_0 : i32, i32, i32
  }
  func.func @transform_2(%arg0: i32) -> (i32, i32) {
    %c0_i32 = arith.constant 0 : i32
    %c0_i32_0 = arith.constant 0 : i32
    %c0_i32_1 = arith.constant 0 : i32
    return %c0_i32, %c0_i32_0 : i32, i32
  }
  func.func @transform_3(%arg0: i32) -> (i32, i32) {
    %c0_i32 = arith.constant 0 : i32
    %c0_i32_0 = arith.constant 0 : i32
    %c0_i32_1 = arith.constant 0 : i32
    return %c0_i32, %c0_i32_0 : i32, i32
  }
  func.func @transform_4(%arg0: i32) -> (i32, i32) {
    %c0_i32 = arith.constant 0 : i32
    %c0_i32_0 = arith.constant 0 : i32
    %c0_i32_1 = arith.constant 0 : i32
    return %c0_i32, %c0_i32_0 : i32, i32
  }
  func.func @transform_5(%arg0: i32) -> (i32, i32, i32, i32) {
    %c0_i32 = arith.constant 0 : i32
    %c0_i32_0 = arith.constant 0 : i32
    %c0_i32_1 = arith.constant 0 : i32
    %c0_i32_2 = arith.constant 0 : i32
    return %arg0, %c0_i32, %c0_i32_0, %c0_i32_1 : i32, i32, i32, i32
  }
}

module attributes {stable_mosaic.version = 11 : i64} {
  func.func @conv3x3_adjust_kernel(%arg0: i32, %arg1: i32, %arg2: memref<2x18x24x128xbf16, #tpu.memory_space<any>>, %arg3: memref<9x128x128xbf16, #tpu.memory_space<vmem>>, %arg4: memref<1x128xf32, #tpu.memory_space<vmem>>, %arg5: memref<1x16x16x128xf32, #tpu.memory_space<vmem>>, %arg6: memref<128x128xbf16, #tpu.memory_space<vmem>>, %arg7: memref<1x16x16x128xf32, #tpu.memory_space<vmem>>, %arg8: memref<18x24x128xbf16, #tpu.memory_space<vmem>>, %arg9: memref<!tpu.dma_semaphore, #tpu.memory_space<semaphore_mem>>) attributes {dimension_semantics = [#tpu.dimension_semantics<parallel>, #tpu.dimension_semantics<parallel>], iteration_bounds = array<i64: 2, 1>, scalar_prefetch = 0 : i64, scratch_operands = 2 : i64, tpu.core_type = #tpu.core_type<tc>, window_params = [{}, {pipeline_mode = #tpu.pipeline_mode<synchronous>, transform_indices = @transform_1, window_bounds = array<i64: 9, 128, 128>}, {pipeline_mode = #tpu.pipeline_mode<synchronous>, transform_indices = @transform_2, window_bounds = array<i64: 1, 128>}, {transform_indices = @transform_3, window_bounds = array<i64: 1, 16, 16, 128>}, {pipeline_mode = #tpu.pipeline_mode<synchronous>, transform_indices = @transform_4, window_bounds = array<i64: 128, 128>}, {transform_indices = @transform_5, window_bounds = array<i64: 1, 16, 16, 128>}]} {
    %c16_i32 = arith.constant 16 : i32
    %0 = arith.muli %arg1, %c16_i32 : i32
    %c0_i32 = arith.constant 0 : i32
    %c0_i32_0 = arith.constant 0 : i32
    %1 = tpu.memref_slice %arg2[%arg0, %0, %c0_i32, %c0_i32_0] : memref<2x18x24x128xbf16, #tpu.memory_space<any>> -> memref<1x18x24x128xbf16, #tpu.memory_space<any>>
    %2 = tpu.memref_squeeze %1 : memref<1x18x24x128xbf16, #tpu.memory_space<any>> -> memref<18x24x128xbf16, #tpu.memory_space<any>>
    tpu.enqueue_dma source(%2 : memref<18x24x128xbf16, #tpu.memory_space<any>>) target(%arg8 : memref<18x24x128xbf16, #tpu.memory_space<vmem>>) target_semaphore(%arg9 : memref<!tpu.dma_semaphore, #tpu.memory_space<semaphore_mem>>)
    %c0 = arith.constant 0 : index
    %c0_1 = arith.constant 0 : index
    %c0_2 = arith.constant 0 : index
    %c0_3 = arith.constant 0 : index
    %3 = vector.load %arg5[%c0, %c0_1, %c0_2, %c0_3] : memref<1x16x16x128xf32, #tpu.memory_space<vmem>>, vector<1x16x16x128xf32>
    %4 = vector.shape_cast %3 : vector<1x16x16x128xf32> to vector<16x16x128xf32>
    %5 = vector.shape_cast %4 : vector<16x16x128xf32> to vector<256x128xf32>
    %6 = arith.truncf %5 : vector<256x128xf32> to vector<256x128xbf16>
    %c0_4 = arith.constant 0 : index
    %c0_5 = arith.constant 0 : index
    %7 = vector.load %arg6[%c0_4, %c0_5] : memref<128x128xbf16, #tpu.memory_space<vmem>>, vector<128x128xbf16>
    %cst = arith.constant dense<0.000000e+00> : vector<256x128xf32>
    %8 = tpu.matmul %6, %7, %cst {dimension_numbers = #tpu.dot_dimension_numbers<[1], [0], [0], [1], [0, 0, 1, 1], [], []>} : vector<256x128xbf16>, vector<128x128xbf16>, vector<256x128xf32> -> vector<256x128xf32>
    %c0_i32_6 = arith.constant 0 : i32
    %c0_i32_7 = arith.constant 0 : i32
    %9 = tpu.memref_slice %arg2[%arg0, %0, %c0_i32_6, %c0_i32_7] : memref<2x18x24x128xbf16, #tpu.memory_space<any>> -> memref<1x18x24x128xbf16, #tpu.memory_space<any>>
    %10 = tpu.memref_squeeze %9 : memref<1x18x24x128xbf16, #tpu.memory_space<any>> -> memref<18x24x128xbf16, #tpu.memory_space<any>>
    tpu.wait_dma2 semaphore(%arg9 : memref<!tpu.dma_semaphore, #tpu.memory_space<semaphore_mem>>) src(%10 : memref<18x24x128xbf16, #tpu.memory_space<any>>) dst(%arg8 : memref<18x24x128xbf16, #tpu.memory_space<vmem>>)
    %c0_8 = arith.constant 0 : index
    %c0_9 = arith.constant 0 : index
    %c0_10 = arith.constant 0 : index
    %11 = vector.load %arg8[%c0_8, %c0_9, %c0_10] : memref<18x24x128xbf16, #tpu.memory_space<vmem>>, vector<18x16x128xbf16>
    %12 = vector.shape_cast %11 : vector<18x16x128xbf16> to vector<288x128xbf16>
    %13 = vector.extract_strided_slice %12 {offsets = [0, 0], sizes = [256, 128], strides = [1, 1]} : vector<288x128xbf16> to vector<256x128xbf16>
    %c0_11 = arith.constant 0 : index
    %c0_12 = arith.constant 0 : index
    %c0_13 = arith.constant 0 : index
    %14 = vector.load %arg3[%c0_11, %c0_12, %c0_13] : memref<9x128x128xbf16, #tpu.memory_space<vmem>>, vector<1x128x128xbf16>
    %15 = vector.shape_cast %14 : vector<1x128x128xbf16> to vector<128x128xbf16>
    %cst_14 = arith.constant dense<0.000000e+00> : vector<256x128xf32>
    %16 = tpu.matmul %13, %15, %cst_14 {dimension_numbers = #tpu.dot_dimension_numbers<[1], [0], [0], [1], [0, 0, 1, 1], [], []>} : vector<256x128xbf16>, vector<128x128xbf16>, vector<256x128xf32> -> vector<256x128xf32>
    %17 = arith.addf %8, %16 : vector<256x128xf32>
    %18 = vector.extract_strided_slice %12 {offsets = [16, 0], sizes = [256, 128], strides = [1, 1]} : vector<288x128xbf16> to vector<256x128xbf16>
    %c3 = arith.constant 3 : index
    %c0_15 = arith.constant 0 : index
    %c0_16 = arith.constant 0 : index
    %19 = vector.load %arg3[%c3, %c0_15, %c0_16] : memref<9x128x128xbf16, #tpu.memory_space<vmem>>, vector<1x128x128xbf16>
    %20 = vector.shape_cast %19 : vector<1x128x128xbf16> to vector<128x128xbf16>
    %cst_17 = arith.constant dense<0.000000e+00> : vector<256x128xf32>
    %21 = tpu.matmul %18, %20, %cst_17 {dimension_numbers = #tpu.dot_dimension_numbers<[1], [0], [0], [1], [0, 0, 1, 1], [], []>} : vector<256x128xbf16>, vector<128x128xbf16>, vector<256x128xf32> -> vector<256x128xf32>
    %22 = arith.addf %17, %21 : vector<256x128xf32>
    %23 = vector.extract_strided_slice %12 {offsets = [32, 0], sizes = [256, 128], strides = [1, 1]} : vector<288x128xbf16> to vector<256x128xbf16>
    %c6 = arith.constant 6 : index
    %c0_18 = arith.constant 0 : index
    %c0_19 = arith.constant 0 : index
    %24 = vector.load %arg3[%c6, %c0_18, %c0_19] : memref<9x128x128xbf16, #tpu.memory_space<vmem>>, vector<1x128x128xbf16>
    %25 = vector.shape_cast %24 : vector<1x128x128xbf16> to vector<128x128xbf16>
    %cst_20 = arith.constant dense<0.000000e+00> : vector<256x128xf32>
    %26 = tpu.matmul %23, %25, %cst_20 {dimension_numbers = #tpu.dot_dimension_numbers<[1], [0], [0], [1], [0, 0, 1, 1], [], []>} : vector<256x128xbf16>, vector<128x128xbf16>, vector<256x128xf32> -> vector<256x128xf32>
    %27 = arith.addf %22, %26 : vector<256x128xf32>
    %c0_21 = arith.constant 0 : index
    %c1 = arith.constant 1 : index
    %c0_22 = arith.constant 0 : index
    %28 = vector.load %arg8[%c0_21, %c1, %c0_22] : memref<18x24x128xbf16, #tpu.memory_space<vmem>>, vector<18x16x128xbf16>
    %29 = vector.shape_cast %28 : vector<18x16x128xbf16> to vector<288x128xbf16>
    %30 = vector.extract_strided_slice %29 {offsets = [0, 0], sizes = [256, 128], strides = [1, 1]} : vector<288x128xbf16> to vector<256x128xbf16>
    %c1_23 = arith.constant 1 : index
    %c0_24 = arith.constant 0 : index
    %c0_25 = arith.constant 0 : index
    %31 = vector.load %arg3[%c1_23, %c0_24, %c0_25] : memref<9x128x128xbf16, #tpu.memory_space<vmem>>, vector<1x128x128xbf16>
    %32 = vector.shape_cast %31 : vector<1x128x128xbf16> to vector<128x128xbf16>
    %cst_26 = arith.constant dense<0.000000e+00> : vector<256x128xf32>
    %33 = tpu.matmul %30, %32, %cst_26 {dimension_numbers = #tpu.dot_dimension_numbers<[1], [0], [0], [1], [0, 0, 1, 1], [], []>} : vector<256x128xbf16>, vector<128x128xbf16>, vector<256x128xf32> -> vector<256x128xf32>
    %34 = arith.addf %27, %33 : vector<256x128xf32>
    %35 = vector.extract_strided_slice %29 {offsets = [16, 0], sizes = [256, 128], strides = [1, 1]} : vector<288x128xbf16> to vector<256x128xbf16>
    %c4 = arith.constant 4 : index
    %c0_27 = arith.constant 0 : index
    %c0_28 = arith.constant 0 : index
    %36 = vector.load %arg3[%c4, %c0_27, %c0_28] : memref<9x128x128xbf16, #tpu.memory_space<vmem>>, vector<1x128x128xbf16>
    %37 = vector.shape_cast %36 : vector<1x128x128xbf16> to vector<128x128xbf16>
    %cst_29 = arith.constant dense<0.000000e+00> : vector<256x128xf32>
    %38 = tpu.matmul %35, %37, %cst_29 {dimension_numbers = #tpu.dot_dimension_numbers<[1], [0], [0], [1], [0, 0, 1, 1], [], []>} : vector<256x128xbf16>, vector<128x128xbf16>, vector<256x128xf32> -> vector<256x128xf32>
    %39 = arith.addf %34, %38 : vector<256x128xf32>
    %40 = vector.extract_strided_slice %29 {offsets = [32, 0], sizes = [256, 128], strides = [1, 1]} : vector<288x128xbf16> to vector<256x128xbf16>
    %c7 = arith.constant 7 : index
    %c0_30 = arith.constant 0 : index
    %c0_31 = arith.constant 0 : index
    %41 = vector.load %arg3[%c7, %c0_30, %c0_31] : memref<9x128x128xbf16, #tpu.memory_space<vmem>>, vector<1x128x128xbf16>
    %42 = vector.shape_cast %41 : vector<1x128x128xbf16> to vector<128x128xbf16>
    %cst_32 = arith.constant dense<0.000000e+00> : vector<256x128xf32>
    %43 = tpu.matmul %40, %42, %cst_32 {dimension_numbers = #tpu.dot_dimension_numbers<[1], [0], [0], [1], [0, 0, 1, 1], [], []>} : vector<256x128xbf16>, vector<128x128xbf16>, vector<256x128xf32> -> vector<256x128xf32>
    %44 = arith.addf %39, %43 : vector<256x128xf32>
    %c0_33 = arith.constant 0 : index
    %c2 = arith.constant 2 : index
    %c0_34 = arith.constant 0 : index
    %45 = vector.load %arg8[%c0_33, %c2, %c0_34] : memref<18x24x128xbf16, #tpu.memory_space<vmem>>, vector<18x16x128xbf16>
    %46 = vector.shape_cast %45 : vector<18x16x128xbf16> to vector<288x128xbf16>
    %47 = vector.extract_strided_slice %46 {offsets = [0, 0], sizes = [256, 128], strides = [1, 1]} : vector<288x128xbf16> to vector<256x128xbf16>
    %c2_35 = arith.constant 2 : index
    %c0_36 = arith.constant 0 : index
    %c0_37 = arith.constant 0 : index
    %48 = vector.load %arg3[%c2_35, %c0_36, %c0_37] : memref<9x128x128xbf16, #tpu.memory_space<vmem>>, vector<1x128x128xbf16>
    %49 = vector.shape_cast %48 : vector<1x128x128xbf16> to vector<128x128xbf16>
    %cst_38 = arith.constant dense<0.000000e+00> : vector<256x128xf32>
    %50 = tpu.matmul %47, %49, %cst_38 {dimension_numbers = #tpu.dot_dimension_numbers<[1], [0], [0], [1], [0, 0, 1, 1], [], []>} : vector<256x128xbf16>, vector<128x128xbf16>, vector<256x128xf32> -> vector<256x128xf32>
    %51 = arith.addf %44, %50 : vector<256x128xf32>
    %52 = vector.extract_strided_slice %46 {offsets = [16, 0], sizes = [256, 128], strides = [1, 1]} : vector<288x128xbf16> to vector<256x128xbf16>
    %c5 = arith.constant 5 : index
    %c0_39 = arith.constant 0 : index
    %c0_40 = arith.constant 0 : index
    %53 = vector.load %arg3[%c5, %c0_39, %c0_40] : memref<9x128x128xbf16, #tpu.memory_space<vmem>>, vector<1x128x128xbf16>
    %54 = vector.shape_cast %53 : vector<1x128x128xbf16> to vector<128x128xbf16>
    %cst_41 = arith.constant dense<0.000000e+00> : vector<256x128xf32>
    %55 = tpu.matmul %52, %54, %cst_41 {dimension_numbers = #tpu.dot_dimension_numbers<[1], [0], [0], [1], [0, 0, 1, 1], [], []>} : vector<256x128xbf16>, vector<128x128xbf16>, vector<256x128xf32> -> vector<256x128xf32>
    %56 = arith.addf %51, %55 : vector<256x128xf32>
    %57 = vector.extract_strided_slice %46 {offsets = [32, 0], sizes = [256, 128], strides = [1, 1]} : vector<288x128xbf16> to vector<256x128xbf16>
    %c8 = arith.constant 8 : index
    %c0_42 = arith.constant 0 : index
    %c0_43 = arith.constant 0 : index
    %58 = vector.load %arg3[%c8, %c0_42, %c0_43] : memref<9x128x128xbf16, #tpu.memory_space<vmem>>, vector<1x128x128xbf16>
    %59 = vector.shape_cast %58 : vector<1x128x128xbf16> to vector<128x128xbf16>
    %cst_44 = arith.constant dense<0.000000e+00> : vector<256x128xf32>
    %60 = tpu.matmul %57, %59, %cst_44 {dimension_numbers = #tpu.dot_dimension_numbers<[1], [0], [0], [1], [0, 0, 1, 1], [], []>} : vector<256x128xbf16>, vector<128x128xbf16>, vector<256x128xf32> -> vector<256x128xf32>
    %61 = arith.addf %56, %60 : vector<256x128xf32>
    %c0_45 = arith.constant 0 : index
    %c0_46 = arith.constant 0 : index
    %62 = vector.load %arg4[%c0_45, %c0_46] : memref<1x128xf32, #tpu.memory_space<vmem>>, vector<1x128xf32>
    %63 = vector.broadcast %62 : vector<1x128xf32> to vector<256x128xf32>
    %64 = arith.addf %61, %63 : vector<256x128xf32>
    %65 = vector.shape_cast %64 : vector<256x128xf32> to vector<16x16x128xf32>
    %c0_47 = arith.constant 0 : index
    %c0_48 = arith.constant 0 : index
    %c0_49 = arith.constant 0 : index
    %c0_50 = arith.constant 0 : index
    %66 = vector.load %arg7[%c0_47, %c0_48, %c0_49, %c0_50] : memref<1x16x16x128xf32, #tpu.memory_space<vmem>>, vector<1x16x16x128xf32>
    %67 = vector.shape_cast %66 : vector<1x16x16x128xf32> to vector<16x16x128xf32>
    %68 = vector.shape_cast %65 : vector<16x16x128xf32> to vector<1x16x16x128xf32>
    tpu.vector_store %arg7[%c0_47, %c0_48, %c0_49, %c0_50], %68 {strides = array<i32>} : memref<1x16x16x128xf32, #tpu.memory_space<vmem>>, vector<1x16x16x128xf32>,
    return
  }
  func.func @transform_1(%arg0: i32, %arg1: i32) -> (i32, i32, i32) {
    %c0_i32 = arith.constant 0 : i32
    %c0_i32_0 = arith.constant 0 : i32
    %c0_i32_1 = arith.constant 0 : i32
    %c0_i32_2 = arith.constant 0 : i32
    return %c0_i32, %c0_i32_0, %c0_i32_1 : i32, i32, i32
  }
  func.func @transform_2(%arg0: i32, %arg1: i32) -> (i32, i32) {
    %c0_i32 = arith.constant 0 : i32
    %c0_i32_0 = arith.constant 0 : i32
    %c0_i32_1 = arith.constant 0 : i32
    return %c0_i32, %c0_i32_0 : i32, i32
  }
  func.func @transform_3(%arg0: i32, %arg1: i32) -> (i32, i32, i32, i32) {
    %c0_i32 = arith.constant 0 : i32
    %c0_i32_0 = arith.constant 0 : i32
    %c0_i32_1 = arith.constant 0 : i32
    return %arg0, %arg1, %c0_i32, %c0_i32_0 : i32, i32, i32, i32
  }
  func.func @transform_4(%arg0: i32, %arg1: i32) -> (i32, i32) {
    %c0_i32 = arith.constant 0 : i32
    %c0_i32_0 = arith.constant 0 : i32
    %c0_i32_1 = arith.constant 0 : i32
    return %c0_i32, %c0_i32_0 : i32, i32
  }
  func.func @transform_5(%arg0: i32, %arg1: i32) -> (i32, i32, i32, i32) {
    %c0_i32 = arith.constant 0 : i32
    %c0_i32_0 = arith.constant 0 : i32
    %c0_i32_1 = arith.constant 0 : i32
    return %arg0, %arg1, %c0_i32, %c0_i32_0 : i32, i32, i32, i32
  }
}

</mosaic_0001>

<llo_original>
// kernel: residual_block_forward.4
$region0: #{residual_block_forward.4}
  #allocation0 [shape = 'u32[]', space=smem, size = 0x4, offset = 0x4, fixed_abs, tag = 'smem constant byte address 0x4 - core index']
  #allocation1 [shape = 'u32[72,128]{1,0:T(1,128)}', space=vmem, size = 0x9000, scoped, tag = 'internal scratch']
  %s0 = inlined_call_operand.vmem [shape: f32[2,16,16,128], index: 0, kind: input, shape index: {}]
  %s1 = inlined_call_operand.vmem [shape: f32[1,128], index: 1, kind: input, shape index: {}]
  %s2 = inlined_call_operand.vmem [shape: f32[1,128], index: 2, kind: input, shape index: {}]
  %s3 = inlined_call_operand.vmem [shape: f32[128,128], index: 3, kind: input, shape index: {}]
  %s4 = inlined_call_operand.vmem [shape: bf16[2,18,24,128], index: 4, kind: output, shape index: {}]
  %s5 = sld [smem:[#allocation0]]
  $region49: #{residual_block_forward.4} parent=0
    _
  %s7 = ssub.s32 1, %s5
  %s8 = scalar_select 0, %s7, %s5
  loop: start=0, step=1, limit=4
  $region2: #{residual_block_forward.4} parent=0 // loop_pre_header
    _
  $region3: #{residual_block_forward.4} parent=0 // loop_header
    %s10 = sphi 0, %s14
    %p11 = scmp.ge.s32.totalorder %s10, 4
    %s20 = sphi 0, %s22
    %s23 = sphi 0, %s20
    %s24 = sphi 0, %s23
    %s40 = sphi 0, %s24
    %s44 = sphi 0, %s44
    %s46 = sphi 0, %s44
    %s47 = sphi 0, %s46
    %s61 = sphi 0, %s47
    %s65 = sphi 0, %s65
    %s67 = sphi 0, %s65
    %s68 = sphi 0, %s67
    %s82 = sphi 0, %s68
    %s86 = sphi 0, %s86
    %s88 = sphi 0, %s86
    %s89 = sphi 0, %s88
    %s103 = sphi 0, %s89
    %s109 = sphi 0, %s111
    %s112 = sphi 0, %s109
    %s113 = sphi 0, %s112
    %s129 = sphi 0, %s113
  $region4: #{residual_block_forward.4} parent=0 // loop_header_branch
    %13 = sbr.rel (%p11) target = $region8
  $region5: #{residual_block_forward.4} parent=0 // loop_body
    %s15 = ssub.s32 %s10, 1
    %s16 = ssub.s32 %s10, 2
    %s17 = sadd.s32 %s10, 1
    %s18 = ssub.s32 %s10, %s17
    %p19 = scmp.eq.s32.totalorder %s18, 0
    %s21 = sadd.s32 %s20, 1
    %s22 = scalar_select %p19, %s20, %s21
    %p25 = pneg %p19
    %p26 = scmp.eq.s32.totalorder %s10, 1
    %p27 = por %p25, %p26
    %p28 = scmp.ne.s32.totalorder %s20, %s23
    %p29 = scmp.eq.s32.totalorder %s10, 0
    %p30 = por %p28, %p29
    %p31 = scmp.ne.s32.totalorder %s20, %s23
    %p32 = scmp.eq.s32.totalorder %s15, 1
    %p33 = por %p31, %p32
    %p34 = scmp.ne.s32.totalorder %s23, %s24
    %p35 = scmp.eq.s32.totalorder %s15, 0
    %p36 = por %p34, %p35
    %p37 = scmp.ne.s32.totalorder %s23, %s24
    %p38 = scmp.eq.s32.totalorder %s16, 1
    %p39 = por %p37, %p38
    %p41 = scmp.ne.s32.totalorder %s24, %s40
    %p42 = scmp.eq.s32.totalorder %s16, 0
    %p43 = por %p41, %p42
    %s45 = sadd.s32 %s44, 1
    %p48 = scmp.eq.s32.totalorder %s10, 1
    %p49 = scmp.ne.s32.totalorder %s44, %s46
    %p50 = scmp.eq.s32.totalorder %s10, 0
    %p51 = por %p49, %p50
    %p52 = scmp.ne.s32.totalorder %s44, %s46
    %p53 = scmp.eq.s32.totalorder %s15, 1
    %p54 = por %p52, %p53
    %p55 = scmp.ne.s32.totalorder %s46, %s47
    %p56 = scmp.eq.s32.totalorder %s15, 0
    %p57 = por %p55, %p56
    %p58 = scmp.ne.s32.totalorder %s46, %s47
    %p59 = scmp.eq.s32.totalorder %s16, 1
    %p60 = por %p58, %p59
    %p62 = scmp.ne.s32.totalorder %s47, %s61
    %p63 = scmp.eq.s32.totalorder %s16, 0
    %p64 = por %p62, %p63
    %s66 = sadd.s32 %s65, 1
    %p69 = scmp.eq.s32.totalorder %s10, 1
    %p70 = scmp.ne.s32.totalorder %s65, %s67
    %p71 = scmp.eq.s32.totalorder %s10, 0
    %p72 = por %p70, %p71
    %p73 = scmp.ne.s32.totalorder %s65, %s67
    %p74 = scmp.eq.s32.totalorder %s15, 1
    %p75 = por %p73, %p74
    %p76 = scmp.ne.s32.totalorder %s67, %s68
    %p77 = scmp.eq.s32.totalorder %s15, 0
    %p78 = por %p76, %p77
    %p79 = scmp.ne.s32.totalorder %s67, %s68
    %p80 = scmp.eq.s32.totalorder %s16, 1
    %p81 = por %p79, %p80
    %p83 = scmp.ne.s32.totalorder %s68, %s82
    %p84 = scmp.eq.s32.totalorder %s16, 0
    %p85 = por %p83, %p84
    %s87 = sadd.s32 %s86, 1
    %p90 = scmp.eq.s32.totalorder %s10, 1
    %p91 = scmp.ne.s32.totalorder %s86, %s88
    %p92 = scmp.eq.s32.totalorder %s10, 0
    %p93 = por %p91, %p92
    %p94 = scmp.ne.s32.totalorder %s86, %s88
    %p95 = scmp.eq.s32.totalorder %s15, 1
    %p96 = por %p94, %p95
    %p97 = scmp.ne.s32.totalorder %s88, %s89
    %p98 = scmp.eq.s32.totalorder %s15, 0
    %p99 = por %p97, %p98
    %p100 = scmp.ne.s32.totalorder %s88, %s89
    %p101 = scmp.eq.s32.totalorder %s16, 1
    %p102 = por %p100, %p101
    %p104 = scmp.ne.s32.totalorder %s89, %s103
    %p105 = scmp.eq.s32.totalorder %s16, 0
    %p106 = por %p104, %p105
    %s107 = ssub.s32 %s10, %s17
    %p108 = scmp.eq.s32.totalorder %s107, 0
    %s110 = sadd.s32 %s109, 1
    %s111 = scalar_select %p108, %s109, %s110
    %p114 = pneg %p108
    %p115 = scmp.eq.s32.totalorder %s10, 1
    %p116 = por %p114, %p115
    %p117 = scmp.ne.s32.totalorder %s109, %s112
    %p118 = scmp.eq.s32.totalorder %s10, 0
    %p119 = por %p117, %p118
    %p120 = scmp.ne.s32.totalorder %s109, %s112
    %p121 = scmp.eq.s32.totalorder %s15, 1
    %p122 = por %p120, %p121
    %p123 = scmp.ne.s32.totalorder %s112, %s113
    %p124 = scmp.eq.s32.totalorder %s15, 0
    %p125 = por %p123, %p124
    %p126 = scmp.ne.s32.totalorder %s112, %s113
    %p127 = scmp.eq.s32.totalorder %s16, 1
    %p128 = por %p126, %p127
    %p130 = scmp.ne.s32.totalorder %s113, %s129
    %p131 = scmp.eq.s32.totalorder %s16, 0
    %p132 = por %p130, %p131
    %p133 = scmp.le.s32.totalorder 1, %s10
    %p134 = scmp.lt.s32.totalorder %s10, 3
    %p135 = pnand %p133, %p134
    %p136 = pneg %p135
    // Predicated region
    $region9: #{residual_block_forward.4} parent=5 // pred_check
      _
    $region10: #{residual_block_forward.4} parent=5 // pred_check_branch
      %138 = sbr.rel (%p135) target = $region12
    $region11: #{residual_block_forward.4} parent=5 // pred_region
      %s139 = ssub.s32 %s10, 1
      // Predicated region
      $region13: #{residual_block_forward.4} parent=11 // pred_check
        %p140 = pneg %p57
      $region14: #{residual_block_forward.4} parent=11 // pred_check_branch
        %142 = sbr.rel (%p140) target = $region16
      $region15: #{residual_block_forward.4} parent=11 // pred_region
        _
      $region16: #{residual_block_forward.4} parent=11 // pred_fallthru
        _
      // Predicated region
      $region17: #{residual_block_forward.4} parent=11 // pred_check
        %p143 = pneg %p78
      $region18: #{residual_block_forward.4} parent=11 // pred_check_branch
        %145 = sbr.rel (%p143) target = $region20
      $region19: #{residual_block_forward.4} parent=11 // pred_region
        _
      $region20: #{residual_block_forward.4} parent=11 // pred_fallthru
        _
      // Predicated region
      $region21: #{residual_block_forward.4} parent=11 // pred_check
        %p146 = pneg %p99
      $region22: #{residual_block_forward.4} parent=11 // pred_check_branch
        %148 = sbr.rel (%p146) target = $region24
      $region23: #{residual_block_forward.4} parent=11 // pred_region
        _
      $region24: #{residual_block_forward.4} parent=11 // pred_fallthru
        _
    $region12: #{residual_block_forward.4} parent=5 // pred_fallthru
      _
    %p149 = scmp.lt.s32.totalorder %s10, 2
    // Predicated region
    $region25: #{residual_block_forward.4} parent=5 // pred_check
      %p150 = pneg %p149
    $region26: #{residual_block_forward.4} parent=5 // pred_check_branch
      %152 = sbr.rel (%p150) target = $region28
    $region27: #{residual_block_forward.4} parent=5 // pred_region
      // Predicated region
      $region29: #{residual_block_forward.4} parent=27 // pred_check
        %p153 = pneg %p30
      $region30: #{residual_block_forward.4} parent=27 // pred_check_branch
        %155 = sbr.rel (%p153) target = $region32
      $region31: #{residual_block_forward.4} parent=27 // pred_region
        %p156 = scmp.lt.s32.totalorder %s10, 1
        %s157 = scalar_select %p156, %s10, 1
        %s158 = smul.addr %s157, 32
        %s159 = smul.addr %s158, 8
        %s160 = scalar_lea.vmem %s0, %s159
      $region32: #{residual_block_forward.4} parent=27 // pred_fallthru
        _
    $region28: #{residual_block_forward.4} parent=5 // pred_fallthru
      _
    %p161 = scmp.le.s32.totalorder 1, %s10
    %p162 = scmp.lt.s32.totalorder %s10, 3
    %p163 = pnand %p161, %p162
    %p164 = pneg %p163
    // Predicated region
    $region33: #{residual_block_forward.4} parent=5 // pred_check
      _
    $region34: #{residual_block_forward.4} parent=5 // pred_check_branch
      %166 = sbr.rel (%p163) target = $region36
    $region35: #{residual_block_forward.4} parent=5 // pred_region
      %s167 = ssub.s32 %s10, 1
      %p168 = scmp.lt.s32.totalorder %s15, 1
      %s169 = scalar_select %p168, %s15, 1
      %s170 = smul.addr %s169, 32
      %s171 = smul.addr %s170, 8
      %s172 = scalar_lea.vmem %s0, %s171
      %p173 = pneg %p36
      %p174 = pneg %p33
      %p175 = pneg %p57
      %p176 = pneg %p54
      %p177 = pneg %p78
      %p178 = pneg %p75
      %p179 = pneg %p99
      %p180 = pneg %p96
      %p181 = pneg %p125
      %p182 = pneg %p122
      %p183 = scmp.lt.s32.totalorder %s15, 1
      %s184 = scalar_select %p183, %s15, 1
      %s185 = smul.addr %s184, 54
      %s186 = smul.addr %s185, 4
      %s187 = scalar_lea.vmem %s4, %s186
      %p188 = scmp.lt.s32.totalorder %s15, 1
      %s189 = scalar_select %p188, %s15, 1
      %s190 = smul.addr %s189, 32
      %s191 = smul.addr %s190, 8
      %s192 = scalar_lea.vmem %s0, %s191
      %p193 = scmp.lt.s32.totalorder %s15, 1
      %s194 = scalar_select %p193, %s15, 1
      %s195 = smul.addr %s194, 54
      %s196 = smul.addr %s195, 4
      %s197 = scalar_lea.vmem %s4, %s196
      %v199 = vld [vmem:[%s192] sm:$0xff]
      %v200 = vld [vmem:[%s192 + $0x8] sm:$0xff]
      %v201 = vld [vmem:[%s192 + $0x10] sm:$0xff]
      %v202 = vld [vmem:[%s192 + $0x18] sm:$0xff]
      %v203 = vld [vmem:[%s192 + $0x20] sm:$0xff]
      %v204 = vld [vmem:[%s192 + $0x28] sm:$0xff]
      %v205 = vld [vmem:[%s192 + $0x30] sm:$0xff]
      %v206 = vld [vmem:[%s192 + $0x38] sm:$0xff]
      %v207 = vld [vmem:[%s192 + $0x40] sm:$0xff]
      %v208 = vld [vmem:[%s192 + $0x48] sm:$0xff]
      %v209 = vld [vmem:[%s192 + $0x50] sm:$0xff]
      %v210 = vld [vmem:[%s192 + $0x58] sm:$0xff]
      %v211 = vld [vmem:[%s192 + $0x60] sm:$0xff]
      %v212 = vld [vmem:[%s192 + $0x68] sm:$0xff]
      %v213 = vld [vmem:[%s192 + $0x70] sm:$0xff]
      %v214 = vld [vmem:[%s192 + $0x78] sm:$0xff]
      %v215 = vld [vmem:[%s192 + $0x80] sm:$0xff]
      %v216 = vld [vmem:[%s192 + $0x88] sm:$0xff]
      %v217 = vld [vmem:[%s192 + $0x90] sm:$0xff]
      %v218 = vld [vmem:[%s192 + $0x98] sm:$0xff]
      %v219 = vld [vmem:[%s192 + $0xa0] sm:$0xff]
      %v220 = vld [vmem:[%s192 + $0xa8] sm:$0xff]
      %v221 = vld [vmem:[%s192 + $0xb0] sm:$0xff]
      %v222 = vld [vmem:[%s192 + $0xb8] sm:$0xff]
      %v223 = vld [vmem:[%s192 + $0xc0] sm:$0xff]
      %v224 = vld [vmem:[%s192 + $0xc8] sm:$0xff]
      %v225 = vld [vmem:[%s192 + $0xd0] sm:$0xff]
      %v226 = vld [vmem:[%s192 + $0xd8] sm:$0xff]
      %v227 = vld [vmem:[%s192 + $0xe0] sm:$0xff]
      %v228 = vld [vmem:[%s192 + $0xe8] sm:$0xff]
      %v229 = vld [vmem:[%s192 + $0xf0] sm:$0xff]
      %v230 = vld [vmem:[%s192 + $0xf8] sm:$0xff]
      %v231 = vld [vmem:[%s1] sm:$0x1]
      %v232 = vld [vmem:[%s2] sm:$0x1]
      %v233 = vld [vmem:[%s3] sm:$0xff]
      %v234 = vld [vmem:[%s3 + $0x8] sm:$0xff]
      %v235 = vld [vmem:[%s3 + $0x10] sm:$0xff]
      %v236 = vld [vmem:[%s3 + $0x18] sm:$0xff]
      %v237 = vld [vmem:[%s3 + $0x20] sm:$0xff]
      %v238 = vld [vmem:[%s3 + $0x28] sm:$0xff]
      %v239 = vld [vmem:[%s3 + $0x30] sm:$0xff]
      %v240 = vld [vmem:[%s3 + $0x38] sm:$0xff]
      %v241 = vld [vmem:[%s3 + $0x40] sm:$0xff]
      %v242 = vld [vmem:[%s3 + $0x48] sm:$0xff]
      %v243 = vld [vmem:[%s3 + $0x50] sm:$0xff]
      %v244 = vld [vmem:[%s3 + $0x58] sm:$0xff]
      %v245 = vld [vmem:[%s3 + $0x60] sm:$0xff]
      %v246 = vld [vmem:[%s3 + $0x68] sm:$0xff]
      %v247 = vld [vmem:[%s3 + $0x70] sm:$0xff]
      %v248 = vld [vmem:[%s3 + $0x78] sm:$0xff]
      %v249 = vadd.f32 %v199, %v200
      %v250 = vadd.f32 %v249, %v201
      %v251 = vadd.f32 %v250, %v202
      %v252 = vadd.f32 %v251, %v203
      %v253 = vadd.f32 %v252, %v204
      %v254 = vadd.f32 %v253, %v205
      %v255 = vadd.f32 %v254, %v206
      %v256 = vadd.f32 %v255, %v207
      %v257 = vadd.f32 %v256, %v208
      %v258 = vadd.f32 %v257, %v209
      %v259 = vadd.f32 %v258, %v210
      %v260 = vadd.f32 %v259, %v211
      %v261 = vadd.f32 %v260, %v212
      %v262 = vadd.f32 %v261, %v213
      %v263 = vadd.f32 %v262, %v214
      %v264 = vadd.f32 %v263, %v215
      %v265 = vadd.f32 %v264, %v216
      %v266 = vadd.f32 %v265, %v217
      %v267 = vadd.f32 %v266, %v218
      %v268 = vadd.f32 %v267, %v219
      %v269 = vadd.f32 %v268, %v220
      %v270 = vadd.f32 %v269, %v221
      %v271 = vadd.f32 %v270, %v222
      %v272 = vadd.f32 %v271, %v223
      %v273 = vadd.f32 %v272, %v224
      %v274 = vadd.f32 %v273, %v225
      %v275 = vadd.f32 %v274, %v226
      %v276 = vadd.f32 %v275, %v227
      %v277 = vadd.f32 %v276, %v228
      %v278 = vadd.f32 %v277, %v229
      %v279 = vadd.f32 %v278, %v230
      %v280 = vrot.slane %v279, 4
      %v281 = vadd.f32 %v279, %v280
      %v282 = vrot.slane %v281, 2
      %v283 = vadd.f32 %v281, %v282
      %v284 = vrot.slane %v283, 1
      %v285 = vadd.f32 %v283, %v284
      %286 = vmatpush.msra.mxu0 %v248
      %287 = vmatpush.msra.mxu0 %v247
      %288 = vmatpush.msra.mxu0 %v246
      %289 = vmatpush.msra.mxu0 %v245
      %290 = vmatpush.msra.mxu0 %v244
      %291 = vmatpush.msra.mxu0 %v243
      %292 = vmatpush.msra.mxu0 %v242
      %293 = vmatpush.msra.mxu0 %v241
      %294 = vmatpush.msra.mxu0 %v240
      %295 = vmatpush.msra.mxu0 %v239
      %296 = vmatpush.msra.mxu0 %v238
      %297 = vmatpush.msra.mxu0 %v237
      %298 = vmatpush.msra.mxu0 %v236
      %299 = vmatpush.msra.mxu0 %v235
      %300 = vmatpush.msra.mxu0 %v234
      %301 = vmatpush.msra.mxu0 %v233
      %302 = vmatmul.f32.gmra.mxu0 %v285
      %v303 = vpop.f32.mrf.mxu0
      %v304 = vadd.f32 0.0, %v303
      %305 = vdwg.mxu0
      %v306 = vrcp.pop 512.0
      %v307 = vmul.f32 512.0, %v306
      %v308 = vsub.f32 1.0, %v307
      %v309 = vmul.f32 %v306, %v308
      %v310 = vadd.f32 %v306, %v309
      %vm311 = vweird.f32 %v306
      %v312 = vsel %vm311, %v306, %v310
      %v313 = vmul.f32 %v304, %v312
      %v314 = vperm.slane %v313, 0
      %v315 = vsub.f32 %v199, %v314
      %v316 = vsub.f32 %v200, %v314
      %v317 = vsub.f32 %v201, %v314
      %v318 = vsub.f32 %v202, %v314
      %v319 = vsub.f32 %v203, %v314
      %v320 = vsub.f32 %v204, %v314
      %v321 = vsub.f32 %v205, %v314
      %v322 = vsub.f32 %v206, %v314
      %v323 = vsub.f32 %v207, %v314
      %v324 = vsub.f32 %v208, %v314
      %v325 = vsub.f32 %v209, %v314
      %v326 = vsub.f32 %v210, %v314
      %v327 = vsub.f32 %v211, %v314
      %v328 = vsub.f32 %v212, %v314
      %v329 = vsub.f32 %v213, %v314
      %v330 = vsub.f32 %v214, %v314
      %v331 = vsub.f32 %v215, %v314
      %v332 = vsub.f32 %v216, %v314
      %v333 = vsub.f32 %v217, %v314
      %v334 = vsub.f32 %v218, %v314
      %v335 = vsub.f32 %v219, %v314
      %v336 = vsub.f32 %v220, %v314
      %v337 = vsub.f32 %v221, %v314
      %v338 = vsub.f32 %v222, %v314
      %v339 = vsub.f32 %v223, %v314
      %v340 = vsub.f32 %v224, %v314
      %v341 = vsub.f32 %v225, %v314
      %v342 = vsub.f32 %v226, %v314
      %v343 = vsub.f32 %v227, %v314
      %v344 = vsub.f32 %v228, %v314
      %v345 = vsub.f32 %v229, %v314
      %v346 = vsub.f32 %v230, %v314
      %v347 = vmul.f32 %v315, %v315
      %v348 = vmul.f32 %v316, %v316
      %v349 = vmul.f32 %v317, %v317
      %v350 = vmul.f32 %v318, %v318
      %v351 = vmul.f32 %v319, %v319
      %v352 = vmul.f32 %v320, %v320
      %v353 = vmul.f32 %v321, %v321
      %v354 = vmul.f32 %v322, %v322
      %v355 = vmul.f32 %v323, %v323
      %v356 = vmul.f32 %v324, %v324
      %v357 = vmul.f32 %v325, %v325
      %v358 = vmul.f32 %v326, %v326
      %v359 = vmul.f32 %v327, %v327
      %v360 = vmul.f32 %v328, %v328
      %v361 = vmul.f32 %v329, %v329
      %v362 = vmul.f32 %v330, %v330
      %v363 = vmul.f32 %v331, %v331
      %v364 = vmul.f32 %v332, %v332
      %v365 = vmul.f32 %v333, %v333
      %v366 = vmul.f32 %v334, %v334
      %v367 = vmul.f32 %v335, %v335
      %v368 = vmul.f32 %v336, %v336
      %v369 = vmul.f32 %v337, %v337
      %v370 = vmul.f32 %v338, %v338
      %v371 = vmul.f32 %v339, %v339
      %v372 = vmul.f32 %v340, %v340
      %v373 = vmul.f32 %v341, %v341
      %v374 = vmul.f32 %v342, %v342
      %v375 = vmul.f32 %v343, %v343
      %v376 = vmul.f32 %v344, %v344
      %v377 = vmul.f32 %v345, %v345
      %v378 = vmul.f32 %v346, %v346
      %v379 = vadd.f32 %v347, %v348
      %v380 = vadd.f32 %v379, %v349
      %v381 = vadd.f32 %v380, %v350
      %v382 = vadd.f32 %v381, %v351
      %v383 = vadd.f32 %v382, %v352
      %v384 = vadd.f32 %v383, %v353
      %v385 = vadd.f32 %v384, %v354
      %v386 = vadd.f32 %v385, %v355
      %v387 = vadd.f32 %v386, %v356
      %v388 = vadd.f32 %v387, %v357
      %v389 = vadd.f32 %v388, %v358
      %v390 = vadd.f32 %v389, %v359
      %v391 = vadd.f32 %v390, %v360
      %v392 = vadd.f32 %v391, %v361
      %v393 = vadd.f32 %v392, %v362
      %v394 = vadd.f32 %v393, %v363
      %v395 = vadd.f32 %v394, %v364
      %v396 = vadd.f32 %v395, %v365
      %v397 = vadd.f32 %v396, %v366
      %v398 = vadd.f32 %v397, %v367
      %v399 = vadd.f32 %v398, %v368
      %v400 = vadd.f32 %v399, %v369
      %v401 = vadd.f32 %v400, %v370
      %v402 = vadd.f32 %v401, %v371
      %v403 = vadd.f32 %v402, %v372
      %v404 = vadd.f32 %v403, %v373
      %v405 = vadd.f32 %v404, %v374
      %v406 = vadd.f32 %v405, %v375
      %v407 = vadd.f32 %v406, %v376
      %v408 = vadd.f32 %v407, %v377
      %v409 = vadd.f32 %v408, %v378
      %v410 = vrot.slane %v409, 4
      %v411 = vadd.f32 %v409, %v410
      %v412 = vrot.slane %v411, 2
      %v413 = vadd.f32 %v411, %v412
      %v414 = vrot.slane %v413, 1
      %v415 = vadd.f32 %v413, %v414
      %416 = vmatpush.msra.mxu0 %v248
      %417 = vmatpush.msra.mxu0 %v247
      %418 = vmatpush.msra.mxu0 %v246
      %419 = vmatpush.msra.mxu0 %v245
      %420 = vmatpush.msra.mxu0 %v244
      %421 = vmatpush.msra.mxu0 %v243
      %422 = vmatpush.msra.mxu0 %v242
      %423 = vmatpush.msra.mxu0 %v241
      %424 = vmatpush.msra.mxu0 %v240
      %425 = vmatpush.msra.mxu0 %v239
      %426 = vmatpush.msra.mxu0 %v238
      %427 = vmatpush.msra.mxu0 %v237
      %428 = vmatpush.msra.mxu0 %v236
      %429 = vmatpush.msra.mxu0 %v235
      %430 = vmatpush.msra.mxu0 %v234
      %431 = vmatpush.msra.mxu0 %v233
      %432 = vmatmul.f32.gmra.mxu0 %v415
      %v433 = vpop.f32.mrf.mxu0
      %v434 = vadd.f32 0.0, %v433
      %435 = vdwg.mxu0
      %v436 = vmul.f32 %v434, %v312
      %v437 = vadd.f32 %v436, 1e-05
      %v438 = vrsqrt.pop %v437
      %v439 = vmul.f32 %v438, %v437
      %v440 = vmul.f32 %v439, %v438
      %v441 = vmul.f32 0.5, %v440
      %v442 = vsub.f32 1.5, %v441
      %v443 = vmul.f32 %v438, %v442
      %vm444 = vweird.f32 %v437
      %vm445 = vweird.f32 %v438
      %vm446 = vmor %vm444, %vm445
      %v447 = vsel %vm446, %v438, %v443
      %v448 = vperm.slane %v447, 0
      %v449 = vmul.f32 %v315, %v448
      %v450 = vmul.f32 %v316, %v448
      %v451 = vmul.f32 %v317, %v448
      %v452 = vmul.f32 %v318, %v448
      %v453 = vmul.f32 %v319, %v448
      %v454 = vmul.f32 %v320, %v448
      %v455 = vmul.f32 %v321, %v448
      %v456 = vmul.f32 %v322, %v448
      %v457 = vmul.f32 %v323, %v448
      %v458 = vmul.f32 %v324, %v448
      %v459 = vmul.f32 %v325, %v448
      %v460 = vmul.f32 %v326, %v448
      %v461 = vmul.f32 %v327, %v448
      %v462 = vmul.f32 %v328, %v448
      %v463 = vmul.f32 %v329, %v448
      %v464 = vmul.f32 %v330, %v448
      %v465 = vmul.f32 %v331, %v448
      %v466 = vmul.f32 %v332, %v448
      %v467 = vmul.f32 %v333, %v448
      %v468 = vmul.f32 %v334, %v448
      %v469 = vmul.f32 %v335, %v448
      %v470 = vmul.f32 %v336, %v448
      %v471 = vmul.f32 %v337, %v448
      %v472 = vmul.f32 %v338, %v448
      %v473 = vmul.f32 %v339, %v448
      %v474 = vmul.f32 %v340, %v448
      %v475 = vmul.f32 %v341, %v448
      %v476 = vmul.f32 %v342, %v448
      %v477 = vmul.f32 %v343, %v448
      %v478 = vmul.f32 %v344, %v448
      %v479 = vmul.f32 %v345, %v448
      %v480 = vmul.f32 %v346, %v448
      %v482 = vperm.slane %v231, 0
      %v484 = vmul.f32 %v449, %v482
      %v485 = vmul.f32 %v450, %v482
      %v486 = vmul.f32 %v451, %v482
      %v487 = vmul.f32 %v452, %v482
      %v488 = vmul.f32 %v453, %v482
      %v489 = vmul.f32 %v454, %v482
      %v490 = vmul.f32 %v455, %v482
      %v491 = vmul.f32 %v456, %v482
      %v492 = vmul.f32 %v457, %v482
      %v493 = vmul.f32 %v458, %v482
      %v494 = vmul.f32 %v459, %v482
      %v495 = vmul.f32 %v460, %v482
      %v496 = vmul.f32 %v461, %v482
      %v497 = vmul.f32 %v462, %v482
      %v498 = vmul.f32 %v463, %v482
      %v499 = vmul.f32 %v464, %v482
      %v500 = vmul.f32 %v465, %v482
      %v501 = vmul.f32 %v466, %v482
      %v502 = vmul.f32 %v467, %v482
      %v503 = vmul.f32 %v468, %v482
      %v504 = vmul.f32 %v469, %v482
      %v505 = vmul.f32 %v470, %v482
      %v506 = vmul.f32 %v471, %v482
      %v507 = vmul.f32 %v472, %v482
      %v508 = vmul.f32 %v473, %v482
      %v509 = vmul.f32 %v474, %v482
      %v510 = vmul.f32 %v475, %v482
      %v511 = vmul.f32 %v476, %v482
      %v512 = vmul.f32 %v477, %v482
      %v513 = vmul.f32 %v478, %v482
      %v514 = vmul.f32 %v479, %v482
      %v515 = vmul.f32 %v480, %v482
      %v517 = vperm.slane %v232, 0
      %v519 = vadd.f32 %v484, %v517
      %v520 = vadd.f32 %v485, %v517
      %v521 = vadd.f32 %v486, %v517
      %v522 = vadd.f32 %v487, %v517
      %v523 = vadd.f32 %v488, %v517
      %v524 = vadd.f32 %v489, %v517
      %v525 = vadd.f32 %v490, %v517
      %v526 = vadd.f32 %v491, %v517
      %v527 = vadd.f32 %v492, %v517
      %v528 = vadd.f32 %v493, %v517
      %v529 = vadd.f32 %v494, %v517
      %v530 = vadd.f32 %v495, %v517
      %v531 = vadd.f32 %v496, %v517
      %v532 = vadd.f32 %v497, %v517
      %v533 = vadd.f32 %v498, %v517
      %v534 = vadd.f32 %v499, %v517
      %v535 = vadd.f32 %v500, %v517
      %v536 = vadd.f32 %v501, %v517
      %v537 = vadd.f32 %v502, %v517
      %v538 = vadd.f32 %v503, %v517
      %v539 = vadd.f32 %v504, %v517
      %v540 = vadd.f32 %v505, %v517
      %v541 = vadd.f32 %v506, %v517
      %v542 = vadd.f32 %v507, %v517
      %v543 = vadd.f32 %v508, %v517
      %v544 = vadd.f32 %v509, %v517
      %v545 = vadd.f32 %v510, %v517
      %v546 = vadd.f32 %v511, %v517
      %v547 = vadd.f32 %v512, %v517
      %v548 = vadd.f32 %v513, %v517
      %v549 = vadd.f32 %v514, %v517
      %v550 = vadd.f32 %v515, %v517
      %v551 = vxor.u32 %v519, 2147483648
      %v552 = vxor.u32 %v520, 2147483648
      %v553 = vxor.u32 %v521, 2147483648
      %v554 = vxor.u32 %v522, 2147483648
      %v555 = vxor.u32 %v523, 2147483648
      %v556 = vxor.u32 %v524, 2147483648
      %v557 = vxor.u32 %v525, 2147483648
      %v558 = vxor.u32 %v526, 2147483648
      %v559 = vxor.u32 %v527, 2147483648
      %v560 = vxor.u32 %v528, 2147483648
      %v561 = vxor.u32 %v529, 2147483648
      %v562 = vxor.u32 %v530, 2147483648
      %v563 = vxor.u32 %v531, 2147483648
      %v564 = vxor.u32 %v532, 2147483648
      %v565 = vxor.u32 %v533, 2147483648
      %v566 = vxor.u32 %v534, 2147483648
      %v567 = vxor.u32 %v535, 2147483648
      %v568 = vxor.u32 %v536, 2147483648
      %v569 = vxor.u32 %v537, 2147483648
      %v570 = vxor.u32 %v538, 2147483648
      %v571 = vxor.u32 %v539, 2147483648
      %v572 = vxor.u32 %v540, 2147483648
      %v573 = vxor.u32 %v541, 2147483648
      %v574 = vxor.u32 %v542, 2147483648
      %v575 = vxor.u32 %v543, 2147483648
      %v576 = vxor.u32 %v544, 2147483648
      %v577 = vxor.u32 %v545, 2147483648
      %v578 = vxor.u32 %v546, 2147483648
      %v579 = vxor.u32 %v547, 2147483648
      %v580 = vxor.u32 %v548, 2147483648
      %v581 = vxor.u32 %v549, 2147483648
      %v582 = vxor.u32 %v550, 2147483648
      %v583 = vmul.f32 %v551, 1.442695
      %v584 = vpow.pop %v583
      %v585 = vmul.f32 %v552, 1.442695
      %v586 = vpow.pop %v585
      %v587 = vmul.f32 %v553, 1.442695
      %v588 = vpow.pop %v587
      %v589 = vmul.f32 %v554, 1.442695
      %v590 = vpow.pop %v589
      %v591 = vmul.f32 %v555, 1.442695
      %v592 = vpow.pop %v591
      %v593 = vmul.f32 %v556, 1.442695
      %v594 = vpow.pop %v593
      %v595 = vmul.f32 %v557, 1.442695
      %v596 = vpow.pop %v595
      %v597 = vmul.f32 %v558, 1.442695
      %v598 = vpow.pop %v597
      %v599 = vmul.f32 %v559, 1.442695
      %v600 = vpow.pop %v599
      %v601 = vmul.f32 %v560, 1.442695
      %v602 = vpow.pop %v601
      %v603 = vmul.f32 %v561, 1.442695
      %v604 = vpow.pop %v603
      %v605 = vmul.f32 %v562, 1.442695
      %v606 = vpow.pop %v605
      %v607 = vmul.f32 %v563, 1.442695
      %v608 = vpow.pop %v607
      %v609 = vmul.f32 %v564, 1.442695
      %v610 = vpow.pop %v609
      %v611 = vmul.f32 %v565, 1.442695
      %v612 = vpow.pop %v611
      %v613 = vmul.f32 %v566, 1.442695
      %v614 = vpow.pop %v613
      %v615 = vmul.f32 %v567, 1.442695
      %v616 = vpow.pop %v615
      %v617 = vmul.f32 %v568, 1.442695
      %v618 = vpow.pop %v617
      %v619 = vmul.f32 %v569, 1.442695
      %v620 = vpow.pop %v619
      %v621 = vmul.f32 %v570, 1.442695
      %v622 = vpow.pop %v621
      %v623 = vmul.f32 %v571, 1.442695
      %v624 = vpow.pop %v623
      %v625 = vmul.f32 %v572, 1.442695
      %v626 = vpow.pop %v625
      %v627 = vmul.f32 %v573, 1.442695
      %v628 = vpow.pop %v627
      %v629 = vmul.f32 %v574, 1.442695
      %v630 = vpow.pop %v629
      %v631 = vmul.f32 %v575, 1.442695
      %v632 = vpow.pop %v631
      %v633 = vmul.f32 %v576, 1.442695
      %v634 = vpow.pop %v633
      %v635 = vmul.f32 %v577, 1.442695
      %v636 = vpow.pop %v635
      %v637 = vmul.f32 %v578, 1.442695
      %v638 = vpow.pop %v637
      %v639 = vmul.f32 %v579, 1.442695
      %v640 = vpow.pop %v639
      %v641 = vmul.f32 %v580, 1.442695
      %v642 = vpow.pop %v641
      %v643 = vmul.f32 %v581, 1.442695
      %v644 = vpow.pop %v643
      %v645 = vmul.f32 %v582, 1.442695
      %v646 = vpow.pop %v645
      %v647 = vadd.f32 %v584, 1.0
      %v648 = vadd.f32 %v586, 1.0
      %v649 = vadd.f32 %v588, 1.0
      %v650 = vadd.f32 %v590, 1.0
      %v651 = vadd.f32 %v592, 1.0
      %v652 = vadd.f32 %v594, 1.0
      %v653 = vadd.f32 %v596, 1.0
      %v654 = vadd.f32 %v598, 1.0
      %v655 = vadd.f32 %v600, 1.0
      %v656 = vadd.f32 %v602, 1.0
      %v657 = vadd.f32 %v604, 1.0
      %v658 = vadd.f32 %v606, 1.0
      %v659 = vadd.f32 %v608, 1.0
      %v660 = vadd.f32 %v610, 1.0
      %v661 = vadd.f32 %v612, 1.0
      %v662 = vadd.f32 %v614, 1.0
      %v663 = vadd.f32 %v616, 1.0
      %v664 = vadd.f32 %v618, 1.0
      %v665 = vadd.f32 %v620, 1.0
      %v666 = vadd.f32 %v622, 1.0
      %v667 = vadd.f32 %v624, 1.0
      %v668 = vadd.f32 %v626, 1.0
      %v669 = vadd.f32 %v628, 1.0
      %v670 = vadd.f32 %v630, 1.0
      %v671 = vadd.f32 %v632, 1.0
      %v672 = vadd.f32 %v634, 1.0
      %v673 = vadd.f32 %v636, 1.0
      %v674 = vadd.f32 %v638, 1.0
      %v675 = vadd.f32 %v640, 1.0
      %v676 = vadd.f32 %v642, 1.0
      %v677 = vadd.f32 %v644, 1.0
      %v678 = vadd.f32 %v646, 1.0
      %v679 = vrcp.pop %v647
      %v680 = vmul.f32 %v647, %v679
      %v681 = vsub.f32 1.0, %v680
      %v682 = vmul.f32 %v679, %v681
      %v683 = vadd.f32 %v679, %v682
      %vm684 = vweird.f32 %v647
      %vm685 = vweird.f32 %v679
      %vm686 = vmor %vm684, %vm685
      %v687 = vsel %vm686, %v679, %v683
      %v688 = vand.u32 2147483647, %v647
      %vm689 = vcmp.eq.f32.partialorder %v688, 8.507059e+37
      %v690 = vand.u32 %v647, 2147483648
      %v691 = vor.u32 1.1754944e-38, %v690
      %v692 = vsel %vm689, %v691, %v687
      %v693 = vmul.f32 1.0, %v692
      %v694 = vrcp.pop %v648
      %v695 = vmul.f32 %v648, %v694
      %v696 = vsub.f32 1.0, %v695
      %v697 = vmul.f32 %v694, %v696
      %v698 = vadd.f32 %v694, %v697
      %vm699 = vweird.f32 %v648
      %vm700 = vweird.f32 %v694
      %vm701 = vmor %vm699, %vm700
      %v702 = vsel %vm701, %v694, %v698
      %v703 = vand.u32 2147483647, %v648
      %vm704 = vcmp.eq.f32.partialorder %v703, 8.507059e+37
      %v705 = vand.u32 %v648, 2147483648
      %v706 = vor.u32 1.1754944e-38, %v705
      %v707 = vsel %vm704, %v706, %v702
      %v708 = vmul.f32 1.0, %v707
      %v709 = vrcp.pop %v649
      %v710 = vmul.f32 %v649, %v709
      %v711 = vsub.f32 1.0, %v710
      %v712 = vmul.f32 %v709, %v711
      %v713 = vadd.f32 %v709, %v712
      %vm714 = vweird.f32 %v649
      %vm715 = vweird.f32 %v709
      %vm716 = vmor %vm714, %vm715
      %v717 = vsel %vm716, %v709, %v713
      %v718 = vand.u32 2147483647, %v649
      %vm719 = vcmp.eq.f32.partialorder %v718, 8.507059e+37
      %v720 = vand.u32 %v649, 2147483648
      %v721 = vor.u32 1.1754944e-38, %v720
      %v722 = vsel %vm719, %v721, %v717
      %v723 = vmul.f32 1.0, %v722
      %v724 = vrcp.pop %v650
      %v725 = vmul.f32 %v650, %v724
      %v726 = vsub.f32 1.0, %v725
      %v727 = vmul.f32 %v724, %v726
      %v728 = vadd.f32 %v724, %v727
      %vm729 = vweird.f32 %v650
      %vm730 = vweird.f32 %v724
      %vm731 = vmor %vm729, %vm730
      %v732 = vsel %vm731, %v724, %v728
      %v733 = vand.u32 2147483647, %v650
      %vm734 = vcmp.eq.f32.partialorder %v733, 8.507059e+37
      %v735 = vand.u32 %v650, 2147483648
      %v736 = vor.u32 1.1754944e-38, %v735
      %v737 = vsel %vm734, %v736, %v732
      %v738 = vmul.f32 1.0, %v737
      %v739 = vrcp.pop %v651
      %v740 = vmul.f32 %v651, %v739
      %v741 = vsub.f32 1.0, %v740
      %v742 = vmul.f32 %v739, %v741
      %v743 = vadd.f32 %v739, %v742
      %vm744 = vweird.f32 %v651
      %vm745 = vweird.f32 %v739
      %vm746 = vmor %vm744, %vm745
      %v747 = vsel %vm746, %v739, %v743
      %v748 = vand.u32 2147483647, %v651
      %vm749 = vcmp.eq.f32.partialorder %v748, 8.507059e+37
      %v750 = vand.u32 %v651, 2147483648
      %v751 = vor.u32 1.1754944e-38, %v750
      %v752 = vsel %vm749, %v751, %v747
      %v753 = vmul.f32 1.0, %v752
      %v754 = vrcp.pop %v652
      %v755 = vmul.f32 %v652, %v754
      %v756 = vsub.f32 1.0, %v755
      %v757 = vmul.f32 %v754, %v756
      %v758 = vadd.f32 %v754, %v757
      %vm759 = vweird.f32 %v652
      %vm760 = vweird.f32 %v754
      %vm761 = vmor %vm759, %vm760
      %v762 = vsel %vm761, %v754, %v758
      %v763 = vand.u32 2147483647, %v652
      %vm764 = vcmp.eq.f32.partialorder %v763, 8.507059e+37
      %v765 = vand.u32 %v652, 2147483648
      %v766 = vor.u32 1.1754944e-38, %v765
      %v767 = vsel %vm764, %v766, %v762
      %v768 = vmul.f32 1.0, %v767
      %v769 = vrcp.pop %v653
      %v770 = vmul.f32 %v653, %v769
      %v771 = vsub.f32 1.0, %v770
      %v772 = vmul.f32 %v769, %v771
      %v773 = vadd.f32 %v769, %v772
      %vm774 = vweird.f32 %v653
      %vm775 = vweird.f32 %v769
      %vm776 = vmor %vm774, %vm775
      %v777 = vsel %vm776, %v769, %v773
      %v778 = vand.u32 2147483647, %v653
      %vm779 = vcmp.eq.f32.partialorder %v778, 8.507059e+37
      %v780 = vand.u32 %v653, 2147483648
      %v781 = vor.u32 1.1754944e-38, %v780
      %v782 = vsel %vm779, %v781, %v777
      %v783 = vmul.f32 1.0, %v782
      %v784 = vrcp.pop %v654
      %v785 = vmul.f32 %v654, %v784
      %v786 = vsub.f32 1.0, %v785
      %v787 = vmul.f32 %v784, %v786
      %v788 = vadd.f32 %v784, %v787
      %vm789 = vweird.f32 %v654
      %vm790 = vweird.f32 %v784
      %vm791 = vmor %vm789, %vm790
      %v792 = vsel %vm791, %v784, %v788
      %v793 = vand.u32 2147483647, %v654
      %vm794 = vcmp.eq.f32.partialorder %v793, 8.507059e+37
      %v795 = vand.u32 %v654, 2147483648
      %v796 = vor.u32 1.1754944e-38, %v795
      %v797 = vsel %vm794, %v796, %v792
      %v798 = vmul.f32 1.0, %v797
      %v799 = vrcp.pop %v655
      %v800 = vmul.f32 %v655, %v799
      %v801 = vsub.f32 1.0, %v800
      %v802 = vmul.f32 %v799, %v801
      %v803 = vadd.f32 %v799, %v802
      %vm804 = vweird.f32 %v655
      %vm805 = vweird.f32 %v799
      %vm806 = vmor %vm804, %vm805
      %v807 = vsel %vm806, %v799, %v803
      %v808 = vand.u32 2147483647, %v655
      %vm809 = vcmp.eq.f32.partialorder %v808, 8.507059e+37
      %v810 = vand.u32 %v655, 2147483648
      %v811 = vor.u32 1.1754944e-38, %v810
      %v812 = vsel %vm809, %v811, %v807
      %v813 = vmul.f32 1.0, %v812
      %v814 = vrcp.pop %v656
      %v815 = vmul.f32 %v656, %v814
      %v816 = vsub.f32 1.0, %v815
      %v817 = vmul.f32 %v814, %v816
      %v818 = vadd.f32 %v814, %v817
      %vm819 = vweird.f32 %v656
      %vm820 = vweird.f32 %v814
      %vm821 = vmor %vm819, %vm820
      %v822 = vsel %vm821, %v814, %v818
      %v823 = vand.u32 2147483647, %v656
      %vm824 = vcmp.eq.f32.partialorder %v823, 8.507059e+37
      %v825 = vand.u32 %v656, 2147483648
      %v826 = vor.u32 1.1754944e-38, %v825
      %v827 = vsel %vm824, %v826, %v822
      %v828 = vmul.f32 1.0, %v827
      %v829 = vrcp.pop %v657
      %v830 = vmul.f32 %v657, %v829
      %v831 = vsub.f32 1.0, %v830
      %v832 = vmul.f32 %v829, %v831
      %v833 = vadd.f32 %v829, %v832
      %vm834 = vweird.f32 %v657
      %vm835 = vweird.f32 %v829
      %vm836 = vmor %vm834, %vm835
      %v837 = vsel %vm836, %v829, %v833
      %v838 = vand.u32 2147483647, %v657
      %vm839 = vcmp.eq.f32.partialorder %v838, 8.507059e+37
      %v840 = vand.u32 %v657, 2147483648
      %v841 = vor.u32 1.1754944e-38, %v840
      %v842 = vsel %vm839, %v841, %v837
      %v843 = vmul.f32 1.0, %v842
      %v844 = vrcp.pop %v658
      %v845 = vmul.f32 %v658, %v844
      %v846 = vsub.f32 1.0, %v845
      %v847 = vmul.f32 %v844, %v846
      %v848 = vadd.f32 %v844, %v847
      %vm849 = vweird.f32 %v658
      %vm850 = vweird.f32 %v844
      %vm851 = vmor %vm849, %vm850
      %v852 = vsel %vm851, %v844, %v848
      %v853 = vand.u32 2147483647, %v658
      %vm854 = vcmp.eq.f32.partialorder %v853, 8.507059e+37
      %v855 = vand.u32 %v658, 2147483648
      %v856 = vor.u32 1.1754944e-38, %v855
      %v857 = vsel %vm854, %v856, %v852
      %v858 = vmul.f32 1.0, %v857
      %v859 = vrcp.pop %v659
      %v860 = vmul.f32 %v659, %v859
      %v861 = vsub.f32 1.0, %v860
      %v862 = vmul.f32 %v859, %v861
      %v863 = vadd.f32 %v859, %v862
      %vm864 = vweird.f32 %v659
      %vm865 = vweird.f32 %v859
      %vm866 = vmor %vm864, %vm865
      %v867 = vsel %vm866, %v859, %v863
      %v868 = vand.u32 2147483647, %v659
      %vm869 = vcmp.eq.f32.partialorder %v868, 8.507059e+37
      %v870 = vand.u32 %v659, 2147483648
      %v871 = vor.u32 1.1754944e-38, %v870
      %v872 = vsel %vm869, %v871, %v867
      %v873 = vmul.f32 1.0, %v872
      %v874 = vrcp.pop %v660
      %v875 = vmul.f32 %v660, %v874
      %v876 = vsub.f32 1.0, %v875
      %v877 = vmul.f32 %v874, %v876
      %v878 = vadd.f32 %v874, %v877
      %vm879 = vweird.f32 %v660
      %vm880 = vweird.f32 %v874
      %vm881 = vmor %vm879, %vm880
      %v882 = vsel %vm881, %v874, %v878
      %v883 = vand.u32 2147483647, %v660
      %vm884 = vcmp.eq.f32.partialorder %v883, 8.507059e+37
      %v885 = vand.u32 %v660, 2147483648
      %v886 = vor.u32 1.1754944e-38, %v885
      %v887 = vsel %vm884, %v886, %v882
      %v888 = vmul.f32 1.0, %v887
      %v889 = vrcp.pop %v661
      %v890 = vmul.f32 %v661, %v889
      %v891 = vsub.f32 1.0, %v890
      %v892 = vmul.f32 %v889, %v891
      %v893 = vadd.f32 %v889, %v892
      %vm894 = vweird.f32 %v661
      %vm895 = vweird.f32 %v889
      %vm896 = vmor %vm894, %vm895
      %v897 = vsel %vm896, %v889, %v893
      %v898 = vand.u32 2147483647, %v661
      %vm899 = vcmp.eq.f32.partialorder %v898, 8.507059e+37
      %v900 = vand.u32 %v661, 2147483648
      %v901 = vor.u32 1.1754944e-38, %v900
      %v902 = vsel %vm899, %v901, %v897
      %v903 = vmul.f32 1.0, %v902
      %v904 = vrcp.pop %v662
      %v905 = vmul.f32 %v662, %v904
      %v906 = vsub.f32 1.0, %v905
      %v907 = vmul.f32 %v904, %v906
      %v908 = vadd.f32 %v904, %v907
      %vm909 = vweird.f32 %v662
      %vm910 = vweird.f32 %v904
      %vm911 = vmor %vm909, %vm910
      %v912 = vsel %vm911, %v904, %v908
      %v913 = vand.u32 2147483647, %v662
      %vm914 = vcmp.eq.f32.partialorder %v913, 8.507059e+37
      %v915 = vand.u32 %v662, 2147483648
      %v916 = vor.u32 1.1754944e-38, %v915
      %v917 = vsel %vm914, %v916, %v912
      %v918 = vmul.f32 1.0, %v917
      %v919 = vrcp.pop %v663
      %v920 = vmul.f32 %v663, %v919
      %v921 = vsub.f32 1.0, %v920
      %v922 = vmul.f32 %v919, %v921
      %v923 = vadd.f32 %v919, %v922
      %vm924 = vweird.f32 %v663
      %vm925 = vweird.f32 %v919
      %vm926 = vmor %vm924, %vm925
      %v927 = vsel %vm926, %v919, %v923
      %v928 = vand.u32 2147483647, %v663
      %vm929 = vcmp.eq.f32.partialorder %v928, 8.507059e+37
      %v930 = vand.u32 %v663, 2147483648
      %v931 = vor.u32 1.1754944e-38, %v930
      %v932 = vsel %vm929, %v931, %v927
      %v933 = vmul.f32 1.0, %v932
      %v934 = vrcp.pop %v664
      %v935 = vmul.f32 %v664, %v934
      %v936 = vsub.f32 1.0, %v935
      %v937 = vmul.f32 %v934, %v936
      %v938 = vadd.f32 %v934, %v937
      %vm939 = vweird.f32 %v664
      %vm940 = vweird.f32 %v934
      %vm941 = vmor %vm939, %vm940
      %v942 = vsel %vm941, %v934, %v938
      %v943 = vand.u32 2147483647, %v664
      %vm944 = vcmp.eq.f32.partialorder %v943, 8.507059e+37
      %v945 = vand.u32 %v664, 2147483648
      %v946 = vor.u32 1.1754944e-38, %v945
      %v947 = vsel %vm944, %v946, %v942
      %v948 = vmul.f32 1.0, %v947
      %v949 = vrcp.pop %v665
      %v950 = vmul.f32 %v665, %v949
      %v951 = vsub.f32 1.0, %v950
      %v952 = vmul.f32 %v949, %v951
      %v953 = vadd.f32 %v949, %v952
      %vm954 = vweird.f32 %v665
      %vm955 = vweird.f32 %v949
      %vm956 = vmor %vm954, %vm955
      %v957 = vsel %vm956, %v949, %v953
      %v958 = vand.u32 2147483647, %v665
      %vm959 = vcmp.eq.f32.partialorder %v958, 8.507059e+37
      %v960 = vand.u32 %v665, 2147483648
      %v961 = vor.u32 1.1754944e-38, %v960
      %v962 = vsel %vm959, %v961, %v957
      %v963 = vmul.f32 1.0, %v962
      %v964 = vrcp.pop %v666
      %v965 = vmul.f32 %v666, %v964
      %v966 = vsub.f32 1.0, %v965
      %v967 = vmul.f32 %v964, %v966
      %v968 = vadd.f32 %v964, %v967
      %vm969 = vweird.f32 %v666
      %vm970 = vweird.f32 %v964
      %vm971 = vmor %vm969, %vm970
      %v972 = vsel %vm971, %v964, %v968
      %v973 = vand.u32 2147483647, %v666
      %vm974 = vcmp.eq.f32.partialorder %v973, 8.507059e+37
      %v975 = vand.u32 %v666, 2147483648
      %v976 = vor.u32 1.1754944e-38, %v975
      %v977 = vsel %vm974, %v976, %v972
      %v978 = vmul.f32 1.0, %v977
      %v979 = vrcp.pop %v667
      %v980 = vmul.f32 %v667, %v979
      %v981 = vsub.f32 1.0, %v980
      %v982 = vmul.f32 %v979, %v981
      %v983 = vadd.f32 %v979, %v982
      %vm984 = vweird.f32 %v667
      %vm985 = vweird.f32 %v979
      %vm986 = vmor %vm984, %vm985
      %v987 = vsel %vm986, %v979, %v983
      %v988 = vand.u32 2147483647, %v667
      %vm989 = vcmp.eq.f32.partialorder %v988, 8.507059e+37
      %v990 = vand.u32 %v667, 2147483648
      %v991 = vor.u32 1.1754944e-38, %v990
      %v992 = vsel %vm989, %v991, %v987
      %v993 = vmul.f32 1.0, %v992
      %v994 = vrcp.pop %v668
      %v995 = vmul.f32 %v668, %v994
      %v996 = vsub.f32 1.0, %v995
      %v997 = vmul.f32 %v994, %v996
      %v998 = vadd.f32 %v994, %v997
      %vm999 = vweird.f32 %v668
      %vm1000 = vweird.f32 %v994
      %vm1001 = vmor %vm999, %vm1000
      %v1002 = vsel %vm1001, %v994, %v998
      %v1003 = vand.u32 2147483647, %v668
      %vm1004 = vcmp.eq.f32.partialorder %v1003, 8.507059e+37
      %v1005 = vand.u32 %v668, 2147483648
      %v1006 = vor.u32 1.1754944e-38, %v1005
      %v1007 = vsel %vm1004, %v1006, %v1002
      %v1008 = vmul.f32 1.0, %v1007
      %v1009 = vrcp.pop %v669
      %v1010 = vmul.f32 %v669, %v1009
      %v1011 = vsub.f32 1.0, %v1010
      %v1012 = vmul.f32 %v1009, %v1011
      %v1013 = vadd.f32 %v1009, %v1012
      %vm1014 = vweird.f32 %v669
      %vm1015 = vweird.f32 %v1009
      %vm1016 = vmor %vm1014, %vm1015
      %v1017 = vsel %vm1016, %v1009, %v1013
      %v1018 = vand.u32 2147483647, %v669
      %vm1019 = vcmp.eq.f32.partialorder %v1018, 8.507059e+37
      %v1020 = vand.u32 %v669, 2147483648
      %v1021 = vor.u32 1.1754944e-38, %v1020
      %v1022 = vsel %vm1019, %v1021, %v1017
      %v1023 = vmul.f32 1.0, %v1022
      %v1024 = vrcp.pop %v670
      %v1025 = vmul.f32 %v670, %v1024
      %v1026 = vsub.f32 1.0, %v1025
      %v1027 = vmul.f32 %v1024, %v1026
      %v1028 = vadd.f32 %v1024, %v1027
      %vm1029 = vweird.f32 %v670
      %vm1030 = vweird.f32 %v1024
      %vm1031 = vmor %vm1029, %vm1030
      %v1032 = vsel %vm1031, %v1024, %v1028
      %v1033 = vand.u32 2147483647, %v670
      %vm1034 = vcmp.eq.f32.partialorder %v1033, 8.507059e+37
      %v1035 = vand.u32 %v670, 2147483648
      %v1036 = vor.u32 1.1754944e-38, %v1035
      %v1037 = vsel %vm1034, %v1036, %v1032
      %v1038 = vmul.f32 1.0, %v1037
      %v1039 = vrcp.pop %v671
      %v1040 = vmul.f32 %v671, %v1039
      %v1041 = vsub.f32 1.0, %v1040
      %v1042 = vmul.f32 %v1039, %v1041
      %v1043 = vadd.f32 %v1039, %v1042
      %vm1044 = vweird.f32 %v671
      %vm1045 = vweird.f32 %v1039
      %vm1046 = vmor %vm1044, %vm1045
      %v1047 = vsel %vm1046, %v1039, %v1043
      %v1048 = vand.u32 2147483647, %v671
      %vm1049 = vcmp.eq.f32.partialorder %v1048, 8.507059e+37
      %v1050 = vand.u32 %v671, 2147483648
      %v1051 = vor.u32 1.1754944e-38, %v1050
      %v1052 = vsel %vm1049, %v1051, %v1047
      %v1053 = vmul.f32 1.0, %v1052
      %v1054 = vrcp.pop %v672
      %v1055 = vmul.f32 %v672, %v1054
      %v1056 = vsub.f32 1.0, %v1055
      %v1057 = vmul.f32 %v1054, %v1056
      %v1058 = vadd.f32 %v1054, %v1057
      %vm1059 = vweird.f32 %v672
      %vm1060 = vweird.f32 %v1054
      %vm1061 = vmor %vm1059, %vm1060
      %v1062 = vsel %vm1061, %v1054, %v1058
      %v1063 = vand.u32 2147483647, %v672
      %vm1064 = vcmp.eq.f32.partialorder %v1063, 8.507059e+37
      %v1065 = vand.u32 %v672, 2147483648
      %v1066 = vor.u32 1.1754944e-38, %v1065
      %v1067 = vsel %vm1064, %v1066, %v1062
      %v1068 = vmul.f32 1.0, %v1067
      %v1069 = vrcp.pop %v673
      %v1070 = vmul.f32 %v673, %v1069
      %v1071 = vsub.f32 1.0, %v1070
      %v1072 = vmul.f32 %v1069, %v1071
      %v1073 = vadd.f32 %v1069, %v1072
      %vm1074 = vweird.f32 %v673
      %vm1075 = vweird.f32 %v1069
      %vm1076 = vmor %vm1074, %vm1075
      %v1077 = vsel %vm1076, %v1069, %v1073
      %v1078 = vand.u32 2147483647, %v673
      %vm1079 = vcmp.eq.f32.partialorder %v1078, 8.507059e+37
      %v1080 = vand.u32 %v673, 2147483648
      %v1081 = vor.u32 1.1754944e-38, %v1080
      %v1082 = vsel %vm1079, %v1081, %v1077
      %v1083 = vmul.f32 1.0, %v1082
      %v1084 = vrcp.pop %v674
      %v1085 = vmul.f32 %v674, %v1084
      %v1086 = vsub.f32 1.0, %v1085
      %v1087 = vmul.f32 %v1084, %v1086
      %v1088 = vadd.f32 %v1084, %v1087
      %vm1089 = vweird.f32 %v674
      %vm1090 = vweird.f32 %v1084
      %vm1091 = vmor %vm1089, %vm1090
      %v1092 = vsel %vm1091, %v1084, %v1088
      %v1093 = vand.u32 2147483647, %v674
      %vm1094 = vcmp.eq.f32.partialorder %v1093, 8.507059e+37
      %v1095 = vand.u32 %v674, 2147483648
      %v1096 = vor.u32 1.1754944e-38, %v1095
      %v1097 = vsel %vm1094, %v1096, %v1092
      %v1098 = vmul.f32 1.0, %v1097
      %v1099 = vrcp.pop %v675
      %v1100 = vmul.f32 %v675, %v1099
      %v1101 = vsub.f32 1.0, %v1100
      %v1102 = vmul.f32 %v1099, %v1101
      %v1103 = vadd.f32 %v1099, %v1102
      %vm1104 = vweird.f32 %v675
      %vm1105 = vweird.f32 %v1099
      %vm1106 = vmor %vm1104, %vm1105
      %v1107 = vsel %vm1106, %v1099, %v1103
      %v1108 = vand.u32 2147483647, %v675
      %vm1109 = vcmp.eq.f32.partialorder %v1108, 8.507059e+37
      %v1110 = vand.u32 %v675, 2147483648
      %v1111 = vor.u32 1.1754944e-38, %v1110
      %v1112 = vsel %vm1109, %v1111, %v1107
      %v1113 = vmul.f32 1.0, %v1112
      %v1114 = vrcp.pop %v676
      %v1115 = vmul.f32 %v676, %v1114
      %v1116 = vsub.f32 1.0, %v1115
      %v1117 = vmul.f32 %v1114, %v1116
      %v1118 = vadd.f32 %v1114, %v1117
      %vm1119 = vweird.f32 %v676
      %vm1120 = vweird.f32 %v1114
      %vm1121 = vmor %vm1119, %vm1120
      %v1122 = vsel %vm1121, %v1114, %v1118
      %v1123 = vand.u32 2147483647, %v676
      %vm1124 = vcmp.eq.f32.partialorder %v1123, 8.507059e+37
      %v1125 = vand.u32 %v676, 2147483648
      %v1126 = vor.u32 1.1754944e-38, %v1125
      %v1127 = vsel %vm1124, %v1126, %v1122
      %v1128 = vmul.f32 1.0, %v1127
      %v1129 = vrcp.pop %v677
      %v1130 = vmul.f32 %v677, %v1129
      %v1131 = vsub.f32 1.0, %v1130
      %v1132 = vmul.f32 %v1129, %v1131
      %v1133 = vadd.f32 %v1129, %v1132
      %vm1134 = vweird.f32 %v677
      %vm1135 = vweird.f32 %v1129
      %vm1136 = vmor %vm1134, %vm1135
      %v1137 = vsel %vm1136, %v1129, %v1133
      %v1138 = vand.u32 2147483647, %v677
      %vm1139 = vcmp.eq.f32.partialorder %v1138, 8.507059e+37
      %v1140 = vand.u32 %v677, 2147483648
      %v1141 = vor.u32 1.1754944e-38, %v1140
      %v1142 = vsel %vm1139, %v1141, %v1137
      %v1143 = vmul.f32 1.0, %v1142
      %v1144 = vrcp.pop %v678
      %v1145 = vmul.f32 %v678, %v1144
      %v1146 = vsub.f32 1.0, %v1145
      %v1147 = vmul.f32 %v1144, %v1146
      %v1148 = vadd.f32 %v1144, %v1147
      %vm1149 = vweird.f32 %v678
      %vm1150 = vweird.f32 %v1144
      %vm1151 = vmor %vm1149, %vm1150
      %v1152 = vsel %vm1151, %v1144, %v1148
      %v1153 = vand.u32 2147483647, %v678
      %vm1154 = vcmp.eq.f32.partialorder %v1153, 8.507059e+37
      %v1155 = vand.u32 %v678, 2147483648
      %v1156 = vor.u32 1.1754944e-38, %v1155
      %v1157 = vsel %vm1154, %v1156, %v1152
      %v1158 = vmul.f32 1.0, %v1157
      %v1159 = vmul.f32 %v519, %v693
      %v1160 = vmul.f32 %v520, %v708
      %v1161 = vmul.f32 %v521, %v723
      %v1162 = vmul.f32 %v522, %v738
      %v1163 = vmul.f32 %v523, %v753
      %v1164 = vmul.f32 %v524, %v768
      %v1165 = vmul.f32 %v525, %v783
      %v1166 = vmul.f32 %v526, %v798
      %v1167 = vmul.f32 %v527, %v813
      %v1168 = vmul.f32 %v528, %v828
      %v1169 = vmul.f32 %v529, %v843
      %v1170 = vmul.f32 %v530, %v858
      %v1171 = vmul.f32 %v531, %v873
      %v1172 = vmul.f32 %v532, %v888
      %v1173 = vmul.f32 %v533, %v903
      %v1174 = vmul.f32 %v534, %v918
      %v1175 = vmul.f32 %v535, %v933
      %v1176 = vmul.f32 %v536, %v948
      %v1177 = vmul.f32 %v537, %v963
      %v1178 = vmul.f32 %v538, %v978
      %v1179 = vmul.f32 %v539, %v993
      %v1180 = vmul.f32 %v540, %v1008
      %v1181 = vmul.f32 %v541, %v1023
      %v1182 = vmul.f32 %v542, %v1038
      %v1183 = vmul.f32 %v543, %v1053
      %v1184 = vmul.f32 %v544, %v1068
      %v1185 = vmul.f32 %v545, %v1083
      %v1186 = vmul.f32 %v546, %v1098
      %v1187 = vmul.f32 %v547, %v1113
      %v1188 = vmul.f32 %v548, %v1128
      %v1189 = vmul.f32 %v549, %v1143
      %v1190 = vmul.f32 %v550, %v1158
      %1191 = vst [vmem:[%s197] sm:$0xf] 0
      %1192 = vst [vmem:[%s197 + $0x4] sm:$0xf] 0
      %1193 = vst [vmem:[%s197 + $0x8] sm:$0xf] 0
      %1194 = vst [vmem:[%s197 + $0xc] sm:$0xf] 0
      %1195 = vst [vmem:[%s197 + $0x10] sm:$0xf] 0
      %1196 = vst [vmem:[%s197 + $0x14] sm:$0xf] 0
      %1197 = vst [vmem:[%s197 + $0x18] sm:$0xf] 0
      %1198 = vst [vmem:[%s197 + $0x1c] sm:$0xf] 0
      %1199 = vst [vmem:[%s197 + $0x20] sm:$0xf] 0
      %1200 = vst [vmem:[%s197 + $0x24] sm:$0xf] 0
      %1201 = vst [vmem:[%s197 + $0x28] sm:$0xf] 0
      %1202 = vst [vmem:[%s197 + $0x2c] sm:$0xf] 0
      %1203 = vst [vmem:[%s197 + $0x30] sm:$0xf] 0
      %1204 = vst [vmem:[%s197 + $0x34] sm:$0xf] 0
      %1205 = vst [vmem:[%s197 + $0x38] sm:$0xf] 0
      %1206 = vst [vmem:[%s197 + $0x3c] sm:$0xf] 0
      %1207 = vst [vmem:[%s197 + $0x40] sm:$0xf] 0
      %1208 = vst [vmem:[%s197 + $0x44] sm:$0xf] 0
      %1209 = vst [vmem:[%s197 + $0x48] sm:$0xf] 0
      %1210 = vst [vmem:[%s197 + $0x4c] sm:$0xf] 0
      %1211 = vst [vmem:[%s197 + $0x50] sm:$0xf] 0
      %1212 = vst [vmem:[%s197 + $0x54] sm:$0xf] 0
      %1213 = vst [vmem:[%s197 + $0x58] sm:$0xf] 0
      %1214 = vst [vmem:[%s197 + $0x5c] sm:$0xf] 0
      %1215 = vst [vmem:[%s197 + $0x60] sm:$0xf] 0
      %1216 = vst [vmem:[%s197 + $0x64] sm:$0xf] 0
      %1217 = vst [vmem:[%s197 + $0x68] sm:$0xf] 0
      %1218 = vst [vmem:[%s197 + $0x6c] sm:$0xf] 0
      %1219 = vst [vmem:[%s197 + $0x70] sm:$0xf] 0
      %1220 = vst [vmem:[%s197 + $0x74] sm:$0xf] 0
      %1221 = vst [vmem:[%s197 + $0x78] sm:$0xf] 0
      %1222 = vst [vmem:[%s197 + $0x7c] sm:$0xf] 0
      %1223 = vst [vmem:[%s197 + $0x80] sm:$0xf] 0
      %1224 = vst [vmem:[%s197 + $0x84] sm:$0xf] 0
      %1225 = vst [vmem:[%s197 + $0x88] sm:$0xf] 0
      %1226 = vst [vmem:[%s197 + $0x8c] sm:$0xf] 0
      %1227 = vst [vmem:[%s197 + $0x90] sm:$0xf] 0
      %1228 = vst [vmem:[%s197 + $0x94] sm:$0xf] 0
      %1229 = vst [vmem:[%s197 + $0x98] sm:$0xf] 0
      %1230 = vst [vmem:[%s197 + $0x9c] sm:$0xf] 0
      %1231 = vst [vmem:[%s197 + $0xa0] sm:$0xf] 0
      %1232 = vst [vmem:[%s197 + $0xa4] sm:$0xf] 0
      %1233 = vst [vmem:[%s197 + $0xa8] sm:$0xf] 0
      %1234 = vst [vmem:[%s197 + $0xac] sm:$0xf] 0
      %1235 = vst [vmem:[%s197 + $0xb0] sm:$0xf] 0
      %1236 = vst [vmem:[%s197 + $0xb4] sm:$0xf] 0
      %1237 = vst [vmem:[%s197 + $0xb8] sm:$0xf] 0
      %1238 = vst [vmem:[%s197 + $0xbc] sm:$0xf] 0
      %1239 = vst [vmem:[%s197 + $0xc0] sm:$0xf] 0
      %1240 = vst [vmem:[%s197 + $0xc4] sm:$0xf] 0
      %1241 = vst [vmem:[%s197 + $0xc8] sm:$0xf] 0
      %1242 = vst [vmem:[%s197 + $0xcc] sm:$0xf] 0
      %1243 = vst [vmem:[%s197 + $0xd0] sm:$0xf] 0
      %1244 = vst [vmem:[%s197 + $0xd4] sm:$0xf] 0
      %v1245 = vpack.c.bf16 %v1159, %v1159
      %v1246 = vpack.c.bf16 %v1160, %v1160
      %v1247 = vpack.c.bf16 %v1161, %v1161
      %v1248 = vpack.c.bf16 %v1162, %v1162
      %v1249 = vpack.c.bf16 %v1163, %v1163
      %v1250 = vpack.c.bf16 %v1164, %v1164
      %v1251 = vpack.c.bf16 %v1165, %v1165
      %v1252 = vpack.c.bf16 %v1166, %v1166
      %v1253 = vpack.c.bf16 %v1167, %v1167
      %v1254 = vpack.c.bf16 %v1168, %v1168
      %v1255 = vpack.c.bf16 %v1169, %v1169
      %v1256 = vpack.c.bf16 %v1170, %v1170
      %v1257 = vpack.c.bf16 %v1171, %v1171
      %v1258 = vpack.c.bf16 %v1172, %v1172
      %v1259 = vpack.c.bf16 %v1173, %v1173
      %v1260 = vpack.c.bf16 %v1174, %v1174
      %v1261 = vpack.c.bf16 %v1175, %v1175
      %v1262 = vpack.c.bf16 %v1176, %v1176
      %v1263 = vpack.c.bf16 %v1177, %v1177
      %v1264 = vpack.c.bf16 %v1178, %v1178
      %v1265 = vpack.c.bf16 %v1179, %v1179
      %v1266 = vpack.c.bf16 %v1180, %v1180
      %v1267 = vpack.c.bf16 %v1181, %v1181
      %v1268 = vpack.c.bf16 %v1182, %v1182
      %v1269 = vpack.c.bf16 %v1183, %v1183
      %v1270 = vpack.c.bf16 %v1184, %v1184
      %v1271 = vpack.c.bf16 %v1185, %v1185
      %v1272 = vpack.c.bf16 %v1186, %v1186
      %v1273 = vpack.c.bf16 %v1187, %v1187
      %v1274 = vpack.c.bf16 %v1188, %v1188
      %v1275 = vpack.c.bf16 %v1189, %v1189
      %v1276 = vpack.c.bf16 %v1190, %v1190
      %vm1277 = vsmask.f32 256
      %vm1278 = vsmask.f32 4368
      %vm1279 = vmor %vm1277, %vm1278
      %v1281 = vshrl.u32 %v1245, 16
      %v1283 = vrot.slane %v1281, 7
      %v1284 = vshll.u32 %v1245, 16
      %v1286 = vor.u32 %v1283, %v1284
      %v1287 = vrot.slane %v1283, 4
      %v1289 = vshrl.u32 %v1246, 16
      %v1291 = vrot.slane %v1289, 7
      %v1292 = vshll.u32 %v1246, 16
      %v1294 = vor.u32 %v1291, %v1292
      %v1295 = vsel %vm1279, %v1287, %v1294
      %v1296 = vrot.slane %v1291, 4
      %v1298 = vshrl.u32 %v1247, 16
      %v1300 = vrot.slane %v1298, 7
      %v1301 = vshll.u32 %v1247, 16
      %v1303 = vor.u32 %v1300, %v1301
      %v1304 = vrot.slane %v1300, 4
      %v1306 = vshrl.u32 %v1248, 16
      %v1308 = vrot.slane %v1306, 7
      %v1309 = vshll.u32 %v1248, 16
      %v1311 = vor.u32 %v1308, %v1309
      %v1312 = vsel %vm1279, %v1304, %v1311
      %v1313 = vrot.slane %v1308, 4
      %v1315 = vshrl.u32 %v1249, 16
      %v1317 = vrot.slane %v1315, 7
      %v1318 = vshll.u32 %v1249, 16
      %v1320 = vor.u32 %v1317, %v1318
      %v1321 = vrot.slane %v1317, 4
      %v1323 = vshrl.u32 %v1250, 16
      %v1325 = vrot.slane %v1323, 7
      %v1326 = vshll.u32 %v1250, 16
      %v1328 = vor.u32 %v1325, %v1326
      %v1329 = vsel %vm1279, %v1321, %v1328
      %v1330 = vrot.slane %v1325, 4
      %v1332 = vshrl.u32 %v1251, 16
      %v1334 = vrot.slane %v1332, 7
      %v1335 = vshll.u32 %v1251, 16
      %v1337 = vor.u32 %v1334, %v1335
      %v1338 = vrot.slane %v1334, 4
      %v1340 = vshrl.u32 %v1252, 16
      %v1342 = vrot.slane %v1340, 7
      %v1343 = vshll.u32 %v1252, 16
      %v1345 = vor.u32 %v1342, %v1343
      %v1346 = vsel %vm1279, %v1338, %v1345
      %v1347 = vrot.slane %v1342, 4
      %v1349 = vshrl.u32 %v1253, 16
      %v1351 = vrot.slane %v1349, 7
      %v1352 = vshll.u32 %v1253, 16
      %v1354 = vor.u32 %v1351, %v1352
      %v1355 = vrot.slane %v1351, 4
      %v1357 = vshrl.u32 %v1254, 16
      %v1359 = vrot.slane %v1357, 7
      %v1360 = vshll.u32 %v1254, 16
      %v1362 = vor.u32 %v1359, %v1360
      %v1363 = vsel %vm1279, %v1355, %v1362
      %v1364 = vrot.slane %v1359, 4
      %v1366 = vshrl.u32 %v1255, 16
      %v1368 = vrot.slane %v1366, 7
      %v1369 = vshll.u32 %v1255, 16
      %v1371 = vor.u32 %v1368, %v1369
      %v1372 = vrot.slane %v1368, 4
      %v1374 = vshrl.u32 %v1256, 16
      %v1376 = vrot.slane %v1374, 7
      %v1377 = vshll.u32 %v1256, 16
      %v1379 = vor.u32 %v1376, %v1377
      %v1380 = vsel %vm1279, %v1372, %v1379
      %v1381 = vrot.slane %v1376, 4
      %v1383 = vshrl.u32 %v1257, 16
      %v1385 = vrot.slane %v1383, 7
      %v1386 = vshll.u32 %v1257, 16
      %v1388 = vor.u32 %v1385, %v1386
      %v1389 = vrot.slane %v1385, 4
      %v1391 = vshrl.u32 %v1258, 16
      %v1393 = vrot.slane %v1391, 7
      %v1394 = vshll.u32 %v1258, 16
      %v1396 = vor.u32 %v1393, %v1394
      %v1397 = vsel %vm1279, %v1389, %v1396
      %v1398 = vrot.slane %v1393, 4
      %v1400 = vshrl.u32 %v1259, 16
      %v1402 = vrot.slane %v1400, 7
      %v1403 = vshll.u32 %v1259, 16
      %v1405 = vor.u32 %v1402, %v1403
      %v1406 = vrot.slane %v1402, 4
      %v1408 = vshrl.u32 %v1260, 16
      %v1410 = vrot.slane %v1408, 7
      %v1411 = vshll.u32 %v1260, 16
      %v1413 = vor.u32 %v1410, %v1411
      %v1414 = vsel %vm1279, %v1406, %v1413
      %v1415 = vrot.slane %v1410, 4
      %v1417 = vshrl.u32 %v1261, 16
      %v1419 = vrot.slane %v1417, 7
      %v1420 = vshll.u32 %v1261, 16
      %v1422 = vor.u32 %v1419, %v1420
      %v1423 = vrot.slane %v1419, 4
      %v1425 = vshrl.u32 %v1262, 16
      %v1427 = vrot.slane %v1425, 7
      %v1428 = vshll.u32 %v1262, 16
      %v1430 = vor.u32 %v1427, %v1428
      %v1431 = vsel %vm1279, %v1423, %v1430
      %v1432 = vrot.slane %v1427, 4
      %v1434 = vshrl.u32 %v1263, 16
      %v1436 = vrot.slane %v1434, 7
      %v1437 = vshll.u32 %v1263, 16
      %v1439 = vor.u32 %v1436, %v1437
      %v1440 = vrot.slane %v1436, 4
      %v1442 = vshrl.u32 %v1264, 16
      %v1444 = vrot.slane %v1442, 7
      %v1445 = vshll.u32 %v1264, 16
      %v1447 = vor.u32 %v1444, %v1445
      %v1448 = vsel %vm1279, %v1440, %v1447
      %v1449 = vrot.slane %v1444, 4
      %v1451 = vshrl.u32 %v1265, 16
      %v1453 = vrot.slane %v1451, 7
      %v1454 = vshll.u32 %v1265, 16
      %v1456 = vor.u32 %v1453, %v1454
      %v1457 = vrot.slane %v1453, 4
      %v1459 = vshrl.u32 %v1266, 16
      %v1461 = vrot.slane %v1459, 7
      %v1462 = vshll.u32 %v1266, 16
      %v1464 = vor.u32 %v1461, %v1462
      %v1465 = vsel %vm1279, %v1457, %v1464
      %v1466 = vrot.slane %v1461, 4
      %v1468 = vshrl.u32 %v1267, 16
      %v1470 = vrot.slane %v1468, 7
      %v1471 = vshll.u32 %v1267, 16
      %v1473 = vor.u32 %v1470, %v1471
      %v1474 = vrot.slane %v1470, 4
      %v1476 = vshrl.u32 %v1268, 16
      %v1478 = vrot.slane %v1476, 7
      %v1479 = vshll.u32 %v1268, 16
      %v1481 = vor.u32 %v1478, %v1479
      %v1482 = vsel %vm1279, %v1474, %v1481
      %v1483 = vrot.slane %v1478, 4
      %v1485 = vshrl.u32 %v1269, 16
      %v1487 = vrot.slane %v1485, 7
      %v1488 = vshll.u32 %v1269, 16
      %v1490 = vor.u32 %v1487, %v1488
      %v1491 = vrot.slane %v1487, 4
      %v1493 = vshrl.u32 %v1270, 16
      %v1495 = vrot.slane %v1493, 7
      %v1496 = vshll.u32 %v1270, 16
      %v1498 = vor.u32 %v1495, %v1496
      %v1499 = vsel %vm1279, %v1491, %v1498
      %v1500 = vrot.slane %v1495, 4
      %v1502 = vshrl.u32 %v1271, 16
      %v1504 = vrot.slane %v1502, 7
      %v1505 = vshll.u32 %v1271, 16
      %v1507 = vor.u32 %v1504, %v1505
      %v1508 = vrot.slane %v1504, 4
      %v1510 = vshrl.u32 %v1272, 16
      %v1512 = vrot.slane %v1510, 7
      %v1513 = vshll.u32 %v1272, 16
      %v1515 = vor.u32 %v1512, %v1513
      %v1516 = vsel %vm1279, %v1508, %v1515
      %v1517 = vrot.slane %v1512, 4
      %v1519 = vshrl.u32 %v1273, 16
      %v1521 = vrot.slane %v1519, 7
      %v1522 = vshll.u32 %v1273, 16
      %v1524 = vor.u32 %v1521, %v1522
      %v1525 = vrot.slane %v1521, 4
      %v1527 = vshrl.u32 %v1274, 16
      %v1529 = vrot.slane %v1527, 7
      %v1530 = vshll.u32 %v1274, 16
      %v1532 = vor.u32 %v1529, %v1530
      %v1533 = vsel %vm1279, %v1525, %v1532
      %v1534 = vrot.slane %v1529, 4
      %v1536 = vshrl.u32 %v1275, 16
      %v1538 = vrot.slane %v1536, 7
      %v1539 = vshll.u32 %v1275, 16
      %v1541 = vor.u32 %v1538, %v1539
      %v1542 = vrot.slane %v1538, 4
      %v1544 = vshrl.u32 %v1276, 16
      %v1546 = vrot.slane %v1544, 7
      %v1547 = vshll.u32 %v1276, 16
      %v1549 = vor.u32 %v1546, %v1547
      %v1550 = vsel %vm1279, %v1542, %v1549
      %v1551 = vrot.slane %v1546, 4
      %s1600 = scalar_lea.vmem %s197, 12
      %vm1601 = vcmask 1043456
      %vm1602 = vsmask.f32 7938
      %vm1603 = vmand %vm1601, %vm1602
      %v1604 = vld [vmem:[%s1600] sm:$0xf]
      %v1605 = vsel %vm1603, %v1286, %v1604
      %1606 = vst [vmem:[%s1600] sm:$0xf] %v1605
      %1607 = vst [vmem:[%s1600 + $0x4] sm:$0xf] %v1295
      %vm1608 = vcmask 1040384
      %vm1609 = vmand %vm1608, %vm1277
      %v1610 = vld [vmem:[%s1600 + $0x8] sm:$0x1]
      %v1611 = vsel %vm1609, %v1296, %v1610
      %1612 = vst [vmem:[%s1600 + $0x8] sm:$0x1] %v1611
      %v1613 = vld [vmem:[%s1600 + $0xc] sm:$0xf]
      %v1614 = vsel %vm1603, %v1303, %v1613
      %1615 = vst [vmem:[%s1600 + $0xc] sm:$0xf] %v1614
      %1616 = vst [vmem:[%s1600 + $0x10] sm:$0xf] %v1312
      %v1617 = vld [vmem:[%s1600 + $0x14] sm:$0x1]
      %v1618 = vsel %vm1609, %v1313, %v1617
      %1619 = vst [vmem:[%s1600 + $0x14] sm:$0x1] %v1618
      %v1620 = vld [vmem:[%s1600 + $0x18] sm:$0xf]
      %v1621 = vsel %vm1603, %v1320, %v1620
      %1622 = vst [vmem:[%s1600 + $0x18] sm:$0xf] %v1621
      %1623 = vst [vmem:[%s1600 + $0x1c] sm:$0xf] %v1329
      %v1624 = vld [vmem:[%s1600 + $0x20] sm:$0x1]
      %v1625 = vsel %vm1609, %v1330, %v1624
      %1626 = vst [vmem:[%s1600 + $0x20] sm:$0x1] %v1625
      %v1627 = vld [vmem:[%s1600 + $0x24] sm:$0xf]
      %v1628 = vsel %vm1603, %v1337, %v1627
      %1629 = vst [vmem:[%s1600 + $0x24] sm:$0xf] %v1628
      %1630 = vst [vmem:[%s1600 + $0x28] sm:$0xf] %v1346
      %v1631 = vld [vmem:[%s1600 + $0x2c] sm:$0x1]
      %v1632 = vsel %vm1609, %v1347, %v1631
      %1633 = vst [vmem:[%s1600 + $0x2c] sm:$0x1] %v1632
      %v1634 = vld [vmem:[%s1600 + $0x30] sm:$0xf]
      %v1635 = vsel %vm1603, %v1354, %v1634
      %1636 = vst [vmem:[%s1600 + $0x30] sm:$0xf] %v1635
      %1637 = vst [vmem:[%s1600 + $0x34] sm:$0xf] %v1363
      %v1638 = vld [vmem:[%s1600 + $0x38] sm:$0x1]
      %v1639 = vsel %vm1609, %v1364, %v1638
      %1640 = vst [vmem:[%s1600 + $0x38] sm:$0x1] %v1639
      %v1641 = vld [vmem:[%s1600 + $0x3c] sm:$0xf]
      %v1642 = vsel %vm1603, %v1371, %v1641
      %1643 = vst [vmem:[%s1600 + $0x3c] sm:$0xf] %v1642
      %1644 = vst [vmem:[%s1600 + $0x40] sm:$0xf] %v1380
      %v1645 = vld [vmem:[%s1600 + $0x44] sm:$0x1]
      %v1646 = vsel %vm1609, %v1381, %v1645
      %1647 = vst [vmem:[%s1600 + $0x44] sm:$0x1] %v1646
      %v1648 = vld [vmem:[%s1600 + $0x48] sm:$0xf]
      %v1649 = vsel %vm1603, %v1388, %v1648
      %1650 = vst [vmem:[%s1600 + $0x48] sm:$0xf] %v1649
      %1651 = vst [vmem:[%s1600 + $0x4c] sm:$0xf] %v1397
      %v1652 = vld [vmem:[%s1600 + $0x50] sm:$0x1]
      %v1653 = vsel %vm1609, %v1398, %v1652
      %1654 = vst [vmem:[%s1600 + $0x50] sm:$0x1] %v1653
      %v1655 = vld [vmem:[%s1600 + $0x54] sm:$0xf]
      %v1656 = vsel %vm1603, %v1405, %v1655
      %1657 = vst [vmem:[%s1600 + $0x54] sm:$0xf] %v1656
      %1658 = vst [vmem:[%s1600 + $0x58] sm:$0xf] %v1414
      %v1659 = vld [vmem:[%s1600 + $0x5c] sm:$0x1]
      %v1660 = vsel %vm1609, %v1415, %v1659
      %1661 = vst [vmem:[%s1600 + $0x5c] sm:$0x1] %v1660
      %v1662 = vld [vmem:[%s1600 + $0x60] sm:$0xf]
      %v1663 = vsel %vm1603, %v1422, %v1662
      %1664 = vst [vmem:[%s1600 + $0x60] sm:$0xf] %v1663
      %1665 = vst [vmem:[%s1600 + $0x64] sm:$0xf] %v1431
      %v1666 = vld [vmem:[%s1600 + $0x68] sm:$0x1]
      %v1667 = vsel %vm1609, %v1432, %v1666
      %1668 = vst [vmem:[%s1600 + $0x68] sm:$0x1] %v1667
      %v1669 = vld [vmem:[%s1600 + $0x6c] sm:$0xf]
      %v1670 = vsel %vm1603, %v1439, %v1669
      %1671 = vst [vmem:[%s1600 + $0x6c] sm:$0xf] %v1670
      %1672 = vst [vmem:[%s1600 + $0x70] sm:$0xf] %v1448
      %v1673 = vld [vmem:[%s1600 + $0x74] sm:$0x1]
      %v1674 = vsel %vm1609, %v1449, %v1673
      %1675 = vst [vmem:[%s1600 + $0x74] sm:$0x1] %v1674
      %v1676 = vld [vmem:[%s1600 + $0x78] sm:$0xf]
      %v1677 = vsel %vm1603, %v1456, %v1676
      %1678 = vst [vmem:[%s1600 + $0x78] sm:$0xf] %v1677
      %1679 = vst [vmem:[%s1600 + $0x7c] sm:$0xf] %v1465
      %v1680 = vld [vmem:[%s1600 + $0x80] sm:$0x1]
      %v1681 = vsel %vm1609, %v1466, %v1680
      %1682 = vst [vmem:[%s1600 + $0x80] sm:$0x1] %v1681
      %v1683 = vld [vmem:[%s1600 + $0x84] sm:$0xf]
      %v1684 = vsel %vm1603, %v1473, %v1683
      %1685 = vst [vmem:[%s1600 + $0x84] sm:$0xf] %v1684
      %1686 = vst [vmem:[%s1600 + $0x88] sm:$0xf] %v1482
      %v1687 = vld [vmem:[%s1600 + $0x8c] sm:$0x1]
      %v1688 = vsel %vm1609, %v1483, %v1687
      %1689 = vst [vmem:[%s1600 + $0x8c] sm:$0x1] %v1688
      %v1690 = vld [vmem:[%s1600 + $0x90] sm:$0xf]
      %v1691 = vsel %vm1603, %v1490, %v1690
      %1692 = vst [vmem:[%s1600 + $0x90] sm:$0xf] %v1691
      %1693 = vst [vmem:[%s1600 + $0x94] sm:$0xf] %v1499
      %v1694 = vld [vmem:[%s1600 + $0x98] sm:$0x1]
      %v1695 = vsel %vm1609, %v1500, %v1694
      %1696 = vst [vmem:[%s1600 + $0x98] sm:$0x1] %v1695
      %v1697 = vld [vmem:[%s1600 + $0x9c] sm:$0xf]
      %v1698 = vsel %vm1603, %v1507, %v1697
      %1699 = vst [vmem:[%s1600 + $0x9c] sm:$0xf] %v1698
      %1700 = vst [vmem:[%s1600 + $0xa0] sm:$0xf] %v1516
      %v1701 = vld [vmem:[%s1600 + $0xa4] sm:$0x1]
      %v1702 = vsel %vm1609, %v1517, %v1701
      %1703 = vst [vmem:[%s1600 + $0xa4] sm:$0x1] %v1702
      %v1704 = vld [vmem:[%s1600 + $0xa8] sm:$0xf]
      %v1705 = vsel %vm1603, %v1524, %v1704
      %1706 = vst [vmem:[%s1600 + $0xa8] sm:$0xf] %v1705
      %1707 = vst [vmem:[%s1600 + $0xac] sm:$0xf] %v1533
      %v1708 = vld [vmem:[%s1600 + $0xb0] sm:$0x1]
      %v1709 = vsel %vm1609, %v1534, %v1708
      %1710 = vst [vmem:[%s1600 + $0xb0] sm:$0x1] %v1709
      %v1711 = vld [vmem:[%s1600 + $0xb4] sm:$0xf]
      %v1712 = vsel %vm1603, %v1541, %v1711
      %1713 = vst [vmem:[%s1600 + $0xb4] sm:$0xf] %v1712
      %1714 = vst [vmem:[%s1600 + $0xb8] sm:$0xf] %v1550
      %v1715 = vld [vmem:[%s1600 + $0xbc] sm:$0x1]
      %v1716 = vsel %vm1609, %v1551, %v1715
      %1717 = vst [vmem:[%s1600 + $0xbc] sm:$0x1] %v1716
      %p1718 = scmp.lt.s32.totalorder %s15, 1
      %s1719 = scalar_select %p1718, %s15, 1
      %s1720 = smul.addr %s1719, 54
      %s1721 = smul.addr %s1720, 4
      %s1722 = scalar_lea.vmem %s4, %s1721
      // Predicated region
      $region37: #{residual_block_forward.4} parent=35 // pred_check
        %p1723 = pneg %p122
      $region38: #{residual_block_forward.4} parent=35 // pred_check_branch
        %1725 = sbr.rel (%p1723) target = $region40
      $region39: #{residual_block_forward.4} parent=35 // pred_region
        _
      $region40: #{residual_block_forward.4} parent=35 // pred_fallthru
        _
    $region36: #{residual_block_forward.4} parent=5 // pred_fallthru
      _
    %p1726 = scmp.le.s32.totalorder 2, %s10
    // Predicated region
    $region41: #{residual_block_forward.4} parent=5 // pred_check
      %p1727 = pneg %p1726
    $region42: #{residual_block_forward.4} parent=5 // pred_check_branch
      %1729 = sbr.rel (%p1727) target = $region44
    $region43: #{residual_block_forward.4} parent=5 // pred_region
      %s1730 = ssub.s32 %s10, 2
      // Predicated region
      $region45: #{residual_block_forward.4} parent=43 // pred_check
        %p1731 = pneg %p128
      $region46: #{residual_block_forward.4} parent=43 // pred_check_branch
        %1733 = sbr.rel (%p1731) target = $region48
      $region47: #{residual_block_forward.4} parent=43 // pred_region
        %p1734 = scmp.lt.s32.totalorder %s16, 1
        %s1735 = scalar_select %p1734, %s16, 1
        %s1736 = smul.addr %s1735, 54
        %s1737 = smul.addr %s1736, 4
        %s1738 = scalar_lea.vmem %s4, %s1737
      $region48: #{residual_block_forward.4} parent=43 // pred_fallthru
        _
    $region44: #{residual_block_forward.4} parent=5 // pred_fallthru
      _
  $region6: #{residual_block_forward.4} parent=0 // loop_footer
    %s14 = sadd.s32 1, %s10
  $region7: #{residual_block_forward.4} parent=0 // loop_footer_branch
    %9 = sbr.rel target = $region3
  $region8: #{residual_block_forward.4} parent=0 // loop_exit
    _

// kernel: residual_block_forward.6
$region0: #{residual_block_forward.6}
  #allocation0 [shape = 'u32[]', space=smem, size = 0x4, offset = 0x4, fixed_abs, tag = 'smem constant byte address 0x4 - core index']
  #allocation1 [shape = 'u32[72,128]{1,0:T(1,128)}', space=vmem, size = 0x9000, scoped, tag = 'internal scratch']
  %s0 = inlined_call_operand.vmem [shape: f32[2,16,16,128], index: 0, kind: input, shape index: {}]
  %s1 = inlined_call_operand.vmem [shape: f32[2,1,128], index: 1, kind: input, shape index: {}]
  %s2 = inlined_call_operand.vmem [shape: f32[1,128], index: 2, kind: input, shape index: {}]
  %s3 = inlined_call_operand.vmem [shape: f32[1,128], index: 3, kind: input, shape index: {}]
  %s4 = inlined_call_operand.vmem [shape: f32[128,128], index: 4, kind: input, shape index: {}]
  %s5 = inlined_call_operand.vmem [shape: bf16[2,18,24,128], index: 5, kind: output, shape index: {}]
  %s6 = sld [smem:[#allocation0]]
  $region53: #{residual_block_forward.6} parent=0
    _
  %s8 = ssub.s32 1, %s6
  %s9 = scalar_select 0, %s8, %s6
  loop: start=0, step=1, limit=4
  $region2: #{residual_block_forward.6} parent=0 // loop_pre_header
    _
  $region3: #{residual_block_forward.6} parent=0 // loop_header
    %s11 = sphi 0, %s15
    %p12 = scmp.ge.s32.totalorder %s11, 4
    %s21 = sphi 0, %s23
    %s24 = sphi 0, %s21
    %s25 = sphi 0, %s24
    %s41 = sphi 0, %s25
    %s47 = sphi 0, %s49
    %s50 = sphi 0, %s47
    %s51 = sphi 0, %s50
    %s67 = sphi 0, %s51
    %s71 = sphi 0, %s71
    %s73 = sphi 0, %s71
    %s74 = sphi 0, %s73
    %s88 = sphi 0, %s74
    %s92 = sphi 0, %s92
    %s94 = sphi 0, %s92
    %s95 = sphi 0, %s94
    %s109 = sphi 0, %s95
    %s113 = sphi 0, %s113
    %s115 = sphi 0, %s113
    %s116 = sphi 0, %s115
    %s130 = sphi 0, %s116
    %s136 = sphi 0, %s138
    %s139 = sphi 0, %s136
    %s140 = sphi 0, %s139
    %s156 = sphi 0, %s140
  $region4: #{residual_block_forward.6} parent=0 // loop_header_branch
    %14 = sbr.rel (%p12) target = $region8
  $region5: #{residual_block_forward.6} parent=0 // loop_body
    %s16 = ssub.s32 %s11, 1
    %s17 = ssub.s32 %s11, 2
    %s18 = sadd.s32 %s11, 1
    %s19 = ssub.s32 %s11, %s18
    %p20 = scmp.eq.s32.totalorder %s19, 0
    %s22 = sadd.s32 %s21, 1
    %s23 = scalar_select %p20, %s21, %s22
    %p26 = pneg %p20
    %p27 = scmp.eq.s32.totalorder %s11, 1
    %p28 = por %p26, %p27
    %p29 = scmp.ne.s32.totalorder %s21, %s24
    %p30 = scmp.eq.s32.totalorder %s11, 0
    %p31 = por %p29, %p30
    %p32 = scmp.ne.s32.totalorder %s21, %s24
    %p33 = scmp.eq.s32.totalorder %s16, 1
    %p34 = por %p32, %p33
    %p35 = scmp.ne.s32.totalorder %s24, %s25
    %p36 = scmp.eq.s32.totalorder %s16, 0
    %p37 = por %p35, %p36
    %p38 = scmp.ne.s32.totalorder %s24, %s25
    %p39 = scmp.eq.s32.totalorder %s17, 1
    %p40 = por %p38, %p39
    %p42 = scmp.ne.s32.totalorder %s25, %s41
    %p43 = scmp.eq.s32.totalorder %s17, 0
    %p44 = por %p42, %p43
    %s45 = ssub.s32 %s11, %s18
    %p46 = scmp.eq.s32.totalorder %s45, 0
    %s48 = sadd.s32 %s47, 1
    %s49 = scalar_select %p46, %s47, %s48
    %p52 = pneg %p46
    %p53 = scmp.eq.s32.totalorder %s11, 1
    %p54 = por %p52, %p53
    %p55 = scmp.ne.s32.totalorder %s47, %s50
    %p56 = scmp.eq.s32.totalorder %s11, 0
    %p57 = por %p55, %p56
    %p58 = scmp.ne.s32.totalorder %s47, %s50
    %p59 = scmp.eq.s32.totalorder %s16, 1
    %p60 = por %p58, %p59
    %p61 = scmp.ne.s32.totalorder %s50, %s51
    %p62 = scmp.eq.s32.totalorder %s16, 0
    %p63 = por %p61, %p62
    %p64 = scmp.ne.s32.totalorder %s50, %s51
    %p65 = scmp.eq.s32.totalorder %s17, 1
    %p66 = por %p64, %p65
    %p68 = scmp.ne.s32.totalorder %s51, %s67
    %p69 = scmp.eq.s32.totalorder %s17, 0
    %p70 = por %p68, %p69
    %s72 = sadd.s32 %s71, 1
    %p75 = scmp.eq.s32.totalorder %s11, 1
    %p76 = scmp.ne.s32.totalorder %s71, %s73
    %p77 = scmp.eq.s32.totalorder %s11, 0
    %p78 = por %p76, %p77
    %p79 = scmp.ne.s32.totalorder %s71, %s73
    %p80 = scmp.eq.s32.totalorder %s16, 1
    %p81 = por %p79, %p80
    %p82 = scmp.ne.s32.totalorder %s73, %s74
    %p83 = scmp.eq.s32.totalorder %s16, 0
    %p84 = por %p82, %p83
    %p85 = scmp.ne.s32.totalorder %s73, %s74
    %p86 = scmp.eq.s32.totalorder %s17, 1
    %p87 = por %p85, %p86
    %p89 = scmp.ne.s32.totalorder %s74, %s88
    %p90 = scmp.eq.s32.totalorder %s17, 0
    %p91 = por %p89, %p90
    %s93 = sadd.s32 %s92, 1
    %p96 = scmp.eq.s32.totalorder %s11, 1
    %p97 = scmp.ne.s32.totalorder %s92, %s94
    %p98 = scmp.eq.s32.totalorder %s11, 0
    %p99 = por %p97, %p98
    %p100 = scmp.ne.s32.totalorder %s92, %s94
    %p101 = scmp.eq.s32.totalorder %s16, 1
    %p102 = por %p100, %p101
    %p103 = scmp.ne.s32.totalorder %s94, %s95
    %p104 = scmp.eq.s32.totalorder %s16, 0
    %p105 = por %p103, %p104
    %p106 = scmp.ne.s32.totalorder %s94, %s95
    %p107 = scmp.eq.s32.totalorder %s17, 1
    %p108 = por %p106, %p107
    %p110 = scmp.ne.s32.totalorder %s95, %s109
    %p111 = scmp.eq.s32.totalorder %s17, 0
    %p112 = por %p110, %p111
    %s114 = sadd.s32 %s113, 1
    %p117 = scmp.eq.s32.totalorder %s11, 1
    %p118 = scmp.ne.s32.totalorder %s113, %s115
    %p119 = scmp.eq.s32.totalorder %s11, 0
    %p120 = por %p118, %p119
    %p121 = scmp.ne.s32.totalorder %s113, %s115
    %p122 = scmp.eq.s32.totalorder %s16, 1
    %p123 = por %p121, %p122
    %p124 = scmp.ne.s32.totalorder %s115, %s116
    %p125 = scmp.eq.s32.totalorder %s16, 0
    %p126 = por %p124, %p125
    %p127 = scmp.ne.s32.totalorder %s115, %s116
    %p128 = scmp.eq.s32.totalorder %s17, 1
    %p129 = por %p127, %p128
    %p131 = scmp.ne.s32.totalorder %s116, %s130
    %p132 = scmp.eq.s32.totalorder %s17, 0
    %p133 = por %p131, %p132
    %s134 = ssub.s32 %s11, %s18
    %p135 = scmp.eq.s32.totalorder %s134, 0
    %s137 = sadd.s32 %s136, 1
    %s138 = scalar_select %p135, %s136, %s137
    %p141 = pneg %p135
    %p142 = scmp.eq.s32.totalorder %s11, 1
    %p143 = por %p141, %p142
    %p144 = scmp.ne.s32.totalorder %s136, %s139
    %p145 = scmp.eq.s32.totalorder %s11, 0
    %p146 = por %p144, %p145
    %p147 = scmp.ne.s32.totalorder %s136, %s139
    %p148 = scmp.eq.s32.totalorder %s16, 1
    %p149 = por %p147, %p148
    %p150 = scmp.ne.s32.totalorder %s139, %s140
    %p151 = scmp.eq.s32.totalorder %s16, 0
    %p152 = por %p150, %p151
    %p153 = scmp.ne.s32.totalorder %s139, %s140
    %p154 = scmp.eq.s32.totalorder %s17, 1
    %p155 = por %p153, %p154
    %p157 = scmp.ne.s32.totalorder %s140, %s156
    %p158 = scmp.eq.s32.totalorder %s17, 0
    %p159 = por %p157, %p158
    %p160 = scmp.le.s32.totalorder 1, %s11
    %p161 = scmp.lt.s32.totalorder %s11, 3
    %p162 = pnand %p160, %p161
    %p163 = pneg %p162
    // Predicated region
    $region9: #{residual_block_forward.6} parent=5 // pred_check
      _
    $region10: #{residual_block_forward.6} parent=5 // pred_check_branch
      %165 = sbr.rel (%p162) target = $region12
    $region11: #{residual_block_forward.6} parent=5 // pred_region
      %s166 = ssub.s32 %s11, 1
      // Predicated region
      $region13: #{residual_block_forward.6} parent=11 // pred_check
        %p167 = pneg %p84
      $region14: #{residual_block_forward.6} parent=11 // pred_check_branch
        %169 = sbr.rel (%p167) target = $region16
      $region15: #{residual_block_forward.6} parent=11 // pred_region
        _
      $region16: #{residual_block_forward.6} parent=11 // pred_fallthru
        _
      // Predicated region
      $region17: #{residual_block_forward.6} parent=11 // pred_check
        %p170 = pneg %p105
      $region18: #{residual_block_forward.6} parent=11 // pred_check_branch
        %172 = sbr.rel (%p170) target = $region20
      $region19: #{residual_block_forward.6} parent=11 // pred_region
        _
      $region20: #{residual_block_forward.6} parent=11 // pred_fallthru
        _
      // Predicated region
      $region21: #{residual_block_forward.6} parent=11 // pred_check
        %p173 = pneg %p126
      $region22: #{residual_block_forward.6} parent=11 // pred_check_branch
        %175 = sbr.rel (%p173) target = $region24
      $region23: #{residual_block_forward.6} parent=11 // pred_region
        _
      $region24: #{residual_block_forward.6} parent=11 // pred_fallthru
        _
    $region12: #{residual_block_forward.6} parent=5 // pred_fallthru
      _
    %p176 = scmp.lt.s32.totalorder %s11, 2
    // Predicated region
    $region25: #{residual_block_forward.6} parent=5 // pred_check
      %p177 = pneg %p176
    $region26: #{residual_block_forward.6} parent=5 // pred_check_branch
      %179 = sbr.rel (%p177) target = $region28
    $region27: #{residual_block_forward.6} parent=5 // pred_region
      // Predicated region
      $region29: #{residual_block_forward.6} parent=27 // pred_check
        %p180 = pneg %p31
      $region30: #{residual_block_forward.6} parent=27 // pred_check_branch
        %182 = sbr.rel (%p180) target = $region32
      $region31: #{residual_block_forward.6} parent=27 // pred_region
        %p183 = scmp.lt.s32.totalorder %s11, 1
        %s184 = scalar_select %p183, %s11, 1
        %s185 = smul.addr %s184, 32
        %s186 = smul.addr %s185, 8
        %s187 = scalar_lea.vmem %s0, %s186
      $region32: #{residual_block_forward.6} parent=27 // pred_fallthru
        _
      // Predicated region
      $region33: #{residual_block_forward.6} parent=27 // pred_check
        %p188 = pneg %p57
      $region34: #{residual_block_forward.6} parent=27 // pred_check_branch
        %190 = sbr.rel (%p188) target = $region36
      $region35: #{residual_block_forward.6} parent=27 // pred_region
        %p191 = scmp.lt.s32.totalorder %s11, 1
        %s192 = scalar_select %p191, %s11, 1
        %s193 = scalar_lea.vmem %s1, %s192
      $region36: #{residual_block_forward.6} parent=27 // pred_fallthru
        _
    $region28: #{residual_block_forward.6} parent=5 // pred_fallthru
      _
    %p194 = scmp.le.s32.totalorder 1, %s11
    %p195 = scmp.lt.s32.totalorder %s11, 3
    %p196 = pnand %p194, %p195
    %p197 = pneg %p196
    // Predicated region
    $region37: #{residual_block_forward.6} parent=5 // pred_check
      _
    $region38: #{residual_block_forward.6} parent=5 // pred_check_branch
      %199 = sbr.rel (%p196) target = $region40
    $region39: #{residual_block_forward.6} parent=5 // pred_region
      %s200 = ssub.s32 %s11, 1
      %p201 = scmp.lt.s32.totalorder %s16, 1
      %s202 = scalar_select %p201, %s16, 1
      %s203 = smul.addr %s202, 32
      %s204 = smul.addr %s203, 8
      %s205 = scalar_lea.vmem %s0, %s204
      %p206 = pneg %p37
      %p207 = pneg %p34
      %p208 = scmp.lt.s32.totalorder %s16, 1
      %s209 = scalar_select %p208, %s16, 1
      %s210 = scalar_lea.vmem %s1, %s209
      %p211 = pneg %p63
      %p212 = pneg %p60
      %p213 = pneg %p84
      %p214 = pneg %p81
      %p215 = pneg %p105
      %p216 = pneg %p102
      %p217 = pneg %p126
      %p218 = pneg %p123
      %p219 = pneg %p152
      %p220 = pneg %p149
      %p221 = scmp.lt.s32.totalorder %s16, 1
      %s222 = scalar_select %p221, %s16, 1
      %s223 = smul.addr %s222, 54
      %s224 = smul.addr %s223, 4
      %s225 = scalar_lea.vmem %s5, %s224
      %p226 = scmp.lt.s32.totalorder %s16, 1
      %s227 = scalar_select %p226, %s16, 1
      %s228 = smul.addr %s227, 32
      %s229 = smul.addr %s228, 8
      %s230 = scalar_lea.vmem %s0, %s229
      %p231 = scmp.lt.s32.totalorder %s16, 1
      %s232 = scalar_select %p231, %s16, 1
      %s233 = scalar_lea.vmem %s1, %s232
      %p234 = scmp.lt.s32.totalorder %s16, 1
      %s235 = scalar_select %p234, %s16, 1
      %s236 = smul.addr %s235, 54
      %s237 = smul.addr %s236, 4
      %s238 = scalar_lea.vmem %s5, %s237
      %v240 = vld [vmem:[%s230] sm:$0xff]
      %v241 = vld [vmem:[%s230 + $0x8] sm:$0xff]
      %v242 = vld [vmem:[%s230 + $0x10] sm:$0xff]
      %v243 = vld [vmem:[%s230 + $0x18] sm:$0xff]
      %v244 = vld [vmem:[%s230 + $0x20] sm:$0xff]
      %v245 = vld [vmem:[%s230 + $0x28] sm:$0xff]
      %v246 = vld [vmem:[%s230 + $0x30] sm:$0xff]
      %v247 = vld [vmem:[%s230 + $0x38] sm:$0xff]
      %v248 = vld [vmem:[%s230 + $0x40] sm:$0xff]
      %v249 = vld [vmem:[%s230 + $0x48] sm:$0xff]
      %v250 = vld [vmem:[%s230 + $0x50] sm:$0xff]
      %v251 = vld [vmem:[%s230 + $0x58] sm:$0xff]
      %v252 = vld [vmem:[%s230 + $0x60] sm:$0xff]
      %v253 = vld [vmem:[%s230 + $0x68] sm:$0xff]
      %v254 = vld [vmem:[%s230 + $0x70] sm:$0xff]
      %v255 = vld [vmem:[%s230 + $0x78] sm:$0xff]
      %v256 = vld [vmem:[%s230 + $0x80] sm:$0xff]
      %v257 = vld [vmem:[%s230 + $0x88] sm:$0xff]
      %v258 = vld [vmem:[%s230 + $0x90] sm:$0xff]
      %v259 = vld [vmem:[%s230 + $0x98] sm:$0xff]
      %v260 = vld [vmem:[%s230 + $0xa0] sm:$0xff]
      %v261 = vld [vmem:[%s230 + $0xa8] sm:$0xff]
      %v262 = vld [vmem:[%s230 + $0xb0] sm:$0xff]
      %v263 = vld [vmem:[%s230 + $0xb8] sm:$0xff]
      %v264 = vld [vmem:[%s230 + $0xc0] sm:$0xff]
      %v265 = vld [vmem:[%s230 + $0xc8] sm:$0xff]
      %v266 = vld [vmem:[%s230 + $0xd0] sm:$0xff]
      %v267 = vld [vmem:[%s230 + $0xd8] sm:$0xff]
      %v268 = vld [vmem:[%s230 + $0xe0] sm:$0xff]
      %v269 = vld [vmem:[%s230 + $0xe8] sm:$0xff]
      %v270 = vld [vmem:[%s230 + $0xf0] sm:$0xff]
      %v271 = vld [vmem:[%s230 + $0xf8] sm:$0xff]
      %v272 = vld [vmem:[%s233] sm:$0x1]
      %v274 = vperm.slane %v272, 0
      %v276 = vadd.f32 %v240, %v274
      %v277 = vadd.f32 %v241, %v274
      %v278 = vadd.f32 %v242, %v274
      %v279 = vadd.f32 %v243, %v274
      %v280 = vadd.f32 %v244, %v274
      %v281 = vadd.f32 %v245, %v274
      %v282 = vadd.f32 %v246, %v274
      %v283 = vadd.f32 %v247, %v274
      %v284 = vadd.f32 %v248, %v274
      %v285 = vadd.f32 %v249, %v274
      %v286 = vadd.f32 %v250, %v274
      %v287 = vadd.f32 %v251, %v274
      %v288 = vadd.f32 %v252, %v274
      %v289 = vadd.f32 %v253, %v274
      %v290 = vadd.f32 %v254, %v274
      %v291 = vadd.f32 %v255, %v274
      %v292 = vadd.f32 %v256, %v274
      %v293 = vadd.f32 %v257, %v274
      %v294 = vadd.f32 %v258, %v274
      %v295 = vadd.f32 %v259, %v274
      %v296 = vadd.f32 %v260, %v274
      %v297 = vadd.f32 %v261, %v274
      %v298 = vadd.f32 %v262, %v274
      %v299 = vadd.f32 %v263, %v274
      %v300 = vadd.f32 %v264, %v274
      %v301 = vadd.f32 %v265, %v274
      %v302 = vadd.f32 %v266, %v274
      %v303 = vadd.f32 %v267, %v274
      %v304 = vadd.f32 %v268, %v274
      %v305 = vadd.f32 %v269, %v274
      %v306 = vadd.f32 %v270, %v274
      %v307 = vadd.f32 %v271, %v274
      %v308 = vld [vmem:[%s2] sm:$0x1]
      %v309 = vld [vmem:[%s3] sm:$0x1]
      %v310 = vld [vmem:[%s4] sm:$0xff]
      %v311 = vld [vmem:[%s4 + $0x8] sm:$0xff]
      %v312 = vld [vmem:[%s4 + $0x10] sm:$0xff]
      %v313 = vld [vmem:[%s4 + $0x18] sm:$0xff]
      %v314 = vld [vmem:[%s4 + $0x20] sm:$0xff]
      %v315 = vld [vmem:[%s4 + $0x28] sm:$0xff]
      %v316 = vld [vmem:[%s4 + $0x30] sm:$0xff]
      %v317 = vld [vmem:[%s4 + $0x38] sm:$0xff]
      %v318 = vld [vmem:[%s4 + $0x40] sm:$0xff]
      %v319 = vld [vmem:[%s4 + $0x48] sm:$0xff]
      %v320 = vld [vmem:[%s4 + $0x50] sm:$0xff]
      %v321 = vld [vmem:[%s4 + $0x58] sm:$0xff]
      %v322 = vld [vmem:[%s4 + $0x60] sm:$0xff]
      %v323 = vld [vmem:[%s4 + $0x68] sm:$0xff]
      %v324 = vld [vmem:[%s4 + $0x70] sm:$0xff]
      %v325 = vld [vmem:[%s4 + $0x78] sm:$0xff]
      %v326 = vadd.f32 %v276, %v277
      %v327 = vadd.f32 %v326, %v278
      %v328 = vadd.f32 %v327, %v279
      %v329 = vadd.f32 %v328, %v280
      %v330 = vadd.f32 %v329, %v281
      %v331 = vadd.f32 %v330, %v282
      %v332 = vadd.f32 %v331, %v283
      %v333 = vadd.f32 %v332, %v284
      %v334 = vadd.f32 %v333, %v285
      %v335 = vadd.f32 %v334, %v286
      %v336 = vadd.f32 %v335, %v287
      %v337 = vadd.f32 %v336, %v288
      %v338 = vadd.f32 %v337, %v289
      %v339 = vadd.f32 %v338, %v290
      %v340 = vadd.f32 %v339, %v291
      %v341 = vadd.f32 %v340, %v292
      %v342 = vadd.f32 %v341, %v293
      %v343 = vadd.f32 %v342, %v294
      %v344 = vadd.f32 %v343, %v295
      %v345 = vadd.f32 %v344, %v296
      %v346 = vadd.f32 %v345, %v297
      %v347 = vadd.f32 %v346, %v298
      %v348 = vadd.f32 %v347, %v299
      %v349 = vadd.f32 %v348, %v300
      %v350 = vadd.f32 %v349, %v301
      %v351 = vadd.f32 %v350, %v302
      %v352 = vadd.f32 %v351, %v303
      %v353 = vadd.f32 %v352, %v304
      %v354 = vadd.f32 %v353, %v305
      %v355 = vadd.f32 %v354, %v306
      %v356 = vadd.f32 %v355, %v307
      %v357 = vrot.slane %v356, 4
      %v358 = vadd.f32 %v356, %v357
      %v359 = vrot.slane %v358, 2
      %v360 = vadd.f32 %v358, %v359
      %v361 = vrot.slane %v360, 1
      %v362 = vadd.f32 %v360, %v361
      %363 = vmatpush.msra.mxu0 %v325
      %364 = vmatpush.msra.mxu0 %v324
      %365 = vmatpush.msra.mxu0 %v323
      %366 = vmatpush.msra.mxu0 %v322
      %367 = vmatpush.msra.mxu0 %v321
      %368 = vmatpush.msra.mxu0 %v320
      %369 = vmatpush.msra.mxu0 %v319
      %370 = vmatpush.msra.mxu0 %v318
      %371 = vmatpush.msra.mxu0 %v317
      %372 = vmatpush.msra.mxu0 %v316
      %373 = vmatpush.msra.mxu0 %v315
      %374 = vmatpush.msra.mxu0 %v314
      %375 = vmatpush.msra.mxu0 %v313
      %376 = vmatpush.msra.mxu0 %v312
      %377 = vmatpush.msra.mxu0 %v311
      %378 = vmatpush.msra.mxu0 %v310
      %379 = vmatmul.f32.gmra.mxu0 %v362
      %v380 = vpop.f32.mrf.mxu0
      %v381 = vadd.f32 0.0, %v380
      %382 = vdwg.mxu0
      %v383 = vrcp.pop 1024.0
      %v384 = vmul.f32 1024.0, %v383
      %v385 = vsub.f32 1.0, %v384
      %v386 = vmul.f32 %v383, %v385
      %v387 = vadd.f32 %v383, %v386
      %vm388 = vweird.f32 %v383
      %v389 = vsel %vm388, %v383, %v387
      %v390 = vmul.f32 %v381, %v389
      %v391 = vperm.slane %v390, 0
      %v392 = vsub.f32 %v276, %v391
      %v393 = vsub.f32 %v277, %v391
      %v394 = vsub.f32 %v278, %v391
      %v395 = vsub.f32 %v279, %v391
      %v396 = vsub.f32 %v280, %v391
      %v397 = vsub.f32 %v281, %v391
      %v398 = vsub.f32 %v282, %v391
      %v399 = vsub.f32 %v283, %v391
      %v400 = vsub.f32 %v284, %v391
      %v401 = vsub.f32 %v285, %v391
      %v402 = vsub.f32 %v286, %v391
      %v403 = vsub.f32 %v287, %v391
      %v404 = vsub.f32 %v288, %v391
      %v405 = vsub.f32 %v289, %v391
      %v406 = vsub.f32 %v290, %v391
      %v407 = vsub.f32 %v291, %v391
      %v408 = vsub.f32 %v292, %v391
      %v409 = vsub.f32 %v293, %v391
      %v410 = vsub.f32 %v294, %v391
      %v411 = vsub.f32 %v295, %v391
      %v412 = vsub.f32 %v296, %v391
      %v413 = vsub.f32 %v297, %v391
      %v414 = vsub.f32 %v298, %v391
      %v415 = vsub.f32 %v299, %v391
      %v416 = vsub.f32 %v300, %v391
      %v417 = vsub.f32 %v301, %v391
      %v418 = vsub.f32 %v302, %v391
      %v419 = vsub.f32 %v303, %v391
      %v420 = vsub.f32 %v304, %v391
      %v421 = vsub.f32 %v305, %v391
      %v422 = vsub.f32 %v306, %v391
      %v423 = vsub.f32 %v307, %v391
      %v424 = vmul.f32 %v392, %v392
      %v425 = vmul.f32 %v393, %v393
      %v426 = vmul.f32 %v394, %v394
      %v427 = vmul.f32 %v395, %v395
      %v428 = vmul.f32 %v396, %v396
      %v429 = vmul.f32 %v397, %v397
      %v430 = vmul.f32 %v398, %v398
      %v431 = vmul.f32 %v399, %v399
      %v432 = vmul.f32 %v400, %v400
      %v433 = vmul.f32 %v401, %v401
      %v434 = vmul.f32 %v402, %v402
      %v435 = vmul.f32 %v403, %v403
      %v436 = vmul.f32 %v404, %v404
      %v437 = vmul.f32 %v405, %v405
      %v438 = vmul.f32 %v406, %v406
      %v439 = vmul.f32 %v407, %v407
      %v440 = vmul.f32 %v408, %v408
      %v441 = vmul.f32 %v409, %v409
      %v442 = vmul.f32 %v410, %v410
      %v443 = vmul.f32 %v411, %v411
      %v444 = vmul.f32 %v412, %v412
      %v445 = vmul.f32 %v413, %v413
      %v446 = vmul.f32 %v414, %v414
      %v447 = vmul.f32 %v415, %v415
      %v448 = vmul.f32 %v416, %v416
      %v449 = vmul.f32 %v417, %v417
      %v450 = vmul.f32 %v418, %v418
      %v451 = vmul.f32 %v419, %v419
      %v452 = vmul.f32 %v420, %v420
      %v453 = vmul.f32 %v421, %v421
      %v454 = vmul.f32 %v422, %v422
      %v455 = vmul.f32 %v423, %v423
      %v456 = vadd.f32 %v424, %v425
      %v457 = vadd.f32 %v456, %v426
      %v458 = vadd.f32 %v457, %v427
      %v459 = vadd.f32 %v458, %v428
      %v460 = vadd.f32 %v459, %v429
      %v461 = vadd.f32 %v460, %v430
      %v462 = vadd.f32 %v461, %v431
      %v463 = vadd.f32 %v462, %v432
      %v464 = vadd.f32 %v463, %v433
      %v465 = vadd.f32 %v464, %v434
      %v466 = vadd.f32 %v465, %v435
      %v467 = vadd.f32 %v466, %v436
      %v468 = vadd.f32 %v467, %v437
      %v469 = vadd.f32 %v468, %v438
      %v470 = vadd.f32 %v469, %v439
      %v471 = vadd.f32 %v470, %v440
      %v472 = vadd.f32 %v471, %v441
      %v473 = vadd.f32 %v472, %v442
      %v474 = vadd.f32 %v473, %v443
      %v475 = vadd.f32 %v474, %v444
      %v476 = vadd.f32 %v475, %v445
      %v477 = vadd.f32 %v476, %v446
      %v478 = vadd.f32 %v477, %v447
      %v479 = vadd.f32 %v478, %v448
      %v480 = vadd.f32 %v479, %v449
      %v481 = vadd.f32 %v480, %v450
      %v482 = vadd.f32 %v481, %v451
      %v483 = vadd.f32 %v482, %v452
      %v484 = vadd.f32 %v483, %v453
      %v485 = vadd.f32 %v484, %v454
      %v486 = vadd.f32 %v485, %v455
      %v487 = vrot.slane %v486, 4
      %v488 = vadd.f32 %v486, %v487
      %v489 = vrot.slane %v488, 2
      %v490 = vadd.f32 %v488, %v489
      %v491 = vrot.slane %v490, 1
      %v492 = vadd.f32 %v490, %v491
      %493 = vmatpush.msra.mxu0 %v325
      %494 = vmatpush.msra.mxu0 %v324
      %495 = vmatpush.msra.mxu0 %v323
      %496 = vmatpush.msra.mxu0 %v322
      %497 = vmatpush.msra.mxu0 %v321
      %498 = vmatpush.msra.mxu0 %v320
      %499 = vmatpush.msra.mxu0 %v319
      %500 = vmatpush.msra.mxu0 %v318
      %501 = vmatpush.msra.mxu0 %v317
      %502 = vmatpush.msra.mxu0 %v316
      %503 = vmatpush.msra.mxu0 %v315
      %504 = vmatpush.msra.mxu0 %v314
      %505 = vmatpush.msra.mxu0 %v313
      %506 = vmatpush.msra.mxu0 %v312
      %507 = vmatpush.msra.mxu0 %v311
      %508 = vmatpush.msra.mxu0 %v310
      %509 = vmatmul.f32.gmra.mxu0 %v492
      %v510 = vpop.f32.mrf.mxu0
      %v511 = vadd.f32 0.0, %v510
      %512 = vdwg.mxu0
      %v513 = vmul.f32 %v511, %v389
      %v514 = vadd.f32 %v513, 1e-05
      %v515 = vrsqrt.pop %v514
      %v516 = vmul.f32 %v515, %v514
      %v517 = vmul.f32 %v516, %v515
      %v518 = vmul.f32 0.5, %v517
      %v519 = vsub.f32 1.5, %v518
      %v520 = vmul.f32 %v515, %v519
      %vm521 = vweird.f32 %v514
      %vm522 = vweird.f32 %v515
      %vm523 = vmor %vm521, %vm522
      %v524 = vsel %vm523, %v515, %v520
      %v525 = vperm.slane %v524, 0
      %v526 = vmul.f32 %v392, %v525
      %v527 = vmul.f32 %v393, %v525
      %v528 = vmul.f32 %v394, %v525
      %v529 = vmul.f32 %v395, %v525
      %v530 = vmul.f32 %v396, %v525
      %v531 = vmul.f32 %v397, %v525
      %v532 = vmul.f32 %v398, %v525
      %v533 = vmul.f32 %v399, %v525
      %v534 = vmul.f32 %v400, %v525
      %v535 = vmul.f32 %v401, %v525
      %v536 = vmul.f32 %v402, %v525
      %v537 = vmul.f32 %v403, %v525
      %v538 = vmul.f32 %v404, %v525
      %v539 = vmul.f32 %v405, %v525
      %v540 = vmul.f32 %v406, %v525
      %v541 = vmul.f32 %v407, %v525
      %v542 = vmul.f32 %v408, %v525
      %v543 = vmul.f32 %v409, %v525
      %v544 = vmul.f32 %v410, %v525
      %v545 = vmul.f32 %v411, %v525
      %v546 = vmul.f32 %v412, %v525
      %v547 = vmul.f32 %v413, %v525
      %v548 = vmul.f32 %v414, %v525
      %v549 = vmul.f32 %v415, %v525
      %v550 = vmul.f32 %v416, %v525
      %v551 = vmul.f32 %v417, %v525
      %v552 = vmul.f32 %v418, %v525
      %v553 = vmul.f32 %v419, %v525
      %v554 = vmul.f32 %v420, %v525
      %v555 = vmul.f32 %v421, %v525
      %v556 = vmul.f32 %v422, %v525
      %v557 = vmul.f32 %v423, %v525
      %v559 = vperm.slane %v308, 0
      %v561 = vmul.f32 %v526, %v559
      %v562 = vmul.f32 %v527, %v559
      %v563 = vmul.f32 %v528, %v559
      %v564 = vmul.f32 %v529, %v559
      %v565 = vmul.f32 %v530, %v559
      %v566 = vmul.f32 %v531, %v559
      %v567 = vmul.f32 %v532, %v559
      %v568 = vmul.f32 %v533, %v559
      %v569 = vmul.f32 %v534, %v559
      %v570 = vmul.f32 %v535, %v559
      %v571 = vmul.f32 %v536, %v559
      %v572 = vmul.f32 %v537, %v559
      %v573 = vmul.f32 %v538, %v559
      %v574 = vmul.f32 %v539, %v559
      %v575 = vmul.f32 %v540, %v559
      %v576 = vmul.f32 %v541, %v559
      %v577 = vmul.f32 %v542, %v559
      %v578 = vmul.f32 %v543, %v559
      %v579 = vmul.f32 %v544, %v559
      %v580 = vmul.f32 %v545, %v559
      %v581 = vmul.f32 %v546, %v559
      %v582 = vmul.f32 %v547, %v559
      %v583 = vmul.f32 %v548, %v559
      %v584 = vmul.f32 %v549, %v559
      %v585 = vmul.f32 %v550, %v559
      %v586 = vmul.f32 %v551, %v559
      %v587 = vmul.f32 %v552, %v559
      %v588 = vmul.f32 %v553, %v559
      %v589 = vmul.f32 %v554, %v559
      %v590 = vmul.f32 %v555, %v559
      %v591 = vmul.f32 %v556, %v559
      %v592 = vmul.f32 %v557, %v559
      %v594 = vperm.slane %v309, 0
      %v596 = vadd.f32 %v561, %v594
      %v597 = vadd.f32 %v562, %v594
      %v598 = vadd.f32 %v563, %v594
      %v599 = vadd.f32 %v564, %v594
      %v600 = vadd.f32 %v565, %v594
      %v601 = vadd.f32 %v566, %v594
      %v602 = vadd.f32 %v567, %v594
      %v603 = vadd.f32 %v568, %v594
      %v604 = vadd.f32 %v569, %v594
      %v605 = vadd.f32 %v570, %v594
      %v606 = vadd.f32 %v571, %v594
      %v607 = vadd.f32 %v572, %v594
      %v608 = vadd.f32 %v573, %v594
      %v609 = vadd.f32 %v574, %v594
      %v610 = vadd.f32 %v575, %v594
      %v611 = vadd.f32 %v576, %v594
      %v612 = vadd.f32 %v577, %v594
      %v613 = vadd.f32 %v578, %v594
      %v614 = vadd.f32 %v579, %v594
      %v615 = vadd.f32 %v580, %v594
      %v616 = vadd.f32 %v581, %v594
      %v617 = vadd.f32 %v582, %v594
      %v618 = vadd.f32 %v583, %v594
      %v619 = vadd.f32 %v584, %v594
      %v620 = vadd.f32 %v585, %v594
      %v621 = vadd.f32 %v586, %v594
      %v622 = vadd.f32 %v587, %v594
      %v623 = vadd.f32 %v588, %v594
      %v624 = vadd.f32 %v589, %v594
      %v625 = vadd.f32 %v590, %v594
      %v626 = vadd.f32 %v591, %v594
      %v627 = vadd.f32 %v592, %v594
      %v628 = vxor.u32 %v596, 2147483648
      %v629 = vxor.u32 %v597, 2147483648
      %v630 = vxor.u32 %v598, 2147483648
      %v631 = vxor.u32 %v599, 2147483648
      %v632 = vxor.u32 %v600, 2147483648
      %v633 = vxor.u32 %v601, 2147483648
      %v634 = vxor.u32 %v602, 2147483648
      %v635 = vxor.u32 %v603, 2147483648
      %v636 = vxor.u32 %v604, 2147483648
      %v637 = vxor.u32 %v605, 2147483648
      %v638 = vxor.u32 %v606, 2147483648
      %v639 = vxor.u32 %v607, 2147483648
      %v640 = vxor.u32 %v608, 2147483648
      %v641 = vxor.u32 %v609, 2147483648
      %v642 = vxor.u32 %v610, 2147483648
      %v643 = vxor.u32 %v611, 2147483648
      %v644 = vxor.u32 %v612, 2147483648
      %v645 = vxor.u32 %v613, 2147483648
      %v646 = vxor.u32 %v614, 2147483648
      %v647 = vxor.u32 %v615, 2147483648
      %v648 = vxor.u32 %v616, 2147483648
      %v649 = vxor.u32 %v617, 2147483648
      %v650 = vxor.u32 %v618, 2147483648
      %v651 = vxor.u32 %v619, 2147483648
      %v652 = vxor.u32 %v620, 2147483648
      %v653 = vxor.u32 %v621, 2147483648
      %v654 = vxor.u32 %v622, 2147483648
      %v655 = vxor.u32 %v623, 2147483648
      %v656 = vxor.u32 %v624, 2147483648
      %v657 = vxor.u32 %v625, 2147483648
      %v658 = vxor.u32 %v626, 2147483648
      %v659 = vxor.u32 %v627, 2147483648
      %v660 = vmul.f32 %v628, 1.442695
      %v661 = vpow.pop %v660
      %v662 = vmul.f32 %v629, 1.442695
      %v663 = vpow.pop %v662
      %v664 = vmul.f32 %v630, 1.442695
      %v665 = vpow.pop %v664
      %v666 = vmul.f32 %v631, 1.442695
      %v667 = vpow.pop %v666
      %v668 = vmul.f32 %v632, 1.442695
      %v669 = vpow.pop %v668
      %v670 = vmul.f32 %v633, 1.442695
      %v671 = vpow.pop %v670
      %v672 = vmul.f32 %v634, 1.442695
      %v673 = vpow.pop %v672
      %v674 = vmul.f32 %v635, 1.442695
      %v675 = vpow.pop %v674
      %v676 = vmul.f32 %v636, 1.442695
      %v677 = vpow.pop %v676
      %v678 = vmul.f32 %v637, 1.442695
      %v679 = vpow.pop %v678
      %v680 = vmul.f32 %v638, 1.442695
      %v681 = vpow.pop %v680
      %v682 = vmul.f32 %v639, 1.442695
      %v683 = vpow.pop %v682
      %v684 = vmul.f32 %v640, 1.442695
      %v685 = vpow.pop %v684
      %v686 = vmul.f32 %v641, 1.442695
      %v687 = vpow.pop %v686
      %v688 = vmul.f32 %v642, 1.442695
      %v689 = vpow.pop %v688
      %v690 = vmul.f32 %v643, 1.442695
      %v691 = vpow.pop %v690
      %v692 = vmul.f32 %v644, 1.442695
      %v693 = vpow.pop %v692
      %v694 = vmul.f32 %v645, 1.442695
      %v695 = vpow.pop %v694
      %v696 = vmul.f32 %v646, 1.442695
      %v697 = vpow.pop %v696
      %v698 = vmul.f32 %v647, 1.442695
      %v699 = vpow.pop %v698
      %v700 = vmul.f32 %v648, 1.442695
      %v701 = vpow.pop %v700
      %v702 = vmul.f32 %v649, 1.442695
      %v703 = vpow.pop %v702
      %v704 = vmul.f32 %v650, 1.442695
      %v705 = vpow.pop %v704
      %v706 = vmul.f32 %v651, 1.442695
      %v707 = vpow.pop %v706
      %v708 = vmul.f32 %v652, 1.442695
      %v709 = vpow.pop %v708
      %v710 = vmul.f32 %v653, 1.442695
      %v711 = vpow.pop %v710
      %v712 = vmul.f32 %v654, 1.442695
      %v713 = vpow.pop %v712
      %v714 = vmul.f32 %v655, 1.442695
      %v715 = vpow.pop %v714
      %v716 = vmul.f32 %v656, 1.442695
      %v717 = vpow.pop %v716
      %v718 = vmul.f32 %v657, 1.442695
      %v719 = vpow.pop %v718
      %v720 = vmul.f32 %v658, 1.442695
      %v721 = vpow.pop %v720
      %v722 = vmul.f32 %v659, 1.442695
      %v723 = vpow.pop %v722
      %v724 = vadd.f32 %v661, 1.0
      %v725 = vadd.f32 %v663, 1.0
      %v726 = vadd.f32 %v665, 1.0
      %v727 = vadd.f32 %v667, 1.0
      %v728 = vadd.f32 %v669, 1.0
      %v729 = vadd.f32 %v671, 1.0
      %v730 = vadd.f32 %v673, 1.0
      %v731 = vadd.f32 %v675, 1.0
      %v732 = vadd.f32 %v677, 1.0
      %v733 = vadd.f32 %v679, 1.0
      %v734 = vadd.f32 %v681, 1.0
      %v735 = vadd.f32 %v683, 1.0
      %v736 = vadd.f32 %v685, 1.0
      %v737 = vadd.f32 %v687, 1.0
      %v738 = vadd.f32 %v689, 1.0
      %v739 = vadd.f32 %v691, 1.0
      %v740 = vadd.f32 %v693, 1.0
      %v741 = vadd.f32 %v695, 1.0
      %v742 = vadd.f32 %v697, 1.0
      %v743 = vadd.f32 %v699, 1.0
      %v744 = vadd.f32 %v701, 1.0
      %v745 = vadd.f32 %v703, 1.0
      %v746 = vadd.f32 %v705, 1.0
      %v747 = vadd.f32 %v707, 1.0
      %v748 = vadd.f32 %v709, 1.0
      %v749 = vadd.f32 %v711, 1.0
      %v750 = vadd.f32 %v713, 1.0
      %v751 = vadd.f32 %v715, 1.0
      %v752 = vadd.f32 %v717, 1.0
      %v753 = vadd.f32 %v719, 1.0
      %v754 = vadd.f32 %v721, 1.0
      %v755 = vadd.f32 %v723, 1.0
      %v756 = vrcp.pop %v724
      %v757 = vmul.f32 %v724, %v756
      %v758 = vsub.f32 1.0, %v757
      %v759 = vmul.f32 %v756, %v758
      %v760 = vadd.f32 %v756, %v759
      %vm761 = vweird.f32 %v724
      %vm762 = vweird.f32 %v756
      %vm763 = vmor %vm761, %vm762
      %v764 = vsel %vm763, %v756, %v760
      %v765 = vand.u32 2147483647, %v724
      %vm766 = vcmp.eq.f32.partialorder %v765, 8.507059e+37
      %v767 = vand.u32 %v724, 2147483648
      %v768 = vor.u32 1.1754944e-38, %v767
      %v769 = vsel %vm766, %v768, %v764
      %v770 = vmul.f32 1.0, %v769
      %v771 = vrcp.pop %v725
      %v772 = vmul.f32 %v725, %v771
      %v773 = vsub.f32 1.0, %v772
      %v774 = vmul.f32 %v771, %v773
      %v775 = vadd.f32 %v771, %v774
      %vm776 = vweird.f32 %v725
      %vm777 = vweird.f32 %v771
      %vm778 = vmor %vm776, %vm777
      %v779 = vsel %vm778, %v771, %v775
      %v780 = vand.u32 2147483647, %v725
      %vm781 = vcmp.eq.f32.partialorder %v780, 8.507059e+37
      %v782 = vand.u32 %v725, 2147483648
      %v783 = vor.u32 1.1754944e-38, %v782
      %v784 = vsel %vm781, %v783, %v779
      %v785 = vmul.f32 1.0, %v784
      %v786 = vrcp.pop %v726
      %v787 = vmul.f32 %v726, %v786
      %v788 = vsub.f32 1.0, %v787
      %v789 = vmul.f32 %v786, %v788
      %v790 = vadd.f32 %v786, %v789
      %vm791 = vweird.f32 %v726
      %vm792 = vweird.f32 %v786
      %vm793 = vmor %vm791, %vm792
      %v794 = vsel %vm793, %v786, %v790
      %v795 = vand.u32 2147483647, %v726
      %vm796 = vcmp.eq.f32.partialorder %v795, 8.507059e+37
      %v797 = vand.u32 %v726, 2147483648
      %v798 = vor.u32 1.1754944e-38, %v797
      %v799 = vsel %vm796, %v798, %v794
      %v800 = vmul.f32 1.0, %v799
      %v801 = vrcp.pop %v727
      %v802 = vmul.f32 %v727, %v801
      %v803 = vsub.f32 1.0, %v802
      %v804 = vmul.f32 %v801, %v803
      %v805 = vadd.f32 %v801, %v804
      %vm806 = vweird.f32 %v727
      %vm807 = vweird.f32 %v801
      %vm808 = vmor %vm806, %vm807
      %v809 = vsel %vm808, %v801, %v805
      %v810 = vand.u32 2147483647, %v727
      %vm811 = vcmp.eq.f32.partialorder %v810, 8.507059e+37
      %v812 = vand.u32 %v727, 2147483648
      %v813 = vor.u32 1.1754944e-38, %v812
      %v814 = vsel %vm811, %v813, %v809
      %v815 = vmul.f32 1.0, %v814
      %v816 = vrcp.pop %v728
      %v817 = vmul.f32 %v728, %v816
      %v818 = vsub.f32 1.0, %v817
      %v819 = vmul.f32 %v816, %v818
      %v820 = vadd.f32 %v816, %v819
      %vm821 = vweird.f32 %v728
      %vm822 = vweird.f32 %v816
      %vm823 = vmor %vm821, %vm822
      %v824 = vsel %vm823, %v816, %v820
      %v825 = vand.u32 2147483647, %v728
      %vm826 = vcmp.eq.f32.partialorder %v825, 8.507059e+37
      %v827 = vand.u32 %v728, 2147483648
      %v828 = vor.u32 1.1754944e-38, %v827
      %v829 = vsel %vm826, %v828, %v824
      %v830 = vmul.f32 1.0, %v829
      %v831 = vrcp.pop %v729
      %v832 = vmul.f32 %v729, %v831
      %v833 = vsub.f32 1.0, %v832
      %v834 = vmul.f32 %v831, %v833
      %v835 = vadd.f32 %v831, %v834
      %vm836 = vweird.f32 %v729
      %vm837 = vweird.f32 %v831
      %vm838 = vmor %vm836, %vm837
      %v839 = vsel %vm838, %v831, %v835
      %v840 = vand.u32 2147483647, %v729
      %vm841 = vcmp.eq.f32.partialorder %v840, 8.507059e+37
      %v842 = vand.u32 %v729, 2147483648
      %v843 = vor.u32 1.1754944e-38, %v842
      %v844 = vsel %vm841, %v843, %v839
      %v845 = vmul.f32 1.0, %v844
      %v846 = vrcp.pop %v730
      %v847 = vmul.f32 %v730, %v846
      %v848 = vsub.f32 1.0, %v847
      %v849 = vmul.f32 %v846, %v848
      %v850 = vadd.f32 %v846, %v849
      %vm851 = vweird.f32 %v730
      %vm852 = vweird.f32 %v846
      %vm853 = vmor %vm851, %vm852
      %v854 = vsel %vm853, %v846, %v850
      %v855 = vand.u32 2147483647, %v730
      %vm856 = vcmp.eq.f32.partialorder %v855, 8.507059e+37
      %v857 = vand.u32 %v730, 2147483648
      %v858 = vor.u32 1.1754944e-38, %v857
      %v859 = vsel %vm856, %v858, %v854
      %v860 = vmul.f32 1.0, %v859
      %v861 = vrcp.pop %v731
      %v862 = vmul.f32 %v731, %v861
      %v863 = vsub.f32 1.0, %v862
      %v864 = vmul.f32 %v861, %v863
      %v865 = vadd.f32 %v861, %v864
      %vm866 = vweird.f32 %v731
      %vm867 = vweird.f32 %v861
      %vm868 = vmor %vm866, %vm867
      %v869 = vsel %vm868, %v861, %v865
      %v870 = vand.u32 2147483647, %v731
      %vm871 = vcmp.eq.f32.partialorder %v870, 8.507059e+37
      %v872 = vand.u32 %v731, 2147483648
      %v873 = vor.u32 1.1754944e-38, %v872
      %v874 = vsel %vm871, %v873, %v869
      %v875 = vmul.f32 1.0, %v874
      %v876 = vrcp.pop %v732
      %v877 = vmul.f32 %v732, %v876
      %v878 = vsub.f32 1.0, %v877
      %v879 = vmul.f32 %v876, %v878
      %v880 = vadd.f32 %v876, %v879
      %vm881 = vweird.f32 %v732
      %vm882 = vweird.f32 %v876
      %vm883 = vmor %vm881, %vm882
      %v884 = vsel %vm883, %v876, %v880
      %v885 = vand.u32 2147483647, %v732
      %vm886 = vcmp.eq.f32.partialorder %v885, 8.507059e+37
      %v887 = vand.u32 %v732, 2147483648
      %v888 = vor.u32 1.1754944e-38, %v887
      %v889 = vsel %vm886, %v888, %v884
      %v890 = vmul.f32 1.0, %v889
      %v891 = vrcp.pop %v733
      %v892 = vmul.f32 %v733, %v891
      %v893 = vsub.f32 1.0, %v892
      %v894 = vmul.f32 %v891, %v893
      %v895 = vadd.f32 %v891, %v894
      %vm896 = vweird.f32 %v733
      %vm897 = vweird.f32 %v891
      %vm898 = vmor %vm896, %vm897
      %v899 = vsel %vm898, %v891, %v895
      %v900 = vand.u32 2147483647, %v733
      %vm901 = vcmp.eq.f32.partialorder %v900, 8.507059e+37
      %v902 = vand.u32 %v733, 2147483648
      %v903 = vor.u32 1.1754944e-38, %v902
      %v904 = vsel %vm901, %v903, %v899
      %v905 = vmul.f32 1.0, %v904
      %v906 = vrcp.pop %v734
      %v907 = vmul.f32 %v734, %v906
      %v908 = vsub.f32 1.0, %v907
      %v909 = vmul.f32 %v906, %v908
      %v910 = vadd.f32 %v906, %v909
      %vm911 = vweird.f32 %v734
      %vm912 = vweird.f32 %v906
      %vm913 = vmor %vm911, %vm912
      %v914 = vsel %vm913, %v906, %v910
      %v915 = vand.u32 2147483647, %v734
      %vm916 = vcmp.eq.f32.partialorder %v915, 8.507059e+37
      %v917 = vand.u32 %v734, 2147483648
      %v918 = vor.u32 1.1754944e-38, %v917
      %v919 = vsel %vm916, %v918, %v914
      %v920 = vmul.f32 1.0, %v919
      %v921 = vrcp.pop %v735
      %v922 = vmul.f32 %v735, %v921
      %v923 = vsub.f32 1.0, %v922
      %v924 = vmul.f32 %v921, %v923
      %v925 = vadd.f32 %v921, %v924
      %vm926 = vweird.f32 %v735
      %vm927 = vweird.f32 %v921
      %vm928 = vmor %vm926, %vm927
      %v929 = vsel %vm928, %v921, %v925
      %v930 = vand.u32 2147483647, %v735
      %vm931 = vcmp.eq.f32.partialorder %v930, 8.507059e+37
      %v932 = vand.u32 %v735, 2147483648
      %v933 = vor.u32 1.1754944e-38, %v932
      %v934 = vsel %vm931, %v933, %v929
      %v935 = vmul.f32 1.0, %v934
      %v936 = vrcp.pop %v736
      %v937 = vmul.f32 %v736, %v936
      %v938 = vsub.f32 1.0, %v937
      %v939 = vmul.f32 %v936, %v938
      %v940 = vadd.f32 %v936, %v939
      %vm941 = vweird.f32 %v736
      %vm942 = vweird.f32 %v936
      %vm943 = vmor %vm941, %vm942
      %v944 = vsel %vm943, %v936, %v940
      %v945 = vand.u32 2147483647, %v736
      %vm946 = vcmp.eq.f32.partialorder %v945, 8.507059e+37
      %v947 = vand.u32 %v736, 2147483648
      %v948 = vor.u32 1.1754944e-38, %v947
      %v949 = vsel %vm946, %v948, %v944
      %v950 = vmul.f32 1.0, %v949
      %v951 = vrcp.pop %v737
      %v952 = vmul.f32 %v737, %v951
      %v953 = vsub.f32 1.0, %v952
      %v954 = vmul.f32 %v951, %v953
      %v955 = vadd.f32 %v951, %v954
      %vm956 = vweird.f32 %v737
      %vm957 = vweird.f32 %v951
      %vm958 = vmor %vm956, %vm957
      %v959 = vsel %vm958, %v951, %v955
      %v960 = vand.u32 2147483647, %v737
      %vm961 = vcmp.eq.f32.partialorder %v960, 8.507059e+37
      %v962 = vand.u32 %v737, 2147483648
      %v963 = vor.u32 1.1754944e-38, %v962
      %v964 = vsel %vm961, %v963, %v959
      %v965 = vmul.f32 1.0, %v964
      %v966 = vrcp.pop %v738
      %v967 = vmul.f32 %v738, %v966
      %v968 = vsub.f32 1.0, %v967
      %v969 = vmul.f32 %v966, %v968
      %v970 = vadd.f32 %v966, %v969
      %vm971 = vweird.f32 %v738
      %vm972 = vweird.f32 %v966
      %vm973 = vmor %vm971, %vm972
      %v974 = vsel %vm973, %v966, %v970
      %v975 = vand.u32 2147483647, %v738
      %vm976 = vcmp.eq.f32.partialorder %v975, 8.507059e+37
      %v977 = vand.u32 %v738, 2147483648
      %v978 = vor.u32 1.1754944e-38, %v977
      %v979 = vsel %vm976, %v978, %v974
      %v980 = vmul.f32 1.0, %v979
      %v981 = vrcp.pop %v739
      %v982 = vmul.f32 %v739, %v981
      %v983 = vsub.f32 1.0, %v982
      %v984 = vmul.f32 %v981, %v983
      %v985 = vadd.f32 %v981, %v984
      %vm986 = vweird.f32 %v739
      %vm987 = vweird.f32 %v981
      %vm988 = vmor %vm986, %vm987
      %v989 = vsel %vm988, %v981, %v985
      %v990 = vand.u32 2147483647, %v739
      %vm991 = vcmp.eq.f32.partialorder %v990, 8.507059e+37
      %v992 = vand.u32 %v739, 2147483648
      %v993 = vor.u32 1.1754944e-38, %v992
      %v994 = vsel %vm991, %v993, %v989
      %v995 = vmul.f32 1.0, %v994
      %v996 = vrcp.pop %v740
      %v997 = vmul.f32 %v740, %v996
      %v998 = vsub.f32 1.0, %v997
      %v999 = vmul.f32 %v996, %v998
      %v1000 = vadd.f32 %v996, %v999
      %vm1001 = vweird.f32 %v740
      %vm1002 = vweird.f32 %v996
      %vm1003 = vmor %vm1001, %vm1002
      %v1004 = vsel %vm1003, %v996, %v1000
      %v1005 = vand.u32 2147483647, %v740
      %vm1006 = vcmp.eq.f32.partialorder %v1005, 8.507059e+37
      %v1007 = vand.u32 %v740, 2147483648
      %v1008 = vor.u32 1.1754944e-38, %v1007
      %v1009 = vsel %vm1006, %v1008, %v1004
      %v1010 = vmul.f32 1.0, %v1009
      %v1011 = vrcp.pop %v741
      %v1012 = vmul.f32 %v741, %v1011
      %v1013 = vsub.f32 1.0, %v1012
      %v1014 = vmul.f32 %v1011, %v1013
      %v1015 = vadd.f32 %v1011, %v1014
      %vm1016 = vweird.f32 %v741
      %vm1017 = vweird.f32 %v1011
      %vm1018 = vmor %vm1016, %vm1017
      %v1019 = vsel %vm1018, %v1011, %v1015
      %v1020 = vand.u32 2147483647, %v741
      %vm1021 = vcmp.eq.f32.partialorder %v1020, 8.507059e+37
      %v1022 = vand.u32 %v741, 2147483648
      %v1023 = vor.u32 1.1754944e-38, %v1022
      %v1024 = vsel %vm1021, %v1023, %v1019
      %v1025 = vmul.f32 1.0, %v1024
      %v1026 = vrcp.pop %v742
      %v1027 = vmul.f32 %v742, %v1026
      %v1028 = vsub.f32 1.0, %v1027
      %v1029 = vmul.f32 %v1026, %v1028
      %v1030 = vadd.f32 %v1026, %v1029
      %vm1031 = vweird.f32 %v742
      %vm1032 = vweird.f32 %v1026
      %vm1033 = vmor %vm1031, %vm1032
      %v1034 = vsel %vm1033, %v1026, %v1030
      %v1035 = vand.u32 2147483647, %v742
      %vm1036 = vcmp.eq.f32.partialorder %v1035, 8.507059e+37
      %v1037 = vand.u32 %v742, 2147483648
      %v1038 = vor.u32 1.1754944e-38, %v1037
      %v1039 = vsel %vm1036, %v1038, %v1034
      %v1040 = vmul.f32 1.0, %v1039
      %v1041 = vrcp.pop %v743
      %v1042 = vmul.f32 %v743, %v1041
      %v1043 = vsub.f32 1.0, %v1042
      %v1044 = vmul.f32 %v1041, %v1043
      %v1045 = vadd.f32 %v1041, %v1044
      %vm1046 = vweird.f32 %v743
      %vm1047 = vweird.f32 %v1041
      %vm1048 = vmor %vm1046, %vm1047
      %v1049 = vsel %vm1048, %v1041, %v1045
      %v1050 = vand.u32 2147483647, %v743
      %vm1051 = vcmp.eq.f32.partialorder %v1050, 8.507059e+37
      %v1052 = vand.u32 %v743, 2147483648
      %v1053 = vor.u32 1.1754944e-38, %v1052
      %v1054 = vsel %vm1051, %v1053, %v1049
      %v1055 = vmul.f32 1.0, %v1054
      %v1056 = vrcp.pop %v744
      %v1057 = vmul.f32 %v744, %v1056
      %v1058 = vsub.f32 1.0, %v1057
      %v1059 = vmul.f32 %v1056, %v1058
      %v1060 = vadd.f32 %v1056, %v1059
      %vm1061 = vweird.f32 %v744
      %vm1062 = vweird.f32 %v1056
      %vm1063 = vmor %vm1061, %vm1062
      %v1064 = vsel %vm1063, %v1056, %v1060
      %v1065 = vand.u32 2147483647, %v744
      %vm1066 = vcmp.eq.f32.partialorder %v1065, 8.507059e+37
      %v1067 = vand.u32 %v744, 2147483648
      %v1068 = vor.u32 1.1754944e-38, %v1067
      %v1069 = vsel %vm1066, %v1068, %v1064
      %v1070 = vmul.f32 1.0, %v1069
      %v1071 = vrcp.pop %v745
      %v1072 = vmul.f32 %v745, %v1071
      %v1073 = vsub.f32 1.0, %v1072
      %v1074 = vmul.f32 %v1071, %v1073
      %v1075 = vadd.f32 %v1071, %v1074
      %vm1076 = vweird.f32 %v745
      %vm1077 = vweird.f32 %v1071
      %vm1078 = vmor %vm1076, %vm1077
      %v1079 = vsel %vm1078, %v1071, %v1075
      %v1080 = vand.u32 2147483647, %v745
      %vm1081 = vcmp.eq.f32.partialorder %v1080, 8.507059e+37
      %v1082 = vand.u32 %v745, 2147483648
      %v1083 = vor.u32 1.1754944e-38, %v1082
      %v1084 = vsel %vm1081, %v1083, %v1079
      %v1085 = vmul.f32 1.0, %v1084
      %v1086 = vrcp.pop %v746
      %v1087 = vmul.f32 %v746, %v1086
      %v1088 = vsub.f32 1.0, %v1087
      %v1089 = vmul.f32 %v1086, %v1088
      %v1090 = vadd.f32 %v1086, %v1089
      %vm1091 = vweird.f32 %v746
      %vm1092 = vweird.f32 %v1086
      %vm1093 = vmor %vm1091, %vm1092
      %v1094 = vsel %vm1093, %v1086, %v1090
      %v1095 = vand.u32 2147483647, %v746
      %vm1096 = vcmp.eq.f32.partialorder %v1095, 8.507059e+37
      %v1097 = vand.u32 %v746, 2147483648
      %v1098 = vor.u32 1.1754944e-38, %v1097
      %v1099 = vsel %vm1096, %v1098, %v1094
      %v1100 = vmul.f32 1.0, %v1099
      %v1101 = vrcp.pop %v747
      %v1102 = vmul.f32 %v747, %v1101
      %v1103 = vsub.f32 1.0, %v1102
      %v1104 = vmul.f32 %v1101, %v1103
      %v1105 = vadd.f32 %v1101, %v1104
      %vm1106 = vweird.f32 %v747
      %vm1107 = vweird.f32 %v1101
      %vm1108 = vmor %vm1106, %vm1107
      %v1109 = vsel %vm1108, %v1101, %v1105
      %v1110 = vand.u32 2147483647, %v747
      %vm1111 = vcmp.eq.f32.partialorder %v1110, 8.507059e+37
      %v1112 = vand.u32 %v747, 2147483648
      %v1113 = vor.u32 1.1754944e-38, %v1112
      %v1114 = vsel %vm1111, %v1113, %v1109
      %v1115 = vmul.f32 1.0, %v1114
      %v1116 = vrcp.pop %v748
      %v1117 = vmul.f32 %v748, %v1116
      %v1118 = vsub.f32 1.0, %v1117
      %v1119 = vmul.f32 %v1116, %v1118
      %v1120 = vadd.f32 %v1116, %v1119
      %vm1121 = vweird.f32 %v748
      %vm1122 = vweird.f32 %v1116
      %vm1123 = vmor %vm1121, %vm1122
      %v1124 = vsel %vm1123, %v1116, %v1120
      %v1125 = vand.u32 2147483647, %v748
      %vm1126 = vcmp.eq.f32.partialorder %v1125, 8.507059e+37
      %v1127 = vand.u32 %v748, 2147483648
      %v1128 = vor.u32 1.1754944e-38, %v1127
      %v1129 = vsel %vm1126, %v1128, %v1124
      %v1130 = vmul.f32 1.0, %v1129
      %v1131 = vrcp.pop %v749
      %v1132 = vmul.f32 %v749, %v1131
      %v1133 = vsub.f32 1.0, %v1132
      %v1134 = vmul.f32 %v1131, %v1133
      %v1135 = vadd.f32 %v1131, %v1134
      %vm1136 = vweird.f32 %v749
      %vm1137 = vweird.f32 %v1131
      %vm1138 = vmor %vm1136, %vm1137
      %v1139 = vsel %vm1138, %v1131, %v1135
      %v1140 = vand.u32 2147483647, %v749
      %vm1141 = vcmp.eq.f32.partialorder %v1140, 8.507059e+37
      %v1142 = vand.u32 %v749, 2147483648
      %v1143 = vor.u32 1.1754944e-38, %v1142
      %v1144 = vsel %vm1141, %v1143, %v1139
      %v1145 = vmul.f32 1.0, %v1144
      %v1146 = vrcp.pop %v750
      %v1147 = vmul.f32 %v750, %v1146
      %v1148 = vsub.f32 1.0, %v1147
      %v1149 = vmul.f32 %v1146, %v1148
      %v1150 = vadd.f32 %v1146, %v1149
      %vm1151 = vweird.f32 %v750
      %vm1152 = vweird.f32 %v1146
      %vm1153 = vmor %vm1151, %vm1152
      %v1154 = vsel %vm1153, %v1146, %v1150
      %v1155 = vand.u32 2147483647, %v750
      %vm1156 = vcmp.eq.f32.partialorder %v1155, 8.507059e+37
      %v1157 = vand.u32 %v750, 2147483648
      %v1158 = vor.u32 1.1754944e-38, %v1157
      %v1159 = vsel %vm1156, %v1158, %v1154
      %v1160 = vmul.f32 1.0, %v1159
      %v1161 = vrcp.pop %v751
      %v1162 = vmul.f32 %v751, %v1161
      %v1163 = vsub.f32 1.0, %v1162
      %v1164 = vmul.f32 %v1161, %v1163
      %v1165 = vadd.f32 %v1161, %v1164
      %vm1166 = vweird.f32 %v751
      %vm1167 = vweird.f32 %v1161
      %vm1168 = vmor %vm1166, %vm1167
      %v1169 = vsel %vm1168, %v1161, %v1165
      %v1170 = vand.u32 2147483647, %v751
      %vm1171 = vcmp.eq.f32.partialorder %v1170, 8.507059e+37
      %v1172 = vand.u32 %v751, 2147483648
      %v1173 = vor.u32 1.1754944e-38, %v1172
      %v1174 = vsel %vm1171, %v1173, %v1169
      %v1175 = vmul.f32 1.0, %v1174
      %v1176 = vrcp.pop %v752
      %v1177 = vmul.f32 %v752, %v1176
      %v1178 = vsub.f32 1.0, %v1177
      %v1179 = vmul.f32 %v1176, %v1178
      %v1180 = vadd.f32 %v1176, %v1179
      %vm1181 = vweird.f32 %v752
      %vm1182 = vweird.f32 %v1176
      %vm1183 = vmor %vm1181, %vm1182
      %v1184 = vsel %vm1183, %v1176, %v1180
      %v1185 = vand.u32 2147483647, %v752
      %vm1186 = vcmp.eq.f32.partialorder %v1185, 8.507059e+37
      %v1187 = vand.u32 %v752, 2147483648
      %v1188 = vor.u32 1.1754944e-38, %v1187
      %v1189 = vsel %vm1186, %v1188, %v1184
      %v1190 = vmul.f32 1.0, %v1189
      %v1191 = vrcp.pop %v753
      %v1192 = vmul.f32 %v753, %v1191
      %v1193 = vsub.f32 1.0, %v1192
      %v1194 = vmul.f32 %v1191, %v1193
      %v1195 = vadd.f32 %v1191, %v1194
      %vm1196 = vweird.f32 %v753
      %vm1197 = vweird.f32 %v1191
      %vm1198 = vmor %vm1196, %vm1197
      %v1199 = vsel %vm1198, %v1191, %v1195
      %v1200 = vand.u32 2147483647, %v753
      %vm1201 = vcmp.eq.f32.partialorder %v1200, 8.507059e+37
      %v1202 = vand.u32 %v753, 2147483648
      %v1203 = vor.u32 1.1754944e-38, %v1202
      %v1204 = vsel %vm1201, %v1203, %v1199
      %v1205 = vmul.f32 1.0, %v1204
      %v1206 = vrcp.pop %v754
      %v1207 = vmul.f32 %v754, %v1206
      %v1208 = vsub.f32 1.0, %v1207
      %v1209 = vmul.f32 %v1206, %v1208
      %v1210 = vadd.f32 %v1206, %v1209
      %vm1211 = vweird.f32 %v754
      %vm1212 = vweird.f32 %v1206
      %vm1213 = vmor %vm1211, %vm1212
      %v1214 = vsel %vm1213, %v1206, %v1210
      %v1215 = vand.u32 2147483647, %v754
      %vm1216 = vcmp.eq.f32.partialorder %v1215, 8.507059e+37
      %v1217 = vand.u32 %v754, 2147483648
      %v1218 = vor.u32 1.1754944e-38, %v1217
      %v1219 = vsel %vm1216, %v1218, %v1214
      %v1220 = vmul.f32 1.0, %v1219
      %v1221 = vrcp.pop %v755
      %v1222 = vmul.f32 %v755, %v1221
      %v1223 = vsub.f32 1.0, %v1222
      %v1224 = vmul.f32 %v1221, %v1223
      %v1225 = vadd.f32 %v1221, %v1224
      %vm1226 = vweird.f32 %v755
      %vm1227 = vweird.f32 %v1221
      %vm1228 = vmor %vm1226, %vm1227
      %v1229 = vsel %vm1228, %v1221, %v1225
      %v1230 = vand.u32 2147483647, %v755
      %vm1231 = vcmp.eq.f32.partialorder %v1230, 8.507059e+37
      %v1232 = vand.u32 %v755, 2147483648
      %v1233 = vor.u32 1.1754944e-38, %v1232
      %v1234 = vsel %vm1231, %v1233, %v1229
      %v1235 = vmul.f32 1.0, %v1234
      %v1236 = vmul.f32 %v596, %v770
      %v1237 = vmul.f32 %v597, %v785
      %v1238 = vmul.f32 %v598, %v800
      %v1239 = vmul.f32 %v599, %v815
      %v1240 = vmul.f32 %v600, %v830
      %v1241 = vmul.f32 %v601, %v845
      %v1242 = vmul.f32 %v602, %v860
      %v1243 = vmul.f32 %v603, %v875
      %v1244 = vmul.f32 %v604, %v890
      %v1245 = vmul.f32 %v605, %v905
      %v1246 = vmul.f32 %v606, %v920
      %v1247 = vmul.f32 %v607, %v935
      %v1248 = vmul.f32 %v608, %v950
      %v1249 = vmul.f32 %v609, %v965
      %v1250 = vmul.f32 %v610, %v980
      %v1251 = vmul.f32 %v611, %v995
      %v1252 = vmul.f32 %v612, %v1010
      %v1253 = vmul.f32 %v613, %v1025
      %v1254 = vmul.f32 %v614, %v1040
      %v1255 = vmul.f32 %v615, %v1055
      %v1256 = vmul.f32 %v616, %v1070
      %v1257 = vmul.f32 %v617, %v1085
      %v1258 = vmul.f32 %v618, %v1100
      %v1259 = vmul.f32 %v619, %v1115
      %v1260 = vmul.f32 %v620, %v1130
      %v1261 = vmul.f32 %v621, %v1145
      %v1262 = vmul.f32 %v622, %v1160
      %v1263 = vmul.f32 %v623, %v1175
      %v1264 = vmul.f32 %v624, %v1190
      %v1265 = vmul.f32 %v625, %v1205
      %v1266 = vmul.f32 %v626, %v1220
      %v1267 = vmul.f32 %v627, %v1235
      %1268 = vst [vmem:[%s238] sm:$0xf] 0
      %1269 = vst [vmem:[%s238 + $0x4] sm:$0xf] 0
      %1270 = vst [vmem:[%s238 + $0x8] sm:$0xf] 0
      %1271 = vst [vmem:[%s238 + $0xc] sm:$0xf] 0
      %1272 = vst [vmem:[%s238 + $0x10] sm:$0xf] 0
      %1273 = vst [vmem:[%s238 + $0x14] sm:$0xf] 0
      %1274 = vst [vmem:[%s238 + $0x18] sm:$0xf] 0
      %1275 = vst [vmem:[%s238 + $0x1c] sm:$0xf] 0
      %1276 = vst [vmem:[%s238 + $0x20] sm:$0xf] 0
      %1277 = vst [vmem:[%s238 + $0x24] sm:$0xf] 0
      %1278 = vst [vmem:[%s238 + $0x28] sm:$0xf] 0
      %1279 = vst [vmem:[%s238 + $0x2c] sm:$0xf] 0
      %1280 = vst [vmem:[%s238 + $0x30] sm:$0xf] 0
      %1281 = vst [vmem:[%s238 + $0x34] sm:$0xf] 0
      %1282 = vst [vmem:[%s238 + $0x38] sm:$0xf] 0
      %1283 = vst [vmem:[%s238 + $0x3c] sm:$0xf] 0
      %1284 = vst [vmem:[%s238 + $0x40] sm:$0xf] 0
      %1285 = vst [vmem:[%s238 + $0x44] sm:$0xf] 0
      %1286 = vst [vmem:[%s238 + $0x48] sm:$0xf] 0
      %1287 = vst [vmem:[%s238 + $0x4c] sm:$0xf] 0
      %1288 = vst [vmem:[%s238 + $0x50] sm:$0xf] 0
      %1289 = vst [vmem:[%s238 + $0x54] sm:$0xf] 0
      %1290 = vst [vmem:[%s238 + $0x58] sm:$0xf] 0
      %1291 = vst [vmem:[%s238 + $0x5c] sm:$0xf] 0
      %1292 = vst [vmem:[%s238 + $0x60] sm:$0xf] 0
      %1293 = vst [vmem:[%s238 + $0x64] sm:$0xf] 0
      %1294 = vst [vmem:[%s238 + $0x68] sm:$0xf] 0
      %1295 = vst [vmem:[%s238 + $0x6c] sm:$0xf] 0
      %1296 = vst [vmem:[%s238 + $0x70] sm:$0xf] 0
      %1297 = vst [vmem:[%s238 + $0x74] sm:$0xf] 0
      %1298 = vst [vmem:[%s238 + $0x78] sm:$0xf] 0
      %1299 = vst [vmem:[%s238 + $0x7c] sm:$0xf] 0
      %1300 = vst [vmem:[%s238 + $0x80] sm:$0xf] 0
      %1301 = vst [vmem:[%s238 + $0x84] sm:$0xf] 0
      %1302 = vst [vmem:[%s238 + $0x88] sm:$0xf] 0
      %1303 = vst [vmem:[%s238 + $0x8c] sm:$0xf] 0
      %1304 = vst [vmem:[%s238 + $0x90] sm:$0xf] 0
      %1305 = vst [vmem:[%s238 + $0x94] sm:$0xf] 0
      %1306 = vst [vmem:[%s238 + $0x98] sm:$0xf] 0
      %1307 = vst [vmem:[%s238 + $0x9c] sm:$0xf] 0
      %1308 = vst [vmem:[%s238 + $0xa0] sm:$0xf] 0
      %1309 = vst [vmem:[%s238 + $0xa4] sm:$0xf] 0
      %1310 = vst [vmem:[%s238 + $0xa8] sm:$0xf] 0
      %1311 = vst [vmem:[%s238 + $0xac] sm:$0xf] 0
      %1312 = vst [vmem:[%s238 + $0xb0] sm:$0xf] 0
      %1313 = vst [vmem:[%s238 + $0xb4] sm:$0xf] 0
      %1314 = vst [vmem:[%s238 + $0xb8] sm:$0xf] 0
      %1315 = vst [vmem:[%s238 + $0xbc] sm:$0xf] 0
      %1316 = vst [vmem:[%s238 + $0xc0] sm:$0xf] 0
      %1317 = vst [vmem:[%s238 + $0xc4] sm:$0xf] 0
      %1318 = vst [vmem:[%s238 + $0xc8] sm:$0xf] 0
      %1319 = vst [vmem:[%s238 + $0xcc] sm:$0xf] 0
      %1320 = vst [vmem:[%s238 + $0xd0] sm:$0xf] 0
      %1321 = vst [vmem:[%s238 + $0xd4] sm:$0xf] 0
      %v1322 = vpack.c.bf16 %v1236, %v1236
      %v1323 = vpack.c.bf16 %v1237, %v1237
      %v1324 = vpack.c.bf16 %v1238, %v1238
      %v1325 = vpack.c.bf16 %v1239, %v1239
      %v1326 = vpack.c.bf16 %v1240, %v1240
      %v1327 = vpack.c.bf16 %v1241, %v1241
      %v1328 = vpack.c.bf16 %v1242, %v1242
      %v1329 = vpack.c.bf16 %v1243, %v1243
      %v1330 = vpack.c.bf16 %v1244, %v1244
      %v1331 = vpack.c.bf16 %v1245, %v1245
      %v1332 = vpack.c.bf16 %v1246, %v1246
      %v1333 = vpack.c.bf16 %v1247, %v1247
      %v1334 = vpack.c.bf16 %v1248, %v1248
      %v1335 = vpack.c.bf16 %v1249, %v1249
      %v1336 = vpack.c.bf16 %v1250, %v1250
      %v1337 = vpack.c.bf16 %v1251, %v1251
      %v1338 = vpack.c.bf16 %v1252, %v1252
      %v1339 = vpack.c.bf16 %v1253, %v1253
      %v1340 = vpack.c.bf16 %v1254, %v1254
      %v1341 = vpack.c.bf16 %v1255, %v1255
      %v1342 = vpack.c.bf16 %v1256, %v1256
      %v1343 = vpack.c.bf16 %v1257, %v1257
      %v1344 = vpack.c.bf16 %v1258, %v1258
      %v1345 = vpack.c.bf16 %v1259, %v1259
      %v1346 = vpack.c.bf16 %v1260, %v1260
      %v1347 = vpack.c.bf16 %v1261, %v1261
      %v1348 = vpack.c.bf16 %v1262, %v1262
      %v1349 = vpack.c.bf16 %v1263, %v1263
      %v1350 = vpack.c.bf16 %v1264, %v1264
      %v1351 = vpack.c.bf16 %v1265, %v1265
      %v1352 = vpack.c.bf16 %v1266, %v1266
      %v1353 = vpack.c.bf16 %v1267, %v1267
      %vm1354 = vsmask.f32 256
      %vm1355 = vsmask.f32 4368
      %vm1356 = vmor %vm1354, %vm1355
      %v1358 = vshrl.u32 %v1322, 16
      %v1360 = vrot.slane %v1358, 7
      %v1361 = vshll.u32 %v1322, 16
      %v1363 = vor.u32 %v1360, %v1361
      %v1364 = vrot.slane %v1360, 4
      %v1366 = vshrl.u32 %v1323, 16
      %v1368 = vrot.slane %v1366, 7
      %v1369 = vshll.u32 %v1323, 16
      %v1371 = vor.u32 %v1368, %v1369
      %v1372 = vsel %vm1356, %v1364, %v1371
      %v1373 = vrot.slane %v1368, 4
      %v1375 = vshrl.u32 %v1324, 16
      %v1377 = vrot.slane %v1375, 7
      %v1378 = vshll.u32 %v1324, 16
      %v1380 = vor.u32 %v1377, %v1378
      %v1381 = vrot.slane %v1377, 4
      %v1383 = vshrl.u32 %v1325, 16
      %v1385 = vrot.slane %v1383, 7
      %v1386 = vshll.u32 %v1325, 16
      %v1388 = vor.u32 %v1385, %v1386
      %v1389 = vsel %vm1356, %v1381, %v1388
      %v1390 = vrot.slane %v1385, 4
      %v1392 = vshrl.u32 %v1326, 16
      %v1394 = vrot.slane %v1392, 7
      %v1395 = vshll.u32 %v1326, 16
      %v1397 = vor.u32 %v1394, %v1395
      %v1398 = vrot.slane %v1394, 4
      %v1400 = vshrl.u32 %v1327, 16
      %v1402 = vrot.slane %v1400, 7
      %v1403 = vshll.u32 %v1327, 16
      %v1405 = vor.u32 %v1402, %v1403
      %v1406 = vsel %vm1356, %v1398, %v1405
      %v1407 = vrot.slane %v1402, 4
      %v1409 = vshrl.u32 %v1328, 16
      %v1411 = vrot.slane %v1409, 7
      %v1412 = vshll.u32 %v1328, 16
      %v1414 = vor.u32 %v1411, %v1412
      %v1415 = vrot.slane %v1411, 4
      %v1417 = vshrl.u32 %v1329, 16
      %v1419 = vrot.slane %v1417, 7
      %v1420 = vshll.u32 %v1329, 16
      %v1422 = vor.u32 %v1419, %v1420
      %v1423 = vsel %vm1356, %v1415, %v1422
      %v1424 = vrot.slane %v1419, 4
      %v1426 = vshrl.u32 %v1330, 16
      %v1428 = vrot.slane %v1426, 7
      %v1429 = vshll.u32 %v1330, 16
      %v1431 = vor.u32 %v1428, %v1429
      %v1432 = vrot.slane %v1428, 4
      %v1434 = vshrl.u32 %v1331, 16
      %v1436 = vrot.slane %v1434, 7
      %v1437 = vshll.u32 %v1331, 16
      %v1439 = vor.u32 %v1436, %v1437
      %v1440 = vsel %vm1356, %v1432, %v1439
      %v1441 = vrot.slane %v1436, 4
      %v1443 = vshrl.u32 %v1332, 16
      %v1445 = vrot.slane %v1443, 7
      %v1446 = vshll.u32 %v1332, 16
      %v1448 = vor.u32 %v1445, %v1446
      %v1449 = vrot.slane %v1445, 4
      %v1451 = vshrl.u32 %v1333, 16
      %v1453 = vrot.slane %v1451, 7
      %v1454 = vshll.u32 %v1333, 16
      %v1456 = vor.u32 %v1453, %v1454
      %v1457 = vsel %vm1356, %v1449, %v1456
      %v1458 = vrot.slane %v1453, 4
      %v1460 = vshrl.u32 %v1334, 16
      %v1462 = vrot.slane %v1460, 7
      %v1463 = vshll.u32 %v1334, 16
      %v1465 = vor.u32 %v1462, %v1463
      %v1466 = vrot.slane %v1462, 4
      %v1468 = vshrl.u32 %v1335, 16
      %v1470 = vrot.slane %v1468, 7
      %v1471 = vshll.u32 %v1335, 16
      %v1473 = vor.u32 %v1470, %v1471
      %v1474 = vsel %vm1356, %v1466, %v1473
      %v1475 = vrot.slane %v1470, 4
      %v1477 = vshrl.u32 %v1336, 16
      %v1479 = vrot.slane %v1477, 7
      %v1480 = vshll.u32 %v1336, 16
      %v1482 = vor.u32 %v1479, %v1480
      %v1483 = vrot.slane %v1479, 4
      %v1485 = vshrl.u32 %v1337, 16
      %v1487 = vrot.slane %v1485, 7
      %v1488 = vshll.u32 %v1337, 16
      %v1490 = vor.u32 %v1487, %v1488
      %v1491 = vsel %vm1356, %v1483, %v1490
      %v1492 = vrot.slane %v1487, 4
      %v1494 = vshrl.u32 %v1338, 16
      %v1496 = vrot.slane %v1494, 7
      %v1497 = vshll.u32 %v1338, 16
      %v1499 = vor.u32 %v1496, %v1497
      %v1500 = vrot.slane %v1496, 4
      %v1502 = vshrl.u32 %v1339, 16
      %v1504 = vrot.slane %v1502, 7
      %v1505 = vshll.u32 %v1339, 16
      %v1507 = vor.u32 %v1504, %v1505
      %v1508 = vsel %vm1356, %v1500, %v1507
      %v1509 = vrot.slane %v1504, 4
      %v1511 = vshrl.u32 %v1340, 16
      %v1513 = vrot.slane %v1511, 7
      %v1514 = vshll.u32 %v1340, 16
      %v1516 = vor.u32 %v1513, %v1514
      %v1517 = vrot.slane %v1513, 4
      %v1519 = vshrl.u32 %v1341, 16
      %v1521 = vrot.slane %v1519, 7
      %v1522 = vshll.u32 %v1341, 16
      %v1524 = vor.u32 %v1521, %v1522
      %v1525 = vsel %vm1356, %v1517, %v1524
      %v1526 = vrot.slane %v1521, 4
      %v1528 = vshrl.u32 %v1342, 16
      %v1530 = vrot.slane %v1528, 7
      %v1531 = vshll.u32 %v1342, 16
      %v1533 = vor.u32 %v1530, %v1531
      %v1534 = vrot.slane %v1530, 4
      %v1536 = vshrl.u32 %v1343, 16
      %v1538 = vrot.slane %v1536, 7
      %v1539 = vshll.u32 %v1343, 16
      %v1541 = vor.u32 %v1538, %v1539
      %v1542 = vsel %vm1356, %v1534, %v1541
      %v1543 = vrot.slane %v1538, 4
      %v1545 = vshrl.u32 %v1344, 16
      %v1547 = vrot.slane %v1545, 7
      %v1548 = vshll.u32 %v1344, 16
      %v1550 = vor.u32 %v1547, %v1548
      %v1551 = vrot.slane %v1547, 4
      %v1553 = vshrl.u32 %v1345, 16
      %v1555 = vrot.slane %v1553, 7
      %v1556 = vshll.u32 %v1345, 16
      %v1558 = vor.u32 %v1555, %v1556
      %v1559 = vsel %vm1356, %v1551, %v1558
      %v1560 = vrot.slane %v1555, 4
      %v1562 = vshrl.u32 %v1346, 16
      %v1564 = vrot.slane %v1562, 7
      %v1565 = vshll.u32 %v1346, 16
      %v1567 = vor.u32 %v1564, %v1565
      %v1568 = vrot.slane %v1564, 4
      %v1570 = vshrl.u32 %v1347, 16
      %v1572 = vrot.slane %v1570, 7
      %v1573 = vshll.u32 %v1347, 16
      %v1575 = vor.u32 %v1572, %v1573
      %v1576 = vsel %vm1356, %v1568, %v1575
      %v1577 = vrot.slane %v1572, 4
      %v1579 = vshrl.u32 %v1348, 16
      %v1581 = vrot.slane %v1579, 7
      %v1582 = vshll.u32 %v1348, 16
      %v1584 = vor.u32 %v1581, %v1582
      %v1585 = vrot.slane %v1581, 4
      %v1587 = vshrl.u32 %v1349, 16
      %v1589 = vrot.slane %v1587, 7
      %v1590 = vshll.u32 %v1349, 16
      %v1592 = vor.u32 %v1589, %v1590
      %v1593 = vsel %vm1356, %v1585, %v1592
      %v1594 = vrot.slane %v1589, 4
      %v1596 = vshrl.u32 %v1350, 16
      %v1598 = vrot.slane %v1596, 7
      %v1599 = vshll.u32 %v1350, 16
      %v1601 = vor.u32 %v1598, %v1599
      %v1602 = vrot.slane %v1598, 4
      %v1604 = vshrl.u32 %v1351, 16
      %v1606 = vrot.slane %v1604, 7
      %v1607 = vshll.u32 %v1351, 16
      %v1609 = vor.u32 %v1606, %v1607
      %v1610 = vsel %vm1356, %v1602, %v1609
      %v1611 = vrot.slane %v1606, 4
      %v1613 = vshrl.u32 %v1352, 16
      %v1615 = vrot.slane %v1613, 7
      %v1616 = vshll.u32 %v1352, 16
      %v1618 = vor.u32 %v1615, %v1616
      %v1619 = vrot.slane %v1615, 4
      %v1621 = vshrl.u32 %v1353, 16
      %v1623 = vrot.slane %v1621, 7
      %v1624 = vshll.u32 %v1353, 16
      %v1626 = vor.u32 %v1623, %v1624
      %v1627 = vsel %vm1356, %v1619, %v1626
      %v1628 = vrot.slane %v1623, 4
      %s1677 = scalar_lea.vmem %s238, 12
      %vm1678 = vcmask 1043456
      %vm1679 = vsmask.f32 7938
      %vm1680 = vmand %vm1678, %vm1679
      %v1681 = vld [vmem:[%s1677] sm:$0xf]
      %v1682 = vsel %vm1680, %v1363, %v1681
      %1683 = vst [vmem:[%s1677] sm:$0xf] %v1682
      %1684 = vst [vmem:[%s1677 + $0x4] sm:$0xf] %v1372
      %vm1685 = vcmask 1040384
      %vm1686 = vmand %vm1685, %vm1354
      %v1687 = vld [vmem:[%s1677 + $0x8] sm:$0x1]
      %v1688 = vsel %vm1686, %v1373, %v1687
      %1689 = vst [vmem:[%s1677 + $0x8] sm:$0x1] %v1688
      %v1690 = vld [vmem:[%s1677 + $0xc] sm:$0xf]
      %v1691 = vsel %vm1680, %v1380, %v1690
      %1692 = vst [vmem:[%s1677 + $0xc] sm:$0xf] %v1691
      %1693 = vst [vmem:[%s1677 + $0x10] sm:$0xf] %v1389
      %v1694 = vld [vmem:[%s1677 + $0x14] sm:$0x1]
      %v1695 = vsel %vm1686, %v1390, %v1694
      %1696 = vst [vmem:[%s1677 + $0x14] sm:$0x1] %v1695
      %v1697 = vld [vmem:[%s1677 + $0x18] sm:$0xf]
      %v1698 = vsel %vm1680, %v1397, %v1697
      %1699 = vst [vmem:[%s1677 + $0x18] sm:$0xf] %v1698
      %1700 = vst [vmem:[%s1677 + $0x1c] sm:$0xf] %v1406
      %v1701 = vld [vmem:[%s1677 + $0x20] sm:$0x1]
      %v1702 = vsel %vm1686, %v1407, %v1701
      %1703 = vst [vmem:[%s1677 + $0x20] sm:$0x1] %v1702
      %v1704 = vld [vmem:[%s1677 + $0x24] sm:$0xf]
      %v1705 = vsel %vm1680, %v1414, %v1704
      %1706 = vst [vmem:[%s1677 + $0x24] sm:$0xf] %v1705
      %1707 = vst [vmem:[%s1677 + $0x28] sm:$0xf] %v1423
      %v1708 = vld [vmem:[%s1677 + $0x2c] sm:$0x1]
      %v1709 = vsel %vm1686, %v1424, %v1708
      %1710 = vst [vmem:[%s1677 + $0x2c] sm:$0x1] %v1709
      %v1711 = vld [vmem:[%s1677 + $0x30] sm:$0xf]
      %v1712 = vsel %vm1680, %v1431, %v1711
      %1713 = vst [vmem:[%s1677 + $0x30] sm:$0xf] %v1712
      %1714 = vst [vmem:[%s1677 + $0x34] sm:$0xf] %v1440
      %v1715 = vld [vmem:[%s1677 + $0x38] sm:$0x1]
      %v1716 = vsel %vm1686, %v1441, %v1715
      %1717 = vst [vmem:[%s1677 + $0x38] sm:$0x1] %v1716
      %v1718 = vld [vmem:[%s1677 + $0x3c] sm:$0xf]
      %v1719 = vsel %vm1680, %v1448, %v1718
      %1720 = vst [vmem:[%s1677 + $0x3c] sm:$0xf] %v1719
      %1721 = vst [vmem:[%s1677 + $0x40] sm:$0xf] %v1457
      %v1722 = vld [vmem:[%s1677 + $0x44] sm:$0x1]
      %v1723 = vsel %vm1686, %v1458, %v1722
      %1724 = vst [vmem:[%s1677 + $0x44] sm:$0x1] %v1723
      %v1725 = vld [vmem:[%s1677 + $0x48] sm:$0xf]
      %v1726 = vsel %vm1680, %v1465, %v1725
      %1727 = vst [vmem:[%s1677 + $0x48] sm:$0xf] %v1726
      %1728 = vst [vmem:[%s1677 + $0x4c] sm:$0xf] %v1474
      %v1729 = vld [vmem:[%s1677 + $0x50] sm:$0x1]
      %v1730 = vsel %vm1686, %v1475, %v1729
      %1731 = vst [vmem:[%s1677 + $0x50] sm:$0x1] %v1730
      %v1732 = vld [vmem:[%s1677 + $0x54] sm:$0xf]
      %v1733 = vsel %vm1680, %v1482, %v1732
      %1734 = vst [vmem:[%s1677 + $0x54] sm:$0xf] %v1733
      %1735 = vst [vmem:[%s1677 + $0x58] sm:$0xf] %v1491
      %v1736 = vld [vmem:[%s1677 + $0x5c] sm:$0x1]
      %v1737 = vsel %vm1686, %v1492, %v1736
      %1738 = vst [vmem:[%s1677 + $0x5c] sm:$0x1] %v1737
      %v1739 = vld [vmem:[%s1677 + $0x60] sm:$0xf]
      %v1740 = vsel %vm1680, %v1499, %v1739
      %1741 = vst [vmem:[%s1677 + $0x60] sm:$0xf] %v1740
      %1742 = vst [vmem:[%s1677 + $0x64] sm:$0xf] %v1508
      %v1743 = vld [vmem:[%s1677 + $0x68] sm:$0x1]
      %v1744 = vsel %vm1686, %v1509, %v1743
      %1745 = vst [vmem:[%s1677 + $0x68] sm:$0x1] %v1744
      %v1746 = vld [vmem:[%s1677 + $0x6c] sm:$0xf]
      %v1747 = vsel %vm1680, %v1516, %v1746
      %1748 = vst [vmem:[%s1677 + $0x6c] sm:$0xf] %v1747
      %1749 = vst [vmem:[%s1677 + $0x70] sm:$0xf] %v1525
      %v1750 = vld [vmem:[%s1677 + $0x74] sm:$0x1]
      %v1751 = vsel %vm1686, %v1526, %v1750
      %1752 = vst [vmem:[%s1677 + $0x74] sm:$0x1] %v1751
      %v1753 = vld [vmem:[%s1677 + $0x78] sm:$0xf]
      %v1754 = vsel %vm1680, %v1533, %v1753
      %1755 = vst [vmem:[%s1677 + $0x78] sm:$0xf] %v1754
      %1756 = vst [vmem:[%s1677 + $0x7c] sm:$0xf] %v1542
      %v1757 = vld [vmem:[%s1677 + $0x80] sm:$0x1]
      %v1758 = vsel %vm1686, %v1543, %v1757
      %1759 = vst [vmem:[%s1677 + $0x80] sm:$0x1] %v1758
      %v1760 = vld [vmem:[%s1677 + $0x84] sm:$0xf]
      %v1761 = vsel %vm1680, %v1550, %v1760
      %1762 = vst [vmem:[%s1677 + $0x84] sm:$0xf] %v1761
      %1763 = vst [vmem:[%s1677 + $0x88] sm:$0xf] %v1559
      %v1764 = vld [vmem:[%s1677 + $0x8c] sm:$0x1]
      %v1765 = vsel %vm1686, %v1560, %v1764
      %1766 = vst [vmem:[%s1677 + $0x8c] sm:$0x1] %v1765
      %v1767 = vld [vmem:[%s1677 + $0x90] sm:$0xf]
      %v1768 = vsel %vm1680, %v1567, %v1767
      %1769 = vst [vmem:[%s1677 + $0x90] sm:$0xf] %v1768
      %1770 = vst [vmem:[%s1677 + $0x94] sm:$0xf] %v1576
      %v1771 = vld [vmem:[%s1677 + $0x98] sm:$0x1]
      %v1772 = vsel %vm1686, %v1577, %v1771
      %1773 = vst [vmem:[%s1677 + $0x98] sm:$0x1] %v1772
      %v1774 = vld [vmem:[%s1677 + $0x9c] sm:$0xf]
      %v1775 = vsel %vm1680, %v1584, %v1774
      %1776 = vst [vmem:[%s1677 + $0x9c] sm:$0xf] %v1775
      %1777 = vst [vmem:[%s1677 + $0xa0] sm:$0xf] %v1593
      %v1778 = vld [vmem:[%s1677 + $0xa4] sm:$0x1]
      %v1779 = vsel %vm1686, %v1594, %v1778
      %1780 = vst [vmem:[%s1677 + $0xa4] sm:$0x1] %v1779
      %v1781 = vld [vmem:[%s1677 + $0xa8] sm:$0xf]
      %v1782 = vsel %vm1680, %v1601, %v1781
      %1783 = vst [vmem:[%s1677 + $0xa8] sm:$0xf] %v1782
      %1784 = vst [vmem:[%s1677 + $0xac] sm:$0xf] %v1610
      %v1785 = vld [vmem:[%s1677 + $0xb0] sm:$0x1]
      %v1786 = vsel %vm1686, %v1611, %v1785
      %1787 = vst [vmem:[%s1677 + $0xb0] sm:$0x1] %v1786
      %v1788 = vld [vmem:[%s1677 + $0xb4] sm:$0xf]
      %v1789 = vsel %vm1680, %v1618, %v1788
      %1790 = vst [vmem:[%s1677 + $0xb4] sm:$0xf] %v1789
      %1791 = vst [vmem:[%s1677 + $0xb8] sm:$0xf] %v1627
      %v1792 = vld [vmem:[%s1677 + $0xbc] sm:$0x1]
      %v1793 = vsel %vm1686, %v1628, %v1792
      %1794 = vst [vmem:[%s1677 + $0xbc] sm:$0x1] %v1793
      %p1795 = scmp.lt.s32.totalorder %s16, 1
      %s1796 = scalar_select %p1795, %s16, 1
      %s1797 = smul.addr %s1796, 54
      %s1798 = smul.addr %s1797, 4
      %s1799 = scalar_lea.vmem %s5, %s1798
      // Predicated region
      $region41: #{residual_block_forward.6} parent=39 // pred_check
        %p1800 = pneg %p149
      $region42: #{residual_block_forward.6} parent=39 // pred_check_branch
        %1802 = sbr.rel (%p1800) target = $region44
      $region43: #{residual_block_forward.6} parent=39 // pred_region
        _
      $region44: #{residual_block_forward.6} parent=39 // pred_fallthru
        _
    $region40: #{residual_block_forward.6} parent=5 // pred_fallthru
      _
    %p1803 = scmp.le.s32.totalorder 2, %s11
    // Predicated region
    $region45: #{residual_block_forward.6} parent=5 // pred_check
      %p1804 = pneg %p1803
    $region46: #{residual_block_forward.6} parent=5 // pred_check_branch
      %1806 = sbr.rel (%p1804) target = $region48
    $region47: #{residual_block_forward.6} parent=5 // pred_region
      %s1807 = ssub.s32 %s11, 2
      // Predicated region
      $region49: #{residual_block_forward.6} parent=47 // pred_check
        %p1808 = pneg %p155
      $region50: #{residual_block_forward.6} parent=47 // pred_check_branch
        %1810 = sbr.rel (%p1808) target = $region52
      $region51: #{residual_block_forward.6} parent=47 // pred_region
        %p1811 = scmp.lt.s32.totalorder %s17, 1
        %s1812 = scalar_select %p1811, %s17, 1
        %s1813 = smul.addr %s1812, 54
        %s1814 = smul.addr %s1813, 4
        %s1815 = scalar_lea.vmem %s5, %s1814
      $region52: #{residual_block_forward.6} parent=47 // pred_fallthru
        _
    $region48: #{residual_block_forward.6} parent=5 // pred_fallthru
      _
  $region6: #{residual_block_forward.6} parent=0 // loop_footer
    %s15 = sadd.s32 1, %s11
  $region7: #{residual_block_forward.6} parent=0 // loop_footer_branch
    %10 = sbr.rel target = $region3
  $region8: #{residual_block_forward.6} parent=0 // loop_exit
    _

// kernel: residual_block_forward.5
$region0: #{residual_block_forward.5}
  #allocation0 [shape = 'u32[]', space=smem, size = 0x4, offset = 0x4, fixed_abs, tag = 'smem constant byte address 0x4 - core index']
  #allocation1 [shape = 'u32[72,128]{1,0:T(1,128)}', space=vmem, size = 0x9000, scoped, tag = 'internal scratch']
  #allocation2 [shape = 'bf16[18,24,128]{2,1,0:T(8,128)(2,1)}', space=vmem, size = 0x1b000, scoped, tag = 'scratch operand']
  #allocation3 [shape = 's32[1]{0}', space=sflag, size = 0x4, scoped, tag = 'scratch operand']
  #allocation4 [shape = 's32[]', space=sflag, size = 0x4, offset = 0, fixed_abs, tag = 'sflag constant byte address 0x0 - dummy sync flag']
  %s0 = inlined_call_operand.vmem [shape: bf16[2,18,24,128], index: 0, kind: input, shape index: {}]
  %s1 = inlined_call_operand.vmem [shape: bf16[9,128,128], index: 1, kind: input, shape index: {}]
  %s2 = inlined_call_operand.vmem [shape: f32[1,128], index: 2, kind: input, shape index: {}]
  %s3 = inlined_call_operand.vmem [shape: f32[2,16,16,128], index: 3, kind: output, shape index: {}]
  %s4 = sld [smem:[#allocation0]]
  $region60: #{residual_block_forward.5} parent=0
    _
  %s6 = ssub.s32 1, %s4
  %s7 = scalar_select 0, %s6, %s4
  loop: start=0, step=1, limit=4
  $region2: #{residual_block_forward.5} parent=0 // loop_pre_header
    _
  $region3: #{residual_block_forward.5} parent=0 // loop_header
    %s9 = sphi 0, %s13
    %p10 = scmp.ge.s32.totalorder %s9, 4
    %s16 = sphi 0, %s28
    %s17 = sphi 0, %s24
    %s18 = sphi 0, %s16
    %s19 = sphi 0, %s17
    %s20 = sphi 0, %s18
    %s21 = sphi 0, %s19
    %s29 = sphi 0, %s29
    %s31 = sphi 0, %s29
    %s32 = sphi 0, %s31
    %s46 = sphi 0, %s32
    %s50 = sphi 0, %s50
    %s52 = sphi 0, %s50
    %s53 = sphi 0, %s52
    %s67 = sphi 0, %s53
    %s75 = sphi 0, %s77
    %s78 = sphi 0, %s75
    %s79 = sphi 0, %s78
    %s95 = sphi 0, %s79
  $region4: #{residual_block_forward.5} parent=0 // loop_header_branch
    %12 = sbr.rel (%p10) target = $region8
  $region5: #{residual_block_forward.5} parent=0 // loop_body
    %s14 = ssub.s32 %s9, 1
    %s15 = ssub.s32 %s9, 2
    %s22 = sadd.s32 1, %s17
    %p23 = scmp.ge.s32.totalorder %s22, 1
    %s24 = scalar_select %p23, 0, %s22
    %s25 = sadd.s32 1, %s16
    %s26 = scalar_select %p23, %s25, %s16
    %p27 = scmp.ge.s32.totalorder %s26, 2
    %s28 = scalar_select %p27, 0, %s26
    %s30 = sadd.s32 %s29, 1
    %p33 = scmp.eq.s32.totalorder %s9, 1
    %p34 = scmp.ne.s32.totalorder %s29, %s31
    %p35 = scmp.eq.s32.totalorder %s9, 0
    %p36 = por %p34, %p35
    %p37 = scmp.ne.s32.totalorder %s29, %s31
    %p38 = scmp.eq.s32.totalorder %s14, 1
    %p39 = por %p37, %p38
    %p40 = scmp.ne.s32.totalorder %s31, %s32
    %p41 = scmp.eq.s32.totalorder %s14, 0
    %p42 = por %p40, %p41
    %p43 = scmp.ne.s32.totalorder %s31, %s32
    %p44 = scmp.eq.s32.totalorder %s15, 1
    %p45 = por %p43, %p44
    %p47 = scmp.ne.s32.totalorder %s32, %s46
    %p48 = scmp.eq.s32.totalorder %s15, 0
    %p49 = por %p47, %p48
    %s51 = sadd.s32 %s50, 1
    %p54 = scmp.eq.s32.totalorder %s9, 1
    %p55 = scmp.ne.s32.totalorder %s50, %s52
    %p56 = scmp.eq.s32.totalorder %s9, 0
    %p57 = por %p55, %p56
    %p58 = scmp.ne.s32.totalorder %s50, %s52
    %p59 = scmp.eq.s32.totalorder %s14, 1
    %p60 = por %p58, %p59
    %p61 = scmp.ne.s32.totalorder %s52, %s53
    %p62 = scmp.eq.s32.totalorder %s14, 0
    %p63 = por %p61, %p62
    %p64 = scmp.ne.s32.totalorder %s52, %s53
    %p65 = scmp.eq.s32.totalorder %s15, 1
    %p66 = por %p64, %p65
    %p68 = scmp.ne.s32.totalorder %s53, %s67
    %p69 = scmp.eq.s32.totalorder %s15, 0
    %p70 = por %p68, %p69
    %s71 = ssub.s32 %s16, %s28
    %s72 = ssub.s32 %s17, %s24
    %s73 = sor.u32 %s71, %s72
    %p74 = scmp.eq.s32.totalorder %s73, 0
    %s76 = sadd.s32 %s75, 1
    %s77 = scalar_select %p74, %s75, %s76
    %p80 = pneg %p74
    %p81 = scmp.eq.s32.totalorder %s9, 1
    %p82 = por %p80, %p81
    %p83 = scmp.ne.s32.totalorder %s75, %s78
    %p84 = scmp.eq.s32.totalorder %s9, 0
    %p85 = por %p83, %p84
    %p86 = scmp.ne.s32.totalorder %s75, %s78
    %p87 = scmp.eq.s32.totalorder %s14, 1
    %p88 = por %p86, %p87
    %p89 = scmp.ne.s32.totalorder %s78, %s79
    %p90 = scmp.eq.s32.totalorder %s14, 0
    %p91 = por %p89, %p90
    %p92 = scmp.ne.s32.totalorder %s78, %s79
    %p93 = scmp.eq.s32.totalorder %s15, 1
    %p94 = por %p92, %p93
    %p96 = scmp.ne.s32.totalorder %s79, %s95
    %p97 = scmp.eq.s32.totalorder %s15, 0
    %p98 = por %p96, %p97
    %p99 = scmp.le.s32.totalorder 1, %s9
    %p100 = scmp.lt.s32.totalorder %s9, 3
    %p101 = pnand %p99, %p100
    %p102 = pneg %p101
    // Predicated region
    $region9: #{residual_block_forward.5} parent=5 // pred_check
      _
    $region10: #{residual_block_forward.5} parent=5 // pred_check_branch
      %104 = sbr.rel (%p101) target = $region12
    $region11: #{residual_block_forward.5} parent=5 // pred_region
      %s105 = ssub.s32 %s9, 1
      // Predicated region
      $region13: #{residual_block_forward.5} parent=11 // pred_check
        %p106 = pneg %p42
      $region14: #{residual_block_forward.5} parent=11 // pred_check_branch
        %108 = sbr.rel (%p106) target = $region16
      $region15: #{residual_block_forward.5} parent=11 // pred_region
        _
      $region16: #{residual_block_forward.5} parent=11 // pred_fallthru
        _
      // Predicated region
      $region17: #{residual_block_forward.5} parent=11 // pred_check
        %p109 = pneg %p63
      $region18: #{residual_block_forward.5} parent=11 // pred_check_branch
        %111 = sbr.rel (%p109) target = $region20
      $region19: #{residual_block_forward.5} parent=11 // pred_region
        _
      $region20: #{residual_block_forward.5} parent=11 // pred_fallthru
        _
    $region12: #{residual_block_forward.5} parent=5 // pred_fallthru
      _
    %p112 = scmp.lt.s32.totalorder %s9, 2
    // Predicated region
    $region21: #{residual_block_forward.5} parent=5 // pred_check
      %p113 = pneg %p112
    $region22: #{residual_block_forward.5} parent=5 // pred_check_branch
      %115 = sbr.rel (%p113) target = $region24
    $region23: #{residual_block_forward.5} parent=5 // pred_region
      _
    $region24: #{residual_block_forward.5} parent=5 // pred_fallthru
      _
    %p116 = scmp.le.s32.totalorder 1, %s9
    %p117 = scmp.lt.s32.totalorder %s9, 3
    %p118 = pnand %p116, %p117
    %p119 = pneg %p118
    // Predicated region
    $region25: #{residual_block_forward.5} parent=5 // pred_check
      _
    $region26: #{residual_block_forward.5} parent=5 // pred_check_branch
      %121 = sbr.rel (%p118) target = $region28
    $region27: #{residual_block_forward.5} parent=5 // pred_region
      %s122 = ssub.s32 %s9, 1
      %p123 = pneg %p42
      %p124 = pneg %p39
      %p125 = pneg %p63
      %p126 = pneg %p60
      %p127 = pneg %p91
      %p128 = pneg %p88
      %s129 = smul.u32 16, %s19
      %p130 = scmp.lt.s32.totalorder %s18, 1
      %s131 = scalar_select %p130, %s18, 1
      %p132 = scmp.lt.s32.totalorder %s129, 15
      %s133 = scalar_select %p132, %s129, 15
      %s134 = smul.addr %s133, 2
      %s135 = smul.addr %s131, 32
      %s136 = sadd.s32 %s134, %s135
      %s137 = smul.addr %s136, 8
      %s138 = scalar_lea.vmem %s3, %s137
      %s139 = smul.u32 16, %s19
      %p140 = scmp.lt.s32.totalorder %s18, 1
      %s141 = scalar_select %p140, %s18, 1
      %p142 = scmp.lt.s32.totalorder %s139, 15
      %s143 = scalar_select %p142, %s139, 15
      %s144 = smul.addr %s143, 2
      %s145 = smul.addr %s141, 32
      %s146 = sadd.s32 %s144, %s145
      %s147 = smul.addr %s146, 8
      %s148 = scalar_lea.vmem %s3, %s147
      %s149 = smul.u32 16, %s19
      %s150 = smul.u32 %s19, 16
      %s151 = smul.u32 %s150, 3
      %s152 = smul.u32 %s18, 54
      %s153 = sadd.s32 %s151, %s152
      %s154 = smul.addr %s153, 4
      %s155 = scalar_lea.vmem %s0, %s154
      // Predicated region
      $region29: #{residual_block_forward.5} parent=27 // pred_check
        _
      $region30: #{residual_block_forward.5} parent=27 // pred_check_branch
        %157 = sbr.rel (0) target = $region32
      $region31: #{residual_block_forward.5} parent=27 // pred_region
        loop: start=0, step=1, limit=1
        $region33: #{residual_block_forward.5} parent=31 // loop_pre_header
          _
        $region34: #{residual_block_forward.5} parent=31 // loop_header
          %s159 = sphi 0, %s163
          %p160 = scmp.ge.s32.totalorder %s159, 1
          %s164 = sphi %s155, %s155
          %s165 = sphi [#allocation2], [#allocation2]
        $region35: #{residual_block_forward.5} parent=31 // loop_header_branch
          %162 = sbr.rel (%p160) target = $region39
        $region36: #{residual_block_forward.5} parent=31 // loop_body
          %v166 = vld [vmem:[%s164] sm:$0xff]
          %167 = vst [vmem:[%s165] sm:$0xff] %v166
          %v168 = vld [vmem:[%s164 + $0x8] sm:$0xff]
          %169 = vst [vmem:[%s165 + $0x8] sm:$0xff] %v168
          %v170 = vld [vmem:[%s164 + $0x10] sm:$0xff]
          %171 = vst [vmem:[%s165 + $0x10] sm:$0xff] %v170
          %v172 = vld [vmem:[%s164 + $0x18] sm:$0xff]
          %173 = vst [vmem:[%s165 + $0x18] sm:$0xff] %v172
          %v174 = vld [vmem:[%s164 + $0x20] sm:$0xff]
          %175 = vst [vmem:[%s165 + $0x20] sm:$0xff] %v174
          %v176 = vld [vmem:[%s164 + $0x28] sm:$0xff]
          %177 = vst [vmem:[%s165 + $0x28] sm:$0xff] %v176
          %v178 = vld [vmem:[%s164 + $0x30] sm:$0xff]
          %179 = vst [vmem:[%s165 + $0x30] sm:$0xff] %v178
          %v180 = vld [vmem:[%s164 + $0x38] sm:$0xff]
          %181 = vst [vmem:[%s165 + $0x38] sm:$0xff] %v180
          %v182 = vld [vmem:[%s164 + $0x40] sm:$0xff]
          %183 = vst [vmem:[%s165 + $0x40] sm:$0xff] %v182
          %v184 = vld [vmem:[%s164 + $0x48] sm:$0xff]
          %185 = vst [vmem:[%s165 + $0x48] sm:$0xff] %v184
          %v186 = vld [vmem:[%s164 + $0x50] sm:$0xff]
          %187 = vst [vmem:[%s165 + $0x50] sm:$0xff] %v186
          %v188 = vld [vmem:[%s164 + $0x58] sm:$0xff]
          %189 = vst [vmem:[%s165 + $0x58] sm:$0xff] %v188
          %v190 = vld [vmem:[%s164 + $0x60] sm:$0xff]
          %191 = vst [vmem:[%s165 + $0x60] sm:$0xff] %v190
          %v192 = vld [vmem:[%s164 + $0x68] sm:$0xff]
          %193 = vst [vmem:[%s165 + $0x68] sm:$0xff] %v192
          %v194 = vld [vmem:[%s164 + $0x70] sm:$0xff]
          %195 = vst [vmem:[%s165 + $0x70] sm:$0xff] %v194
          %v196 = vld [vmem:[%s164 + $0x78] sm:$0xff]
          %197 = vst [vmem:[%s165 + $0x78] sm:$0xff] %v196
          %v198 = vld [vmem:[%s164 + $0x80] sm:$0xff]
          %199 = vst [vmem:[%s165 + $0x80] sm:$0xff] %v198
          %v200 = vld [vmem:[%s164 + $0x88] sm:$0xff]
          %201 = vst [vmem:[%s165 + $0x88] sm:$0xff] %v200
          %v202 = vld [vmem:[%s164 + $0x90] sm:$0xff]
          %203 = vst [vmem:[%s165 + $0x90] sm:$0xff] %v202
          %v204 = vld [vmem:[%s164 + $0x98] sm:$0xff]
          %205 = vst [vmem:[%s165 + $0x98] sm:$0xff] %v204
          %v206 = vld [vmem:[%s164 + $0xa0] sm:$0xff]
          %207 = vst [vmem:[%s165 + $0xa0] sm:$0xff] %v206
          %v208 = vld [vmem:[%s164 + $0xa8] sm:$0xff]
          %209 = vst [vmem:[%s165 + $0xa8] sm:$0xff] %v208
          %v210 = vld [vmem:[%s164 + $0xb0] sm:$0xff]
          %211 = vst [vmem:[%s165 + $0xb0] sm:$0xff] %v210
          %v212 = vld [vmem:[%s164 + $0xb8] sm:$0xff]
          %213 = vst [vmem:[%s165 + $0xb8] sm:$0xff] %v212
          %v214 = vld [vmem:[%s164 + $0xc0] sm:$0xff]
          %215 = vst [vmem:[%s165 + $0xc0] sm:$0xff] %v214
          %v216 = vld [vmem:[%s164 + $0xc8] sm:$0xff]
          %217 = vst [vmem:[%s165 + $0xc8] sm:$0xff] %v216
          %v218 = vld [vmem:[%s164 + $0xd0] sm:$0xff]
          %219 = vst [vmem:[%s165 + $0xd0] sm:$0xff] %v218
        $region37: #{residual_block_forward.5} parent=31 // loop_footer
          %s163 = sadd.s32 1, %s159
        $region38: #{residual_block_forward.5} parent=31 // loop_footer_branch
          %158 = sbr.rel target = $region34
        $region39: #{residual_block_forward.5} parent=31 // loop_exit
          _
      $region32: #{residual_block_forward.5} parent=27 // pred_fallthru
        _
      // Predicated region
      $region40: #{residual_block_forward.5} parent=27 // pred_check
        _
      $region41: #{residual_block_forward.5} parent=27 // pred_check_branch
        %221 = sbr.rel target = $region43
      $region42: #{residual_block_forward.5} parent=27 // pred_region
        _
      $region43: #{residual_block_forward.5} parent=27 // pred_fallthru
        _
      // Predicated region
      $region44: #{residual_block_forward.5} parent=27 // pred_check
        _
      $region45: #{residual_block_forward.5} parent=27 // pred_check_branch
        %224 = sbr.rel (0) target = $region47
      $region46: #{residual_block_forward.5} parent=27 // pred_region
        %225 = vsyncadd [#allocation3], 3456
      $region47: #{residual_block_forward.5} parent=27 // pred_fallthru
        _
      %s226 = smul.u32 4, 18
      %s227 = smul.u32 %s226, 3
      %s228 = smul.u32 %s227, 1
      %s229 = sshll.u32 %s228, 4
      %230 = dma.done [#allocation3], %s229
      %v231 = vld [vmem:[#allocation2] sm:$0xf]
      %v232 = vld [vmem:[#allocation2 + $0x4] sm:$0xf]
      %v233 = vld [vmem:[#allocation2 + $0xc] sm:$0xf]
      %v234 = vld [vmem:[#allocation2 + $0x10] sm:$0xf]
      %v235 = vld [vmem:[#allocation2 + $0x18] sm:$0xf]
      %v236 = vld [vmem:[#allocation2 + $0x1c] sm:$0xf]
      %v237 = vld [vmem:[#allocation2 + $0x24] sm:$0xf]
      %v238 = vld [vmem:[#allocation2 + $0x28] sm:$0xf]
      %v239 = vld [vmem:[#allocation2 + $0x30] sm:$0xf]
      %v240 = vld [vmem:[#allocation2 + $0x34] sm:$0xf]
      %v241 = vld [vmem:[#allocation2 + $0x3c] sm:$0xf]
      %v242 = vld [vmem:[#allocation2 + $0x40] sm:$0xf]
      %v243 = vld [vmem:[#allocation2 + $0x48] sm:$0xf]
      %v244 = vld [vmem:[#allocation2 + $0x4c] sm:$0xf]
      %v245 = vld [vmem:[#allocation2 + $0x54] sm:$0xf]
      %v246 = vld [vmem:[#allocation2 + $0x58] sm:$0xf]
      %v247 = vld [vmem:[#allocation2 + $0x60] sm:$0xf]
      %v248 = vld [vmem:[#allocation2 + $0x64] sm:$0xf]
      %v249 = vld [vmem:[#allocation2 + $0x6c] sm:$0xf]
      %v250 = vld [vmem:[#allocation2 + $0x70] sm:$0xf]
      %v251 = vld [vmem:[#allocation2 + $0x78] sm:$0xf]
      %v252 = vld [vmem:[#allocation2 + $0x7c] sm:$0xf]
      %v253 = vld [vmem:[#allocation2 + $0x84] sm:$0xf]
      %v254 = vld [vmem:[#allocation2 + $0x88] sm:$0xf]
      %v255 = vld [vmem:[#allocation2 + $0x90] sm:$0xf]
      %v256 = vld [vmem:[#allocation2 + $0x94] sm:$0xf]
      %v257 = vld [vmem:[#allocation2 + $0x9c] sm:$0xf]
      %v258 = vld [vmem:[#allocation2 + $0xa0] sm:$0xf]
      %v259 = vld [vmem:[#allocation2 + $0xa8] sm:$0xf]
      %v260 = vld [vmem:[#allocation2 + $0xac] sm:$0xf]
      %v261 = vld [vmem:[#allocation2 + $0xb4] sm:$0xf]
      %v262 = vld [vmem:[#allocation2 + $0xb8] sm:$0xf]
      %v263 = vld [vmem:[#allocation2 + $0xc0] sm:$0xf]
      %v264 = vld [vmem:[#allocation2 + $0xc4] sm:$0xf]
      %v265 = vld [vmem:[#allocation2 + $0xcc] sm:$0xf]
      %v266 = vld [vmem:[#allocation2 + $0xd0] sm:$0xf]
      %v267 = vld [vmem:[%s1] sm:$0xf]
      %v268 = vld [vmem:[%s1 + $0x4] sm:$0xf]
      %v269 = vld [vmem:[%s1 + $0x8] sm:$0xf]
      %v270 = vld [vmem:[%s1 + $0xc] sm:$0xf]
      %v271 = vld [vmem:[%s1 + $0x10] sm:$0xf]
      %v272 = vld [vmem:[%s1 + $0x14] sm:$0xf]
      %v273 = vld [vmem:[%s1 + $0x18] sm:$0xf]
      %v274 = vld [vmem:[%s1 + $0x1c] sm:$0xf]
      %v275 = vld [vmem:[%s1 + $0x20] sm:$0xf]
      %v276 = vld [vmem:[%s1 + $0x24] sm:$0xf]
      %v277 = vld [vmem:[%s1 + $0x28] sm:$0xf]
      %v278 = vld [vmem:[%s1 + $0x2c] sm:$0xf]
      %v279 = vld [vmem:[%s1 + $0x30] sm:$0xf]
      %v280 = vld [vmem:[%s1 + $0x34] sm:$0xf]
      %v281 = vld [vmem:[%s1 + $0x38] sm:$0xf]
      %v282 = vld [vmem:[%s1 + $0x3c] sm:$0xf]
      %s283 = scalar_lea.vmem %s1, 192
      %v284 = vld [vmem:[%s283] sm:$0xf]
      %v285 = vld [vmem:[%s283 + $0x4] sm:$0xf]
      %v286 = vld [vmem:[%s283 + $0x8] sm:$0xf]
      %v287 = vld [vmem:[%s283 + $0xc] sm:$0xf]
      %v288 = vld [vmem:[%s283 + $0x10] sm:$0xf]
      %v289 = vld [vmem:[%s283 + $0x14] sm:$0xf]
      %v290 = vld [vmem:[%s283 + $0x18] sm:$0xf]
      %v291 = vld [vmem:[%s283 + $0x1c] sm:$0xf]
      %v292 = vld [vmem:[%s283 + $0x20] sm:$0xf]
      %v293 = vld [vmem:[%s283 + $0x24] sm:$0xf]
      %v294 = vld [vmem:[%s283 + $0x28] sm:$0xf]
      %v295 = vld [vmem:[%s283 + $0x2c] sm:$0xf]
      %v296 = vld [vmem:[%s283 + $0x30] sm:$0xf]
      %v297 = vld [vmem:[%s283 + $0x34] sm:$0xf]
      %v298 = vld [vmem:[%s283 + $0x38] sm:$0xf]
      %v299 = vld [vmem:[%s283 + $0x3c] sm:$0xf]
      %v332 = vunpack.c.l.b16 %v233
      %v333 = vunpack.c.l.b16 %v234
      %v334 = vunpack.c.l.b16 %v235
      %v335 = vunpack.c.l.b16 %v236
      %v336 = vunpack.c.l.b16 %v237
      %v337 = vunpack.c.l.b16 %v238
      %v338 = vunpack.c.l.b16 %v239
      %v339 = vunpack.c.l.b16 %v240
      %v340 = vunpack.c.l.b16 %v241
      %v341 = vunpack.c.l.b16 %v242
      %v342 = vunpack.c.l.b16 %v243
      %v343 = vunpack.c.l.b16 %v244
      %v344 = vunpack.c.l.b16 %v245
      %v345 = vunpack.c.l.b16 %v246
      %v346 = vunpack.c.l.b16 %v247
      %v347 = vunpack.c.l.b16 %v248
      %v348 = vunpack.c.l.b16 %v249
      %v349 = vunpack.c.l.b16 %v250
      %v350 = vunpack.c.l.b16 %v251
      %v351 = vunpack.c.l.b16 %v252
      %v352 = vunpack.c.l.b16 %v253
      %v353 = vunpack.c.l.b16 %v254
      %v354 = vunpack.c.l.b16 %v255
      %v355 = vunpack.c.l.b16 %v256
      %v356 = vunpack.c.l.b16 %v257
      %v357 = vunpack.c.l.b16 %v258
      %v358 = vunpack.c.l.b16 %v259
      %v359 = vunpack.c.l.b16 %v260
      %v360 = vunpack.c.l.b16 %v261
      %v361 = vunpack.c.l.b16 %v262
      %v362 = vunpack.c.l.b16 %v263
      %v363 = vunpack.c.l.b16 %v264
      %v364 = vpack.c.b16 %v333, %v332
      %v365 = vpack.c.b16 %v335, %v334
      %v366 = vpack.c.b16 %v337, %v336
      %v367 = vpack.c.b16 %v339, %v338
      %v368 = vpack.c.b16 %v341, %v340
      %v369 = vpack.c.b16 %v343, %v342
      %v370 = vpack.c.b16 %v345, %v344
      %v371 = vpack.c.b16 %v347, %v346
      %v372 = vpack.c.b16 %v349, %v348
      %v373 = vpack.c.b16 %v351, %v350
      %v374 = vpack.c.b16 %v353, %v352
      %v375 = vpack.c.b16 %v355, %v354
      %v376 = vpack.c.b16 %v357, %v356
      %v377 = vpack.c.b16 %v359, %v358
      %v378 = vpack.c.b16 %v361, %v360
      %v379 = vpack.c.b16 %v363, %v362
      %v412 = vunpack.c.l.b16 %v284
      %v413 = vunpack.c.l.b16 %v285
      %v414 = vunpack.c.l.b16 %v286
      %v415 = vunpack.c.l.b16 %v287
      %v416 = vunpack.c.l.b16 %v288
      %v417 = vunpack.c.l.b16 %v289
      %v418 = vunpack.c.l.b16 %v290
      %v419 = vunpack.c.l.b16 %v291
      %v420 = vunpack.c.l.b16 %v292
      %v421 = vunpack.c.l.b16 %v293
      %v422 = vunpack.c.l.b16 %v294
      %v423 = vunpack.c.l.b16 %v295
      %v424 = vunpack.c.l.b16 %v296
      %v425 = vunpack.c.l.b16 %v297
      %v426 = vunpack.c.l.b16 %v298
      %v427 = vunpack.c.l.b16 %v299
      %v428 = vpack.c.b16 %v413, %v412
      %v429 = vpack.c.b16 %v415, %v414
      %v430 = vpack.c.b16 %v417, %v416
      %v431 = vpack.c.b16 %v419, %v418
      %v432 = vpack.c.b16 %v421, %v420
      %v433 = vpack.c.b16 %v423, %v422
      %v434 = vpack.c.b16 %v425, %v424
      %v435 = vpack.c.b16 %v427, %v426
      %444 = vmatpush.bf16.msra.mxu0 %v435
      %445 = vmatpush.bf16.msra.mxu0 %v434
      %446 = vmatpush.bf16.msra.mxu0 %v433
      %447 = vmatpush.bf16.msra.mxu0 %v432
      %448 = vmatpush.bf16.msra.mxu0 %v431
      %449 = vmatpush.bf16.msra.mxu0 %v430
      %450 = vmatpush.bf16.msra.mxu0 %v429
      %451 = vmatpush.bf16.msra.mxu0 %v428
      %452 = vmatmul.bf16.gmra.mxu0 %v364
      %v453 = vpop.f32.mrf.mxu0
      %v454 = vadd.f32 0.0, %v453
      %v455 = vpop.f32.mrf.mxu0
      %v456 = vadd.f32 0.0, %v455
      %457 = vmatmul.bf16.gmra.mxu0 %v365
      %v458 = vpop.f32.mrf.mxu0
      %v459 = vadd.f32 0.0, %v458
      %v460 = vpop.f32.mrf.mxu0
      %v461 = vadd.f32 0.0, %v460
      %462 = vmatmul.bf16.gmra.mxu0 %v366
      %v463 = vpop.f32.mrf.mxu0
      %v464 = vadd.f32 0.0, %v463
      %v465 = vpop.f32.mrf.mxu0
      %v466 = vadd.f32 0.0, %v465
      %467 = vmatmul.bf16.gmra.mxu0 %v367
      %v468 = vpop.f32.mrf.mxu0
      %v469 = vadd.f32 0.0, %v468
      %v470 = vpop.f32.mrf.mxu0
      %v471 = vadd.f32 0.0, %v470
      %472 = vmatmul.bf16.gmra.mxu0 %v368
      %v473 = vpop.f32.mrf.mxu0
      %v474 = vadd.f32 0.0, %v473
      %v475 = vpop.f32.mrf.mxu0
      %v476 = vadd.f32 0.0, %v475
      %477 = vmatmul.bf16.gmra.mxu0 %v369
      %v478 = vpop.f32.mrf.mxu0
      %v479 = vadd.f32 0.0, %v478
      %v480 = vpop.f32.mrf.mxu0
      %v481 = vadd.f32 0.0, %v480
      %482 = vmatmul.bf16.gmra.mxu0 %v370
      %v483 = vpop.f32.mrf.mxu0
      %v484 = vadd.f32 0.0, %v483
      %v485 = vpop.f32.mrf.mxu0
      %v486 = vadd.f32 0.0, %v485
      %487 = vmatmul.bf16.gmra.mxu0 %v371
      %v488 = vpop.f32.mrf.mxu0
      %v489 = vadd.f32 0.0, %v488
      %v490 = vpop.f32.mrf.mxu0
      %v491 = vadd.f32 0.0, %v490
      %492 = vmatmul.bf16.gmra.mxu0 %v372
      %v493 = vpop.f32.mrf.mxu0
      %v494 = vadd.f32 0.0, %v493
      %v495 = vpop.f32.mrf.mxu0
      %v496 = vadd.f32 0.0, %v495
      %497 = vmatmul.bf16.gmra.mxu0 %v373
      %v498 = vpop.f32.mrf.mxu0
      %v499 = vadd.f32 0.0, %v498
      %v500 = vpop.f32.mrf.mxu0
      %v501 = vadd.f32 0.0, %v500
      %502 = vmatmul.bf16.gmra.mxu0 %v374
      %v503 = vpop.f32.mrf.mxu0
      %v504 = vadd.f32 0.0, %v503
      %v505 = vpop.f32.mrf.mxu0
      %v506 = vadd.f32 0.0, %v505
      %507 = vmatmul.bf16.gmra.mxu0 %v375
      %v508 = vpop.f32.mrf.mxu0
      %v509 = vadd.f32 0.0, %v508
      %v510 = vpop.f32.mrf.mxu0
      %v511 = vadd.f32 0.0, %v510
      %512 = vmatmul.bf16.gmra.mxu0 %v376
      %v513 = vpop.f32.mrf.mxu0
      %v514 = vadd.f32 0.0, %v513
      %v515 = vpop.f32.mrf.mxu0
      %v516 = vadd.f32 0.0, %v515
      %517 = vmatmul.bf16.gmra.mxu0 %v377
      %v518 = vpop.f32.mrf.mxu0
      %v519 = vadd.f32 0.0, %v518
      %v520 = vpop.f32.mrf.mxu0
      %v521 = vadd.f32 0.0, %v520
      %522 = vmatmul.bf16.gmra.mxu0 %v378
      %v523 = vpop.f32.mrf.mxu0
      %v524 = vadd.f32 0.0, %v523
      %v525 = vpop.f32.mrf.mxu0
      %v526 = vadd.f32 0.0, %v525
      %527 = vmatmul.bf16.gmra.mxu0 %v379
      %v528 = vpop.f32.mrf.mxu0
      %v529 = vadd.f32 0.0, %v528
      %v530 = vpop.f32.mrf.mxu0
      %v531 = vadd.f32 0.0, %v530
      %532 = vdwg.mxu0
      %v535 = vunpack.c.l.b16 %v231
      %v536 = vunpack.c.l.b16 %v232
      %v537 = vpack.c.b16 %v536, %v535
      %v555 = vunpack.c.l.b16 %v267
      %v556 = vunpack.c.l.b16 %v268
      %v557 = vunpack.c.l.b16 %v269
      %v558 = vunpack.c.l.b16 %v270
      %v559 = vunpack.c.l.b16 %v271
      %v560 = vunpack.c.l.b16 %v272
      %v561 = vunpack.c.l.b16 %v273
      %v562 = vunpack.c.l.b16 %v274
      %v563 = vunpack.c.l.b16 %v275
      %v564 = vunpack.c.l.b16 %v276
      %v565 = vunpack.c.l.b16 %v277
      %v566 = vunpack.c.l.b16 %v278
      %v567 = vunpack.c.l.b16 %v279
      %v568 = vunpack.c.l.b16 %v280
      %v569 = vunpack.c.l.b16 %v281
      %v570 = vunpack.c.l.b16 %v282
      %v571 = vpack.c.b16 %v556, %v555
      %v572 = vpack.c.b16 %v558, %v557
      %v573 = vpack.c.b16 %v560, %v559
      %v574 = vpack.c.b16 %v562, %v561
      %v575 = vpack.c.b16 %v564, %v563
      %v576 = vpack.c.b16 %v566, %v565
      %v577 = vpack.c.b16 %v568, %v567
      %v578 = vpack.c.b16 %v570, %v569
      %587 = vmatpush.bf16.msra.mxu0 %v578
      %588 = vmatpush.bf16.msra.mxu0 %v577
      %589 = vmatpush.bf16.msra.mxu0 %v576
      %590 = vmatpush.bf16.msra.mxu0 %v575
      %591 = vmatpush.bf16.msra.mxu0 %v574
      %592 = vmatpush.bf16.msra.mxu0 %v573
      %593 = vmatpush.bf16.msra.mxu0 %v572
      %594 = vmatpush.bf16.msra.mxu0 %v571
      %595 = vmatmul.bf16.gmra.mxu0 %v537
      %v596 = vpop.f32.mrf.mxu0
      %v597 = vadd.f32 %v454, %v596
      %v598 = vpop.f32.mrf.mxu0
      %v599 = vadd.f32 %v456, %v598
      %600 = vmatmul.bf16.gmra.mxu0 %v364
      %v601 = vpop.f32.mrf.mxu0
      %v602 = vadd.f32 %v459, %v601
      %v603 = vpop.f32.mrf.mxu0
      %v604 = vadd.f32 %v461, %v603
      %605 = vmatmul.bf16.gmra.mxu0 %v365
      %v606 = vpop.f32.mrf.mxu0
      %v607 = vadd.f32 %v464, %v606
      %v608 = vpop.f32.mrf.mxu0
      %v609 = vadd.f32 %v466, %v608
      %610 = vmatmul.bf16.gmra.mxu0 %v366
      %v611 = vpop.f32.mrf.mxu0
      %v612 = vadd.f32 %v469, %v611
      %v613 = vpop.f32.mrf.mxu0
      %v614 = vadd.f32 %v471, %v613
      %615 = vmatmul.bf16.gmra.mxu0 %v367
      %v616 = vpop.f32.mrf.mxu0
      %v617 = vadd.f32 %v474, %v616
      %v618 = vpop.f32.mrf.mxu0
      %v619 = vadd.f32 %v476, %v618
      %620 = vmatmul.bf16.gmra.mxu0 %v368
      %v621 = vpop.f32.mrf.mxu0
      %v622 = vadd.f32 %v479, %v621
      %v623 = vpop.f32.mrf.mxu0
      %v624 = vadd.f32 %v481, %v623
      %625 = vmatmul.bf16.gmra.mxu0 %v369
      %v626 = vpop.f32.mrf.mxu0
      %v627 = vadd.f32 %v484, %v626
      %v628 = vpop.f32.mrf.mxu0
      %v629 = vadd.f32 %v486, %v628
      %630 = vmatmul.bf16.gmra.mxu0 %v370
      %v631 = vpop.f32.mrf.mxu0
      %v632 = vadd.f32 %v489, %v631
      %v633 = vpop.f32.mrf.mxu0
      %v634 = vadd.f32 %v491, %v633
      %635 = vmatmul.bf16.gmra.mxu0 %v371
      %v636 = vpop.f32.mrf.mxu0
      %v637 = vadd.f32 %v494, %v636
      %v638 = vpop.f32.mrf.mxu0
      %v639 = vadd.f32 %v496, %v638
      %640 = vmatmul.bf16.gmra.mxu0 %v372
      %v641 = vpop.f32.mrf.mxu0
      %v642 = vadd.f32 %v499, %v641
      %v643 = vpop.f32.mrf.mxu0
      %v644 = vadd.f32 %v501, %v643
      %645 = vmatmul.bf16.gmra.mxu0 %v373
      %v646 = vpop.f32.mrf.mxu0
      %v647 = vadd.f32 %v504, %v646
      %v648 = vpop.f32.mrf.mxu0
      %v649 = vadd.f32 %v506, %v648
      %650 = vmatmul.bf16.gmra.mxu0 %v374
      %v651 = vpop.f32.mrf.mxu0
      %v652 = vadd.f32 %v509, %v651
      %v653 = vpop.f32.mrf.mxu0
      %v654 = vadd.f32 %v511, %v653
      %655 = vmatmul.bf16.gmra.mxu0 %v375
      %v656 = vpop.f32.mrf.mxu0
      %v657 = vadd.f32 %v514, %v656
      %v658 = vpop.f32.mrf.mxu0
      %v659 = vadd.f32 %v516, %v658
      %660 = vmatmul.bf16.gmra.mxu0 %v376
      %v661 = vpop.f32.mrf.mxu0
      %v662 = vadd.f32 %v519, %v661
      %v663 = vpop.f32.mrf.mxu0
      %v664 = vadd.f32 %v521, %v663
      %665 = vmatmul.bf16.gmra.mxu0 %v377
      %v666 = vpop.f32.mrf.mxu0
      %v667 = vadd.f32 %v524, %v666
      %v668 = vpop.f32.mrf.mxu0
      %v669 = vadd.f32 %v526, %v668
      %670 = vmatmul.bf16.gmra.mxu0 %v378
      %v671 = vpop.f32.mrf.mxu0
      %v672 = vadd.f32 %v529, %v671
      %v673 = vpop.f32.mrf.mxu0
      %v674 = vadd.f32 %v531, %v673
      %675 = vdwg.mxu0
      %s676 = scalar_lea.vmem %s1, 384
      %v677 = vld [vmem:[%s676] sm:$0xf]
      %v678 = vld [vmem:[%s676 + $0x4] sm:$0xf]
      %v679 = vld [vmem:[%s676 + $0x8] sm:$0xf]
      %v680 = vld [vmem:[%s676 + $0xc] sm:$0xf]
      %v681 = vld [vmem:[%s676 + $0x10] sm:$0xf]
      %v682 = vld [vmem:[%s676 + $0x14] sm:$0xf]
      %v683 = vld [vmem:[%s676 + $0x18] sm:$0xf]
      %v684 = vld [vmem:[%s676 + $0x1c] sm:$0xf]
      %v685 = vld [vmem:[%s676 + $0x20] sm:$0xf]
      %v686 = vld [vmem:[%s676 + $0x24] sm:$0xf]
      %v687 = vld [vmem:[%s676 + $0x28] sm:$0xf]
      %v688 = vld [vmem:[%s676 + $0x2c] sm:$0xf]
      %v689 = vld [vmem:[%s676 + $0x30] sm:$0xf]
      %v690 = vld [vmem:[%s676 + $0x34] sm:$0xf]
      %v691 = vld [vmem:[%s676 + $0x38] sm:$0xf]
      %v692 = vld [vmem:[%s676 + $0x3c] sm:$0xf]
      %v695 = vunpack.c.l.b16 %v265
      %v696 = vunpack.c.l.b16 %v266
      %v697 = vpack.c.b16 %v696, %v695
      %v715 = vunpack.c.l.b16 %v677
      %v716 = vunpack.c.l.b16 %v678
      %v717 = vunpack.c.l.b16 %v679
      %v718 = vunpack.c.l.b16 %v680
      %v719 = vunpack.c.l.b16 %v681
      %v720 = vunpack.c.l.b16 %v682
      %v721 = vunpack.c.l.b16 %v683
      %v722 = vunpack.c.l.b16 %v684
      %v723 = vunpack.c.l.b16 %v685
      %v724 = vunpack.c.l.b16 %v686
      %v725 = vunpack.c.l.b16 %v687
      %v726 = vunpack.c.l.b16 %v688
      %v727 = vunpack.c.l.b16 %v689
      %v728 = vunpack.c.l.b16 %v690
      %v729 = vunpack.c.l.b16 %v691
      %v730 = vunpack.c.l.b16 %v692
      %v731 = vpack.c.b16 %v716, %v715
      %v732 = vpack.c.b16 %v718, %v717
      %v733 = vpack.c.b16 %v720, %v719
      %v734 = vpack.c.b16 %v722, %v721
      %v735 = vpack.c.b16 %v724, %v723
      %v736 = vpack.c.b16 %v726, %v725
      %v737 = vpack.c.b16 %v728, %v727
      %v738 = vpack.c.b16 %v730, %v729
      %747 = vmatpush.bf16.msra.mxu0 %v738
      %748 = vmatpush.bf16.msra.mxu0 %v737
      %749 = vmatpush.bf16.msra.mxu0 %v736
      %750 = vmatpush.bf16.msra.mxu0 %v735
      %751 = vmatpush.bf16.msra.mxu0 %v734
      %752 = vmatpush.bf16.msra.mxu0 %v733
      %753 = vmatpush.bf16.msra.mxu0 %v732
      %754 = vmatpush.bf16.msra.mxu0 %v731
      %755 = vmatmul.bf16.gmra.mxu0 %v365
      %v756 = vpop.f32.mrf.mxu0
      %v757 = vadd.f32 0.0, %v756
      %v758 = vpop.f32.mrf.mxu0
      %v759 = vadd.f32 0.0, %v758
      %760 = vmatmul.bf16.gmra.mxu0 %v366
      %v761 = vpop.f32.mrf.mxu0
      %v762 = vadd.f32 0.0, %v761
      %v763 = vpop.f32.mrf.mxu0
      %v764 = vadd.f32 0.0, %v763
      %765 = vmatmul.bf16.gmra.mxu0 %v367
      %v766 = vpop.f32.mrf.mxu0
      %v767 = vadd.f32 0.0, %v766
      %v768 = vpop.f32.mrf.mxu0
      %v769 = vadd.f32 0.0, %v768
      %770 = vmatmul.bf16.gmra.mxu0 %v368
      %v771 = vpop.f32.mrf.mxu0
      %v772 = vadd.f32 0.0, %v771
      %v773 = vpop.f32.mrf.mxu0
      %v774 = vadd.f32 0.0, %v773
      %775 = vmatmul.bf16.gmra.mxu0 %v369
      %v776 = vpop.f32.mrf.mxu0
      %v777 = vadd.f32 0.0, %v776
      %v778 = vpop.f32.mrf.mxu0
      %v779 = vadd.f32 0.0, %v778
      %780 = vmatmul.bf16.gmra.mxu0 %v370
      %v781 = vpop.f32.mrf.mxu0
      %v782 = vadd.f32 0.0, %v781
      %v783 = vpop.f32.mrf.mxu0
      %v784 = vadd.f32 0.0, %v783
      %785 = vmatmul.bf16.gmra.mxu0 %v371
      %v786 = vpop.f32.mrf.mxu0
      %v787 = vadd.f32 0.0, %v786
      %v788 = vpop.f32.mrf.mxu0
      %v789 = vadd.f32 0.0, %v788
      %790 = vmatmul.bf16.gmra.mxu0 %v372
      %v791 = vpop.f32.mrf.mxu0
      %v792 = vadd.f32 0.0, %v791
      %v793 = vpop.f32.mrf.mxu0
      %v794 = vadd.f32 0.0, %v793
      %795 = vmatmul.bf16.gmra.mxu0 %v373
      %v796 = vpop.f32.mrf.mxu0
      %v797 = vadd.f32 0.0, %v796
      %v798 = vpop.f32.mrf.mxu0
      %v799 = vadd.f32 0.0, %v798
      %800 = vmatmul.bf16.gmra.mxu0 %v374
      %v801 = vpop.f32.mrf.mxu0
      %v802 = vadd.f32 0.0, %v801
      %v803 = vpop.f32.mrf.mxu0
      %v804 = vadd.f32 0.0, %v803
      %805 = vmatmul.bf16.gmra.mxu0 %v375
      %v806 = vpop.f32.mrf.mxu0
      %v807 = vadd.f32 0.0, %v806
      %v808 = vpop.f32.mrf.mxu0
      %v809 = vadd.f32 0.0, %v808
      %810 = vmatmul.bf16.gmra.mxu0 %v376
      %v811 = vpop.f32.mrf.mxu0
      %v812 = vadd.f32 0.0, %v811
      %v813 = vpop.f32.mrf.mxu0
      %v814 = vadd.f32 0.0, %v813
      %815 = vmatmul.bf16.gmra.mxu0 %v377
      %v816 = vpop.f32.mrf.mxu0
      %v817 = vadd.f32 0.0, %v816
      %v818 = vpop.f32.mrf.mxu0
      %v819 = vadd.f32 0.0, %v818
      %820 = vmatmul.bf16.gmra.mxu0 %v378
      %v821 = vpop.f32.mrf.mxu0
      %v822 = vadd.f32 0.0, %v821
      %v823 = vpop.f32.mrf.mxu0
      %v824 = vadd.f32 0.0, %v823
      %825 = vmatmul.bf16.gmra.mxu0 %v379
      %v826 = vpop.f32.mrf.mxu0
      %v827 = vadd.f32 0.0, %v826
      %v828 = vpop.f32.mrf.mxu0
      %v829 = vadd.f32 0.0, %v828
      %830 = vmatmul.bf16.gmra.mxu0 %v697
      %v831 = vpop.f32.mrf.mxu0
      %v832 = vadd.f32 0.0, %v831
      %v833 = vpop.f32.mrf.mxu0
      %v834 = vadd.f32 0.0, %v833
      %835 = vdwg.mxu0
      %v836 = vadd.f32 %v597, %v757
      %v837 = vadd.f32 %v599, %v759
      %v838 = vadd.f32 %v602, %v762
      %v839 = vadd.f32 %v604, %v764
      %v840 = vadd.f32 %v607, %v767
      %v841 = vadd.f32 %v609, %v769
      %v842 = vadd.f32 %v612, %v772
      %v843 = vadd.f32 %v614, %v774
      %v844 = vadd.f32 %v617, %v777
      %v845 = vadd.f32 %v619, %v779
      %v846 = vadd.f32 %v622, %v782
      %v847 = vadd.f32 %v624, %v784
      %v848 = vadd.f32 %v627, %v787
      %v849 = vadd.f32 %v629, %v789
      %v850 = vadd.f32 %v632, %v792
      %v851 = vadd.f32 %v634, %v794
      %v852 = vadd.f32 %v637, %v797
      %v853 = vadd.f32 %v639, %v799
      %v854 = vadd.f32 %v642, %v802
      %v855 = vadd.f32 %v644, %v804
      %v856 = vadd.f32 %v647, %v807
      %v857 = vadd.f32 %v649, %v809
      %v858 = vadd.f32 %v652, %v812
      %v859 = vadd.f32 %v654, %v814
      %v860 = vadd.f32 %v657, %v817
      %v861 = vadd.f32 %v659, %v819
      %v862 = vadd.f32 %v662, %v822
      %v863 = vadd.f32 %v664, %v824
      %v864 = vadd.f32 %v667, %v827
      %v865 = vadd.f32 %v669, %v829
      %v866 = vadd.f32 %v672, %v832
      %v867 = vadd.f32 %v674, %v834
      %v868 = vld [vmem:[#allocation2] sm:$0xf]
      %v869 = vld [vmem:[#allocation2 + $0x4] sm:$0xf]
      %v870 = vld [vmem:[#allocation2 + $0x8] sm:$0x1]
      %v871 = vld [vmem:[#allocation2 + $0xc] sm:$0xf]
      %v872 = vld [vmem:[#allocation2 + $0x10] sm:$0xf]
      %v873 = vld [vmem:[#allocation2 + $0x14] sm:$0x1]
      %v874 = vld [vmem:[#allocation2 + $0x18] sm:$0xf]
      %v875 = vld [vmem:[#allocation2 + $0x1c] sm:$0xf]
      %v876 = vld [vmem:[#allocation2 + $0x20] sm:$0x1]
      %v877 = vld [vmem:[#allocation2 + $0x24] sm:$0xf]
      %v878 = vld [vmem:[#allocation2 + $0x28] sm:$0xf]
      %v879 = vld [vmem:[#allocation2 + $0x2c] sm:$0x1]
      %v880 = vld [vmem:[#allocation2 + $0x30] sm:$0xf]
      %v881 = vld [vmem:[#allocation2 + $0x34] sm:$0xf]
      %v882 = vld [vmem:[#allocation2 + $0x38] sm:$0x1]
      %v883 = vld [vmem:[#allocation2 + $0x3c] sm:$0xf]
      %v884 = vld [vmem:[#allocation2 + $0x40] sm:$0xf]
      %v885 = vld [vmem:[#allocation2 + $0x44] sm:$0x1]
      %v886 = vld [vmem:[#allocation2 + $0x48] sm:$0xf]
      %v887 = vld [vmem:[#allocation2 + $0x4c] sm:$0xf]
      %v888 = vld [vmem:[#allocation2 + $0x50] sm:$0x1]
      %v889 = vld [vmem:[#allocation2 + $0x54] sm:$0xf]
      %v890 = vld [vmem:[#allocation2 + $0x58] sm:$0xf]
      %v891 = vld [vmem:[#allocation2 + $0x5c] sm:$0x1]
      %v892 = vld [vmem:[#allocation2 + $0x60] sm:$0xf]
      %v893 = vld [vmem:[#allocation2 + $0x64] sm:$0xf]
      %v894 = vld [vmem:[#allocation2 + $0x68] sm:$0x1]
      %v895 = vld [vmem:[#allocation2 + $0x6c] sm:$0xf]
      %v896 = vld [vmem:[#allocation2 + $0x70] sm:$0xf]
      %v897 = vld [vmem:[#allocation2 + $0x74] sm:$0x1]
      %v898 = vld [vmem:[#allocation2 + $0x78] sm:$0xf]
      %v899 = vld [vmem:[#allocation2 + $0x7c] sm:$0xf]
      %v900 = vld [vmem:[#allocation2 + $0x80] sm:$0x1]
      %v901 = vld [vmem:[#allocation2 + $0x84] sm:$0xf]
      %v902 = vld [vmem:[#allocation2 + $0x88] sm:$0xf]
      %v903 = vld [vmem:[#allocation2 + $0x8c] sm:$0x1]
      %v904 = vld [vmem:[#allocation2 + $0x90] sm:$0xf]
      %v905 = vld [vmem:[#allocation2 + $0x94] sm:$0xf]
      %v906 = vld [vmem:[#allocation2 + $0x98] sm:$0x1]
      %v907 = vld [vmem:[#allocation2 + $0x9c] sm:$0xf]
      %v908 = vld [vmem:[#allocation2 + $0xa0] sm:$0xf]
      %v909 = vld [vmem:[#allocation2 + $0xa4] sm:$0x1]
      %v910 = vld [vmem:[#allocation2 + $0xa8] sm:$0xf]
      %v911 = vld [vmem:[#allocation2 + $0xac] sm:$0xf]
      %v912 = vld [vmem:[#allocation2 + $0xb0] sm:$0x1]
      %v913 = vld [vmem:[#allocation2 + $0xb4] sm:$0xf]
      %v914 = vld [vmem:[#allocation2 + $0xb8] sm:$0xf]
      %v915 = vld [vmem:[#allocation2 + $0xbc] sm:$0x1]
      %v916 = vld [vmem:[#allocation2 + $0xc0] sm:$0xf]
      %v917 = vld [vmem:[#allocation2 + $0xc4] sm:$0xf]
      %v918 = vld [vmem:[#allocation2 + $0xc8] sm:$0x1]
      %v919 = vld [vmem:[#allocation2 + $0xcc] sm:$0xf]
      %v920 = vld [vmem:[#allocation2 + $0xd0] sm:$0xf]
      %v921 = vld [vmem:[#allocation2 + $0xd4] sm:$0x1]
      %vm922 = vsmask.f32 3328
      %vm923 = vsmask.f32 7440
      %vm924 = vmor %vm922, %vm923
      %v926 = vshrl.u32 %v868, 16
      %v928 = vrot.slane %v926, 4
      %v929 = vshll.u32 %v868, 16
      %v931 = vrot.slane %v929, 5
      %v932 = vor.u32 %v928, %v931
      %v933 = vrot.slane %v932, 4
      %v935 = vshll.u32 %v869, 16
      %v937 = vrot.slane %v935, 5
      %v938 = vsel %vm924, %v933, %v937
      %v939 = vshrl.u32 %v869, 16
      %v941 = vrot.slane %v939, 4
      %v942 = vor.u32 %v941, %v937
      %v943 = vrot.slane %v942, 4
      %v945 = vshll.u32 %v870, 16
      %v947 = vrot.slane %v945, 5
      %v948 = vsel %vm924, %v943, %v947
      %v950 = vshrl.u32 %v871, 16
      %v952 = vrot.slane %v950, 4
      %v953 = vshll.u32 %v871, 16
      %v955 = vrot.slane %v953, 5
      %v956 = vor.u32 %v952, %v955
      %v957 = vrot.slane %v956, 4
      %v959 = vshll.u32 %v872, 16
      %v961 = vrot.slane %v959, 5
      %v962 = vsel %vm924, %v957, %v961
      %v963 = vshrl.u32 %v872, 16
      %v965 = vrot.slane %v963, 4
      %v966 = vor.u32 %v965, %v961
      %v967 = vrot.slane %v966, 4
      %v969 = vshll.u32 %v873, 16
      %v971 = vrot.slane %v969, 5
      %v972 = vsel %vm924, %v967, %v971
      %v974 = vshrl.u32 %v874, 16
      %v976 = vrot.slane %v974, 4
      %v977 = vshll.u32 %v874, 16
      %v979 = vrot.slane %v977, 5
      %v980 = vor.u32 %v976, %v979
      %v981 = vrot.slane %v980, 4
      %v983 = vshll.u32 %v875, 16
      %v985 = vrot.slane %v983, 5
      %v986 = vsel %vm924, %v981, %v985
      %v987 = vshrl.u32 %v875, 16
      %v989 = vrot.slane %v987, 4
      %v990 = vor.u32 %v989, %v985
      %v991 = vrot.slane %v990, 4
      %v993 = vshll.u32 %v876, 16
      %v995 = vrot.slane %v993, 5
      %v996 = vsel %vm924, %v991, %v995
      %v998 = vshrl.u32 %v877, 16
      %v1000 = vrot.slane %v998, 4
      %v1001 = vshll.u32 %v877, 16
      %v1003 = vrot.slane %v1001, 5
      %v1004 = vor.u32 %v1000, %v1003
      %v1005 = vrot.slane %v1004, 4
      %v1007 = vshll.u32 %v878, 16
      %v1009 = vrot.slane %v1007, 5
      %v1010 = vsel %vm924, %v1005, %v1009
      %v1011 = vshrl.u32 %v878, 16
      %v1013 = vrot.slane %v1011, 4
      %v1014 = vor.u32 %v1013, %v1009
      %v1015 = vrot.slane %v1014, 4
      %v1017 = vshll.u32 %v879, 16
      %v1019 = vrot.slane %v1017, 5
      %v1020 = vsel %vm924, %v1015, %v1019
      %v1022 = vshrl.u32 %v880, 16
      %v1024 = vrot.slane %v1022, 4
      %v1025 = vshll.u32 %v880, 16
      %v1027 = vrot.slane %v1025, 5
      %v1028 = vor.u32 %v1024, %v1027
      %v1029 = vrot.slane %v1028, 4
      %v1031 = vshll.u32 %v881, 16
      %v1033 = vrot.slane %v1031, 5
      %v1034 = vsel %vm924, %v1029, %v1033
      %v1035 = vshrl.u32 %v881, 16
      %v1037 = vrot.slane %v1035, 4
      %v1038 = vor.u32 %v1037, %v1033
      %v1039 = vrot.slane %v1038, 4
      %v1041 = vshll.u32 %v882, 16
      %v1043 = vrot.slane %v1041, 5
      %v1044 = vsel %vm924, %v1039, %v1043
      %v1046 = vshrl.u32 %v883, 16
      %v1048 = vrot.slane %v1046, 4
      %v1049 = vshll.u32 %v883, 16
      %v1051 = vrot.slane %v1049, 5
      %v1052 = vor.u32 %v1048, %v1051
      %v1053 = vrot.slane %v1052, 4
      %v1055 = vshll.u32 %v884, 16
      %v1057 = vrot.slane %v1055, 5
      %v1058 = vsel %vm924, %v1053, %v1057
      %v1059 = vshrl.u32 %v884, 16
      %v1061 = vrot.slane %v1059, 4
      %v1062 = vor.u32 %v1061, %v1057
      %v1063 = vrot.slane %v1062, 4
      %v1065 = vshll.u32 %v885, 16
      %v1067 = vrot.slane %v1065, 5
      %v1068 = vsel %vm924, %v1063, %v1067
      %v1070 = vshrl.u32 %v886, 16
      %v1072 = vrot.slane %v1070, 4
      %v1073 = vshll.u32 %v886, 16
      %v1075 = vrot.slane %v1073, 5
      %v1076 = vor.u32 %v1072, %v1075
      %v1077 = vrot.slane %v1076, 4
      %v1079 = vshll.u32 %v887, 16
      %v1081 = vrot.slane %v1079, 5
      %v1082 = vsel %vm924, %v1077, %v1081
      %v1083 = vshrl.u32 %v887, 16
      %v1085 = vrot.slane %v1083, 4
      %v1086 = vor.u32 %v1085, %v1081
      %v1087 = vrot.slane %v1086, 4
      %v1089 = vshll.u32 %v888, 16
      %v1091 = vrot.slane %v1089, 5
      %v1092 = vsel %vm924, %v1087, %v1091
      %v1094 = vshrl.u32 %v889, 16
      %v1096 = vrot.slane %v1094, 4
      %v1097 = vshll.u32 %v889, 16
      %v1099 = vrot.slane %v1097, 5
      %v1100 = vor.u32 %v1096, %v1099
      %v1101 = vrot.slane %v1100, 4
      %v1103 = vshll.u32 %v890, 16
      %v1105 = vrot.slane %v1103, 5
      %v1106 = vsel %vm924, %v1101, %v1105
      %v1107 = vshrl.u32 %v890, 16
      %v1109 = vrot.slane %v1107, 4
      %v1110 = vor.u32 %v1109, %v1105
      %v1111 = vrot.slane %v1110, 4
      %v1113 = vshll.u32 %v891, 16
      %v1115 = vrot.slane %v1113, 5
      %v1116 = vsel %vm924, %v1111, %v1115
      %v1118 = vshrl.u32 %v892, 16
      %v1120 = vrot.slane %v1118, 4
      %v1121 = vshll.u32 %v892, 16
      %v1123 = vrot.slane %v1121, 5
      %v1124 = vor.u32 %v1120, %v1123
      %v1125 = vrot.slane %v1124, 4
      %v1127 = vshll.u32 %v893, 16
      %v1129 = vrot.slane %v1127, 5
      %v1130 = vsel %vm924, %v1125, %v1129
      %v1131 = vshrl.u32 %v893, 16
      %v1133 = vrot.slane %v1131, 4
      %v1134 = vor.u32 %v1133, %v1129
      %v1135 = vrot.slane %v1134, 4
      %v1137 = vshll.u32 %v894, 16
      %v1139 = vrot.slane %v1137, 5
      %v1140 = vsel %vm924, %v1135, %v1139
      %v1142 = vshrl.u32 %v895, 16
      %v1144 = vrot.slane %v1142, 4
      %v1145 = vshll.u32 %v895, 16
      %v1147 = vrot.slane %v1145, 5
      %v1148 = vor.u32 %v1144, %v1147
      %v1149 = vrot.slane %v1148, 4
      %v1151 = vshll.u32 %v896, 16
      %v1153 = vrot.slane %v1151, 5
      %v1154 = vsel %vm924, %v1149, %v1153
      %v1155 = vshrl.u32 %v896, 16
      %v1157 = vrot.slane %v1155, 4
      %v1158 = vor.u32 %v1157, %v1153
      %v1159 = vrot.slane %v1158, 4
      %v1161 = vshll.u32 %v897, 16
      %v1163 = vrot.slane %v1161, 5
      %v1164 = vsel %vm924, %v1159, %v1163
      %v1166 = vshrl.u32 %v898, 16
      %v1168 = vrot.slane %v1166, 4
      %v1169 = vshll.u32 %v898, 16
      %v1171 = vrot.slane %v1169, 5
      %v1172 = vor.u32 %v1168, %v1171
      %v1173 = vrot.slane %v1172, 4
      %v1175 = vshll.u32 %v899, 16
      %v1177 = vrot.slane %v1175, 5
      %v1178 = vsel %vm924, %v1173, %v1177
      %v1179 = vshrl.u32 %v899, 16
      %v1181 = vrot.slane %v1179, 4
      %v1182 = vor.u32 %v1181, %v1177
      %v1183 = vrot.slane %v1182, 4
      %v1185 = vshll.u32 %v900, 16
      %v1187 = vrot.slane %v1185, 5
      %v1188 = vsel %vm924, %v1183, %v1187
      %v1190 = vshrl.u32 %v901, 16
      %v1192 = vrot.slane %v1190, 4
      %v1193 = vshll.u32 %v901, 16
      %v1195 = vrot.slane %v1193, 5
      %v1196 = vor.u32 %v1192, %v1195
      %v1197 = vrot.slane %v1196, 4
      %v1199 = vshll.u32 %v902, 16
      %v1201 = vrot.slane %v1199, 5
      %v1202 = vsel %vm924, %v1197, %v1201
      %v1203 = vshrl.u32 %v902, 16
      %v1205 = vrot.slane %v1203, 4
      %v1206 = vor.u32 %v1205, %v1201
      %v1207 = vrot.slane %v1206, 4
      %v1209 = vshll.u32 %v903, 16
      %v1211 = vrot.slane %v1209, 5
      %v1212 = vsel %vm924, %v1207, %v1211
      %v1214 = vshrl.u32 %v904, 16
      %v1216 = vrot.slane %v1214, 4
      %v1217 = vshll.u32 %v904, 16
      %v1219 = vrot.slane %v1217, 5
      %v1220 = vor.u32 %v1216, %v1219
      %v1221 = vrot.slane %v1220, 4
      %v1223 = vshll.u32 %v905, 16
      %v1225 = vrot.slane %v1223, 5
      %v1226 = vsel %vm924, %v1221, %v1225
      %v1227 = vshrl.u32 %v905, 16
      %v1229 = vrot.slane %v1227, 4
      %v1230 = vor.u32 %v1229, %v1225
      %v1231 = vrot.slane %v1230, 4
      %v1233 = vshll.u32 %v906, 16
      %v1235 = vrot.slane %v1233, 5
      %v1236 = vsel %vm924, %v1231, %v1235
      %v1238 = vshrl.u32 %v907, 16
      %v1240 = vrot.slane %v1238, 4
      %v1241 = vshll.u32 %v907, 16
      %v1243 = vrot.slane %v1241, 5
      %v1244 = vor.u32 %v1240, %v1243
      %v1245 = vrot.slane %v1244, 4
      %v1247 = vshll.u32 %v908, 16
      %v1249 = vrot.slane %v1247, 5
      %v1250 = vsel %vm924, %v1245, %v1249
      %v1251 = vshrl.u32 %v908, 16
      %v1253 = vrot.slane %v1251, 4
      %v1254 = vor.u32 %v1253, %v1249
      %v1255 = vrot.slane %v1254, 4
      %v1257 = vshll.u32 %v909, 16
      %v1259 = vrot.slane %v1257, 5
      %v1260 = vsel %vm924, %v1255, %v1259
      %v1262 = vshrl.u32 %v910, 16
      %v1264 = vrot.slane %v1262, 4
      %v1265 = vshll.u32 %v910, 16
      %v1267 = vrot.slane %v1265, 5
      %v1268 = vor.u32 %v1264, %v1267
      %v1269 = vrot.slane %v1268, 4
      %v1271 = vshll.u32 %v911, 16
      %v1273 = vrot.slane %v1271, 5
      %v1274 = vsel %vm924, %v1269, %v1273
      %v1275 = vshrl.u32 %v911, 16
      %v1277 = vrot.slane %v1275, 4
      %v1278 = vor.u32 %v1277, %v1273
      %v1279 = vrot.slane %v1278, 4
      %v1281 = vshll.u32 %v912, 16
      %v1283 = vrot.slane %v1281, 5
      %v1284 = vsel %vm924, %v1279, %v1283
      %v1286 = vshrl.u32 %v913, 16
      %v1288 = vrot.slane %v1286, 4
      %v1289 = vshll.u32 %v913, 16
      %v1291 = vrot.slane %v1289, 5
      %v1292 = vor.u32 %v1288, %v1291
      %v1293 = vrot.slane %v1292, 4
      %v1295 = vshll.u32 %v914, 16
      %v1297 = vrot.slane %v1295, 5
      %v1298 = vsel %vm924, %v1293, %v1297
      %v1299 = vshrl.u32 %v914, 16
      %v1301 = vrot.slane %v1299, 4
      %v1302 = vor.u32 %v1301, %v1297
      %v1303 = vrot.slane %v1302, 4
      %v1305 = vshll.u32 %v915, 16
      %v1307 = vrot.slane %v1305, 5
      %v1308 = vsel %vm924, %v1303, %v1307
      %v1310 = vshrl.u32 %v916, 16
      %v1312 = vrot.slane %v1310, 4
      %v1313 = vshll.u32 %v916, 16
      %v1315 = vrot.slane %v1313, 5
      %v1316 = vor.u32 %v1312, %v1315
      %v1317 = vrot.slane %v1316, 4
      %v1319 = vshll.u32 %v917, 16
      %v1321 = vrot.slane %v1319, 5
      %v1322 = vsel %vm924, %v1317, %v1321
      %v1323 = vshrl.u32 %v917, 16
      %v1325 = vrot.slane %v1323, 4
      %v1326 = vor.u32 %v1325, %v1321
      %v1327 = vrot.slane %v1326, 4
      %v1329 = vshll.u32 %v918, 16
      %v1331 = vrot.slane %v1329, 5
      %v1332 = vsel %vm924, %v1327, %v1331
      %v1334 = vshrl.u32 %v919, 16
      %v1336 = vrot.slane %v1334, 4
      %v1337 = vshll.u32 %v919, 16
      %v1339 = vrot.slane %v1337, 5
      %v1340 = vor.u32 %v1336, %v1339
      %v1341 = vrot.slane %v1340, 4
      %v1343 = vshll.u32 %v920, 16
      %v1345 = vrot.slane %v1343, 5
      %v1346 = vsel %vm924, %v1341, %v1345
      %v1347 = vshrl.u32 %v920, 16
      %v1349 = vrot.slane %v1347, 4
      %v1350 = vor.u32 %v1349, %v1345
      %v1351 = vrot.slane %v1350, 4
      %v1353 = vshll.u32 %v921, 16
      %v1355 = vrot.slane %v1353, 5
      %v1356 = vsel %vm924, %v1351, %v1355
      %s1357 = scalar_lea.vmem %s1, 64
      %v1358 = vld [vmem:[%s1357] sm:$0xf]
      %v1359 = vld [vmem:[%s1357 + $0x4] sm:$0xf]
      %v1360 = vld [vmem:[%s1357 + $0x8] sm:$0xf]
      %v1361 = vld [vmem:[%s1357 + $0xc] sm:$0xf]
      %v1362 = vld [vmem:[%s1357 + $0x10] sm:$0xf]
      %v1363 = vld [vmem:[%s1357 + $0x14] sm:$0xf]
      %v1364 = vld [vmem:[%s1357 + $0x18] sm:$0xf]
      %v1365 = vld [vmem:[%s1357 + $0x1c] sm:$0xf]
      %v1366 = vld [vmem:[%s1357 + $0x20] sm:$0xf]
      %v1367 = vld [vmem:[%s1357 + $0x24] sm:$0xf]
      %v1368 = vld [vmem:[%s1357 + $0x28] sm:$0xf]
      %v1369 = vld [vmem:[%s1357 + $0x2c] sm:$0xf]
      %v1370 = vld [vmem:[%s1357 + $0x30] sm:$0xf]
      %v1371 = vld [vmem:[%s1357 + $0x34] sm:$0xf]
      %v1372 = vld [vmem:[%s1357 + $0x38] sm:$0xf]
      %v1373 = vld [vmem:[%s1357 + $0x3c] sm:$0xf]
      %v1374 = vunpack.c.l.b16 %v938
      %v1375 = vunpack.c.l.b16 %v948
      %v1376 = vunpack.c.l.b16 %v962
      %v1377 = vunpack.c.l.b16 %v972
      %v1378 = vunpack.c.l.b16 %v986
      %v1379 = vunpack.c.l.b16 %v996
      %v1380 = vunpack.c.l.b16 %v1010
      %v1381 = vunpack.c.l.b16 %v1020
      %v1382 = vunpack.c.l.b16 %v1034
      %v1383 = vunpack.c.l.b16 %v1044
      %v1384 = vunpack.c.l.b16 %v1058
      %v1385 = vunpack.c.l.b16 %v1068
      %v1386 = vunpack.c.l.b16 %v1082
      %v1387 = vunpack.c.l.b16 %v1092
      %v1388 = vunpack.c.l.b16 %v1106
      %v1389 = vunpack.c.l.b16 %v1116
      %v1390 = vunpack.c.l.b16 %v1130
      %v1391 = vunpack.c.l.b16 %v1140
      %v1392 = vunpack.c.l.b16 %v1154
      %v1393 = vunpack.c.l.b16 %v1164
      %v1394 = vunpack.c.l.b16 %v1178
      %v1395 = vunpack.c.l.b16 %v1188
      %v1396 = vunpack.c.l.b16 %v1202
      %v1397 = vunpack.c.l.b16 %v1212
      %v1398 = vunpack.c.l.b16 %v1226
      %v1399 = vunpack.c.l.b16 %v1236
      %v1400 = vunpack.c.l.b16 %v1250
      %v1401 = vunpack.c.l.b16 %v1260
      %v1402 = vunpack.c.l.b16 %v1274
      %v1403 = vunpack.c.l.b16 %v1284
      %v1404 = vunpack.c.l.b16 %v1298
      %v1405 = vunpack.c.l.b16 %v1308
      %v1406 = vpack.c.b16 %v1375, %v1374
      %v1407 = vpack.c.b16 %v1377, %v1376
      %v1408 = vpack.c.b16 %v1379, %v1378
      %v1409 = vpack.c.b16 %v1381, %v1380
      %v1410 = vpack.c.b16 %v1383, %v1382
      %v1411 = vpack.c.b16 %v1385, %v1384
      %v1412 = vpack.c.b16 %v1387, %v1386
      %v1413 = vpack.c.b16 %v1389, %v1388
      %v1414 = vpack.c.b16 %v1391, %v1390
      %v1415 = vpack.c.b16 %v1393, %v1392
      %v1416 = vpack.c.b16 %v1395, %v1394
      %v1417 = vpack.c.b16 %v1397, %v1396
      %v1418 = vpack.c.b16 %v1399, %v1398
      %v1419 = vpack.c.b16 %v1401, %v1400
      %v1420 = vpack.c.b16 %v1403, %v1402
      %v1421 = vpack.c.b16 %v1405, %v1404
      %v1454 = vunpack.c.l.b16 %v1358
      %v1455 = vunpack.c.l.b16 %v1359
      %v1456 = vunpack.c.l.b16 %v1360
      %v1457 = vunpack.c.l.b16 %v1361
      %v1458 = vunpack.c.l.b16 %v1362
      %v1459 = vunpack.c.l.b16 %v1363
      %v1460 = vunpack.c.l.b16 %v1364
      %v1461 = vunpack.c.l.b16 %v1365
      %v1462 = vunpack.c.l.b16 %v1366
      %v1463 = vunpack.c.l.b16 %v1367
      %v1464 = vunpack.c.l.b16 %v1368
      %v1465 = vunpack.c.l.b16 %v1369
      %v1466 = vunpack.c.l.b16 %v1370
      %v1467 = vunpack.c.l.b16 %v1371
      %v1468 = vunpack.c.l.b16 %v1372
      %v1469 = vunpack.c.l.b16 %v1373
      %v1470 = vpack.c.b16 %v1455, %v1454
      %v1471 = vpack.c.b16 %v1457, %v1456
      %v1472 = vpack.c.b16 %v1459, %v1458
      %v1473 = vpack.c.b16 %v1461, %v1460
      %v1474 = vpack.c.b16 %v1463, %v1462
      %v1475 = vpack.c.b16 %v1465, %v1464
      %v1476 = vpack.c.b16 %v1467, %v1466
      %v1477 = vpack.c.b16 %v1469, %v1468
      %1486 = vmatpush.bf16.msra.mxu0 %v1477
      %1487 = vmatpush.bf16.msra.mxu0 %v1476
      %1488 = vmatpush.bf16.msra.mxu0 %v1475
      %1489 = vmatpush.bf16.msra.mxu0 %v1474
      %1490 = vmatpush.bf16.msra.mxu0 %v1473
      %1491 = vmatpush.bf16.msra.mxu0 %v1472
      %1492 = vmatpush.bf16.msra.mxu0 %v1471
      %1493 = vmatpush.bf16.msra.mxu0 %v1470
      %1494 = vmatmul.bf16.gmra.mxu0 %v1406
      %v1495 = vpop.f32.mrf.mxu0
      %v1496 = vadd.f32 0.0, %v1495
      %v1497 = vpop.f32.mrf.mxu0
      %v1498 = vadd.f32 0.0, %v1497
      %1499 = vmatmul.bf16.gmra.mxu0 %v1407
      %v1500 = vpop.f32.mrf.mxu0
      %v1501 = vadd.f32 0.0, %v1500
      %v1502 = vpop.f32.mrf.mxu0
      %v1503 = vadd.f32 0.0, %v1502
      %1504 = vmatmul.bf16.gmra.mxu0 %v1408
      %v1505 = vpop.f32.mrf.mxu0
      %v1506 = vadd.f32 0.0, %v1505
      %v1507 = vpop.f32.mrf.mxu0
      %v1508 = vadd.f32 0.0, %v1507
      %1509 = vmatmul.bf16.gmra.mxu0 %v1409
      %v1510 = vpop.f32.mrf.mxu0
      %v1511 = vadd.f32 0.0, %v1510
      %v1512 = vpop.f32.mrf.mxu0
      %v1513 = vadd.f32 0.0, %v1512
      %1514 = vmatmul.bf16.gmra.mxu0 %v1410
      %v1515 = vpop.f32.mrf.mxu0
      %v1516 = vadd.f32 0.0, %v1515
      %v1517 = vpop.f32.mrf.mxu0
      %v1518 = vadd.f32 0.0, %v1517
      %1519 = vmatmul.bf16.gmra.mxu0 %v1411
      %v1520 = vpop.f32.mrf.mxu0
      %v1521 = vadd.f32 0.0, %v1520
      %v1522 = vpop.f32.mrf.mxu0
      %v1523 = vadd.f32 0.0, %v1522
      %1524 = vmatmul.bf16.gmra.mxu0 %v1412
      %v1525 = vpop.f32.mrf.mxu0
      %v1526 = vadd.f32 0.0, %v1525
      %v1527 = vpop.f32.mrf.mxu0
      %v1528 = vadd.f32 0.0, %v1527
      %1529 = vmatmul.bf16.gmra.mxu0 %v1413
      %v1530 = vpop.f32.mrf.mxu0
      %v1531 = vadd.f32 0.0, %v1530
      %v1532 = vpop.f32.mrf.mxu0
      %v1533 = vadd.f32 0.0, %v1532
      %1534 = vmatmul.bf16.gmra.mxu0 %v1414
      %v1535 = vpop.f32.mrf.mxu0
      %v1536 = vadd.f32 0.0, %v1535
      %v1537 = vpop.f32.mrf.mxu0
      %v1538 = vadd.f32 0.0, %v1537
      %1539 = vmatmul.bf16.gmra.mxu0 %v1415
      %v1540 = vpop.f32.mrf.mxu0
      %v1541 = vadd.f32 0.0, %v1540
      %v1542 = vpop.f32.mrf.mxu0
      %v1543 = vadd.f32 0.0, %v1542
      %1544 = vmatmul.bf16.gmra.mxu0 %v1416
      %v1545 = vpop.f32.mrf.mxu0
      %v1546 = vadd.f32 0.0, %v1545
      %v1547 = vpop.f32.mrf.mxu0
      %v1548 = vadd.f32 0.0, %v1547
      %1549 = vmatmul.bf16.gmra.mxu0 %v1417
      %v1550 = vpop.f32.mrf.mxu0
      %v1551 = vadd.f32 0.0, %v1550
      %v1552 = vpop.f32.mrf.mxu0
      %v1553 = vadd.f32 0.0, %v1552
      %1554 = vmatmul.bf16.gmra.mxu0 %v1418
      %v1555 = vpop.f32.mrf.mxu0
      %v1556 = vadd.f32 0.0, %v1555
      %v1557 = vpop.f32.mrf.mxu0
      %v1558 = vadd.f32 0.0, %v1557
      %1559 = vmatmul.bf16.gmra.mxu0 %v1419
      %v1560 = vpop.f32.mrf.mxu0
      %v1561 = vadd.f32 0.0, %v1560
      %v1562 = vpop.f32.mrf.mxu0
      %v1563 = vadd.f32 0.0, %v1562
      %1564 = vmatmul.bf16.gmra.mxu0 %v1420
      %v1565 = vpop.f32.mrf.mxu0
      %v1566 = vadd.f32 0.0, %v1565
      %v1567 = vpop.f32.mrf.mxu0
      %v1568 = vadd.f32 0.0, %v1567
      %1569 = vmatmul.bf16.gmra.mxu0 %v1421
      %v1570 = vpop.f32.mrf.mxu0
      %v1571 = vadd.f32 0.0, %v1570
      %v1572 = vpop.f32.mrf.mxu0
      %v1573 = vadd.f32 0.0, %v1572
      %1574 = vdwg.mxu0
      %v1575 = vadd.f32 %v836, %v1496
      %v1576 = vadd.f32 %v837, %v1498
      %v1577 = vadd.f32 %v838, %v1501
      %v1578 = vadd.f32 %v839, %v1503
      %v1579 = vadd.f32 %v840, %v1506
      %v1580 = vadd.f32 %v841, %v1508
      %v1581 = vadd.f32 %v842, %v1511
      %v1582 = vadd.f32 %v843, %v1513
      %v1583 = vadd.f32 %v844, %v1516
      %v1584 = vadd.f32 %v845, %v1518
      %v1585 = vadd.f32 %v846, %v1521
      %v1586 = vadd.f32 %v847, %v1523
      %v1587 = vadd.f32 %v848, %v1526
      %v1588 = vadd.f32 %v849, %v1528
      %v1589 = vadd.f32 %v850, %v1531
      %v1590 = vadd.f32 %v851, %v1533
      %v1591 = vadd.f32 %v852, %v1536
      %v1592 = vadd.f32 %v853, %v1538
      %v1593 = vadd.f32 %v854, %v1541
      %v1594 = vadd.f32 %v855, %v1543
      %v1595 = vadd.f32 %v856, %v1546
      %v1596 = vadd.f32 %v857, %v1548
      %v1597 = vadd.f32 %v858, %v1551
      %v1598 = vadd.f32 %v859, %v1553
      %v1599 = vadd.f32 %v860, %v1556
      %v1600 = vadd.f32 %v861, %v1558
      %v1601 = vadd.f32 %v862, %v1561
      %v1602 = vadd.f32 %v863, %v1563
      %v1603 = vadd.f32 %v864, %v1566
      %v1604 = vadd.f32 %v865, %v1568
      %v1605 = vadd.f32 %v866, %v1571
      %v1606 = vadd.f32 %v867, %v1573
      %s1607 = scalar_lea.vmem %s1, 256
      %v1608 = vld [vmem:[%s1607] sm:$0xf]
      %v1609 = vld [vmem:[%s1607 + $0x4] sm:$0xf]
      %v1610 = vld [vmem:[%s1607 + $0x8] sm:$0xf]
      %v1611 = vld [vmem:[%s1607 + $0xc] sm:$0xf]
      %v1612 = vld [vmem:[%s1607 + $0x10] sm:$0xf]
      %v1613 = vld [vmem:[%s1607 + $0x14] sm:$0xf]
      %v1614 = vld [vmem:[%s1607 + $0x18] sm:$0xf]
      %v1615 = vld [vmem:[%s1607 + $0x1c] sm:$0xf]
      %v1616 = vld [vmem:[%s1607 + $0x20] sm:$0xf]
      %v1617 = vld [vmem:[%s1607 + $0x24] sm:$0xf]
      %v1618 = vld [vmem:[%s1607 + $0x28] sm:$0xf]
      %v1619 = vld [vmem:[%s1607 + $0x2c] sm:$0xf]
      %v1620 = vld [vmem:[%s1607 + $0x30] sm:$0xf]
      %v1621 = vld [vmem:[%s1607 + $0x34] sm:$0xf]
      %v1622 = vld [vmem:[%s1607 + $0x38] sm:$0xf]
      %v1623 = vld [vmem:[%s1607 + $0x3c] sm:$0xf]
      %v1624 = vunpack.c.l.b16 %v1322
      %v1625 = vunpack.c.l.b16 %v1332
      %v1626 = vpack.c.b16 %v1625, %v1624
      %v1644 = vunpack.c.l.b16 %v1608
      %v1645 = vunpack.c.l.b16 %v1609
      %v1646 = vunpack.c.l.b16 %v1610
      %v1647 = vunpack.c.l.b16 %v1611
      %v1648 = vunpack.c.l.b16 %v1612
      %v1649 = vunpack.c.l.b16 %v1613
      %v1650 = vunpack.c.l.b16 %v1614
      %v1651 = vunpack.c.l.b16 %v1615
      %v1652 = vunpack.c.l.b16 %v1616
      %v1653 = vunpack.c.l.b16 %v1617
      %v1654 = vunpack.c.l.b16 %v1618
      %v1655 = vunpack.c.l.b16 %v1619
      %v1656 = vunpack.c.l.b16 %v1620
      %v1657 = vunpack.c.l.b16 %v1621
      %v1658 = vunpack.c.l.b16 %v1622
      %v1659 = vunpack.c.l.b16 %v1623
      %v1660 = vpack.c.b16 %v1645, %v1644
      %v1661 = vpack.c.b16 %v1647, %v1646
      %v1662 = vpack.c.b16 %v1649, %v1648
      %v1663 = vpack.c.b16 %v1651, %v1650
      %v1664 = vpack.c.b16 %v1653, %v1652
      %v1665 = vpack.c.b16 %v1655, %v1654
      %v1666 = vpack.c.b16 %v1657, %v1656
      %v1667 = vpack.c.b16 %v1659, %v1658
      %1676 = vmatpush.bf16.msra.mxu0 %v1667
      %1677 = vmatpush.bf16.msra.mxu0 %v1666
      %1678 = vmatpush.bf16.msra.mxu0 %v1665
      %1679 = vmatpush.bf16.msra.mxu0 %v1664
      %1680 = vmatpush.bf16.msra.mxu0 %v1663
      %1681 = vmatpush.bf16.msra.mxu0 %v1662
      %1682 = vmatpush.bf16.msra.mxu0 %v1661
      %1683 = vmatpush.bf16.msra.mxu0 %v1660
      %1684 = vmatmul.bf16.gmra.mxu0 %v1407
      %v1685 = vpop.f32.mrf.mxu0
      %v1686 = vadd.f32 0.0, %v1685
      %v1687 = vpop.f32.mrf.mxu0
      %v1688 = vadd.f32 0.0, %v1687
      %1689 = vmatmul.bf16.gmra.mxu0 %v1408
      %v1690 = vpop.f32.mrf.mxu0
      %v1691 = vadd.f32 0.0, %v1690
      %v1692 = vpop.f32.mrf.mxu0
      %v1693 = vadd.f32 0.0, %v1692
      %1694 = vmatmul.bf16.gmra.mxu0 %v1409
      %v1695 = vpop.f32.mrf.mxu0
      %v1696 = vadd.f32 0.0, %v1695
      %v1697 = vpop.f32.mrf.mxu0
      %v1698 = vadd.f32 0.0, %v1697
      %1699 = vmatmul.bf16.gmra.mxu0 %v1410
      %v1700 = vpop.f32.mrf.mxu0
      %v1701 = vadd.f32 0.0, %v1700
      %v1702 = vpop.f32.mrf.mxu0
      %v1703 = vadd.f32 0.0, %v1702
      %1704 = vmatmul.bf16.gmra.mxu0 %v1411
      %v1705 = vpop.f32.mrf.mxu0
      %v1706 = vadd.f32 0.0, %v1705
      %v1707 = vpop.f32.mrf.mxu0
      %v1708 = vadd.f32 0.0, %v1707
      %1709 = vmatmul.bf16.gmra.mxu0 %v1412
      %v1710 = vpop.f32.mrf.mxu0
      %v1711 = vadd.f32 0.0, %v1710
      %v1712 = vpop.f32.mrf.mxu0
      %v1713 = vadd.f32 0.0, %v1712
      %1714 = vmatmul.bf16.gmra.mxu0 %v1413
      %v1715 = vpop.f32.mrf.mxu0
      %v1716 = vadd.f32 0.0, %v1715
      %v1717 = vpop.f32.mrf.mxu0
      %v1718 = vadd.f32 0.0, %v1717
      %1719 = vmatmul.bf16.gmra.mxu0 %v1414
      %v1720 = vpop.f32.mrf.mxu0
      %v1721 = vadd.f32 0.0, %v1720
      %v1722 = vpop.f32.mrf.mxu0
      %v1723 = vadd.f32 0.0, %v1722
      %1724 = vmatmul.bf16.gmra.mxu0 %v1415
      %v1725 = vpop.f32.mrf.mxu0
      %v1726 = vadd.f32 0.0, %v1725
      %v1727 = vpop.f32.mrf.mxu0
      %v1728 = vadd.f32 0.0, %v1727
      %1729 = vmatmul.bf16.gmra.mxu0 %v1416
      %v1730 = vpop.f32.mrf.mxu0
      %v1731 = vadd.f32 0.0, %v1730
      %v1732 = vpop.f32.mrf.mxu0
      %v1733 = vadd.f32 0.0, %v1732
      %1734 = vmatmul.bf16.gmra.mxu0 %v1417
      %v1735 = vpop.f32.mrf.mxu0
      %v1736 = vadd.f32 0.0, %v1735
      %v1737 = vpop.f32.mrf.mxu0
      %v1738 = vadd.f32 0.0, %v1737
      %1739 = vmatmul.bf16.gmra.mxu0 %v1418
      %v1740 = vpop.f32.mrf.mxu0
      %v1741 = vadd.f32 0.0, %v1740
      %v1742 = vpop.f32.mrf.mxu0
      %v1743 = vadd.f32 0.0, %v1742
      %1744 = vmatmul.bf16.gmra.mxu0 %v1419
      %v1745 = vpop.f32.mrf.mxu0
      %v1746 = vadd.f32 0.0, %v1745
      %v1747 = vpop.f32.mrf.mxu0
      %v1748 = vadd.f32 0.0, %v1747
      %1749 = vmatmul.bf16.gmra.mxu0 %v1420
      %v1750 = vpop.f32.mrf.mxu0
      %v1751 = vadd.f32 0.0, %v1750
      %v1752 = vpop.f32.mrf.mxu0
      %v1753 = vadd.f32 0.0, %v1752
      %1754 = vmatmul.bf16.gmra.mxu0 %v1421
      %v1755 = vpop.f32.mrf.mxu0
      %v1756 = vadd.f32 0.0, %v1755
      %v1757 = vpop.f32.mrf.mxu0
      %v1758 = vadd.f32 0.0, %v1757
      %1759 = vmatmul.bf16.gmra.mxu0 %v1626
      %v1760 = vpop.f32.mrf.mxu0
      %v1761 = vadd.f32 0.0, %v1760
      %v1762 = vpop.f32.mrf.mxu0
      %v1763 = vadd.f32 0.0, %v1762
      %1764 = vdwg.mxu0
      %v1765 = vadd.f32 %v1575, %v1686
      %v1766 = vadd.f32 %v1576, %v1688
      %v1767 = vadd.f32 %v1577, %v1691
      %v1768 = vadd.f32 %v1578, %v1693
      %v1769 = vadd.f32 %v1579, %v1696
      %v1770 = vadd.f32 %v1580, %v1698
      %v1771 = vadd.f32 %v1581, %v1701
      %v1772 = vadd.f32 %v1582, %v1703
      %v1773 = vadd.f32 %v1583, %v1706
      %v1774 = vadd.f32 %v1584, %v1708
      %v1775 = vadd.f32 %v1585, %v1711
      %v1776 = vadd.f32 %v1586, %v1713
      %v1777 = vadd.f32 %v1587, %v1716
      %v1778 = vadd.f32 %v1588, %v1718
      %v1779 = vadd.f32 %v1589, %v1721
      %v1780 = vadd.f32 %v1590, %v1723
      %v1781 = vadd.f32 %v1591, %v1726
      %v1782 = vadd.f32 %v1592, %v1728
      %v1783 = vadd.f32 %v1593, %v1731
      %v1784 = vadd.f32 %v1594, %v1733
      %v1785 = vadd.f32 %v1595, %v1736
      %v1786 = vadd.f32 %v1596, %v1738
      %v1787 = vadd.f32 %v1597, %v1741
      %v1788 = vadd.f32 %v1598, %v1743
      %v1789 = vadd.f32 %v1599, %v1746
      %v1790 = vadd.f32 %v1600, %v1748
      %v1791 = vadd.f32 %v1601, %v1751
      %v1792 = vadd.f32 %v1602, %v1753
      %v1793 = vadd.f32 %v1603, %v1756
      %v1794 = vadd.f32 %v1604, %v1758
      %v1795 = vadd.f32 %v1605, %v1761
      %v1796 = vadd.f32 %v1606, %v1763
      %s1797 = scalar_lea.vmem %s1, 448
      %v1798 = vld [vmem:[%s1797] sm:$0xf]
      %v1799 = vld [vmem:[%s1797 + $0x4] sm:$0xf]
      %v1800 = vld [vmem:[%s1797 + $0x8] sm:$0xf]
      %v1801 = vld [vmem:[%s1797 + $0xc] sm:$0xf]
      %v1802 = vld [vmem:[%s1797 + $0x10] sm:$0xf]
      %v1803 = vld [vmem:[%s1797 + $0x14] sm:$0xf]
      %v1804 = vld [vmem:[%s1797 + $0x18] sm:$0xf]
      %v1805 = vld [vmem:[%s1797 + $0x1c] sm:$0xf]
      %v1806 = vld [vmem:[%s1797 + $0x20] sm:$0xf]
      %v1807 = vld [vmem:[%s1797 + $0x24] sm:$0xf]
      %v1808 = vld [vmem:[%s1797 + $0x28] sm:$0xf]
      %v1809 = vld [vmem:[%s1797 + $0x2c] sm:$0xf]
      %v1810 = vld [vmem:[%s1797 + $0x30] sm:$0xf]
      %v1811 = vld [vmem:[%s1797 + $0x34] sm:$0xf]
      %v1812 = vld [vmem:[%s1797 + $0x38] sm:$0xf]
      %v1813 = vld [vmem:[%s1797 + $0x3c] sm:$0xf]
      %v1814 = vunpack.c.l.b16 %v1346
      %v1815 = vunpack.c.l.b16 %v1356
      %v1816 = vpack.c.b16 %v1815, %v1814
      %v1834 = vunpack.c.l.b16 %v1798
      %v1835 = vunpack.c.l.b16 %v1799
      %v1836 = vunpack.c.l.b16 %v1800
      %v1837 = vunpack.c.l.b16 %v1801
      %v1838 = vunpack.c.l.b16 %v1802
      %v1839 = vunpack.c.l.b16 %v1803
      %v1840 = vunpack.c.l.b16 %v1804
      %v1841 = vunpack.c.l.b16 %v1805
      %v1842 = vunpack.c.l.b16 %v1806
      %v1843 = vunpack.c.l.b16 %v1807
      %v1844 = vunpack.c.l.b16 %v1808
      %v1845 = vunpack.c.l.b16 %v1809
      %v1846 = vunpack.c.l.b16 %v1810
      %v1847 = vunpack.c.l.b16 %v1811
      %v1848 = vunpack.c.l.b16 %v1812
      %v1849 = vunpack.c.l.b16 %v1813
      %v1850 = vpack.c.b16 %v1835, %v1834
      %v1851 = vpack.c.b16 %v1837, %v1836
      %v1852 = vpack.c.b16 %v1839, %v1838
      %v1853 = vpack.c.b16 %v1841, %v1840
      %v1854 = vpack.c.b16 %v1843, %v1842
      %v1855 = vpack.c.b16 %v1845, %v1844
      %v1856 = vpack.c.b16 %v1847, %v1846
      %v1857 = vpack.c.b16 %v1849, %v1848
      %1866 = vmatpush.bf16.msra.mxu0 %v1857
      %1867 = vmatpush.bf16.msra.mxu0 %v1856
      %1868 = vmatpush.bf16.msra.mxu0 %v1855
      %1869 = vmatpush.bf16.msra.mxu0 %v1854
      %1870 = vmatpush.bf16.msra.mxu0 %v1853
      %1871 = vmatpush.bf16.msra.mxu0 %v1852
      %1872 = vmatpush.bf16.msra.mxu0 %v1851
      %1873 = vmatpush.bf16.msra.mxu0 %v1850
      %1874 = vmatmul.bf16.gmra.mxu0 %v1408
      %v1875 = vpop.f32.mrf.mxu0
      %v1876 = vadd.f32 0.0, %v1875
      %v1877 = vpop.f32.mrf.mxu0
      %v1878 = vadd.f32 0.0, %v1877
      %1879 = vmatmul.bf16.gmra.mxu0 %v1409
      %v1880 = vpop.f32.mrf.mxu0
      %v1881 = vadd.f32 0.0, %v1880
      %v1882 = vpop.f32.mrf.mxu0
      %v1883 = vadd.f32 0.0, %v1882
      %1884 = vmatmul.bf16.gmra.mxu0 %v1410
      %v1885 = vpop.f32.mrf.mxu0
      %v1886 = vadd.f32 0.0, %v1885
      %v1887 = vpop.f32.mrf.mxu0
      %v1888 = vadd.f32 0.0, %v1887
      %1889 = vmatmul.bf16.gmra.mxu0 %v1411
      %v1890 = vpop.f32.mrf.mxu0
      %v1891 = vadd.f32 0.0, %v1890
      %v1892 = vpop.f32.mrf.mxu0
      %v1893 = vadd.f32 0.0, %v1892
      %1894 = vmatmul.bf16.gmra.mxu0 %v1412
      %v1895 = vpop.f32.mrf.mxu0
      %v1896 = vadd.f32 0.0, %v1895
      %v1897 = vpop.f32.mrf.mxu0
      %v1898 = vadd.f32 0.0, %v1897
      %1899 = vmatmul.bf16.gmra.mxu0 %v1413
      %v1900 = vpop.f32.mrf.mxu0
      %v1901 = vadd.f32 0.0, %v1900
      %v1902 = vpop.f32.mrf.mxu0
      %v1903 = vadd.f32 0.0, %v1902
      %1904 = vmatmul.bf16.gmra.mxu0 %v1414
      %v1905 = vpop.f32.mrf.mxu0
      %v1906 = vadd.f32 0.0, %v1905
      %v1907 = vpop.f32.mrf.mxu0
      %v1908 = vadd.f32 0.0, %v1907
      %1909 = vmatmul.bf16.gmra.mxu0 %v1415
      %v1910 = vpop.f32.mrf.mxu0
      %v1911 = vadd.f32 0.0, %v1910
      %v1912 = vpop.f32.mrf.mxu0
      %v1913 = vadd.f32 0.0, %v1912
      %1914 = vmatmul.bf16.gmra.mxu0 %v1416
      %v1915 = vpop.f32.mrf.mxu0
      %v1916 = vadd.f32 0.0, %v1915
      %v1917 = vpop.f32.mrf.mxu0
      %v1918 = vadd.f32 0.0, %v1917
      %1919 = vmatmul.bf16.gmra.mxu0 %v1417
      %v1920 = vpop.f32.mrf.mxu0
      %v1921 = vadd.f32 0.0, %v1920
      %v1922 = vpop.f32.mrf.mxu0
      %v1923 = vadd.f32 0.0, %v1922
      %1924 = vmatmul.bf16.gmra.mxu0 %v1418
      %v1925 = vpop.f32.mrf.mxu0
      %v1926 = vadd.f32 0.0, %v1925
      %v1927 = vpop.f32.mrf.mxu0
      %v1928 = vadd.f32 0.0, %v1927
      %1929 = vmatmul.bf16.gmra.mxu0 %v1419
      %v1930 = vpop.f32.mrf.mxu0
      %v1931 = vadd.f32 0.0, %v1930
      %v1932 = vpop.f32.mrf.mxu0
      %v1933 = vadd.f32 0.0, %v1932
      %1934 = vmatmul.bf16.gmra.mxu0 %v1420
      %v1935 = vpop.f32.mrf.mxu0
      %v1936 = vadd.f32 0.0, %v1935
      %v1937 = vpop.f32.mrf.mxu0
      %v1938 = vadd.f32 0.0, %v1937
      %1939 = vmatmul.bf16.gmra.mxu0 %v1421
      %v1940 = vpop.f32.mrf.mxu0
      %v1941 = vadd.f32 0.0, %v1940
      %v1942 = vpop.f32.mrf.mxu0
      %v1943 = vadd.f32 0.0, %v1942
      %1944 = vmatmul.bf16.gmra.mxu0 %v1626
      %v1945 = vpop.f32.mrf.mxu0
      %v1946 = vadd.f32 0.0, %v1945
      %v1947 = vpop.f32.mrf.mxu0
      %v1948 = vadd.f32 0.0, %v1947
      %1949 = vmatmul.bf16.gmra.mxu0 %v1816
      %v1950 = vpop.f32.mrf.mxu0
      %v1951 = vadd.f32 0.0, %v1950
      %v1952 = vpop.f32.mrf.mxu0
      %v1953 = vadd.f32 0.0, %v1952
      %1954 = vdwg.mxu0
      %v1955 = vadd.f32 %v1765, %v1876
      %v1956 = vadd.f32 %v1766, %v1878
      %v1957 = vadd.f32 %v1767, %v1881
      %v1958 = vadd.f32 %v1768, %v1883
      %v1959 = vadd.f32 %v1769, %v1886
      %v1960 = vadd.f32 %v1770, %v1888
      %v1961 = vadd.f32 %v1771, %v1891
      %v1962 = vadd.f32 %v1772, %v1893
      %v1963 = vadd.f32 %v1773, %v1896
      %v1964 = vadd.f32 %v1774, %v1898
      %v1965 = vadd.f32 %v1775, %v1901
      %v1966 = vadd.f32 %v1776, %v1903
      %v1967 = vadd.f32 %v1777, %v1906
      %v1968 = vadd.f32 %v1778, %v1908
      %v1969 = vadd.f32 %v1779, %v1911
      %v1970 = vadd.f32 %v1780, %v1913
      %v1971 = vadd.f32 %v1781, %v1916
      %v1972 = vadd.f32 %v1782, %v1918
      %v1973 = vadd.f32 %v1783, %v1921
      %v1974 = vadd.f32 %v1784, %v1923
      %v1975 = vadd.f32 %v1785, %v1926
      %v1976 = vadd.f32 %v1786, %v1928
      %v1977 = vadd.f32 %v1787, %v1931
      %v1978 = vadd.f32 %v1788, %v1933
      %v1979 = vadd.f32 %v1789, %v1936
      %v1980 = vadd.f32 %v1790, %v1938
      %v1981 = vadd.f32 %v1791, %v1941
      %v1982 = vadd.f32 %v1792, %v1943
      %v1983 = vadd.f32 %v1793, %v1946
      %v1984 = vadd.f32 %v1794, %v1948
      %v1985 = vadd.f32 %v1795, %v1951
      %v1986 = vadd.f32 %v1796, %v1953
      %v1987 = vld [vmem:[#allocation2] sm:$0xe]
      %v1988 = vld [vmem:[#allocation2 + $0xc] sm:$0xe]
      %v1989 = vld [vmem:[#allocation2 + $0x18] sm:$0xe]
      %v1990 = vld [vmem:[#allocation2 + $0x24] sm:$0xe]
      %v1991 = vld [vmem:[#allocation2 + $0x30] sm:$0xe]
      %v1992 = vld [vmem:[#allocation2 + $0x3c] sm:$0xe]
      %v1993 = vld [vmem:[#allocation2 + $0x48] sm:$0xe]
      %v1994 = vld [vmem:[#allocation2 + $0x54] sm:$0xe]
      %v1995 = vld [vmem:[#allocation2 + $0x60] sm:$0xe]
      %v1996 = vld [vmem:[#allocation2 + $0x6c] sm:$0xe]
      %v1997 = vld [vmem:[#allocation2 + $0x78] sm:$0xe]
      %v1998 = vld [vmem:[#allocation2 + $0x84] sm:$0xe]
      %v1999 = vld [vmem:[#allocation2 + $0x90] sm:$0xe]
      %v2000 = vld [vmem:[#allocation2 + $0x9c] sm:$0xe]
      %v2001 = vld [vmem:[#allocation2 + $0xa8] sm:$0xe]
      %v2002 = vld [vmem:[#allocation2 + $0xb4] sm:$0xe]
      %v2003 = vld [vmem:[#allocation2 + $0xc0] sm:$0xe]
      %v2004 = vld [vmem:[#allocation2 + $0xcc] sm:$0xe]
      %vm2059 = vcmask 1042432
      %vm2060 = vcmask 1046532
      %vm2061 = vmor %vm2059, %vm2060
      %v2062 = vrot.slane %v1987, 5
      %v2063 = vrot.slane %v2062, 4
      %v2064 = vrot.slane %v869, 5
      %v2065 = vsel %vm2061, %v2063, %v2064
      %v2066 = vrot.slane %v2064, 4
      %v2067 = vrot.slane %v870, 5
      %v2068 = vsel %vm2061, %v2066, %v2067
      %v2069 = vrot.slane %v1988, 5
      %v2070 = vrot.slane %v2069, 4
      %v2071 = vrot.slane %v872, 5
      %v2072 = vsel %vm2061, %v2070, %v2071
      %v2073 = vrot.slane %v2071, 4
      %v2074 = vrot.slane %v873, 5
      %v2075 = vsel %vm2061, %v2073, %v2074
      %v2076 = vrot.slane %v1989, 5
      %v2077 = vrot.slane %v2076, 4
      %v2078 = vrot.slane %v875, 5
      %v2079 = vsel %vm2061, %v2077, %v2078
      %v2080 = vrot.slane %v2078, 4
      %v2081 = vrot.slane %v876, 5
      %v2082 = vsel %vm2061, %v2080, %v2081
      %v2083 = vrot.slane %v1990, 5
      %v2084 = vrot.slane %v2083, 4
      %v2085 = vrot.slane %v878, 5
      %v2086 = vsel %vm2061, %v2084, %v2085
      %v2087 = vrot.slane %v2085, 4
      %v2088 = vrot.slane %v879, 5
      %v2089 = vsel %vm2061, %v2087, %v2088
      %v2090 = vrot.slane %v1991, 5
      %v2091 = vrot.slane %v2090, 4
      %v2092 = vrot.slane %v881, 5
      %v2093 = vsel %vm2061, %v2091, %v2092
      %v2094 = vrot.slane %v2092, 4
      %v2095 = vrot.slane %v882, 5
      %v2096 = vsel %vm2061, %v2094, %v2095
      %v2097 = vrot.slane %v1992, 5
      %v2098 = vrot.slane %v2097, 4
      %v2099 = vrot.slane %v884, 5
      %v2100 = vsel %vm2061, %v2098, %v2099
      %v2101 = vrot.slane %v2099, 4
      %v2102 = vrot.slane %v885, 5
      %v2103 = vsel %vm2061, %v2101, %v2102
      %v2104 = vrot.slane %v1993, 5
      %v2105 = vrot.slane %v2104, 4
      %v2106 = vrot.slane %v887, 5
      %v2107 = vsel %vm2061, %v2105, %v2106
      %v2108 = vrot.slane %v2106, 4
      %v2109 = vrot.slane %v888, 5
      %v2110 = vsel %vm2061, %v2108, %v2109
      %v2111 = vrot.slane %v1994, 5
      %v2112 = vrot.slane %v2111, 4
      %v2113 = vrot.slane %v890, 5
      %v2114 = vsel %vm2061, %v2112, %v2113
      %v2115 = vrot.slane %v2113, 4
      %v2116 = vrot.slane %v891, 5
      %v2117 = vsel %vm2061, %v2115, %v2116
      %v2118 = vrot.slane %v1995, 5
      %v2119 = vrot.slane %v2118, 4
      %v2120 = vrot.slane %v893, 5
      %v2121 = vsel %vm2061, %v2119, %v2120
      %v2122 = vrot.slane %v2120, 4
      %v2123 = vrot.slane %v894, 5
      %v2124 = vsel %vm2061, %v2122, %v2123
      %v2125 = vrot.slane %v1996, 5
      %v2126 = vrot.slane %v2125, 4
      %v2127 = vrot.slane %v896, 5
      %v2128 = vsel %vm2061, %v2126, %v2127
      %v2129 = vrot.slane %v2127, 4
      %v2130 = vrot.slane %v897, 5
      %v2131 = vsel %vm2061, %v2129, %v2130
      %v2132 = vrot.slane %v1997, 5
      %v2133 = vrot.slane %v2132, 4
      %v2134 = vrot.slane %v899, 5
      %v2135 = vsel %vm2061, %v2133, %v2134
      %v2136 = vrot.slane %v2134, 4
      %v2137 = vrot.slane %v900, 5
      %v2138 = vsel %vm2061, %v2136, %v2137
      %v2139 = vrot.slane %v1998, 5
      %v2140 = vrot.slane %v2139, 4
      %v2141 = vrot.slane %v902, 5
      %v2142 = vsel %vm2061, %v2140, %v2141
      %v2143 = vrot.slane %v2141, 4
      %v2144 = vrot.slane %v903, 5
      %v2145 = vsel %vm2061, %v2143, %v2144
      %v2146 = vrot.slane %v1999, 5
      %v2147 = vrot.slane %v2146, 4
      %v2148 = vrot.slane %v905, 5
      %v2149 = vsel %vm2061, %v2147, %v2148
      %v2150 = vrot.slane %v2148, 4
      %v2151 = vrot.slane %v906, 5
      %v2152 = vsel %vm2061, %v2150, %v2151
      %v2153 = vrot.slane %v2000, 5
      %v2154 = vrot.slane %v2153, 4
      %v2155 = vrot.slane %v908, 5
      %v2156 = vsel %vm2061, %v2154, %v2155
      %v2157 = vrot.slane %v2155, 4
      %v2158 = vrot.slane %v909, 5
      %v2159 = vsel %vm2061, %v2157, %v2158
      %v2160 = vrot.slane %v2001, 5
      %v2161 = vrot.slane %v2160, 4
      %v2162 = vrot.slane %v911, 5
      %v2163 = vsel %vm2061, %v2161, %v2162
      %v2164 = vrot.slane %v2162, 4
      %v2165 = vrot.slane %v912, 5
      %v2166 = vsel %vm2061, %v2164, %v2165
      %v2167 = vrot.slane %v2002, 5
      %v2168 = vrot.slane %v2167, 4
      %v2169 = vrot.slane %v914, 5
      %v2170 = vsel %vm2061, %v2168, %v2169
      %v2171 = vrot.slane %v2169, 4
      %v2172 = vrot.slane %v915, 5
      %v2173 = vsel %vm2061, %v2171, %v2172
      %v2174 = vrot.slane %v2003, 5
      %v2175 = vrot.slane %v2174, 4
      %v2176 = vrot.slane %v917, 5
      %v2177 = vsel %vm2061, %v2175, %v2176
      %v2178 = vrot.slane %v2176, 4
      %v2179 = vrot.slane %v918, 5
      %v2180 = vsel %vm2061, %v2178, %v2179
      %v2181 = vrot.slane %v2004, 5
      %v2182 = vrot.slane %v2181, 4
      %v2183 = vrot.slane %v920, 5
      %v2184 = vsel %vm2061, %v2182, %v2183
      %v2185 = vrot.slane %v2183, 4
      %v2186 = vrot.slane %v921, 5
      %v2187 = vsel %vm2061, %v2185, %v2186
      %s2188 = scalar_lea.vmem %s1, 128
      %v2189 = vld [vmem:[%s2188] sm:$0xf]
      %v2190 = vld [vmem:[%s2188 + $0x4] sm:$0xf]
      %v2191 = vld [vmem:[%s2188 + $0x8] sm:$0xf]
      %v2192 = vld [vmem:[%s2188 + $0xc] sm:$0xf]
      %v2193 = vld [vmem:[%s2188 + $0x10] sm:$0xf]
      %v2194 = vld [vmem:[%s2188 + $0x14] sm:$0xf]
      %v2195 = vld [vmem:[%s2188 + $0x18] sm:$0xf]
      %v2196 = vld [vmem:[%s2188 + $0x1c] sm:$0xf]
      %v2197 = vld [vmem:[%s2188 + $0x20] sm:$0xf]
      %v2198 = vld [vmem:[%s2188 + $0x24] sm:$0xf]
      %v2199 = vld [vmem:[%s2188 + $0x28] sm:$0xf]
      %v2200 = vld [vmem:[%s2188 + $0x2c] sm:$0xf]
      %v2201 = vld [vmem:[%s2188 + $0x30] sm:$0xf]
      %v2202 = vld [vmem:[%s2188 + $0x34] sm:$0xf]
      %v2203 = vld [vmem:[%s2188 + $0x38] sm:$0xf]
      %v2204 = vld [vmem:[%s2188 + $0x3c] sm:$0xf]
      %v2205 = vunpack.c.l.b16 %v2065
      %v2206 = vunpack.c.l.b16 %v2068
      %v2207 = vunpack.c.l.b16 %v2072
      %v2208 = vunpack.c.l.b16 %v2075
      %v2209 = vunpack.c.l.b16 %v2079
      %v2210 = vunpack.c.l.b16 %v2082
      %v2211 = vunpack.c.l.b16 %v2086
      %v2212 = vunpack.c.l.b16 %v2089
      %v2213 = vunpack.c.l.b16 %v2093
      %v2214 = vunpack.c.l.b16 %v2096
      %v2215 = vunpack.c.l.b16 %v2100
      %v2216 = vunpack.c.l.b16 %v2103
      %v2217 = vunpack.c.l.b16 %v2107
      %v2218 = vunpack.c.l.b16 %v2110
      %v2219 = vunpack.c.l.b16 %v2114
      %v2220 = vunpack.c.l.b16 %v2117
      %v2221 = vunpack.c.l.b16 %v2121
      %v2222 = vunpack.c.l.b16 %v2124
      %v2223 = vunpack.c.l.b16 %v2128
      %v2224 = vunpack.c.l.b16 %v2131
      %v2225 = vunpack.c.l.b16 %v2135
      %v2226 = vunpack.c.l.b16 %v2138
      %v2227 = vunpack.c.l.b16 %v2142
      %v2228 = vunpack.c.l.b16 %v2145
      %v2229 = vunpack.c.l.b16 %v2149
      %v2230 = vunpack.c.l.b16 %v2152
      %v2231 = vunpack.c.l.b16 %v2156
      %v2232 = vunpack.c.l.b16 %v2159
      %v2233 = vunpack.c.l.b16 %v2163
      %v2234 = vunpack.c.l.b16 %v2166
      %v2235 = vunpack.c.l.b16 %v2170
      %v2236 = vunpack.c.l.b16 %v2173
      %v2237 = vpack.c.b16 %v2206, %v2205
      %v2238 = vpack.c.b16 %v2208, %v2207
      %v2239 = vpack.c.b16 %v2210, %v2209
      %v2240 = vpack.c.b16 %v2212, %v2211
      %v2241 = vpack.c.b16 %v2214, %v2213
      %v2242 = vpack.c.b16 %v2216, %v2215
      %v2243 = vpack.c.b16 %v2218, %v2217
      %v2244 = vpack.c.b16 %v2220, %v2219
      %v2245 = vpack.c.b16 %v2222, %v2221
      %v2246 = vpack.c.b16 %v2224, %v2223
      %v2247 = vpack.c.b16 %v2226, %v2225
      %v2248 = vpack.c.b16 %v2228, %v2227
      %v2249 = vpack.c.b16 %v2230, %v2229
      %v2250 = vpack.c.b16 %v2232, %v2231
      %v2251 = vpack.c.b16 %v2234, %v2233
      %v2252 = vpack.c.b16 %v2236, %v2235
      %v2285 = vunpack.c.l.b16 %v2189
      %v2286 = vunpack.c.l.b16 %v2190
      %v2287 = vunpack.c.l.b16 %v2191
      %v2288 = vunpack.c.l.b16 %v2192
      %v2289 = vunpack.c.l.b16 %v2193
      %v2290 = vunpack.c.l.b16 %v2194
      %v2291 = vunpack.c.l.b16 %v2195
      %v2292 = vunpack.c.l.b16 %v2196
      %v2293 = vunpack.c.l.b16 %v2197
      %v2294 = vunpack.c.l.b16 %v2198
      %v2295 = vunpack.c.l.b16 %v2199
      %v2296 = vunpack.c.l.b16 %v2200
      %v2297 = vunpack.c.l.b16 %v2201
      %v2298 = vunpack.c.l.b16 %v2202
      %v2299 = vunpack.c.l.b16 %v2203
      %v2300 = vunpack.c.l.b16 %v2204
      %v2301 = vpack.c.b16 %v2286, %v2285
      %v2302 = vpack.c.b16 %v2288, %v2287
      %v2303 = vpack.c.b16 %v2290, %v2289
      %v2304 = vpack.c.b16 %v2292, %v2291
      %v2305 = vpack.c.b16 %v2294, %v2293
      %v2306 = vpack.c.b16 %v2296, %v2295
      %v2307 = vpack.c.b16 %v2298, %v2297
      %v2308 = vpack.c.b16 %v2300, %v2299
      %2317 = vmatpush.bf16.msra.mxu0 %v2308
      %2318 = vmatpush.bf16.msra.mxu0 %v2307
      %2319 = vmatpush.bf16.msra.mxu0 %v2306
      %2320 = vmatpush.bf16.msra.mxu0 %v2305
      %2321 = vmatpush.bf16.msra.mxu0 %v2304
      %2322 = vmatpush.bf16.msra.mxu0 %v2303
      %2323 = vmatpush.bf16.msra.mxu0 %v2302
      %2324 = vmatpush.bf16.msra.mxu0 %v2301
      %2325 = vmatmul.bf16.gmra.mxu0 %v2237
      %v2326 = vpop.f32.mrf.mxu0
      %v2327 = vadd.f32 0.0, %v2326
      %v2328 = vpop.f32.mrf.mxu0
      %v2329 = vadd.f32 0.0, %v2328
      %2330 = vmatmul.bf16.gmra.mxu0 %v2238
      %v2331 = vpop.f32.mrf.mxu0
      %v2332 = vadd.f32 0.0, %v2331
      %v2333 = vpop.f32.mrf.mxu0
      %v2334 = vadd.f32 0.0, %v2333
      %2335 = vmatmul.bf16.gmra.mxu0 %v2239
      %v2336 = vpop.f32.mrf.mxu0
      %v2337 = vadd.f32 0.0, %v2336
      %v2338 = vpop.f32.mrf.mxu0
      %v2339 = vadd.f32 0.0, %v2338
      %2340 = vmatmul.bf16.gmra.mxu0 %v2240
      %v2341 = vpop.f32.mrf.mxu0
      %v2342 = vadd.f32 0.0, %v2341
      %v2343 = vpop.f32.mrf.mxu0
      %v2344 = vadd.f32 0.0, %v2343
      %2345 = vmatmul.bf16.gmra.mxu0 %v2241
      %v2346 = vpop.f32.mrf.mxu0
      %v2347 = vadd.f32 0.0, %v2346
      %v2348 = vpop.f32.mrf.mxu0
      %v2349 = vadd.f32 0.0, %v2348
      %2350 = vmatmul.bf16.gmra.mxu0 %v2242
      %v2351 = vpop.f32.mrf.mxu0
      %v2352 = vadd.f32 0.0, %v2351
      %v2353 = vpop.f32.mrf.mxu0
      %v2354 = vadd.f32 0.0, %v2353
      %2355 = vmatmul.bf16.gmra.mxu0 %v2243
      %v2356 = vpop.f32.mrf.mxu0
      %v2357 = vadd.f32 0.0, %v2356
      %v2358 = vpop.f32.mrf.mxu0
      %v2359 = vadd.f32 0.0, %v2358
      %2360 = vmatmul.bf16.gmra.mxu0 %v2244
      %v2361 = vpop.f32.mrf.mxu0
      %v2362 = vadd.f32 0.0, %v2361
      %v2363 = vpop.f32.mrf.mxu0
      %v2364 = vadd.f32 0.0, %v2363
      %2365 = vmatmul.bf16.gmra.mxu0 %v2245
      %v2366 = vpop.f32.mrf.mxu0
      %v2367 = vadd.f32 0.0, %v2366
      %v2368 = vpop.f32.mrf.mxu0
      %v2369 = vadd.f32 0.0, %v2368
      %2370 = vmatmul.bf16.gmra.mxu0 %v2246
      %v2371 = vpop.f32.mrf.mxu0
      %v2372 = vadd.f32 0.0, %v2371
      %v2373 = vpop.f32.mrf.mxu0
      %v2374 = vadd.f32 0.0, %v2373
      %2375 = vmatmul.bf16.gmra.mxu0 %v2247
      %v2376 = vpop.f32.mrf.mxu0
      %v2377 = vadd.f32 0.0, %v2376
      %v2378 = vpop.f32.mrf.mxu0
      %v2379 = vadd.f32 0.0, %v2378
      %2380 = vmatmul.bf16.gmra.mxu0 %v2248
      %v2381 = vpop.f32.mrf.mxu0
      %v2382 = vadd.f32 0.0, %v2381
      %v2383 = vpop.f32.mrf.mxu0
      %v2384 = vadd.f32 0.0, %v2383
      %2385 = vmatmul.bf16.gmra.mxu0 %v2249
      %v2386 = vpop.f32.mrf.mxu0
      %v2387 = vadd.f32 0.0, %v2386
      %v2388 = vpop.f32.mrf.mxu0
      %v2389 = vadd.f32 0.0, %v2388
      %2390 = vmatmul.bf16.gmra.mxu0 %v2250
      %v2391 = vpop.f32.mrf.mxu0
      %v2392 = vadd.f32 0.0, %v2391
      %v2393 = vpop.f32.mrf.mxu0
      %v2394 = vadd.f32 0.0, %v2393
      %2395 = vmatmul.bf16.gmra.mxu0 %v2251
      %v2396 = vpop.f32.mrf.mxu0
      %v2397 = vadd.f32 0.0, %v2396
      %v2398 = vpop.f32.mrf.mxu0
      %v2399 = vadd.f32 0.0, %v2398
      %2400 = vmatmul.bf16.gmra.mxu0 %v2252
      %v2401 = vpop.f32.mrf.mxu0
      %v2402 = vadd.f32 0.0, %v2401
      %v2403 = vpop.f32.mrf.mxu0
      %v2404 = vadd.f32 0.0, %v2403
      %2405 = vdwg.mxu0
      %v2406 = vadd.f32 %v1955, %v2327
      %v2407 = vadd.f32 %v1956, %v2329
      %v2408 = vadd.f32 %v1957, %v2332
      %v2409 = vadd.f32 %v1958, %v2334
      %v2410 = vadd.f32 %v1959, %v2337
      %v2411 = vadd.f32 %v1960, %v2339
      %v2412 = vadd.f32 %v1961, %v2342
      %v2413 = vadd.f32 %v1962, %v2344
      %v2414 = vadd.f32 %v1963, %v2347
      %v2415 = vadd.f32 %v1964, %v2349
      %v2416 = vadd.f32 %v1965, %v2352
      %v2417 = vadd.f32 %v1966, %v2354
      %v2418 = vadd.f32 %v1967, %v2357
      %v2419 = vadd.f32 %v1968, %v2359
      %v2420 = vadd.f32 %v1969, %v2362
      %v2421 = vadd.f32 %v1970, %v2364
      %v2422 = vadd.f32 %v1971, %v2367
      %v2423 = vadd.f32 %v1972, %v2369
      %v2424 = vadd.f32 %v1973, %v2372
      %v2425 = vadd.f32 %v1974, %v2374
      %v2426 = vadd.f32 %v1975, %v2377
      %v2427 = vadd.f32 %v1976, %v2379
      %v2428 = vadd.f32 %v1977, %v2382
      %v2429 = vadd.f32 %v1978, %v2384
      %v2430 = vadd.f32 %v1979, %v2387
      %v2431 = vadd.f32 %v1980, %v2389
      %v2432 = vadd.f32 %v1981, %v2392
      %v2433 = vadd.f32 %v1982, %v2394
      %v2434 = vadd.f32 %v1983, %v2397
      %v2435 = vadd.f32 %v1984, %v2399
      %v2436 = vadd.f32 %v1985, %v2402
      %v2437 = vadd.f32 %v1986, %v2404
      %s2438 = scalar_lea.vmem %s1, 320
      %v2439 = vld [vmem:[%s2438] sm:$0xf]
      %v2440 = vld [vmem:[%s2438 + $0x4] sm:$0xf]
      %v2441 = vld [vmem:[%s2438 + $0x8] sm:$0xf]
      %v2442 = vld [vmem:[%s2438 + $0xc] sm:$0xf]
      %v2443 = vld [vmem:[%s2438 + $0x10] sm:$0xf]
      %v2444 = vld [vmem:[%s2438 + $0x14] sm:$0xf]
      %v2445 = vld [vmem:[%s2438 + $0x18] sm:$0xf]
      %v2446 = vld [vmem:[%s2438 + $0x1c] sm:$0xf]
      %v2447 = vld [vmem:[%s2438 + $0x20] sm:$0xf]
      %v2448 = vld [vmem:[%s2438 + $0x24] sm:$0xf]
      %v2449 = vld [vmem:[%s2438 + $0x28] sm:$0xf]
      %v2450 = vld [vmem:[%s2438 + $0x2c] sm:$0xf]
      %v2451 = vld [vmem:[%s2438 + $0x30] sm:$0xf]
      %v2452 = vld [vmem:[%s2438 + $0x34] sm:$0xf]
      %v2453 = vld [vmem:[%s2438 + $0x38] sm:$0xf]
      %v2454 = vld [vmem:[%s2438 + $0x3c] sm:$0xf]
      %v2455 = vunpack.c.l.b16 %v2177
      %v2456 = vunpack.c.l.b16 %v2180
      %v2457 = vpack.c.b16 %v2456, %v2455
      %v2475 = vunpack.c.l.b16 %v2439
      %v2476 = vunpack.c.l.b16 %v2440
      %v2477 = vunpack.c.l.b16 %v2441
      %v2478 = vunpack.c.l.b16 %v2442
      %v2479 = vunpack.c.l.b16 %v2443
      %v2480 = vunpack.c.l.b16 %v2444
      %v2481 = vunpack.c.l.b16 %v2445
      %v2482 = vunpack.c.l.b16 %v2446
      %v2483 = vunpack.c.l.b16 %v2447
      %v2484 = vunpack.c.l.b16 %v2448
      %v2485 = vunpack.c.l.b16 %v2449
      %v2486 = vunpack.c.l.b16 %v2450
      %v2487 = vunpack.c.l.b16 %v2451
      %v2488 = vunpack.c.l.b16 %v2452
      %v2489 = vunpack.c.l.b16 %v2453
      %v2490 = vunpack.c.l.b16 %v2454
      %v2491 = vpack.c.b16 %v2476, %v2475
      %v2492 = vpack.c.b16 %v2478, %v2477
      %v2493 = vpack.c.b16 %v2480, %v2479
      %v2494 = vpack.c.b16 %v2482, %v2481
      %v2495 = vpack.c.b16 %v2484, %v2483
      %v2496 = vpack.c.b16 %v2486, %v2485
      %v2497 = vpack.c.b16 %v2488, %v2487
      %v2498 = vpack.c.b16 %v2490, %v2489
      %2507 = vmatpush.bf16.msra.mxu0 %v2498
      %2508 = vmatpush.bf16.msra.mxu0 %v2497
      %2509 = vmatpush.bf16.msra.mxu0 %v2496
      %2510 = vmatpush.bf16.msra.mxu0 %v2495
      %2511 = vmatpush.bf16.msra.mxu0 %v2494
      %2512 = vmatpush.bf16.msra.mxu0 %v2493
      %2513 = vmatpush.bf16.msra.mxu0 %v2492
      %2514 = vmatpush.bf16.msra.mxu0 %v2491
      %2515 = vmatmul.bf16.gmra.mxu0 %v2238
      %v2516 = vpop.f32.mrf.mxu0
      %v2517 = vadd.f32 0.0, %v2516
      %v2518 = vpop.f32.mrf.mxu0
      %v2519 = vadd.f32 0.0, %v2518
      %2520 = vmatmul.bf16.gmra.mxu0 %v2239
      %v2521 = vpop.f32.mrf.mxu0
      %v2522 = vadd.f32 0.0, %v2521
      %v2523 = vpop.f32.mrf.mxu0
      %v2524 = vadd.f32 0.0, %v2523
      %2525 = vmatmul.bf16.gmra.mxu0 %v2240
      %v2526 = vpop.f32.mrf.mxu0
      %v2527 = vadd.f32 0.0, %v2526
      %v2528 = vpop.f32.mrf.mxu0
      %v2529 = vadd.f32 0.0, %v2528
      %2530 = vmatmul.bf16.gmra.mxu0 %v2241
      %v2531 = vpop.f32.mrf.mxu0
      %v2532 = vadd.f32 0.0, %v2531
      %v2533 = vpop.f32.mrf.mxu0
      %v2534 = vadd.f32 0.0, %v2533
      %2535 = vmatmul.bf16.gmra.mxu0 %v2242
      %v2536 = vpop.f32.mrf.mxu0
      %v2537 = vadd.f32 0.0, %v2536
      %v2538 = vpop.f32.mrf.mxu0
      %v2539 = vadd.f32 0.0, %v2538
      %2540 = vmatmul.bf16.gmra.mxu0 %v2243
      %v2541 = vpop.f32.mrf.mxu0
      %v2542 = vadd.f32 0.0, %v2541
      %v2543 = vpop.f32.mrf.mxu0
      %v2544 = vadd.f32 0.0, %v2543
      %2545 = vmatmul.bf16.gmra.mxu0 %v2244
      %v2546 = vpop.f32.mrf.mxu0
      %v2547 = vadd.f32 0.0, %v2546
      %v2548 = vpop.f32.mrf.mxu0
      %v2549 = vadd.f32 0.0, %v2548
      %2550 = vmatmul.bf16.gmra.mxu0 %v2245
      %v2551 = vpop.f32.mrf.mxu0
      %v2552 = vadd.f32 0.0, %v2551
      %v2553 = vpop.f32.mrf.mxu0
      %v2554 = vadd.f32 0.0, %v2553
      %2555 = vmatmul.bf16.gmra.mxu0 %v2246
      %v2556 = vpop.f32.mrf.mxu0
      %v2557 = vadd.f32 0.0, %v2556
      %v2558 = vpop.f32.mrf.mxu0
      %v2559 = vadd.f32 0.0, %v2558
      %2560 = vmatmul.bf16.gmra.mxu0 %v2247
      %v2561 = vpop.f32.mrf.mxu0
      %v2562 = vadd.f32 0.0, %v2561
      %v2563 = vpop.f32.mrf.mxu0
      %v2564 = vadd.f32 0.0, %v2563
      %2565 = vmatmul.bf16.gmra.mxu0 %v2248
      %v2566 = vpop.f32.mrf.mxu0
      %v2567 = vadd.f32 0.0, %v2566
      %v2568 = vpop.f32.mrf.mxu0
      %v2569 = vadd.f32 0.0, %v2568
      %2570 = vmatmul.bf16.gmra.mxu0 %v2249
      %v2571 = vpop.f32.mrf.mxu0
      %v2572 = vadd.f32 0.0, %v2571
      %v2573 = vpop.f32.mrf.mxu0
      %v2574 = vadd.f32 0.0, %v2573
      %2575 = vmatmul.bf16.gmra.mxu0 %v2250
      %v2576 = vpop.f32.mrf.mxu0
      %v2577 = vadd.f32 0.0, %v2576
      %v2578 = vpop.f32.mrf.mxu0
      %v2579 = vadd.f32 0.0, %v2578
      %2580 = vmatmul.bf16.gmra.mxu0 %v2251
      %v2581 = vpop.f32.mrf.mxu0
      %v2582 = vadd.f32 0.0, %v2581
      %v2583 = vpop.f32.mrf.mxu0
      %v2584 = vadd.f32 0.0, %v2583
      %2585 = vmatmul.bf16.gmra.mxu0 %v2252
      %v2586 = vpop.f32.mrf.mxu0
      %v2587 = vadd.f32 0.0, %v2586
      %v2588 = vpop.f32.mrf.mxu0
      %v2589 = vadd.f32 0.0, %v2588
      %2590 = vmatmul.bf16.gmra.mxu0 %v2457
      %v2591 = vpop.f32.mrf.mxu0
      %v2592 = vadd.f32 0.0, %v2591
      %v2593 = vpop.f32.mrf.mxu0
      %v2594 = vadd.f32 0.0, %v2593
      %2595 = vdwg.mxu0
      %v2596 = vadd.f32 %v2406, %v2517
      %v2597 = vadd.f32 %v2407, %v2519
      %v2598 = vadd.f32 %v2408, %v2522
      %v2599 = vadd.f32 %v2409, %v2524
      %v2600 = vadd.f32 %v2410, %v2527
      %v2601 = vadd.f32 %v2411, %v2529
      %v2602 = vadd.f32 %v2412, %v2532
      %v2603 = vadd.f32 %v2413, %v2534
      %v2604 = vadd.f32 %v2414, %v2537
      %v2605 = vadd.f32 %v2415, %v2539
      %v2606 = vadd.f32 %v2416, %v2542
      %v2607 = vadd.f32 %v2417, %v2544
      %v2608 = vadd.f32 %v2418, %v2547
      %v2609 = vadd.f32 %v2419, %v2549
      %v2610 = vadd.f32 %v2420, %v2552
      %v2611 = vadd.f32 %v2421, %v2554
      %v2612 = vadd.f32 %v2422, %v2557
      %v2613 = vadd.f32 %v2423, %v2559
      %v2614 = vadd.f32 %v2424, %v2562
      %v2615 = vadd.f32 %v2425, %v2564
      %v2616 = vadd.f32 %v2426, %v2567
      %v2617 = vadd.f32 %v2427, %v2569
      %v2618 = vadd.f32 %v2428, %v2572
      %v2619 = vadd.f32 %v2429, %v2574
      %v2620 = vadd.f32 %v2430, %v2577
      %v2621 = vadd.f32 %v2431, %v2579
      %v2622 = vadd.f32 %v2432, %v2582
      %v2623 = vadd.f32 %v2433, %v2584
      %v2624 = vadd.f32 %v2434, %v2587
      %v2625 = vadd.f32 %v2435, %v2589
      %v2626 = vadd.f32 %v2436, %v2592
      %v2627 = vadd.f32 %v2437, %v2594
      %s2628 = scalar_lea.vmem %s1, 512
      %v2629 = vld [vmem:[%s2628] sm:$0xf]
      %v2630 = vld [vmem:[%s2628 + $0x4] sm:$0xf]
      %v2631 = vld [vmem:[%s2628 + $0x8] sm:$0xf]
      %v2632 = vld [vmem:[%s2628 + $0xc] sm:$0xf]
      %v2633 = vld [vmem:[%s2628 + $0x10] sm:$0xf]
      %v2634 = vld [vmem:[%s2628 + $0x14] sm:$0xf]
      %v2635 = vld [vmem:[%s2628 + $0x18] sm:$0xf]
      %v2636 = vld [vmem:[%s2628 + $0x1c] sm:$0xf]
      %v2637 = vld [vmem:[%s2628 + $0x20] sm:$0xf]
      %v2638 = vld [vmem:[%s2628 + $0x24] sm:$0xf]
      %v2639 = vld [vmem:[%s2628 + $0x28] sm:$0xf]
      %v2640 = vld [vmem:[%s2628 + $0x2c] sm:$0xf]
      %v2641 = vld [vmem:[%s2628 + $0x30] sm:$0xf]
      %v2642 = vld [vmem:[%s2628 + $0x34] sm:$0xf]
      %v2643 = vld [vmem:[%s2628 + $0x38] sm:$0xf]
      %v2644 = vld [vmem:[%s2628 + $0x3c] sm:$0xf]
      %v2645 = vunpack.c.l.b16 %v2184
      %v2646 = vunpack.c.l.b16 %v2187
      %v2647 = vpack.c.b16 %v2646, %v2645
      %v2665 = vunpack.c.l.b16 %v2629
      %v2666 = vunpack.c.l.b16 %v2630
      %v2667 = vunpack.c.l.b16 %v2631
      %v2668 = vunpack.c.l.b16 %v2632
      %v2669 = vunpack.c.l.b16 %v2633
      %v2670 = vunpack.c.l.b16 %v2634
      %v2671 = vunpack.c.l.b16 %v2635
      %v2672 = vunpack.c.l.b16 %v2636
      %v2673 = vunpack.c.l.b16 %v2637
      %v2674 = vunpack.c.l.b16 %v2638
      %v2675 = vunpack.c.l.b16 %v2639
      %v2676 = vunpack.c.l.b16 %v2640
      %v2677 = vunpack.c.l.b16 %v2641
      %v2678 = vunpack.c.l.b16 %v2642
      %v2679 = vunpack.c.l.b16 %v2643
      %v2680 = vunpack.c.l.b16 %v2644
      %v2681 = vpack.c.b16 %v2666, %v2665
      %v2682 = vpack.c.b16 %v2668, %v2667
      %v2683 = vpack.c.b16 %v2670, %v2669
      %v2684 = vpack.c.b16 %v2672, %v2671
      %v2685 = vpack.c.b16 %v2674, %v2673
      %v2686 = vpack.c.b16 %v2676, %v2675
      %v2687 = vpack.c.b16 %v2678, %v2677
      %v2688 = vpack.c.b16 %v2680, %v2679
      %2697 = vmatpush.bf16.msra.mxu0 %v2688
      %2698 = vmatpush.bf16.msra.mxu0 %v2687
      %2699 = vmatpush.bf16.msra.mxu0 %v2686
      %2700 = vmatpush.bf16.msra.mxu0 %v2685
      %2701 = vmatpush.bf16.msra.mxu0 %v2684
      %2702 = vmatpush.bf16.msra.mxu0 %v2683
      %2703 = vmatpush.bf16.msra.mxu0 %v2682
      %2704 = vmatpush.bf16.msra.mxu0 %v2681
      %2705 = vmatmul.bf16.gmra.mxu0 %v2239
      %v2706 = vpop.f32.mrf.mxu0
      %v2707 = vadd.f32 0.0, %v2706
      %v2708 = vpop.f32.mrf.mxu0
      %v2709 = vadd.f32 0.0, %v2708
      %2710 = vmatmul.bf16.gmra.mxu0 %v2240
      %v2711 = vpop.f32.mrf.mxu0
      %v2712 = vadd.f32 0.0, %v2711
      %v2713 = vpop.f32.mrf.mxu0
      %v2714 = vadd.f32 0.0, %v2713
      %2715 = vmatmul.bf16.gmra.mxu0 %v2241
      %v2716 = vpop.f32.mrf.mxu0
      %v2717 = vadd.f32 0.0, %v2716
      %v2718 = vpop.f32.mrf.mxu0
      %v2719 = vadd.f32 0.0, %v2718
      %2720 = vmatmul.bf16.gmra.mxu0 %v2242
      %v2721 = vpop.f32.mrf.mxu0
      %v2722 = vadd.f32 0.0, %v2721
      %v2723 = vpop.f32.mrf.mxu0
      %v2724 = vadd.f32 0.0, %v2723
      %2725 = vmatmul.bf16.gmra.mxu0 %v2243
      %v2726 = vpop.f32.mrf.mxu0
      %v2727 = vadd.f32 0.0, %v2726
      %v2728 = vpop.f32.mrf.mxu0
      %v2729 = vadd.f32 0.0, %v2728
      %2730 = vmatmul.bf16.gmra.mxu0 %v2244
      %v2731 = vpop.f32.mrf.mxu0
      %v2732 = vadd.f32 0.0, %v2731
      %v2733 = vpop.f32.mrf.mxu0
      %v2734 = vadd.f32 0.0, %v2733
      %2735 = vmatmul.bf16.gmra.mxu0 %v2245
      %v2736 = vpop.f32.mrf.mxu0
      %v2737 = vadd.f32 0.0, %v2736
      %v2738 = vpop.f32.mrf.mxu0
      %v2739 = vadd.f32 0.0, %v2738
      %2740 = vmatmul.bf16.gmra.mxu0 %v2246
      %v2741 = vpop.f32.mrf.mxu0
      %v2742 = vadd.f32 0.0, %v2741
      %v2743 = vpop.f32.mrf.mxu0
      %v2744 = vadd.f32 0.0, %v2743
      %2745 = vmatmul.bf16.gmra.mxu0 %v2247
      %v2746 = vpop.f32.mrf.mxu0
      %v2747 = vadd.f32 0.0, %v2746
      %v2748 = vpop.f32.mrf.mxu0
      %v2749 = vadd.f32 0.0, %v2748
      %2750 = vmatmul.bf16.gmra.mxu0 %v2248
      %v2751 = vpop.f32.mrf.mxu0
      %v2752 = vadd.f32 0.0, %v2751
      %v2753 = vpop.f32.mrf.mxu0
      %v2754 = vadd.f32 0.0, %v2753
      %2755 = vmatmul.bf16.gmra.mxu0 %v2249
      %v2756 = vpop.f32.mrf.mxu0
      %v2757 = vadd.f32 0.0, %v2756
      %v2758 = vpop.f32.mrf.mxu0
      %v2759 = vadd.f32 0.0, %v2758
      %2760 = vmatmul.bf16.gmra.mxu0 %v2250
      %v2761 = vpop.f32.mrf.mxu0
      %v2762 = vadd.f32 0.0, %v2761
      %v2763 = vpop.f32.mrf.mxu0
      %v2764 = vadd.f32 0.0, %v2763
      %2765 = vmatmul.bf16.gmra.mxu0 %v2251
      %v2766 = vpop.f32.mrf.mxu0
      %v2767 = vadd.f32 0.0, %v2766
      %v2768 = vpop.f32.mrf.mxu0
      %v2769 = vadd.f32 0.0, %v2768
      %2770 = vmatmul.bf16.gmra.mxu0 %v2252
      %v2771 = vpop.f32.mrf.mxu0
      %v2772 = vadd.f32 0.0, %v2771
      %v2773 = vpop.f32.mrf.mxu0
      %v2774 = vadd.f32 0.0, %v2773
      %2775 = vmatmul.bf16.gmra.mxu0 %v2457
      %v2776 = vpop.f32.mrf.mxu0
      %v2777 = vadd.f32 0.0, %v2776
      %v2778 = vpop.f32.mrf.mxu0
      %v2779 = vadd.f32 0.0, %v2778
      %2780 = vmatmul.bf16.gmra.mxu0 %v2647
      %v2781 = vpop.f32.mrf.mxu0
      %v2782 = vadd.f32 0.0, %v2781
      %v2783 = vpop.f32.mrf.mxu0
      %v2784 = vadd.f32 0.0, %v2783
      %2785 = vdwg.mxu0
      %v2786 = vadd.f32 %v2596, %v2707
      %v2787 = vadd.f32 %v2597, %v2709
      %v2788 = vadd.f32 %v2598, %v2712
      %v2789 = vadd.f32 %v2599, %v2714
      %v2790 = vadd.f32 %v2600, %v2717
      %v2791 = vadd.f32 %v2601, %v2719
      %v2792 = vadd.f32 %v2602, %v2722
      %v2793 = vadd.f32 %v2603, %v2724
      %v2794 = vadd.f32 %v2604, %v2727
      %v2795 = vadd.f32 %v2605, %v2729
      %v2796 = vadd.f32 %v2606, %v2732
      %v2797 = vadd.f32 %v2607, %v2734
      %v2798 = vadd.f32 %v2608, %v2737
      %v2799 = vadd.f32 %v2609, %v2739
      %v2800 = vadd.f32 %v2610, %v2742
      %v2801 = vadd.f32 %v2611, %v2744
      %v2802 = vadd.f32 %v2612, %v2747
      %v2803 = vadd.f32 %v2613, %v2749
      %v2804 = vadd.f32 %v2614, %v2752
      %v2805 = vadd.f32 %v2615, %v2754
      %v2806 = vadd.f32 %v2616, %v2757
      %v2807 = vadd.f32 %v2617, %v2759
      %v2808 = vadd.f32 %v2618, %v2762
      %v2809 = vadd.f32 %v2619, %v2764
      %v2810 = vadd.f32 %v2620, %v2767
      %v2811 = vadd.f32 %v2621, %v2769
      %v2812 = vadd.f32 %v2622, %v2772
      %v2813 = vadd.f32 %v2623, %v2774
      %v2814 = vadd.f32 %v2624, %v2777
      %v2815 = vadd.f32 %v2625, %v2779
      %v2816 = vadd.f32 %v2626, %v2782
      %v2817 = vadd.f32 %v2627, %v2784
      %v2818 = vld [vmem:[%s2] sm:$0x1]
      %v2820 = vperm.slane %v2818, 0
      %v2822 = vadd.f32 %v2786, %v2820
      %v2823 = vadd.f32 %v2787, %v2820
      %v2824 = vadd.f32 %v2788, %v2820
      %v2825 = vadd.f32 %v2789, %v2820
      %v2826 = vadd.f32 %v2790, %v2820
      %v2827 = vadd.f32 %v2791, %v2820
      %v2828 = vadd.f32 %v2792, %v2820
      %v2829 = vadd.f32 %v2793, %v2820
      %v2830 = vadd.f32 %v2794, %v2820
      %v2831 = vadd.f32 %v2795, %v2820
      %v2832 = vadd.f32 %v2796, %v2820
      %v2833 = vadd.f32 %v2797, %v2820
      %v2834 = vadd.f32 %v2798, %v2820
      %v2835 = vadd.f32 %v2799, %v2820
      %v2836 = vadd.f32 %v2800, %v2820
      %v2837 = vadd.f32 %v2801, %v2820
      %v2838 = vadd.f32 %v2802, %v2820
      %v2839 = vadd.f32 %v2803, %v2820
      %v2840 = vadd.f32 %v2804, %v2820
      %v2841 = vadd.f32 %v2805, %v2820
      %v2842 = vadd.f32 %v2806, %v2820
      %v2843 = vadd.f32 %v2807, %v2820
      %v2844 = vadd.f32 %v2808, %v2820
      %v2845 = vadd.f32 %v2809, %v2820
      %v2846 = vadd.f32 %v2810, %v2820
      %v2847 = vadd.f32 %v2811, %v2820
      %v2848 = vadd.f32 %v2812, %v2820
      %v2849 = vadd.f32 %v2813, %v2820
      %v2850 = vadd.f32 %v2814, %v2820
      %v2851 = vadd.f32 %v2815, %v2820
      %v2852 = vadd.f32 %v2816, %v2820
      %v2853 = vadd.f32 %v2817, %v2820
      %2854 = vst [vmem:[%s148] sm:$0xff] %v2822
      %2855 = vst [vmem:[%s148 + $0x8] sm:$0xff] %v2823
      %2856 = vst [vmem:[%s148 + $0x10] sm:$0xff] %v2824
      %2857 = vst [vmem:[%s148 + $0x18] sm:$0xff] %v2825
      %2858 = vst [vmem:[%s148 + $0x20] sm:$0xff] %v2826
      %2859 = vst [vmem:[%s148 + $0x28] sm:$0xff] %v2827
      %2860 = vst [vmem:[%s148 + $0x30] sm:$0xff] %v2828
      %2861 = vst [vmem:[%s148 + $0x38] sm:$0xff] %v2829
      %2862 = vst [vmem:[%s148 + $0x40] sm:$0xff] %v2830
      %2863 = vst [vmem:[%s148 + $0x48] sm:$0xff] %v2831
      %2864 = vst [vmem:[%s148 + $0x50] sm:$0xff] %v2832
      %2865 = vst [vmem:[%s148 + $0x58] sm:$0xff] %v2833
      %2866 = vst [vmem:[%s148 + $0x60] sm:$0xff] %v2834
      %2867 = vst [vmem:[%s148 + $0x68] sm:$0xff] %v2835
      %2868 = vst [vmem:[%s148 + $0x70] sm:$0xff] %v2836
      %2869 = vst [vmem:[%s148 + $0x78] sm:$0xff] %v2837
      %2870 = vst [vmem:[%s148 + $0x80] sm:$0xff] %v2838
      %2871 = vst [vmem:[%s148 + $0x88] sm:$0xff] %v2839
      %2872 = vst [vmem:[%s148 + $0x90] sm:$0xff] %v2840
      %2873 = vst [vmem:[%s148 + $0x98] sm:$0xff] %v2841
      %2874 = vst [vmem:[%s148 + $0xa0] sm:$0xff] %v2842
      %2875 = vst [vmem:[%s148 + $0xa8] sm:$0xff] %v2843
      %2876 = vst [vmem:[%s148 + $0xb0] sm:$0xff] %v2844
      %2877 = vst [vmem:[%s148 + $0xb8] sm:$0xff] %v2845
      %2878 = vst [vmem:[%s148 + $0xc0] sm:$0xff] %v2846
      %2879 = vst [vmem:[%s148 + $0xc8] sm:$0xff] %v2847
      %2880 = vst [vmem:[%s148 + $0xd0] sm:$0xff] %v2848
      %2881 = vst [vmem:[%s148 + $0xd8] sm:$0xff] %v2849
      %2882 = vst [vmem:[%s148 + $0xe0] sm:$0xff] %v2850
      %2883 = vst [vmem:[%s148 + $0xe8] sm:$0xff] %v2851
      %2884 = vst [vmem:[%s148 + $0xf0] sm:$0xff] %v2852
      %2885 = vst [vmem:[%s148 + $0xf8] sm:$0xff] %v2853
      %s2886 = smul.u32 16, %s19
      %p2887 = scmp.lt.s32.totalorder %s18, 1
      %s2888 = scalar_select %p2887, %s18, 1
      %p2889 = scmp.lt.s32.totalorder %s2886, 15
      %s2890 = scalar_select %p2889, %s2886, 15
      %s2891 = smul.addr %s2890, 2
      %s2892 = smul.addr %s2888, 32
      %s2893 = sadd.s32 %s2891, %s2892
      %s2894 = smul.addr %s2893, 8
      %s2895 = scalar_lea.vmem %s3, %s2894
      // Predicated region
      $region48: #{residual_block_forward.5} parent=27 // pred_check
        %p2896 = pneg %p88
      $region49: #{residual_block_forward.5} parent=27 // pred_check_branch
        %2898 = sbr.rel (%p2896) target = $region51
      $region50: #{residual_block_forward.5} parent=27 // pred_region
        %s2899 = smul.u32 16, %s19
      $region51: #{residual_block_forward.5} parent=27 // pred_fallthru
        _
    $region28: #{residual_block_forward.5} parent=5 // pred_fallthru
      _
    %p2900 = scmp.le.s32.totalorder 2, %s9
    // Predicated region
    $region52: #{residual_block_forward.5} parent=5 // pred_check
      %p2901 = pneg %p2900
    $region53: #{residual_block_forward.5} parent=5 // pred_check_branch
      %2903 = sbr.rel (%p2901) target = $region55
    $region54: #{residual_block_forward.5} parent=5 // pred_region
      %s2904 = ssub.s32 %s9, 2
      // Predicated region
      $region56: #{residual_block_forward.5} parent=54 // pred_check
        %p2905 = pneg %p94
      $region57: #{residual_block_forward.5} parent=54 // pred_check_branch
        %2907 = sbr.rel (%p2905) target = $region59
      $region58: #{residual_block_forward.5} parent=54 // pred_region
        %s2908 = smul.u32 16, %s21
        %p2909 = scmp.lt.s32.totalorder %s20, 1
        %s2910 = scalar_select %p2909, %s20, 1
        %p2911 = scmp.lt.s32.totalorder %s2908, 15
        %s2912 = scalar_select %p2911, %s2908, 15
        %s2913 = smul.addr %s2912, 2
        %s2914 = smul.addr %s2910, 32
        %s2915 = sadd.s32 %s2913, %s2914
        %s2916 = smul.addr %s2915, 8
        %s2917 = scalar_lea.vmem %s3, %s2916
      $region59: #{residual_block_forward.5} parent=54 // pred_fallthru
        _
    $region55: #{residual_block_forward.5} parent=5 // pred_fallthru
      _
  $region6: #{residual_block_forward.5} parent=0 // loop_footer
    %s13 = sadd.s32 1, %s9
  $region7: #{residual_block_forward.5} parent=0 // loop_footer_branch
    %8 = sbr.rel target = $region3
  $region8: #{residual_block_forward.5} parent=0 // loop_exit
    _
  %2918 = vsyncmov [#allocation3]
  %s2919 = vpop.sfrf %2918
  %p2920 = scmp.eq.s32.totalorder %s2919, 0
  %p2921 = pneg %p2920
  %2923 = shalt.err (%p2921)

// kernel: residual_block_forward.7
$region0: #{residual_block_forward.7}
  #allocation0 [shape = 'u32[]', space=smem, size = 0x4, offset = 0x4, fixed_abs, tag = 'smem constant byte address 0x4 - core index']
  #allocation1 [shape = 'u32[72,128]{1,0:T(1,128)}', space=vmem, size = 0x9000, scoped, tag = 'internal scratch']
  #allocation2 [shape = 'bf16[18,24,128]{2,1,0:T(8,128)(2,1)}', space=vmem, size = 0x1b000, scoped, tag = 'scratch operand']
  #allocation3 [shape = 's32[1]{0}', space=sflag, size = 0x4, scoped, tag = 'scratch operand']
  #allocation4 [shape = 's32[]', space=sflag, size = 0x4, offset = 0, fixed_abs, tag = 'sflag constant byte address 0x0 - dummy sync flag']
  %s0 = inlined_call_operand.vmem [shape: bf16[2,18,24,128], index: 0, kind: input, shape index: {}]
  %s1 = inlined_call_operand.vmem [shape: bf16[9,128,128], index: 1, kind: input, shape index: {}]
  %s2 = inlined_call_operand.vmem [shape: f32[1,128], index: 2, kind: input, shape index: {}]
  %s3 = inlined_call_operand.vmem [shape: f32[2,16,16,128], index: 3, kind: input, shape index: {}]
  %s4 = inlined_call_operand.vmem [shape: bf16[128,128], index: 4, kind: input, shape index: {}]
  %s5 = inlined_call_operand.vmem [shape: f32[2,16,16,128], index: 5, kind: output, shape index: {}]
  %s6 = sld [smem:[#allocation0]]
  $region68: #{residual_block_forward.7} parent=0
    _
  %s8 = ssub.s32 1, %s6
  %s9 = scalar_select 0, %s8, %s6
  loop: start=0, step=1, limit=4
  $region2: #{residual_block_forward.7} parent=0 // loop_pre_header
    _
  $region3: #{residual_block_forward.7} parent=0 // loop_header
    %s11 = sphi 0, %s15
    %p12 = scmp.ge.s32.totalorder %s11, 4
    %s18 = sphi 0, %s30
    %s19 = sphi 0, %s26
    %s20 = sphi 0, %s18
    %s21 = sphi 0, %s19
    %s22 = sphi 0, %s20
    %s23 = sphi 0, %s21
    %s31 = sphi 0, %s31
    %s33 = sphi 0, %s31
    %s34 = sphi 0, %s33
    %s48 = sphi 0, %s34
    %s52 = sphi 0, %s52
    %s54 = sphi 0, %s52
    %s55 = sphi 0, %s54
    %s69 = sphi 0, %s55
    %s77 = sphi 0, %s79
    %s80 = sphi 0, %s77
    %s81 = sphi 0, %s80
    %s97 = sphi 0, %s81
    %s101 = sphi 0, %s101
    %s103 = sphi 0, %s101
    %s104 = sphi 0, %s103
    %s118 = sphi 0, %s104
    %s126 = sphi 0, %s128
    %s129 = sphi 0, %s126
    %s130 = sphi 0, %s129
    %s146 = sphi 0, %s130
  $region4: #{residual_block_forward.7} parent=0 // loop_header_branch
    %14 = sbr.rel (%p12) target = $region8
  $region5: #{residual_block_forward.7} parent=0 // loop_body
    %s16 = ssub.s32 %s11, 1
    %s17 = ssub.s32 %s11, 2
    %s24 = sadd.s32 1, %s19
    %p25 = scmp.ge.s32.totalorder %s24, 1
    %s26 = scalar_select %p25, 0, %s24
    %s27 = sadd.s32 1, %s18
    %s28 = scalar_select %p25, %s27, %s18
    %p29 = scmp.ge.s32.totalorder %s28, 2
    %s30 = scalar_select %p29, 0, %s28
    %s32 = sadd.s32 %s31, 1
    %p35 = scmp.eq.s32.totalorder %s11, 1
    %p36 = scmp.ne.s32.totalorder %s31, %s33
    %p37 = scmp.eq.s32.totalorder %s11, 0
    %p38 = por %p36, %p37
    %p39 = scmp.ne.s32.totalorder %s31, %s33
    %p40 = scmp.eq.s32.totalorder %s16, 1
    %p41 = por %p39, %p40
    %p42 = scmp.ne.s32.totalorder %s33, %s34
    %p43 = scmp.eq.s32.totalorder %s16, 0
    %p44 = por %p42, %p43
    %p45 = scmp.ne.s32.totalorder %s33, %s34
    %p46 = scmp.eq.s32.totalorder %s17, 1
    %p47 = por %p45, %p46
    %p49 = scmp.ne.s32.totalorder %s34, %s48
    %p50 = scmp.eq.s32.totalorder %s17, 0
    %p51 = por %p49, %p50
    %s53 = sadd.s32 %s52, 1
    %p56 = scmp.eq.s32.totalorder %s11, 1
    %p57 = scmp.ne.s32.totalorder %s52, %s54
    %p58 = scmp.eq.s32.totalorder %s11, 0
    %p59 = por %p57, %p58
    %p60 = scmp.ne.s32.totalorder %s52, %s54
    %p61 = scmp.eq.s32.totalorder %s16, 1
    %p62 = por %p60, %p61
    %p63 = scmp.ne.s32.totalorder %s54, %s55
    %p64 = scmp.eq.s32.totalorder %s16, 0
    %p65 = por %p63, %p64
    %p66 = scmp.ne.s32.totalorder %s54, %s55
    %p67 = scmp.eq.s32.totalorder %s17, 1
    %p68 = por %p66, %p67
    %p70 = scmp.ne.s32.totalorder %s55, %s69
    %p71 = scmp.eq.s32.totalorder %s17, 0
    %p72 = por %p70, %p71
    %s73 = ssub.s32 %s18, %s30
    %s74 = ssub.s32 %s19, %s26
    %s75 = sor.u32 %s73, %s74
    %p76 = scmp.eq.s32.totalorder %s75, 0
    %s78 = sadd.s32 %s77, 1
    %s79 = scalar_select %p76, %s77, %s78
    %p82 = pneg %p76
    %p83 = scmp.eq.s32.totalorder %s11, 1
    %p84 = por %p82, %p83
    %p85 = scmp.ne.s32.totalorder %s77, %s80
    %p86 = scmp.eq.s32.totalorder %s11, 0
    %p87 = por %p85, %p86
    %p88 = scmp.ne.s32.totalorder %s77, %s80
    %p89 = scmp.eq.s32.totalorder %s16, 1
    %p90 = por %p88, %p89
    %p91 = scmp.ne.s32.totalorder %s80, %s81
    %p92 = scmp.eq.s32.totalorder %s16, 0
    %p93 = por %p91, %p92
    %p94 = scmp.ne.s32.totalorder %s80, %s81
    %p95 = scmp.eq.s32.totalorder %s17, 1
    %p96 = por %p94, %p95
    %p98 = scmp.ne.s32.totalorder %s81, %s97
    %p99 = scmp.eq.s32.totalorder %s17, 0
    %p100 = por %p98, %p99
    %s102 = sadd.s32 %s101, 1
    %p105 = scmp.eq.s32.totalorder %s11, 1
    %p106 = scmp.ne.s32.totalorder %s101, %s103
    %p107 = scmp.eq.s32.totalorder %s11, 0
    %p108 = por %p106, %p107
    %p109 = scmp.ne.s32.totalorder %s101, %s103
    %p110 = scmp.eq.s32.totalorder %s16, 1
    %p111 = por %p109, %p110
    %p112 = scmp.ne.s32.totalorder %s103, %s104
    %p113 = scmp.eq.s32.totalorder %s16, 0
    %p114 = por %p112, %p113
    %p115 = scmp.ne.s32.totalorder %s103, %s104
    %p116 = scmp.eq.s32.totalorder %s17, 1
    %p117 = por %p115, %p116
    %p119 = scmp.ne.s32.totalorder %s104, %s118
    %p120 = scmp.eq.s32.totalorder %s17, 0
    %p121 = por %p119, %p120
    %s122 = ssub.s32 %s18, %s30
    %s123 = ssub.s32 %s19, %s26
    %s124 = sor.u32 %s122, %s123
    %p125 = scmp.eq.s32.totalorder %s124, 0
    %s127 = sadd.s32 %s126, 1
    %s128 = scalar_select %p125, %s126, %s127
    %p131 = pneg %p125
    %p132 = scmp.eq.s32.totalorder %s11, 1
    %p133 = por %p131, %p132
    %p134 = scmp.ne.s32.totalorder %s126, %s129
    %p135 = scmp.eq.s32.totalorder %s11, 0
    %p136 = por %p134, %p135
    %p137 = scmp.ne.s32.totalorder %s126, %s129
    %p138 = scmp.eq.s32.totalorder %s16, 1
    %p139 = por %p137, %p138
    %p140 = scmp.ne.s32.totalorder %s129, %s130
    %p141 = scmp.eq.s32.totalorder %s16, 0
    %p142 = por %p140, %p141
    %p143 = scmp.ne.s32.totalorder %s129, %s130
    %p144 = scmp.eq.s32.totalorder %s17, 1
    %p145 = por %p143, %p144
    %p147 = scmp.ne.s32.totalorder %s130, %s146
    %p148 = scmp.eq.s32.totalorder %s17, 0
    %p149 = por %p147, %p148
    %p150 = scmp.le.s32.totalorder 1, %s11
    %p151 = scmp.lt.s32.totalorder %s11, 3
    %p152 = pnand %p150, %p151
    %p153 = pneg %p152
    // Predicated region
    $region9: #{residual_block_forward.7} parent=5 // pred_check
      _
    $region10: #{residual_block_forward.7} parent=5 // pred_check_branch
      %155 = sbr.rel (%p152) target = $region12
    $region11: #{residual_block_forward.7} parent=5 // pred_region
      %s156 = ssub.s32 %s11, 1
      // Predicated region
      $region13: #{residual_block_forward.7} parent=11 // pred_check
        %p157 = pneg %p44
      $region14: #{residual_block_forward.7} parent=11 // pred_check_branch
        %159 = sbr.rel (%p157) target = $region16
      $region15: #{residual_block_forward.7} parent=11 // pred_region
        _
      $region16: #{residual_block_forward.7} parent=11 // pred_fallthru
        _
      // Predicated region
      $region17: #{residual_block_forward.7} parent=11 // pred_check
        %p160 = pneg %p65
      $region18: #{residual_block_forward.7} parent=11 // pred_check_branch
        %162 = sbr.rel (%p160) target = $region20
      $region19: #{residual_block_forward.7} parent=11 // pred_region
        _
      $region20: #{residual_block_forward.7} parent=11 // pred_fallthru
        _
      // Predicated region
      $region21: #{residual_block_forward.7} parent=11 // pred_check
        %p163 = pneg %p114
      $region22: #{residual_block_forward.7} parent=11 // pred_check_branch
        %165 = sbr.rel (%p163) target = $region24
      $region23: #{residual_block_forward.7} parent=11 // pred_region
        _
      $region24: #{residual_block_forward.7} parent=11 // pred_fallthru
        _
    $region12: #{residual_block_forward.7} parent=5 // pred_fallthru
      _
    %p166 = scmp.lt.s32.totalorder %s11, 2
    // Predicated region
    $region25: #{residual_block_forward.7} parent=5 // pred_check
      %p167 = pneg %p166
    $region26: #{residual_block_forward.7} parent=5 // pred_check_branch
      %169 = sbr.rel (%p167) target = $region28
    $region27: #{residual_block_forward.7} parent=5 // pred_region
      // Predicated region
      $region29: #{residual_block_forward.7} parent=27 // pred_check
        %p170 = pneg %p87
      $region30: #{residual_block_forward.7} parent=27 // pred_check_branch
        %172 = sbr.rel (%p170) target = $region32
      $region31: #{residual_block_forward.7} parent=27 // pred_region
        %s173 = smul.u32 16, %s19
        %p174 = scmp.lt.s32.totalorder %s18, 1
        %s175 = scalar_select %p174, %s18, 1
        %p176 = scmp.lt.s32.totalorder %s173, 15
        %s177 = scalar_select %p176, %s173, 15
        %s178 = smul.addr %s177, 2
        %s179 = smul.addr %s175, 32
        %s180 = sadd.s32 %s178, %s179
        %s181 = smul.addr %s180, 8
        %s182 = scalar_lea.vmem %s3, %s181
        %s183 = smul.u32 16, %s19
      $region32: #{residual_block_forward.7} parent=27 // pred_fallthru
        _
    $region28: #{residual_block_forward.7} parent=5 // pred_fallthru
      _
    %p184 = scmp.le.s32.totalorder 1, %s11
    %p185 = scmp.lt.s32.totalorder %s11, 3
    %p186 = pnand %p184, %p185
    %p187 = pneg %p186
    // Predicated region
    $region33: #{residual_block_forward.7} parent=5 // pred_check
      _
    $region34: #{residual_block_forward.7} parent=5 // pred_check_branch
      %189 = sbr.rel (%p186) target = $region36
    $region35: #{residual_block_forward.7} parent=5 // pred_region
      %s190 = ssub.s32 %s11, 1
      %p191 = pneg %p44
      %p192 = pneg %p41
      %p193 = pneg %p65
      %p194 = pneg %p62
      %s195 = smul.u32 16, %s21
      %p196 = scmp.lt.s32.totalorder %s20, 1
      %s197 = scalar_select %p196, %s20, 1
      %p198 = scmp.lt.s32.totalorder %s195, 15
      %s199 = scalar_select %p198, %s195, 15
      %s200 = smul.addr %s199, 2
      %s201 = smul.addr %s197, 32
      %s202 = sadd.s32 %s200, %s201
      %s203 = smul.addr %s202, 8
      %s204 = scalar_lea.vmem %s3, %s203
      %p205 = pneg %p93
      %p206 = pneg %p90
      %p207 = pneg %p114
      %p208 = pneg %p111
      %p209 = pneg %p142
      %p210 = pneg %p139
      %s211 = smul.u32 16, %s21
      %p212 = scmp.lt.s32.totalorder %s20, 1
      %s213 = scalar_select %p212, %s20, 1
      %p214 = scmp.lt.s32.totalorder %s211, 15
      %s215 = scalar_select %p214, %s211, 15
      %s216 = smul.addr %s215, 2
      %s217 = smul.addr %s213, 32
      %s218 = sadd.s32 %s216, %s217
      %s219 = smul.addr %s218, 8
      %s220 = scalar_lea.vmem %s5, %s219
      %s221 = smul.u32 16, %s21
      %p222 = scmp.lt.s32.totalorder %s20, 1
      %s223 = scalar_select %p222, %s20, 1
      %p224 = scmp.lt.s32.totalorder %s221, 15
      %s225 = scalar_select %p224, %s221, 15
      %s226 = smul.addr %s225, 2
      %s227 = smul.addr %s223, 32
      %s228 = sadd.s32 %s226, %s227
      %s229 = smul.addr %s228, 8
      %s230 = scalar_lea.vmem %s3, %s229
      %s231 = smul.u32 16, %s21
      %s232 = smul.u32 16, %s21
      %p233 = scmp.lt.s32.totalorder %s20, 1
      %s234 = scalar_select %p233, %s20, 1
      %p235 = scmp.lt.s32.totalorder %s232, 15
      %s236 = scalar_select %p235, %s232, 15
      %s237 = smul.addr %s236, 2
      %s238 = smul.addr %s234, 32
      %s239 = sadd.s32 %s237, %s238
      %s240 = smul.addr %s239, 8
      %s241 = scalar_lea.vmem %s5, %s240
      %s242 = smul.u32 16, %s21
      %s243 = smul.u32 %s21, 16
      %s244 = smul.u32 %s243, 3
      %s245 = smul.u32 %s20, 54
      %s246 = sadd.s32 %s244, %s245
      %s247 = smul.addr %s246, 4
      %s248 = scalar_lea.vmem %s0, %s247
      // Predicated region
      $region37: #{residual_block_forward.7} parent=35 // pred_check
        _
      $region38: #{residual_block_forward.7} parent=35 // pred_check_branch
        %250 = sbr.rel (0) target = $region40
      $region39: #{residual_block_forward.7} parent=35 // pred_region
        loop: start=0, step=1, limit=1
        $region41: #{residual_block_forward.7} parent=39 // loop_pre_header
          _
        $region42: #{residual_block_forward.7} parent=39 // loop_header
          %s252 = sphi 0, %s256
          %p253 = scmp.ge.s32.totalorder %s252, 1
          %s257 = sphi %s248, %s248
          %s258 = sphi [#allocation2], [#allocation2]
        $region43: #{residual_block_forward.7} parent=39 // loop_header_branch
          %255 = sbr.rel (%p253) target = $region47
        $region44: #{residual_block_forward.7} parent=39 // loop_body
          %v259 = vld [vmem:[%s257] sm:$0xff]
          %260 = vst [vmem:[%s258] sm:$0xff] %v259
          %v261 = vld [vmem:[%s257 + $0x8] sm:$0xff]
          %262 = vst [vmem:[%s258 + $0x8] sm:$0xff] %v261
          %v263 = vld [vmem:[%s257 + $0x10] sm:$0xff]
          %264 = vst [vmem:[%s258 + $0x10] sm:$0xff] %v263
          %v265 = vld [vmem:[%s257 + $0x18] sm:$0xff]
          %266 = vst [vmem:[%s258 + $0x18] sm:$0xff] %v265
          %v267 = vld [vmem:[%s257 + $0x20] sm:$0xff]
          %268 = vst [vmem:[%s258 + $0x20] sm:$0xff] %v267
          %v269 = vld [vmem:[%s257 + $0x28] sm:$0xff]
          %270 = vst [vmem:[%s258 + $0x28] sm:$0xff] %v269
          %v271 = vld [vmem:[%s257 + $0x30] sm:$0xff]
          %272 = vst [vmem:[%s258 + $0x30] sm:$0xff] %v271
          %v273 = vld [vmem:[%s257 + $0x38] sm:$0xff]
          %274 = vst [vmem:[%s258 + $0x38] sm:$0xff] %v273
          %v275 = vld [vmem:[%s257 + $0x40] sm:$0xff]
          %276 = vst [vmem:[%s258 + $0x40] sm:$0xff] %v275
          %v277 = vld [vmem:[%s257 + $0x48] sm:$0xff]
          %278 = vst [vmem:[%s258 + $0x48] sm:$0xff] %v277
          %v279 = vld [vmem:[%s257 + $0x50] sm:$0xff]
          %280 = vst [vmem:[%s258 + $0x50] sm:$0xff] %v279
          %v281 = vld [vmem:[%s257 + $0x58] sm:$0xff]
          %282 = vst [vmem:[%s258 + $0x58] sm:$0xff] %v281
          %v283 = vld [vmem:[%s257 + $0x60] sm:$0xff]
          %284 = vst [vmem:[%s258 + $0x60] sm:$0xff] %v283
          %v285 = vld [vmem:[%s257 + $0x68] sm:$0xff]
          %286 = vst [vmem:[%s258 + $0x68] sm:$0xff] %v285
          %v287 = vld [vmem:[%s257 + $0x70] sm:$0xff]
          %288 = vst [vmem:[%s258 + $0x70] sm:$0xff] %v287
          %v289 = vld [vmem:[%s257 + $0x78] sm:$0xff]
          %290 = vst [vmem:[%s258 + $0x78] sm:$0xff] %v289
          %v291 = vld [vmem:[%s257 + $0x80] sm:$0xff]
          %292 = vst [vmem:[%s258 + $0x80] sm:$0xff] %v291
          %v293 = vld [vmem:[%s257 + $0x88] sm:$0xff]
          %294 = vst [vmem:[%s258 + $0x88] sm:$0xff] %v293
          %v295 = vld [vmem:[%s257 + $0x90] sm:$0xff]
          %296 = vst [vmem:[%s258 + $0x90] sm:$0xff] %v295
          %v297 = vld [vmem:[%s257 + $0x98] sm:$0xff]
          %298 = vst [vmem:[%s258 + $0x98] sm:$0xff] %v297
          %v299 = vld [vmem:[%s257 + $0xa0] sm:$0xff]
          %300 = vst [vmem:[%s258 + $0xa0] sm:$0xff] %v299
          %v301 = vld [vmem:[%s257 + $0xa8] sm:$0xff]
          %302 = vst [vmem:[%s258 + $0xa8] sm:$0xff] %v301
          %v303 = vld [vmem:[%s257 + $0xb0] sm:$0xff]
          %304 = vst [vmem:[%s258 + $0xb0] sm:$0xff] %v303
          %v305 = vld [vmem:[%s257 + $0xb8] sm:$0xff]
          %306 = vst [vmem:[%s258 + $0xb8] sm:$0xff] %v305
          %v307 = vld [vmem:[%s257 + $0xc0] sm:$0xff]
          %308 = vst [vmem:[%s258 + $0xc0] sm:$0xff] %v307
          %v309 = vld [vmem:[%s257 + $0xc8] sm:$0xff]
          %310 = vst [vmem:[%s258 + $0xc8] sm:$0xff] %v309
          %v311 = vld [vmem:[%s257 + $0xd0] sm:$0xff]
          %312 = vst [vmem:[%s258 + $0xd0] sm:$0xff] %v311
        $region45: #{residual_block_forward.7} parent=39 // loop_footer
          %s256 = sadd.s32 1, %s252
        $region46: #{residual_block_forward.7} parent=39 // loop_footer_branch
          %251 = sbr.rel target = $region42
        $region47: #{residual_block_forward.7} parent=39 // loop_exit
          _
      $region40: #{residual_block_forward.7} parent=35 // pred_fallthru
        _
      // Predicated region
      $region48: #{residual_block_forward.7} parent=35 // pred_check
        _
      $region49: #{residual_block_forward.7} parent=35 // pred_check_branch
        %314 = sbr.rel target = $region51
      $region50: #{residual_block_forward.7} parent=35 // pred_region
        _
      $region51: #{residual_block_forward.7} parent=35 // pred_fallthru
        _
      // Predicated region
      $region52: #{residual_block_forward.7} parent=35 // pred_check
        _
      $region53: #{residual_block_forward.7} parent=35 // pred_check_branch
        %317 = sbr.rel (0) target = $region55
      $region54: #{residual_block_forward.7} parent=35 // pred_region
        %318 = vsyncadd [#allocation3], 3456
      $region55: #{residual_block_forward.7} parent=35 // pred_fallthru
        _
      %v319 = vld [vmem:[%s230] sm:$0xff]
      %v320 = vld [vmem:[%s230 + $0x8] sm:$0xff]
      %v321 = vld [vmem:[%s230 + $0x10] sm:$0xff]
      %v322 = vld [vmem:[%s230 + $0x18] sm:$0xff]
      %v323 = vld [vmem:[%s230 + $0x20] sm:$0xff]
      %v324 = vld [vmem:[%s230 + $0x28] sm:$0xff]
      %v325 = vld [vmem:[%s230 + $0x30] sm:$0xff]
      %v326 = vld [vmem:[%s230 + $0x38] sm:$0xff]
      %v327 = vld [vmem:[%s230 + $0x40] sm:$0xff]
      %v328 = vld [vmem:[%s230 + $0x48] sm:$0xff]
      %v329 = vld [vmem:[%s230 + $0x50] sm:$0xff]
      %v330 = vld [vmem:[%s230 + $0x58] sm:$0xff]
      %v331 = vld [vmem:[%s230 + $0x60] sm:$0xff]
      %v332 = vld [vmem:[%s230 + $0x68] sm:$0xff]
      %v333 = vld [vmem:[%s230 + $0x70] sm:$0xff]
      %v334 = vld [vmem:[%s230 + $0x78] sm:$0xff]
      %v335 = vld [vmem:[%s230 + $0x80] sm:$0xff]
      %v336 = vld [vmem:[%s230 + $0x88] sm:$0xff]
      %v337 = vld [vmem:[%s230 + $0x90] sm:$0xff]
      %v338 = vld [vmem:[%s230 + $0x98] sm:$0xff]
      %v339 = vld [vmem:[%s230 + $0xa0] sm:$0xff]
      %v340 = vld [vmem:[%s230 + $0xa8] sm:$0xff]
      %v341 = vld [vmem:[%s230 + $0xb0] sm:$0xff]
      %v342 = vld [vmem:[%s230 + $0xb8] sm:$0xff]
      %v343 = vld [vmem:[%s230 + $0xc0] sm:$0xff]
      %v344 = vld [vmem:[%s230 + $0xc8] sm:$0xff]
      %v345 = vld [vmem:[%s230 + $0xd0] sm:$0xff]
      %v346 = vld [vmem:[%s230 + $0xd8] sm:$0xff]
      %v347 = vld [vmem:[%s230 + $0xe0] sm:$0xff]
      %v348 = vld [vmem:[%s230 + $0xe8] sm:$0xff]
      %v349 = vld [vmem:[%s230 + $0xf0] sm:$0xff]
      %v350 = vld [vmem:[%s230 + $0xf8] sm:$0xff]
      %v351 = vpack.c.bf16 %v320, %v319
      %v352 = vpack.c.bf16 %v322, %v321
      %v353 = vpack.c.bf16 %v324, %v323
      %v354 = vpack.c.bf16 %v326, %v325
      %v355 = vpack.c.bf16 %v328, %v327
      %v356 = vpack.c.bf16 %v330, %v329
      %v357 = vpack.c.bf16 %v332, %v331
      %v358 = vpack.c.bf16 %v334, %v333
      %v359 = vpack.c.bf16 %v336, %v335
      %v360 = vpack.c.bf16 %v338, %v337
      %v361 = vpack.c.bf16 %v340, %v339
      %v362 = vpack.c.bf16 %v342, %v341
      %v363 = vpack.c.bf16 %v344, %v343
      %v364 = vpack.c.bf16 %v346, %v345
      %v365 = vpack.c.bf16 %v348, %v347
      %v366 = vpack.c.bf16 %v350, %v349
      %v367 = vld [vmem:[%s4] sm:$0xf]
      %v368 = vld [vmem:[%s4 + $0x4] sm:$0xf]
      %v369 = vld [vmem:[%s4 + $0x8] sm:$0xf]
      %v370 = vld [vmem:[%s4 + $0xc] sm:$0xf]
      %v371 = vld [vmem:[%s4 + $0x10] sm:$0xf]
      %v372 = vld [vmem:[%s4 + $0x14] sm:$0xf]
      %v373 = vld [vmem:[%s4 + $0x18] sm:$0xf]
      %v374 = vld [vmem:[%s4 + $0x1c] sm:$0xf]
      %v375 = vld [vmem:[%s4 + $0x20] sm:$0xf]
      %v376 = vld [vmem:[%s4 + $0x24] sm:$0xf]
      %v377 = vld [vmem:[%s4 + $0x28] sm:$0xf]
      %v378 = vld [vmem:[%s4 + $0x2c] sm:$0xf]
      %v379 = vld [vmem:[%s4 + $0x30] sm:$0xf]
      %v380 = vld [vmem:[%s4 + $0x34] sm:$0xf]
      %v381 = vld [vmem:[%s4 + $0x38] sm:$0xf]
      %v382 = vld [vmem:[%s4 + $0x3c] sm:$0xf]
      %s383 = smul.u32 4, 18
      %s384 = smul.u32 %s383, 3
      %s385 = smul.u32 %s384, 1
      %s386 = sshll.u32 %s385, 4
      %387 = dma.done [#allocation3], %s386
      %v388 = vld [vmem:[#allocation2] sm:$0xf]
      %v389 = vld [vmem:[#allocation2 + $0x4] sm:$0xf]
      %v390 = vld [vmem:[#allocation2 + $0xc] sm:$0xf]
      %v391 = vld [vmem:[#allocation2 + $0x10] sm:$0xf]
      %v392 = vld [vmem:[#allocation2 + $0x18] sm:$0xf]
      %v393 = vld [vmem:[#allocation2 + $0x1c] sm:$0xf]
      %v394 = vld [vmem:[#allocation2 + $0x24] sm:$0xf]
      %v395 = vld [vmem:[#allocation2 + $0x28] sm:$0xf]
      %v396 = vld [vmem:[#allocation2 + $0x30] sm:$0xf]
      %v397 = vld [vmem:[#allocation2 + $0x34] sm:$0xf]
      %v398 = vld [vmem:[#allocation2 + $0x3c] sm:$0xf]
      %v399 = vld [vmem:[#allocation2 + $0x40] sm:$0xf]
      %v400 = vld [vmem:[#allocation2 + $0x48] sm:$0xf]
      %v401 = vld [vmem:[#allocation2 + $0x4c] sm:$0xf]
      %v402 = vld [vmem:[#allocation2 + $0x54] sm:$0xf]
      %v403 = vld [vmem:[#allocation2 + $0x58] sm:$0xf]
      %v404 = vld [vmem:[#allocation2 + $0x60] sm:$0xf]
      %v405 = vld [vmem:[#allocation2 + $0x64] sm:$0xf]
      %v406 = vld [vmem:[#allocation2 + $0x6c] sm:$0xf]
      %v407 = vld [vmem:[#allocation2 + $0x70] sm:$0xf]
      %v408 = vld [vmem:[#allocation2 + $0x78] sm:$0xf]
      %v409 = vld [vmem:[#allocation2 + $0x7c] sm:$0xf]
      %v410 = vld [vmem:[#allocation2 + $0x84] sm:$0xf]
      %v411 = vld [vmem:[#allocation2 + $0x88] sm:$0xf]
      %v412 = vld [vmem:[#allocation2 + $0x90] sm:$0xf]
      %v413 = vld [vmem:[#allocation2 + $0x94] sm:$0xf]
      %v414 = vld [vmem:[#allocation2 + $0x9c] sm:$0xf]
      %v415 = vld [vmem:[#allocation2 + $0xa0] sm:$0xf]
      %v416 = vld [vmem:[#allocation2 + $0xa8] sm:$0xf]
      %v417 = vld [vmem:[#allocation2 + $0xac] sm:$0xf]
      %v418 = vld [vmem:[#allocation2 + $0xb4] sm:$0xf]
      %v419 = vld [vmem:[#allocation2 + $0xb8] sm:$0xf]
      %v420 = vld [vmem:[#allocation2 + $0xc0] sm:$0xf]
      %v421 = vld [vmem:[#allocation2 + $0xc4] sm:$0xf]
      %v422 = vld [vmem:[#allocation2 + $0xcc] sm:$0xf]
      %v423 = vld [vmem:[#allocation2 + $0xd0] sm:$0xf]
      %v424 = vld [vmem:[%s1] sm:$0xf]
      %v425 = vld [vmem:[%s1 + $0x4] sm:$0xf]
      %v426 = vld [vmem:[%s1 + $0x8] sm:$0xf]
      %v427 = vld [vmem:[%s1 + $0xc] sm:$0xf]
      %v428 = vld [vmem:[%s1 + $0x10] sm:$0xf]
      %v429 = vld [vmem:[%s1 + $0x14] sm:$0xf]
      %v430 = vld [vmem:[%s1 + $0x18] sm:$0xf]
      %v431 = vld [vmem:[%s1 + $0x1c] sm:$0xf]
      %v432 = vld [vmem:[%s1 + $0x20] sm:$0xf]
      %v433 = vld [vmem:[%s1 + $0x24] sm:$0xf]
      %v434 = vld [vmem:[%s1 + $0x28] sm:$0xf]
      %v435 = vld [vmem:[%s1 + $0x2c] sm:$0xf]
      %v436 = vld [vmem:[%s1 + $0x30] sm:$0xf]
      %v437 = vld [vmem:[%s1 + $0x34] sm:$0xf]
      %v438 = vld [vmem:[%s1 + $0x38] sm:$0xf]
      %v439 = vld [vmem:[%s1 + $0x3c] sm:$0xf]
      %v472 = vunpack.c.l.b16 %v388
      %v473 = vunpack.c.l.b16 %v389
      %v474 = vunpack.c.l.b16 %v390
      %v475 = vunpack.c.l.b16 %v391
      %v476 = vunpack.c.l.b16 %v392
      %v477 = vunpack.c.l.b16 %v393
      %v478 = vunpack.c.l.b16 %v394
      %v479 = vunpack.c.l.b16 %v395
      %v480 = vunpack.c.l.b16 %v396
      %v481 = vunpack.c.l.b16 %v397
      %v482 = vunpack.c.l.b16 %v398
      %v483 = vunpack.c.l.b16 %v399
      %v484 = vunpack.c.l.b16 %v400
      %v485 = vunpack.c.l.b16 %v401
      %v486 = vunpack.c.l.b16 %v402
      %v487 = vunpack.c.l.b16 %v403
      %v488 = vunpack.c.l.b16 %v404
      %v489 = vunpack.c.l.b16 %v405
      %v490 = vunpack.c.l.b16 %v406
      %v491 = vunpack.c.l.b16 %v407
      %v492 = vunpack.c.l.b16 %v408
      %v493 = vunpack.c.l.b16 %v409
      %v494 = vunpack.c.l.b16 %v410
      %v495 = vunpack.c.l.b16 %v411
      %v496 = vunpack.c.l.b16 %v412
      %v497 = vunpack.c.l.b16 %v413
      %v498 = vunpack.c.l.b16 %v414
      %v499 = vunpack.c.l.b16 %v415
      %v500 = vunpack.c.l.b16 %v416
      %v501 = vunpack.c.l.b16 %v417
      %v502 = vunpack.c.l.b16 %v418
      %v503 = vunpack.c.l.b16 %v419
      %v504 = vpack.c.b16 %v473, %v472
      %v505 = vpack.c.b16 %v475, %v474
      %v506 = vpack.c.b16 %v477, %v476
      %v507 = vpack.c.b16 %v479, %v478
      %v508 = vpack.c.b16 %v481, %v480
      %v509 = vpack.c.b16 %v483, %v482
      %v510 = vpack.c.b16 %v485, %v484
      %v511 = vpack.c.b16 %v487, %v486
      %v512 = vpack.c.b16 %v489, %v488
      %v513 = vpack.c.b16 %v491, %v490
      %v514 = vpack.c.b16 %v493, %v492
      %v515 = vpack.c.b16 %v495, %v494
      %v516 = vpack.c.b16 %v497, %v496
      %v517 = vpack.c.b16 %v499, %v498
      %v518 = vpack.c.b16 %v501, %v500
      %v519 = vpack.c.b16 %v503, %v502
      %v552 = vunpack.c.l.b16 %v424
      %v553 = vunpack.c.l.b16 %v425
      %v554 = vunpack.c.l.b16 %v426
      %v555 = vunpack.c.l.b16 %v427
      %v556 = vunpack.c.l.b16 %v428
      %v557 = vunpack.c.l.b16 %v429
      %v558 = vunpack.c.l.b16 %v430
      %v559 = vunpack.c.l.b16 %v431
      %v560 = vunpack.c.l.b16 %v432
      %v561 = vunpack.c.l.b16 %v433
      %v562 = vunpack.c.l.b16 %v434
      %v563 = vunpack.c.l.b16 %v435
      %v564 = vunpack.c.l.b16 %v436
      %v565 = vunpack.c.l.b16 %v437
      %v566 = vunpack.c.l.b16 %v438
      %v567 = vunpack.c.l.b16 %v439
      %v568 = vpack.c.b16 %v553, %v552
      %v569 = vpack.c.b16 %v555, %v554
      %v570 = vpack.c.b16 %v557, %v556
      %v571 = vpack.c.b16 %v559, %v558
      %v572 = vpack.c.b16 %v561, %v560
      %v573 = vpack.c.b16 %v563, %v562
      %v574 = vpack.c.b16 %v565, %v564
      %v575 = vpack.c.b16 %v567, %v566
      %584 = vmatpush.bf16.msra.mxu0 %v575
      %585 = vmatpush.bf16.msra.mxu0 %v574
      %586 = vmatpush.bf16.msra.mxu0 %v573
      %587 = vmatpush.bf16.msra.mxu0 %v572
      %588 = vmatpush.bf16.msra.mxu0 %v571
      %589 = vmatpush.bf16.msra.mxu0 %v570
      %590 = vmatpush.bf16.msra.mxu0 %v569
      %591 = vmatpush.bf16.msra.mxu0 %v568
      %592 = vmatmul.bf16.gmra.mxu0 %v504
      %v593 = vpop.f32.mrf.mxu0
      %v594 = vadd.f32 0.0, %v593
      %v595 = vpop.f32.mrf.mxu0
      %v596 = vadd.f32 0.0, %v595
      %597 = vmatmul.bf16.gmra.mxu0 %v505
      %v598 = vpop.f32.mrf.mxu0
      %v599 = vadd.f32 0.0, %v598
      %v600 = vpop.f32.mrf.mxu0
      %v601 = vadd.f32 0.0, %v600
      %602 = vmatmul.bf16.gmra.mxu0 %v506
      %v603 = vpop.f32.mrf.mxu0
      %v604 = vadd.f32 0.0, %v603
      %v605 = vpop.f32.mrf.mxu0
      %v606 = vadd.f32 0.0, %v605
      %607 = vmatmul.bf16.gmra.mxu0 %v507
      %v608 = vpop.f32.mrf.mxu0
      %v609 = vadd.f32 0.0, %v608
      %v610 = vpop.f32.mrf.mxu0
      %v611 = vadd.f32 0.0, %v610
      %612 = vmatmul.bf16.gmra.mxu0 %v508
      %v613 = vpop.f32.mrf.mxu0
      %v614 = vadd.f32 0.0, %v613
      %v615 = vpop.f32.mrf.mxu0
      %v616 = vadd.f32 0.0, %v615
      %617 = vmatmul.bf16.gmra.mxu0 %v509
      %v618 = vpop.f32.mrf.mxu0
      %v619 = vadd.f32 0.0, %v618
      %v620 = vpop.f32.mrf.mxu0
      %v621 = vadd.f32 0.0, %v620
      %622 = vmatmul.bf16.gmra.mxu0 %v510
      %v623 = vpop.f32.mrf.mxu0
      %v624 = vadd.f32 0.0, %v623
      %v625 = vpop.f32.mrf.mxu0
      %v626 = vadd.f32 0.0, %v625
      %627 = vmatmul.bf16.gmra.mxu0 %v511
      %v628 = vpop.f32.mrf.mxu0
      %v629 = vadd.f32 0.0, %v628
      %v630 = vpop.f32.mrf.mxu0
      %v631 = vadd.f32 0.0, %v630
      %632 = vmatmul.bf16.gmra.mxu0 %v512
      %v633 = vpop.f32.mrf.mxu0
      %v634 = vadd.f32 0.0, %v633
      %v635 = vpop.f32.mrf.mxu0
      %v636 = vadd.f32 0.0, %v635
      %637 = vmatmul.bf16.gmra.mxu0 %v513
      %v638 = vpop.f32.mrf.mxu0
      %v639 = vadd.f32 0.0, %v638
      %v640 = vpop.f32.mrf.mxu0
      %v641 = vadd.f32 0.0, %v640
      %642 = vmatmul.bf16.gmra.mxu0 %v514
      %v643 = vpop.f32.mrf.mxu0
      %v644 = vadd.f32 0.0, %v643
      %v645 = vpop.f32.mrf.mxu0
      %v646 = vadd.f32 0.0, %v645
      %647 = vmatmul.bf16.gmra.mxu0 %v515
      %v648 = vpop.f32.mrf.mxu0
      %v649 = vadd.f32 0.0, %v648
      %v650 = vpop.f32.mrf.mxu0
      %v651 = vadd.f32 0.0, %v650
      %652 = vmatmul.bf16.gmra.mxu0 %v516
      %v653 = vpop.f32.mrf.mxu0
      %v654 = vadd.f32 0.0, %v653
      %v655 = vpop.f32.mrf.mxu0
      %v656 = vadd.f32 0.0, %v655
      %657 = vmatmul.bf16.gmra.mxu0 %v517
      %v658 = vpop.f32.mrf.mxu0
      %v659 = vadd.f32 0.0, %v658
      %v660 = vpop.f32.mrf.mxu0
      %v661 = vadd.f32 0.0, %v660
      %662 = vmatmul.bf16.gmra.mxu0 %v518
      %v663 = vpop.f32.mrf.mxu0
      %v664 = vadd.f32 0.0, %v663
      %v665 = vpop.f32.mrf.mxu0
      %v666 = vadd.f32 0.0, %v665
      %667 = vmatmul.bf16.gmra.mxu0 %v519
      %v668 = vpop.f32.mrf.mxu0
      %v669 = vadd.f32 0.0, %v668
      %v670 = vpop.f32.mrf.mxu0
      %v671 = vadd.f32 0.0, %v670
      %672 = vdwg.mxu0
      %v689 = vunpack.c.l.b16 %v367
      %v690 = vunpack.c.l.b16 %v368
      %v691 = vunpack.c.l.b16 %v369
      %v692 = vunpack.c.l.b16 %v370
      %v693 = vunpack.c.l.b16 %v371
      %v694 = vunpack.c.l.b16 %v372
      %v695 = vunpack.c.l.b16 %v373
      %v696 = vunpack.c.l.b16 %v374
      %v697 = vunpack.c.l.b16 %v375
      %v698 = vunpack.c.l.b16 %v376
      %v699 = vunpack.c.l.b16 %v377
      %v700 = vunpack.c.l.b16 %v378
      %v701 = vunpack.c.l.b16 %v379
      %v702 = vunpack.c.l.b16 %v380
      %v703 = vunpack.c.l.b16 %v381
      %v704 = vunpack.c.l.b16 %v382
      %v705 = vpack.c.b16 %v690, %v689
      %v706 = vpack.c.b16 %v692, %v691
      %v707 = vpack.c.b16 %v694, %v693
      %v708 = vpack.c.b16 %v696, %v695
      %v709 = vpack.c.b16 %v698, %v697
      %v710 = vpack.c.b16 %v700, %v699
      %v711 = vpack.c.b16 %v702, %v701
      %v712 = vpack.c.b16 %v704, %v703
      %721 = vmatpush.bf16.msra.mxu0 %v712
      %722 = vmatpush.bf16.msra.mxu0 %v711
      %723 = vmatpush.bf16.msra.mxu0 %v710
      %724 = vmatpush.bf16.msra.mxu0 %v709
      %725 = vmatpush.bf16.msra.mxu0 %v708
      %726 = vmatpush.bf16.msra.mxu0 %v707
      %727 = vmatpush.bf16.msra.mxu0 %v706
      %728 = vmatpush.bf16.msra.mxu0 %v705
      %729 = vmatmul.bf16.gmra.mxu0 %v351
      %v730 = vpop.f32.mrf.mxu0
      %v731 = vadd.f32 %v594, %v730
      %v732 = vpop.f32.mrf.mxu0
      %v733 = vadd.f32 %v596, %v732
      %734 = vmatmul.bf16.gmra.mxu0 %v352
      %v735 = vpop.f32.mrf.mxu0
      %v736 = vadd.f32 %v599, %v735
      %v737 = vpop.f32.mrf.mxu0
      %v738 = vadd.f32 %v601, %v737
      %739 = vmatmul.bf16.gmra.mxu0 %v353
      %v740 = vpop.f32.mrf.mxu0
      %v741 = vadd.f32 %v604, %v740
      %v742 = vpop.f32.mrf.mxu0
      %v743 = vadd.f32 %v606, %v742
      %744 = vmatmul.bf16.gmra.mxu0 %v354
      %v745 = vpop.f32.mrf.mxu0
      %v746 = vadd.f32 %v609, %v745
      %v747 = vpop.f32.mrf.mxu0
      %v748 = vadd.f32 %v611, %v747
      %749 = vmatmul.bf16.gmra.mxu0 %v355
      %v750 = vpop.f32.mrf.mxu0
      %v751 = vadd.f32 %v614, %v750
      %v752 = vpop.f32.mrf.mxu0
      %v753 = vadd.f32 %v616, %v752
      %754 = vmatmul.bf16.gmra.mxu0 %v356
      %v755 = vpop.f32.mrf.mxu0
      %v756 = vadd.f32 %v619, %v755
      %v757 = vpop.f32.mrf.mxu0
      %v758 = vadd.f32 %v621, %v757
      %759 = vmatmul.bf16.gmra.mxu0 %v357
      %v760 = vpop.f32.mrf.mxu0
      %v761 = vadd.f32 %v624, %v760
      %v762 = vpop.f32.mrf.mxu0
      %v763 = vadd.f32 %v626, %v762
      %764 = vmatmul.bf16.gmra.mxu0 %v358
      %v765 = vpop.f32.mrf.mxu0
      %v766 = vadd.f32 %v629, %v765
      %v767 = vpop.f32.mrf.mxu0
      %v768 = vadd.f32 %v631, %v767
      %769 = vmatmul.bf16.gmra.mxu0 %v359
      %v770 = vpop.f32.mrf.mxu0
      %v771 = vadd.f32 %v634, %v770
      %v772 = vpop.f32.mrf.mxu0
      %v773 = vadd.f32 %v636, %v772
      %774 = vmatmul.bf16.gmra.mxu0 %v360
      %v775 = vpop.f32.mrf.mxu0
      %v776 = vadd.f32 %v639, %v775
      %v777 = vpop.f32.mrf.mxu0
      %v778 = vadd.f32 %v641, %v777
      %779 = vmatmul.bf16.gmra.mxu0 %v361
      %v780 = vpop.f32.mrf.mxu0
      %v781 = vadd.f32 %v644, %v780
      %v782 = vpop.f32.mrf.mxu0
      %v783 = vadd.f32 %v646, %v782
      %784 = vmatmul.bf16.gmra.mxu0 %v362
      %v785 = vpop.f32.mrf.mxu0
      %v786 = vadd.f32 %v649, %v785
      %v787 = vpop.f32.mrf.mxu0
      %v788 = vadd.f32 %v651, %v787
      %789 = vmatmul.bf16.gmra.mxu0 %v363
      %v790 = vpop.f32.mrf.mxu0
      %v791 = vadd.f32 %v654, %v790
      %v792 = vpop.f32.mrf.mxu0
      %v793 = vadd.f32 %v656, %v792
      %794 = vmatmul.bf16.gmra.mxu0 %v364
      %v795 = vpop.f32.mrf.mxu0
      %v796 = vadd.f32 %v659, %v795
      %v797 = vpop.f32.mrf.mxu0
      %v798 = vadd.f32 %v661, %v797
      %799 = vmatmul.bf16.gmra.mxu0 %v365
      %v800 = vpop.f32.mrf.mxu0
      %v801 = vadd.f32 %v664, %v800
      %v802 = vpop.f32.mrf.mxu0
      %v803 = vadd.f32 %v666, %v802
      %804 = vmatmul.bf16.gmra.mxu0 %v366
      %v805 = vpop.f32.mrf.mxu0
      %v806 = vadd.f32 %v669, %v805
      %v807 = vpop.f32.mrf.mxu0
      %v808 = vadd.f32 %v671, %v807
      %809 = vdwg.mxu0
      %s810 = scalar_lea.vmem %s1, 192
      %v811 = vld [vmem:[%s810] sm:$0xf]
      %v812 = vld [vmem:[%s810 + $0x4] sm:$0xf]
      %v813 = vld [vmem:[%s810 + $0x8] sm:$0xf]
      %v814 = vld [vmem:[%s810 + $0xc] sm:$0xf]
      %v815 = vld [vmem:[%s810 + $0x10] sm:$0xf]
      %v816 = vld [vmem:[%s810 + $0x14] sm:$0xf]
      %v817 = vld [vmem:[%s810 + $0x18] sm:$0xf]
      %v818 = vld [vmem:[%s810 + $0x1c] sm:$0xf]
      %v819 = vld [vmem:[%s810 + $0x20] sm:$0xf]
      %v820 = vld [vmem:[%s810 + $0x24] sm:$0xf]
      %v821 = vld [vmem:[%s810 + $0x28] sm:$0xf]
      %v822 = vld [vmem:[%s810 + $0x2c] sm:$0xf]
      %v823 = vld [vmem:[%s810 + $0x30] sm:$0xf]
      %v824 = vld [vmem:[%s810 + $0x34] sm:$0xf]
      %v825 = vld [vmem:[%s810 + $0x38] sm:$0xf]
      %v826 = vld [vmem:[%s810 + $0x3c] sm:$0xf]
      %v829 = vunpack.c.l.b16 %v420
      %v830 = vunpack.c.l.b16 %v421
      %v831 = vpack.c.b16 %v830, %v829
      %v849 = vunpack.c.l.b16 %v811
      %v850 = vunpack.c.l.b16 %v812
      %v851 = vunpack.c.l.b16 %v813
      %v852 = vunpack.c.l.b16 %v814
      %v853 = vunpack.c.l.b16 %v815
      %v854 = vunpack.c.l.b16 %v816
      %v855 = vunpack.c.l.b16 %v817
      %v856 = vunpack.c.l.b16 %v818
      %v857 = vunpack.c.l.b16 %v819
      %v858 = vunpack.c.l.b16 %v820
      %v859 = vunpack.c.l.b16 %v821
      %v860 = vunpack.c.l.b16 %v822
      %v861 = vunpack.c.l.b16 %v823
      %v862 = vunpack.c.l.b16 %v824
      %v863 = vunpack.c.l.b16 %v825
      %v864 = vunpack.c.l.b16 %v826
      %v865 = vpack.c.b16 %v850, %v849
      %v866 = vpack.c.b16 %v852, %v851
      %v867 = vpack.c.b16 %v854, %v853
      %v868 = vpack.c.b16 %v856, %v855
      %v869 = vpack.c.b16 %v858, %v857
      %v870 = vpack.c.b16 %v860, %v859
      %v871 = vpack.c.b16 %v862, %v861
      %v872 = vpack.c.b16 %v864, %v863
      %881 = vmatpush.bf16.msra.mxu0 %v872
      %882 = vmatpush.bf16.msra.mxu0 %v871
      %883 = vmatpush.bf16.msra.mxu0 %v870
      %884 = vmatpush.bf16.msra.mxu0 %v869
      %885 = vmatpush.bf16.msra.mxu0 %v868
      %886 = vmatpush.bf16.msra.mxu0 %v867
      %887 = vmatpush.bf16.msra.mxu0 %v866
      %888 = vmatpush.bf16.msra.mxu0 %v865
      %889 = vmatmul.bf16.gmra.mxu0 %v505
      %v890 = vpop.f32.mrf.mxu0
      %v891 = vadd.f32 0.0, %v890
      %v892 = vpop.f32.mrf.mxu0
      %v893 = vadd.f32 0.0, %v892
      %894 = vmatmul.bf16.gmra.mxu0 %v506
      %v895 = vpop.f32.mrf.mxu0
      %v896 = vadd.f32 0.0, %v895
      %v897 = vpop.f32.mrf.mxu0
      %v898 = vadd.f32 0.0, %v897
      %899 = vmatmul.bf16.gmra.mxu0 %v507
      %v900 = vpop.f32.mrf.mxu0
      %v901 = vadd.f32 0.0, %v900
      %v902 = vpop.f32.mrf.mxu0
      %v903 = vadd.f32 0.0, %v902
      %904 = vmatmul.bf16.gmra.mxu0 %v508
      %v905 = vpop.f32.mrf.mxu0
      %v906 = vadd.f32 0.0, %v905
      %v907 = vpop.f32.mrf.mxu0
      %v908 = vadd.f32 0.0, %v907
      %909 = vmatmul.bf16.gmra.mxu0 %v509
      %v910 = vpop.f32.mrf.mxu0
      %v911 = vadd.f32 0.0, %v910
      %v912 = vpop.f32.mrf.mxu0
      %v913 = vadd.f32 0.0, %v912
      %914 = vmatmul.bf16.gmra.mxu0 %v510
      %v915 = vpop.f32.mrf.mxu0
      %v916 = vadd.f32 0.0, %v915
      %v917 = vpop.f32.mrf.mxu0
      %v918 = vadd.f32 0.0, %v917
      %919 = vmatmul.bf16.gmra.mxu0 %v511
      %v920 = vpop.f32.mrf.mxu0
      %v921 = vadd.f32 0.0, %v920
      %v922 = vpop.f32.mrf.mxu0
      %v923 = vadd.f32 0.0, %v922
      %924 = vmatmul.bf16.gmra.mxu0 %v512
      %v925 = vpop.f32.mrf.mxu0
      %v926 = vadd.f32 0.0, %v925
      %v927 = vpop.f32.mrf.mxu0
      %v928 = vadd.f32 0.0, %v927
      %929 = vmatmul.bf16.gmra.mxu0 %v513
      %v930 = vpop.f32.mrf.mxu0
      %v931 = vadd.f32 0.0, %v930
      %v932 = vpop.f32.mrf.mxu0
      %v933 = vadd.f32 0.0, %v932
      %934 = vmatmul.bf16.gmra.mxu0 %v514
      %v935 = vpop.f32.mrf.mxu0
      %v936 = vadd.f32 0.0, %v935
      %v937 = vpop.f32.mrf.mxu0
      %v938 = vadd.f32 0.0, %v937
      %939 = vmatmul.bf16.gmra.mxu0 %v515
      %v940 = vpop.f32.mrf.mxu0
      %v941 = vadd.f32 0.0, %v940
      %v942 = vpop.f32.mrf.mxu0
      %v943 = vadd.f32 0.0, %v942
      %944 = vmatmul.bf16.gmra.mxu0 %v516
      %v945 = vpop.f32.mrf.mxu0
      %v946 = vadd.f32 0.0, %v945
      %v947 = vpop.f32.mrf.mxu0
      %v948 = vadd.f32 0.0, %v947
      %949 = vmatmul.bf16.gmra.mxu0 %v517
      %v950 = vpop.f32.mrf.mxu0
      %v951 = vadd.f32 0.0, %v950
      %v952 = vpop.f32.mrf.mxu0
      %v953 = vadd.f32 0.0, %v952
      %954 = vmatmul.bf16.gmra.mxu0 %v518
      %v955 = vpop.f32.mrf.mxu0
      %v956 = vadd.f32 0.0, %v955
      %v957 = vpop.f32.mrf.mxu0
      %v958 = vadd.f32 0.0, %v957
      %959 = vmatmul.bf16.gmra.mxu0 %v519
      %v960 = vpop.f32.mrf.mxu0
      %v961 = vadd.f32 0.0, %v960
      %v962 = vpop.f32.mrf.mxu0
      %v963 = vadd.f32 0.0, %v962
      %964 = vmatmul.bf16.gmra.mxu0 %v831
      %v965 = vpop.f32.mrf.mxu0
      %v966 = vadd.f32 0.0, %v965
      %v967 = vpop.f32.mrf.mxu0
      %v968 = vadd.f32 0.0, %v967
      %969 = vdwg.mxu0
      %v970 = vadd.f32 %v731, %v891
      %v971 = vadd.f32 %v733, %v893
      %v972 = vadd.f32 %v736, %v896
      %v973 = vadd.f32 %v738, %v898
      %v974 = vadd.f32 %v741, %v901
      %v975 = vadd.f32 %v743, %v903
      %v976 = vadd.f32 %v746, %v906
      %v977 = vadd.f32 %v748, %v908
      %v978 = vadd.f32 %v751, %v911
      %v979 = vadd.f32 %v753, %v913
      %v980 = vadd.f32 %v756, %v916
      %v981 = vadd.f32 %v758, %v918
      %v982 = vadd.f32 %v761, %v921
      %v983 = vadd.f32 %v763, %v923
      %v984 = vadd.f32 %v766, %v926
      %v985 = vadd.f32 %v768, %v928
      %v986 = vadd.f32 %v771, %v931
      %v987 = vadd.f32 %v773, %v933
      %v988 = vadd.f32 %v776, %v936
      %v989 = vadd.f32 %v778, %v938
      %v990 = vadd.f32 %v781, %v941
      %v991 = vadd.f32 %v783, %v943
      %v992 = vadd.f32 %v786, %v946
      %v993 = vadd.f32 %v788, %v948
      %v994 = vadd.f32 %v791, %v951
      %v995 = vadd.f32 %v793, %v953
      %v996 = vadd.f32 %v796, %v956
      %v997 = vadd.f32 %v798, %v958
      %v998 = vadd.f32 %v801, %v961
      %v999 = vadd.f32 %v803, %v963
      %v1000 = vadd.f32 %v806, %v966
      %v1001 = vadd.f32 %v808, %v968
      %s1002 = scalar_lea.vmem %s1, 384
      %v1003 = vld [vmem:[%s1002] sm:$0xf]
      %v1004 = vld [vmem:[%s1002 + $0x4] sm:$0xf]
      %v1005 = vld [vmem:[%s1002 + $0x8] sm:$0xf]
      %v1006 = vld [vmem:[%s1002 + $0xc] sm:$0xf]
      %v1007 = vld [vmem:[%s1002 + $0x10] sm:$0xf]
      %v1008 = vld [vmem:[%s1002 + $0x14] sm:$0xf]
      %v1009 = vld [vmem:[%s1002 + $0x18] sm:$0xf]
      %v1010 = vld [vmem:[%s1002 + $0x1c] sm:$0xf]
      %v1011 = vld [vmem:[%s1002 + $0x20] sm:$0xf]
      %v1012 = vld [vmem:[%s1002 + $0x24] sm:$0xf]
      %v1013 = vld [vmem:[%s1002 + $0x28] sm:$0xf]
      %v1014 = vld [vmem:[%s1002 + $0x2c] sm:$0xf]
      %v1015 = vld [vmem:[%s1002 + $0x30] sm:$0xf]
      %v1016 = vld [vmem:[%s1002 + $0x34] sm:$0xf]
      %v1017 = vld [vmem:[%s1002 + $0x38] sm:$0xf]
      %v1018 = vld [vmem:[%s1002 + $0x3c] sm:$0xf]
      %v1021 = vunpack.c.l.b16 %v422
      %v1022 = vunpack.c.l.b16 %v423
      %v1023 = vpack.c.b16 %v1022, %v1021
      %v1041 = vunpack.c.l.b16 %v1003
      %v1042 = vunpack.c.l.b16 %v1004
      %v1043 = vunpack.c.l.b16 %v1005
      %v1044 = vunpack.c.l.b16 %v1006
      %v1045 = vunpack.c.l.b16 %v1007
      %v1046 = vunpack.c.l.b16 %v1008
      %v1047 = vunpack.c.l.b16 %v1009
      %v1048 = vunpack.c.l.b16 %v1010
      %v1049 = vunpack.c.l.b16 %v1011
      %v1050 = vunpack.c.l.b16 %v1012
      %v1051 = vunpack.c.l.b16 %v1013
      %v1052 = vunpack.c.l.b16 %v1014
      %v1053 = vunpack.c.l.b16 %v1015
      %v1054 = vunpack.c.l.b16 %v1016
      %v1055 = vunpack.c.l.b16 %v1017
      %v1056 = vunpack.c.l.b16 %v1018
      %v1057 = vpack.c.b16 %v1042, %v1041
      %v1058 = vpack.c.b16 %v1044, %v1043
      %v1059 = vpack.c.b16 %v1046, %v1045
      %v1060 = vpack.c.b16 %v1048, %v1047
      %v1061 = vpack.c.b16 %v1050, %v1049
      %v1062 = vpack.c.b16 %v1052, %v1051
      %v1063 = vpack.c.b16 %v1054, %v1053
      %v1064 = vpack.c.b16 %v1056, %v1055
      %1073 = vmatpush.bf16.msra.mxu0 %v1064
      %1074 = vmatpush.bf16.msra.mxu0 %v1063
      %1075 = vmatpush.bf16.msra.mxu0 %v1062
      %1076 = vmatpush.bf16.msra.mxu0 %v1061
      %1077 = vmatpush.bf16.msra.mxu0 %v1060
      %1078 = vmatpush.bf16.msra.mxu0 %v1059
      %1079 = vmatpush.bf16.msra.mxu0 %v1058
      %1080 = vmatpush.bf16.msra.mxu0 %v1057
      %1081 = vmatmul.bf16.gmra.mxu0 %v506
      %v1082 = vpop.f32.mrf.mxu0
      %v1083 = vadd.f32 0.0, %v1082
      %v1084 = vpop.f32.mrf.mxu0
      %v1085 = vadd.f32 0.0, %v1084
      %1086 = vmatmul.bf16.gmra.mxu0 %v507
      %v1087 = vpop.f32.mrf.mxu0
      %v1088 = vadd.f32 0.0, %v1087
      %v1089 = vpop.f32.mrf.mxu0
      %v1090 = vadd.f32 0.0, %v1089
      %1091 = vmatmul.bf16.gmra.mxu0 %v508
      %v1092 = vpop.f32.mrf.mxu0
      %v1093 = vadd.f32 0.0, %v1092
      %v1094 = vpop.f32.mrf.mxu0
      %v1095 = vadd.f32 0.0, %v1094
      %1096 = vmatmul.bf16.gmra.mxu0 %v509
      %v1097 = vpop.f32.mrf.mxu0
      %v1098 = vadd.f32 0.0, %v1097
      %v1099 = vpop.f32.mrf.mxu0
      %v1100 = vadd.f32 0.0, %v1099
      %1101 = vmatmul.bf16.gmra.mxu0 %v510
      %v1102 = vpop.f32.mrf.mxu0
      %v1103 = vadd.f32 0.0, %v1102
      %v1104 = vpop.f32.mrf.mxu0
      %v1105 = vadd.f32 0.0, %v1104
      %1106 = vmatmul.bf16.gmra.mxu0 %v511
      %v1107 = vpop.f32.mrf.mxu0
      %v1108 = vadd.f32 0.0, %v1107
      %v1109 = vpop.f32.mrf.mxu0
      %v1110 = vadd.f32 0.0, %v1109
      %1111 = vmatmul.bf16.gmra.mxu0 %v512
      %v1112 = vpop.f32.mrf.mxu0
      %v1113 = vadd.f32 0.0, %v1112
      %v1114 = vpop.f32.mrf.mxu0
      %v1115 = vadd.f32 0.0, %v1114
      %1116 = vmatmul.bf16.gmra.mxu0 %v513
      %v1117 = vpop.f32.mrf.mxu0
      %v1118 = vadd.f32 0.0, %v1117
      %v1119 = vpop.f32.mrf.mxu0
      %v1120 = vadd.f32 0.0, %v1119
      %1121 = vmatmul.bf16.gmra.mxu0 %v514
      %v1122 = vpop.f32.mrf.mxu0
      %v1123 = vadd.f32 0.0, %v1122
      %v1124 = vpop.f32.mrf.mxu0
      %v1125 = vadd.f32 0.0, %v1124
      %1126 = vmatmul.bf16.gmra.mxu0 %v515
      %v1127 = vpop.f32.mrf.mxu0
      %v1128 = vadd.f32 0.0, %v1127
      %v1129 = vpop.f32.mrf.mxu0
      %v1130 = vadd.f32 0.0, %v1129
      %1131 = vmatmul.bf16.gmra.mxu0 %v516
      %v1132 = vpop.f32.mrf.mxu0
      %v1133 = vadd.f32 0.0, %v1132
      %v1134 = vpop.f32.mrf.mxu0
      %v1135 = vadd.f32 0.0, %v1134
      %1136 = vmatmul.bf16.gmra.mxu0 %v517
      %v1137 = vpop.f32.mrf.mxu0
      %v1138 = vadd.f32 0.0, %v1137
      %v1139 = vpop.f32.mrf.mxu0
      %v1140 = vadd.f32 0.0, %v1139
      %1141 = vmatmul.bf16.gmra.mxu0 %v518
      %v1142 = vpop.f32.mrf.mxu0
      %v1143 = vadd.f32 0.0, %v1142
      %v1144 = vpop.f32.mrf.mxu0
      %v1145 = vadd.f32 0.0, %v1144
      %1146 = vmatmul.bf16.gmra.mxu0 %v519
      %v1147 = vpop.f32.mrf.mxu0
      %v1148 = vadd.f32 0.0, %v1147
      %v1149 = vpop.f32.mrf.mxu0
      %v1150 = vadd.f32 0.0, %v1149
      %1151 = vmatmul.bf16.gmra.mxu0 %v831
      %v1152 = vpop.f32.mrf.mxu0
      %v1153 = vadd.f32 0.0, %v1152
      %v1154 = vpop.f32.mrf.mxu0
      %v1155 = vadd.f32 0.0, %v1154
      %1156 = vmatmul.bf16.gmra.mxu0 %v1023
      %v1157 = vpop.f32.mrf.mxu0
      %v1158 = vadd.f32 0.0, %v1157
      %v1159 = vpop.f32.mrf.mxu0
      %v1160 = vadd.f32 0.0, %v1159
      %1161 = vdwg.mxu0
      %v1162 = vadd.f32 %v970, %v1083
      %v1163 = vadd.f32 %v971, %v1085
      %v1164 = vadd.f32 %v972, %v1088
      %v1165 = vadd.f32 %v973, %v1090
      %v1166 = vadd.f32 %v974, %v1093
      %v1167 = vadd.f32 %v975, %v1095
      %v1168 = vadd.f32 %v976, %v1098
      %v1169 = vadd.f32 %v977, %v1100
      %v1170 = vadd.f32 %v978, %v1103
      %v1171 = vadd.f32 %v979, %v1105
      %v1172 = vadd.f32 %v980, %v1108
      %v1173 = vadd.f32 %v981, %v1110
      %v1174 = vadd.f32 %v982, %v1113
      %v1175 = vadd.f32 %v983, %v1115
      %v1176 = vadd.f32 %v984, %v1118
      %v1177 = vadd.f32 %v985, %v1120
      %v1178 = vadd.f32 %v986, %v1123
      %v1179 = vadd.f32 %v987, %v1125
      %v1180 = vadd.f32 %v988, %v1128
      %v1181 = vadd.f32 %v989, %v1130
      %v1182 = vadd.f32 %v990, %v1133
      %v1183 = vadd.f32 %v991, %v1135
      %v1184 = vadd.f32 %v992, %v1138
      %v1185 = vadd.f32 %v993, %v1140
      %v1186 = vadd.f32 %v994, %v1143
      %v1187 = vadd.f32 %v995, %v1145
      %v1188 = vadd.f32 %v996, %v1148
      %v1189 = vadd.f32 %v997, %v1150
      %v1190 = vadd.f32 %v998, %v1153
      %v1191 = vadd.f32 %v999, %v1155
      %v1192 = vadd.f32 %v1000, %v1158
      %v1193 = vadd.f32 %v1001, %v1160
      %v1194 = vld [vmem:[#allocation2] sm:$0xf]
      %v1195 = vld [vmem:[#allocation2 + $0x4] sm:$0xf]
      %v1196 = vld [vmem:[#allocation2 + $0x8] sm:$0x1]
      %v1197 = vld [vmem:[#allocation2 + $0xc] sm:$0xf]
      %v1198 = vld [vmem:[#allocation2 + $0x10] sm:$0xf]
      %v1199 = vld [vmem:[#allocation2 + $0x14] sm:$0x1]
      %v1200 = vld [vmem:[#allocation2 + $0x18] sm:$0xf]
      %v1201 = vld [vmem:[#allocation2 + $0x1c] sm:$0xf]
      %v1202 = vld [vmem:[#allocation2 + $0x20] sm:$0x1]
      %v1203 = vld [vmem:[#allocation2 + $0x24] sm:$0xf]
      %v1204 = vld [vmem:[#allocation2 + $0x28] sm:$0xf]
      %v1205 = vld [vmem:[#allocation2 + $0x2c] sm:$0x1]
      %v1206 = vld [vmem:[#allocation2 + $0x30] sm:$0xf]
      %v1207 = vld [vmem:[#allocation2 + $0x34] sm:$0xf]
      %v1208 = vld [vmem:[#allocation2 + $0x38] sm:$0x1]
      %v1209 = vld [vmem:[#allocation2 + $0x3c] sm:$0xf]
      %v1210 = vld [vmem:[#allocation2 + $0x40] sm:$0xf]
      %v1211 = vld [vmem:[#allocation2 + $0x44] sm:$0x1]
      %v1212 = vld [vmem:[#allocation2 + $0x48] sm:$0xf]
      %v1213 = vld [vmem:[#allocation2 + $0x4c] sm:$0xf]
      %v1214 = vld [vmem:[#allocation2 + $0x50] sm:$0x1]
      %v1215 = vld [vmem:[#allocation2 + $0x54] sm:$0xf]
      %v1216 = vld [vmem:[#allocation2 + $0x58] sm:$0xf]
      %v1217 = vld [vmem:[#allocation2 + $0x5c] sm:$0x1]
      %v1218 = vld [vmem:[#allocation2 + $0x60] sm:$0xf]
      %v1219 = vld [vmem:[#allocation2 + $0x64] sm:$0xf]
      %v1220 = vld [vmem:[#allocation2 + $0x68] sm:$0x1]
      %v1221 = vld [vmem:[#allocation2 + $0x6c] sm:$0xf]
      %v1222 = vld [vmem:[#allocation2 + $0x70] sm:$0xf]
      %v1223 = vld [vmem:[#allocation2 + $0x74] sm:$0x1]
      %v1224 = vld [vmem:[#allocation2 + $0x78] sm:$0xf]
      %v1225 = vld [vmem:[#allocation2 + $0x7c] sm:$0xf]
      %v1226 = vld [vmem:[#allocation2 + $0x80] sm:$0x1]
      %v1227 = vld [vmem:[#allocation2 + $0x84] sm:$0xf]
      %v1228 = vld [vmem:[#allocation2 + $0x88] sm:$0xf]
      %v1229 = vld [vmem:[#allocation2 + $0x8c] sm:$0x1]
      %v1230 = vld [vmem:[#allocation2 + $0x90] sm:$0xf]
      %v1231 = vld [vmem:[#allocation2 + $0x94] sm:$0xf]
      %v1232 = vld [vmem:[#allocation2 + $0x98] sm:$0x1]
      %v1233 = vld [vmem:[#allocation2 + $0x9c] sm:$0xf]
      %v1234 = vld [vmem:[#allocation2 + $0xa0] sm:$0xf]
      %v1235 = vld [vmem:[#allocation2 + $0xa4] sm:$0x1]
      %v1236 = vld [vmem:[#allocation2 + $0xa8] sm:$0xf]
      %v1237 = vld [vmem:[#allocation2 + $0xac] sm:$0xf]
      %v1238 = vld [vmem:[#allocation2 + $0xb0] sm:$0x1]
      %v1239 = vld [vmem:[#allocation2 + $0xb4] sm:$0xf]
      %v1240 = vld [vmem:[#allocation2 + $0xb8] sm:$0xf]
      %v1241 = vld [vmem:[#allocation2 + $0xbc] sm:$0x1]
      %v1242 = vld [vmem:[#allocation2 + $0xc0] sm:$0xf]
      %v1243 = vld [vmem:[#allocation2 + $0xc4] sm:$0xf]
      %v1244 = vld [vmem:[#allocation2 + $0xc8] sm:$0x1]
      %v1245 = vld [vmem:[#allocation2 + $0xcc] sm:$0xf]
      %v1246 = vld [vmem:[#allocation2 + $0xd0] sm:$0xf]
      %v1247 = vld [vmem:[#allocation2 + $0xd4] sm:$0x1]
      %vm1248 = vsmask.f32 3328
      %vm1249 = vsmask.f32 7440
      %vm1250 = vmor %vm1248, %vm1249
      %v1252 = vshrl.u32 %v1194, 16
      %v1254 = vrot.slane %v1252, 4
      %v1255 = vshll.u32 %v1194, 16
      %v1257 = vrot.slane %v1255, 5
      %v1258 = vor.u32 %v1254, %v1257
      %v1259 = vrot.slane %v1258, 4
      %v1261 = vshll.u32 %v1195, 16
      %v1263 = vrot.slane %v1261, 5
      %v1264 = vsel %vm1250, %v1259, %v1263
      %v1265 = vshrl.u32 %v1195, 16
      %v1267 = vrot.slane %v1265, 4
      %v1268 = vor.u32 %v1267, %v1263
      %v1269 = vrot.slane %v1268, 4
      %v1271 = vshll.u32 %v1196, 16
      %v1273 = vrot.slane %v1271, 5
      %v1274 = vsel %vm1250, %v1269, %v1273
      %v1276 = vshrl.u32 %v1197, 16
      %v1278 = vrot.slane %v1276, 4
      %v1279 = vshll.u32 %v1197, 16
      %v1281 = vrot.slane %v1279, 5
      %v1282 = vor.u32 %v1278, %v1281
      %v1283 = vrot.slane %v1282, 4
      %v1285 = vshll.u32 %v1198, 16
      %v1287 = vrot.slane %v1285, 5
      %v1288 = vsel %vm1250, %v1283, %v1287
      %v1289 = vshrl.u32 %v1198, 16
      %v1291 = vrot.slane %v1289, 4
      %v1292 = vor.u32 %v1291, %v1287
      %v1293 = vrot.slane %v1292, 4
      %v1295 = vshll.u32 %v1199, 16
      %v1297 = vrot.slane %v1295, 5
      %v1298 = vsel %vm1250, %v1293, %v1297
      %v1300 = vshrl.u32 %v1200, 16
      %v1302 = vrot.slane %v1300, 4
      %v1303 = vshll.u32 %v1200, 16
      %v1305 = vrot.slane %v1303, 5
      %v1306 = vor.u32 %v1302, %v1305
      %v1307 = vrot.slane %v1306, 4
      %v1309 = vshll.u32 %v1201, 16
      %v1311 = vrot.slane %v1309, 5
      %v1312 = vsel %vm1250, %v1307, %v1311
      %v1313 = vshrl.u32 %v1201, 16
      %v1315 = vrot.slane %v1313, 4
      %v1316 = vor.u32 %v1315, %v1311
      %v1317 = vrot.slane %v1316, 4
      %v1319 = vshll.u32 %v1202, 16
      %v1321 = vrot.slane %v1319, 5
      %v1322 = vsel %vm1250, %v1317, %v1321
      %v1324 = vshrl.u32 %v1203, 16
      %v1326 = vrot.slane %v1324, 4
      %v1327 = vshll.u32 %v1203, 16
      %v1329 = vrot.slane %v1327, 5
      %v1330 = vor.u32 %v1326, %v1329
      %v1331 = vrot.slane %v1330, 4
      %v1333 = vshll.u32 %v1204, 16
      %v1335 = vrot.slane %v1333, 5
      %v1336 = vsel %vm1250, %v1331, %v1335
      %v1337 = vshrl.u32 %v1204, 16
      %v1339 = vrot.slane %v1337, 4
      %v1340 = vor.u32 %v1339, %v1335
      %v1341 = vrot.slane %v1340, 4
      %v1343 = vshll.u32 %v1205, 16
      %v1345 = vrot.slane %v1343, 5
      %v1346 = vsel %vm1250, %v1341, %v1345
      %v1348 = vshrl.u32 %v1206, 16
      %v1350 = vrot.slane %v1348, 4
      %v1351 = vshll.u32 %v1206, 16
      %v1353 = vrot.slane %v1351, 5
      %v1354 = vor.u32 %v1350, %v1353
      %v1355 = vrot.slane %v1354, 4
      %v1357 = vshll.u32 %v1207, 16
      %v1359 = vrot.slane %v1357, 5
      %v1360 = vsel %vm1250, %v1355, %v1359
      %v1361 = vshrl.u32 %v1207, 16
      %v1363 = vrot.slane %v1361, 4
      %v1364 = vor.u32 %v1363, %v1359
      %v1365 = vrot.slane %v1364, 4
      %v1367 = vshll.u32 %v1208, 16
      %v1369 = vrot.slane %v1367, 5
      %v1370 = vsel %vm1250, %v1365, %v1369
      %v1372 = vshrl.u32 %v1209, 16
      %v1374 = vrot.slane %v1372, 4
      %v1375 = vshll.u32 %v1209, 16
      %v1377 = vrot.slane %v1375, 5
      %v1378 = vor.u32 %v1374, %v1377
      %v1379 = vrot.slane %v1378, 4
      %v1381 = vshll.u32 %v1210, 16
      %v1383 = vrot.slane %v1381, 5
      %v1384 = vsel %vm1250, %v1379, %v1383
      %v1385 = vshrl.u32 %v1210, 16
      %v1387 = vrot.slane %v1385, 4
      %v1388 = vor.u32 %v1387, %v1383
      %v1389 = vrot.slane %v1388, 4
      %v1391 = vshll.u32 %v1211, 16
      %v1393 = vrot.slane %v1391, 5
      %v1394 = vsel %vm1250, %v1389, %v1393
      %v1396 = vshrl.u32 %v1212, 16
      %v1398 = vrot.slane %v1396, 4
      %v1399 = vshll.u32 %v1212, 16
      %v1401 = vrot.slane %v1399, 5
      %v1402 = vor.u32 %v1398, %v1401
      %v1403 = vrot.slane %v1402, 4
      %v1405 = vshll.u32 %v1213, 16
      %v1407 = vrot.slane %v1405, 5
      %v1408 = vsel %vm1250, %v1403, %v1407
      %v1409 = vshrl.u32 %v1213, 16
      %v1411 = vrot.slane %v1409, 4
      %v1412 = vor.u32 %v1411, %v1407
      %v1413 = vrot.slane %v1412, 4
      %v1415 = vshll.u32 %v1214, 16
      %v1417 = vrot.slane %v1415, 5
      %v1418 = vsel %vm1250, %v1413, %v1417
      %v1420 = vshrl.u32 %v1215, 16
      %v1422 = vrot.slane %v1420, 4
      %v1423 = vshll.u32 %v1215, 16
      %v1425 = vrot.slane %v1423, 5
      %v1426 = vor.u32 %v1422, %v1425
      %v1427 = vrot.slane %v1426, 4
      %v1429 = vshll.u32 %v1216, 16
      %v1431 = vrot.slane %v1429, 5
      %v1432 = vsel %vm1250, %v1427, %v1431
      %v1433 = vshrl.u32 %v1216, 16
      %v1435 = vrot.slane %v1433, 4
      %v1436 = vor.u32 %v1435, %v1431
      %v1437 = vrot.slane %v1436, 4
      %v1439 = vshll.u32 %v1217, 16
      %v1441 = vrot.slane %v1439, 5
      %v1442 = vsel %vm1250, %v1437, %v1441
      %v1444 = vshrl.u32 %v1218, 16
      %v1446 = vrot.slane %v1444, 4
      %v1447 = vshll.u32 %v1218, 16
      %v1449 = vrot.slane %v1447, 5
      %v1450 = vor.u32 %v1446, %v1449
      %v1451 = vrot.slane %v1450, 4
      %v1453 = vshll.u32 %v1219, 16
      %v1455 = vrot.slane %v1453, 5
      %v1456 = vsel %vm1250, %v1451, %v1455
      %v1457 = vshrl.u32 %v1219, 16
      %v1459 = vrot.slane %v1457, 4
      %v1460 = vor.u32 %v1459, %v1455
      %v1461 = vrot.slane %v1460, 4
      %v1463 = vshll.u32 %v1220, 16
      %v1465 = vrot.slane %v1463, 5
      %v1466 = vsel %vm1250, %v1461, %v1465
      %v1468 = vshrl.u32 %v1221, 16
      %v1470 = vrot.slane %v1468, 4
      %v1471 = vshll.u32 %v1221, 16
      %v1473 = vrot.slane %v1471, 5
      %v1474 = vor.u32 %v1470, %v1473
      %v1475 = vrot.slane %v1474, 4
      %v1477 = vshll.u32 %v1222, 16
      %v1479 = vrot.slane %v1477, 5
      %v1480 = vsel %vm1250, %v1475, %v1479
      %v1481 = vshrl.u32 %v1222, 16
      %v1483 = vrot.slane %v1481, 4
      %v1484 = vor.u32 %v1483, %v1479
      %v1485 = vrot.slane %v1484, 4
      %v1487 = vshll.u32 %v1223, 16
      %v1489 = vrot.slane %v1487, 5
      %v1490 = vsel %vm1250, %v1485, %v1489
      %v1492 = vshrl.u32 %v1224, 16
      %v1494 = vrot.slane %v1492, 4
      %v1495 = vshll.u32 %v1224, 16
      %v1497 = vrot.slane %v1495, 5
      %v1498 = vor.u32 %v1494, %v1497
      %v1499 = vrot.slane %v1498, 4
      %v1501 = vshll.u32 %v1225, 16
      %v1503 = vrot.slane %v1501, 5
      %v1504 = vsel %vm1250, %v1499, %v1503
      %v1505 = vshrl.u32 %v1225, 16
      %v1507 = vrot.slane %v1505, 4
      %v1508 = vor.u32 %v1507, %v1503
      %v1509 = vrot.slane %v1508, 4
      %v1511 = vshll.u32 %v1226, 16
      %v1513 = vrot.slane %v1511, 5
      %v1514 = vsel %vm1250, %v1509, %v1513
      %v1516 = vshrl.u32 %v1227, 16
      %v1518 = vrot.slane %v1516, 4
      %v1519 = vshll.u32 %v1227, 16
      %v1521 = vrot.slane %v1519, 5
      %v1522 = vor.u32 %v1518, %v1521
      %v1523 = vrot.slane %v1522, 4
      %v1525 = vshll.u32 %v1228, 16
      %v1527 = vrot.slane %v1525, 5
      %v1528 = vsel %vm1250, %v1523, %v1527
      %v1529 = vshrl.u32 %v1228, 16
      %v1531 = vrot.slane %v1529, 4
      %v1532 = vor.u32 %v1531, %v1527
      %v1533 = vrot.slane %v1532, 4
      %v1535 = vshll.u32 %v1229, 16
      %v1537 = vrot.slane %v1535, 5
      %v1538 = vsel %vm1250, %v1533, %v1537
      %v1540 = vshrl.u32 %v1230, 16
      %v1542 = vrot.slane %v1540, 4
      %v1543 = vshll.u32 %v1230, 16
      %v1545 = vrot.slane %v1543, 5
      %v1546 = vor.u32 %v1542, %v1545
      %v1547 = vrot.slane %v1546, 4
      %v1549 = vshll.u32 %v1231, 16
      %v1551 = vrot.slane %v1549, 5
      %v1552 = vsel %vm1250, %v1547, %v1551
      %v1553 = vshrl.u32 %v1231, 16
      %v1555 = vrot.slane %v1553, 4
      %v1556 = vor.u32 %v1555, %v1551
      %v1557 = vrot.slane %v1556, 4
      %v1559 = vshll.u32 %v1232, 16
      %v1561 = vrot.slane %v1559, 5
      %v1562 = vsel %vm1250, %v1557, %v1561
      %v1564 = vshrl.u32 %v1233, 16
      %v1566 = vrot.slane %v1564, 4
      %v1567 = vshll.u32 %v1233, 16
      %v1569 = vrot.slane %v1567, 5
      %v1570 = vor.u32 %v1566, %v1569
      %v1571 = vrot.slane %v1570, 4
      %v1573 = vshll.u32 %v1234, 16
      %v1575 = vrot.slane %v1573, 5
      %v1576 = vsel %vm1250, %v1571, %v1575
      %v1577 = vshrl.u32 %v1234, 16
      %v1579 = vrot.slane %v1577, 4
      %v1580 = vor.u32 %v1579, %v1575
      %v1581 = vrot.slane %v1580, 4
      %v1583 = vshll.u32 %v1235, 16
      %v1585 = vrot.slane %v1583, 5
      %v1586 = vsel %vm1250, %v1581, %v1585
      %v1588 = vshrl.u32 %v1236, 16
      %v1590 = vrot.slane %v1588, 4
      %v1591 = vshll.u32 %v1236, 16
      %v1593 = vrot.slane %v1591, 5
      %v1594 = vor.u32 %v1590, %v1593
      %v1595 = vrot.slane %v1594, 4
      %v1597 = vshll.u32 %v1237, 16
      %v1599 = vrot.slane %v1597, 5
      %v1600 = vsel %vm1250, %v1595, %v1599
      %v1601 = vshrl.u32 %v1237, 16
      %v1603 = vrot.slane %v1601, 4
      %v1604 = vor.u32 %v1603, %v1599
      %v1605 = vrot.slane %v1604, 4
      %v1607 = vshll.u32 %v1238, 16
      %v1609 = vrot.slane %v1607, 5
      %v1610 = vsel %vm1250, %v1605, %v1609
      %v1612 = vshrl.u32 %v1239, 16
      %v1614 = vrot.slane %v1612, 4
      %v1615 = vshll.u32 %v1239, 16
      %v1617 = vrot.slane %v1615, 5
      %v1618 = vor.u32 %v1614, %v1617
      %v1619 = vrot.slane %v1618, 4
      %v1621 = vshll.u32 %v1240, 16
      %v1623 = vrot.slane %v1621, 5
      %v1624 = vsel %vm1250, %v1619, %v1623
      %v1625 = vshrl.u32 %v1240, 16
      %v1627 = vrot.slane %v1625, 4
      %v1628 = vor.u32 %v1627, %v1623
      %v1629 = vrot.slane %v1628, 4
      %v1631 = vshll.u32 %v1241, 16
      %v1633 = vrot.slane %v1631, 5
      %v1634 = vsel %vm1250, %v1629, %v1633
      %v1636 = vshrl.u32 %v1242, 16
      %v1638 = vrot.slane %v1636, 4
      %v1639 = vshll.u32 %v1242, 16
      %v1641 = vrot.slane %v1639, 5
      %v1642 = vor.u32 %v1638, %v1641
      %v1643 = vrot.slane %v1642, 4
      %v1645 = vshll.u32 %v1243, 16
      %v1647 = vrot.slane %v1645, 5
      %v1648 = vsel %vm1250, %v1643, %v1647
      %v1649 = vshrl.u32 %v1243, 16
      %v1651 = vrot.slane %v1649, 4
      %v1652 = vor.u32 %v1651, %v1647
      %v1653 = vrot.slane %v1652, 4
      %v1655 = vshll.u32 %v1244, 16
      %v1657 = vrot.slane %v1655, 5
      %v1658 = vsel %vm1250, %v1653, %v1657
      %v1660 = vshrl.u32 %v1245, 16
      %v1662 = vrot.slane %v1660, 4
      %v1663 = vshll.u32 %v1245, 16
      %v1665 = vrot.slane %v1663, 5
      %v1666 = vor.u32 %v1662, %v1665
      %v1667 = vrot.slane %v1666, 4
      %v1669 = vshll.u32 %v1246, 16
      %v1671 = vrot.slane %v1669, 5
      %v1672 = vsel %vm1250, %v1667, %v1671
      %v1673 = vshrl.u32 %v1246, 16
      %v1675 = vrot.slane %v1673, 4
      %v1676 = vor.u32 %v1675, %v1671
      %v1677 = vrot.slane %v1676, 4
      %v1679 = vshll.u32 %v1247, 16
      %v1681 = vrot.slane %v1679, 5
      %v1682 = vsel %vm1250, %v1677, %v1681
      %s1683 = scalar_lea.vmem %s1, 64
      %v1684 = vld [vmem:[%s1683] sm:$0xf]
      %v1685 = vld [vmem:[%s1683 + $0x4] sm:$0xf]
      %v1686 = vld [vmem:[%s1683 + $0x8] sm:$0xf]
      %v1687 = vld [vmem:[%s1683 + $0xc] sm:$0xf]
      %v1688 = vld [vmem:[%s1683 + $0x10] sm:$0xf]
      %v1689 = vld [vmem:[%s1683 + $0x14] sm:$0xf]
      %v1690 = vld [vmem:[%s1683 + $0x18] sm:$0xf]
      %v1691 = vld [vmem:[%s1683 + $0x1c] sm:$0xf]
      %v1692 = vld [vmem:[%s1683 + $0x20] sm:$0xf]
      %v1693 = vld [vmem:[%s1683 + $0x24] sm:$0xf]
      %v1694 = vld [vmem:[%s1683 + $0x28] sm:$0xf]
      %v1695 = vld [vmem:[%s1683 + $0x2c] sm:$0xf]
      %v1696 = vld [vmem:[%s1683 + $0x30] sm:$0xf]
      %v1697 = vld [vmem:[%s1683 + $0x34] sm:$0xf]
      %v1698 = vld [vmem:[%s1683 + $0x38] sm:$0xf]
      %v1699 = vld [vmem:[%s1683 + $0x3c] sm:$0xf]
      %v1700 = vunpack.c.l.b16 %v1264
      %v1701 = vunpack.c.l.b16 %v1274
      %v1702 = vunpack.c.l.b16 %v1288
      %v1703 = vunpack.c.l.b16 %v1298
      %v1704 = vunpack.c.l.b16 %v1312
      %v1705 = vunpack.c.l.b16 %v1322
      %v1706 = vunpack.c.l.b16 %v1336
      %v1707 = vunpack.c.l.b16 %v1346
      %v1708 = vunpack.c.l.b16 %v1360
      %v1709 = vunpack.c.l.b16 %v1370
      %v1710 = vunpack.c.l.b16 %v1384
      %v1711 = vunpack.c.l.b16 %v1394
      %v1712 = vunpack.c.l.b16 %v1408
      %v1713 = vunpack.c.l.b16 %v1418
      %v1714 = vunpack.c.l.b16 %v1432
      %v1715 = vunpack.c.l.b16 %v1442
      %v1716 = vunpack.c.l.b16 %v1456
      %v1717 = vunpack.c.l.b16 %v1466
      %v1718 = vunpack.c.l.b16 %v1480
      %v1719 = vunpack.c.l.b16 %v1490
      %v1720 = vunpack.c.l.b16 %v1504
      %v1721 = vunpack.c.l.b16 %v1514
      %v1722 = vunpack.c.l.b16 %v1528
      %v1723 = vunpack.c.l.b16 %v1538
      %v1724 = vunpack.c.l.b16 %v1552
      %v1725 = vunpack.c.l.b16 %v1562
      %v1726 = vunpack.c.l.b16 %v1576
      %v1727 = vunpack.c.l.b16 %v1586
      %v1728 = vunpack.c.l.b16 %v1600
      %v1729 = vunpack.c.l.b16 %v1610
      %v1730 = vunpack.c.l.b16 %v1624
      %v1731 = vunpack.c.l.b16 %v1634
      %v1732 = vpack.c.b16 %v1701, %v1700
      %v1733 = vpack.c.b16 %v1703, %v1702
      %v1734 = vpack.c.b16 %v1705, %v1704
      %v1735 = vpack.c.b16 %v1707, %v1706
      %v1736 = vpack.c.b16 %v1709, %v1708
      %v1737 = vpack.c.b16 %v1711, %v1710
      %v1738 = vpack.c.b16 %v1713, %v1712
      %v1739 = vpack.c.b16 %v1715, %v1714
      %v1740 = vpack.c.b16 %v1717, %v1716
      %v1741 = vpack.c.b16 %v1719, %v1718
      %v1742 = vpack.c.b16 %v1721, %v1720
      %v1743 = vpack.c.b16 %v1723, %v1722
      %v1744 = vpack.c.b16 %v1725, %v1724
      %v1745 = vpack.c.b16 %v1727, %v1726
      %v1746 = vpack.c.b16 %v1729, %v1728
      %v1747 = vpack.c.b16 %v1731, %v1730
      %v1780 = vunpack.c.l.b16 %v1684
      %v1781 = vunpack.c.l.b16 %v1685
      %v1782 = vunpack.c.l.b16 %v1686
      %v1783 = vunpack.c.l.b16 %v1687
      %v1784 = vunpack.c.l.b16 %v1688
      %v1785 = vunpack.c.l.b16 %v1689
      %v1786 = vunpack.c.l.b16 %v1690
      %v1787 = vunpack.c.l.b16 %v1691
      %v1788 = vunpack.c.l.b16 %v1692
      %v1789 = vunpack.c.l.b16 %v1693
      %v1790 = vunpack.c.l.b16 %v1694
      %v1791 = vunpack.c.l.b16 %v1695
      %v1792 = vunpack.c.l.b16 %v1696
      %v1793 = vunpack.c.l.b16 %v1697
      %v1794 = vunpack.c.l.b16 %v1698
      %v1795 = vunpack.c.l.b16 %v1699
      %v1796 = vpack.c.b16 %v1781, %v1780
      %v1797 = vpack.c.b16 %v1783, %v1782
      %v1798 = vpack.c.b16 %v1785, %v1784
      %v1799 = vpack.c.b16 %v1787, %v1786
      %v1800 = vpack.c.b16 %v1789, %v1788
      %v1801 = vpack.c.b16 %v1791, %v1790
      %v1802 = vpack.c.b16 %v1793, %v1792
      %v1803 = vpack.c.b16 %v1795, %v1794
      %1812 = vmatpush.bf16.msra.mxu0 %v1803
      %1813 = vmatpush.bf16.msra.mxu0 %v1802
      %1814 = vmatpush.bf16.msra.mxu0 %v1801
      %1815 = vmatpush.bf16.msra.mxu0 %v1800
      %1816 = vmatpush.bf16.msra.mxu0 %v1799
      %1817 = vmatpush.bf16.msra.mxu0 %v1798
      %1818 = vmatpush.bf16.msra.mxu0 %v1797
      %1819 = vmatpush.bf16.msra.mxu0 %v1796
      %1820 = vmatmul.bf16.gmra.mxu0 %v1732
      %v1821 = vpop.f32.mrf.mxu0
      %v1822 = vadd.f32 0.0, %v1821
      %v1823 = vpop.f32.mrf.mxu0
      %v1824 = vadd.f32 0.0, %v1823
      %1825 = vmatmul.bf16.gmra.mxu0 %v1733
      %v1826 = vpop.f32.mrf.mxu0
      %v1827 = vadd.f32 0.0, %v1826
      %v1828 = vpop.f32.mrf.mxu0
      %v1829 = vadd.f32 0.0, %v1828
      %1830 = vmatmul.bf16.gmra.mxu0 %v1734
      %v1831 = vpop.f32.mrf.mxu0
      %v1832 = vadd.f32 0.0, %v1831
      %v1833 = vpop.f32.mrf.mxu0
      %v1834 = vadd.f32 0.0, %v1833
      %1835 = vmatmul.bf16.gmra.mxu0 %v1735
      %v1836 = vpop.f32.mrf.mxu0
      %v1837 = vadd.f32 0.0, %v1836
      %v1838 = vpop.f32.mrf.mxu0
      %v1839 = vadd.f32 0.0, %v1838
      %1840 = vmatmul.bf16.gmra.mxu0 %v1736
      %v1841 = vpop.f32.mrf.mxu0
      %v1842 = vadd.f32 0.0, %v1841
      %v1843 = vpop.f32.mrf.mxu0
      %v1844 = vadd.f32 0.0, %v1843
      %1845 = vmatmul.bf16.gmra.mxu0 %v1737
      %v1846 = vpop.f32.mrf.mxu0
      %v1847 = vadd.f32 0.0, %v1846
      %v1848 = vpop.f32.mrf.mxu0
      %v1849 = vadd.f32 0.0, %v1848
      %1850 = vmatmul.bf16.gmra.mxu0 %v1738
      %v1851 = vpop.f32.mrf.mxu0
      %v1852 = vadd.f32 0.0, %v1851
      %v1853 = vpop.f32.mrf.mxu0
      %v1854 = vadd.f32 0.0, %v1853
      %1855 = vmatmul.bf16.gmra.mxu0 %v1739
      %v1856 = vpop.f32.mrf.mxu0
      %v1857 = vadd.f32 0.0, %v1856
      %v1858 = vpop.f32.mrf.mxu0
      %v1859 = vadd.f32 0.0, %v1858
      %1860 = vmatmul.bf16.gmra.mxu0 %v1740
      %v1861 = vpop.f32.mrf.mxu0
      %v1862 = vadd.f32 0.0, %v1861
      %v1863 = vpop.f32.mrf.mxu0
      %v1864 = vadd.f32 0.0, %v1863
      %1865 = vmatmul.bf16.gmra.mxu0 %v1741
      %v1866 = vpop.f32.mrf.mxu0
      %v1867 = vadd.f32 0.0, %v1866
      %v1868 = vpop.f32.mrf.mxu0
      %v1869 = vadd.f32 0.0, %v1868
      %1870 = vmatmul.bf16.gmra.mxu0 %v1742
      %v1871 = vpop.f32.mrf.mxu0
      %v1872 = vadd.f32 0.0, %v1871
      %v1873 = vpop.f32.mrf.mxu0
      %v1874 = vadd.f32 0.0, %v1873
      %1875 = vmatmul.bf16.gmra.mxu0 %v1743
      %v1876 = vpop.f32.mrf.mxu0
      %v1877 = vadd.f32 0.0, %v1876
      %v1878 = vpop.f32.mrf.mxu0
      %v1879 = vadd.f32 0.0, %v1878
      %1880 = vmatmul.bf16.gmra.mxu0 %v1744
      %v1881 = vpop.f32.mrf.mxu0
      %v1882 = vadd.f32 0.0, %v1881
      %v1883 = vpop.f32.mrf.mxu0
      %v1884 = vadd.f32 0.0, %v1883
      %1885 = vmatmul.bf16.gmra.mxu0 %v1745
      %v1886 = vpop.f32.mrf.mxu0
      %v1887 = vadd.f32 0.0, %v1886
      %v1888 = vpop.f32.mrf.mxu0
      %v1889 = vadd.f32 0.0, %v1888
      %1890 = vmatmul.bf16.gmra.mxu0 %v1746
      %v1891 = vpop.f32.mrf.mxu0
      %v1892 = vadd.f32 0.0, %v1891
      %v1893 = vpop.f32.mrf.mxu0
      %v1894 = vadd.f32 0.0, %v1893
      %1895 = vmatmul.bf16.gmra.mxu0 %v1747
      %v1896 = vpop.f32.mrf.mxu0
      %v1897 = vadd.f32 0.0, %v1896
      %v1898 = vpop.f32.mrf.mxu0
      %v1899 = vadd.f32 0.0, %v1898
      %1900 = vdwg.mxu0
      %v1901 = vadd.f32 %v1162, %v1822
      %v1902 = vadd.f32 %v1163, %v1824
      %v1903 = vadd.f32 %v1164, %v1827
      %v1904 = vadd.f32 %v1165, %v1829
      %v1905 = vadd.f32 %v1166, %v1832
      %v1906 = vadd.f32 %v1167, %v1834
      %v1907 = vadd.f32 %v1168, %v1837
      %v1908 = vadd.f32 %v1169, %v1839
      %v1909 = vadd.f32 %v1170, %v1842
      %v1910 = vadd.f32 %v1171, %v1844
      %v1911 = vadd.f32 %v1172, %v1847
      %v1912 = vadd.f32 %v1173, %v1849
      %v1913 = vadd.f32 %v1174, %v1852
      %v1914 = vadd.f32 %v1175, %v1854
      %v1915 = vadd.f32 %v1176, %v1857
      %v1916 = vadd.f32 %v1177, %v1859
      %v1917 = vadd.f32 %v1178, %v1862
      %v1918 = vadd.f32 %v1179, %v1864
      %v1919 = vadd.f32 %v1180, %v1867
      %v1920 = vadd.f32 %v1181, %v1869
      %v1921 = vadd.f32 %v1182, %v1872
      %v1922 = vadd.f32 %v1183, %v1874
      %v1923 = vadd.f32 %v1184, %v1877
      %v1924 = vadd.f32 %v1185, %v1879
      %v1925 = vadd.f32 %v1186, %v1882
      %v1926 = vadd.f32 %v1187, %v1884
      %v1927 = vadd.f32 %v1188, %v1887
      %v1928 = vadd.f32 %v1189, %v1889
      %v1929 = vadd.f32 %v1190, %v1892
      %v1930 = vadd.f32 %v1191, %v1894
      %v1931 = vadd.f32 %v1192, %v1897
      %v1932 = vadd.f32 %v1193, %v1899
      %s1933 = scalar_lea.vmem %s1, 256
      %v1934 = vld [vmem:[%s1933] sm:$0xf]
      %v1935 = vld [vmem:[%s1933 + $0x4] sm:$0xf]
      %v1936 = vld [vmem:[%s1933 + $0x8] sm:$0xf]
      %v1937 = vld [vmem:[%s1933 + $0xc] sm:$0xf]
      %v1938 = vld [vmem:[%s1933 + $0x10] sm:$0xf]
      %v1939 = vld [vmem:[%s1933 + $0x14] sm:$0xf]
      %v1940 = vld [vmem:[%s1933 + $0x18] sm:$0xf]
      %v1941 = vld [vmem:[%s1933 + $0x1c] sm:$0xf]
      %v1942 = vld [vmem:[%s1933 + $0x20] sm:$0xf]
      %v1943 = vld [vmem:[%s1933 + $0x24] sm:$0xf]
      %v1944 = vld [vmem:[%s1933 + $0x28] sm:$0xf]
      %v1945 = vld [vmem:[%s1933 + $0x2c] sm:$0xf]
      %v1946 = vld [vmem:[%s1933 + $0x30] sm:$0xf]
      %v1947 = vld [vmem:[%s1933 + $0x34] sm:$0xf]
      %v1948 = vld [vmem:[%s1933 + $0x38] sm:$0xf]
      %v1949 = vld [vmem:[%s1933 + $0x3c] sm:$0xf]
      %v1950 = vunpack.c.l.b16 %v1648
      %v1951 = vunpack.c.l.b16 %v1658
      %v1952 = vpack.c.b16 %v1951, %v1950
      %v1970 = vunpack.c.l.b16 %v1934
      %v1971 = vunpack.c.l.b16 %v1935
      %v1972 = vunpack.c.l.b16 %v1936
      %v1973 = vunpack.c.l.b16 %v1937
      %v1974 = vunpack.c.l.b16 %v1938
      %v1975 = vunpack.c.l.b16 %v1939
      %v1976 = vunpack.c.l.b16 %v1940
      %v1977 = vunpack.c.l.b16 %v1941
      %v1978 = vunpack.c.l.b16 %v1942
      %v1979 = vunpack.c.l.b16 %v1943
      %v1980 = vunpack.c.l.b16 %v1944
      %v1981 = vunpack.c.l.b16 %v1945
      %v1982 = vunpack.c.l.b16 %v1946
      %v1983 = vunpack.c.l.b16 %v1947
      %v1984 = vunpack.c.l.b16 %v1948
      %v1985 = vunpack.c.l.b16 %v1949
      %v1986 = vpack.c.b16 %v1971, %v1970
      %v1987 = vpack.c.b16 %v1973, %v1972
      %v1988 = vpack.c.b16 %v1975, %v1974
      %v1989 = vpack.c.b16 %v1977, %v1976
      %v1990 = vpack.c.b16 %v1979, %v1978
      %v1991 = vpack.c.b16 %v1981, %v1980
      %v1992 = vpack.c.b16 %v1983, %v1982
      %v1993 = vpack.c.b16 %v1985, %v1984
      %2002 = vmatpush.bf16.msra.mxu0 %v1993
      %2003 = vmatpush.bf16.msra.mxu0 %v1992
      %2004 = vmatpush.bf16.msra.mxu0 %v1991
      %2005 = vmatpush.bf16.msra.mxu0 %v1990
      %2006 = vmatpush.bf16.msra.mxu0 %v1989
      %2007 = vmatpush.bf16.msra.mxu0 %v1988
      %2008 = vmatpush.bf16.msra.mxu0 %v1987
      %2009 = vmatpush.bf16.msra.mxu0 %v1986
      %2010 = vmatmul.bf16.gmra.mxu0 %v1733
      %v2011 = vpop.f32.mrf.mxu0
      %v2012 = vadd.f32 0.0, %v2011
      %v2013 = vpop.f32.mrf.mxu0
      %v2014 = vadd.f32 0.0, %v2013
      %2015 = vmatmul.bf16.gmra.mxu0 %v1734
      %v2016 = vpop.f32.mrf.mxu0
      %v2017 = vadd.f32 0.0, %v2016
      %v2018 = vpop.f32.mrf.mxu0
      %v2019 = vadd.f32 0.0, %v2018
      %2020 = vmatmul.bf16.gmra.mxu0 %v1735
      %v2021 = vpop.f32.mrf.mxu0
      %v2022 = vadd.f32 0.0, %v2021
      %v2023 = vpop.f32.mrf.mxu0
      %v2024 = vadd.f32 0.0, %v2023
      %2025 = vmatmul.bf16.gmra.mxu0 %v1736
      %v2026 = vpop.f32.mrf.mxu0
      %v2027 = vadd.f32 0.0, %v2026
      %v2028 = vpop.f32.mrf.mxu0
      %v2029 = vadd.f32 0.0, %v2028
      %2030 = vmatmul.bf16.gmra.mxu0 %v1737
      %v2031 = vpop.f32.mrf.mxu0
      %v2032 = vadd.f32 0.0, %v2031
      %v2033 = vpop.f32.mrf.mxu0
      %v2034 = vadd.f32 0.0, %v2033
      %2035 = vmatmul.bf16.gmra.mxu0 %v1738
      %v2036 = vpop.f32.mrf.mxu0
      %v2037 = vadd.f32 0.0, %v2036
      %v2038 = vpop.f32.mrf.mxu0
      %v2039 = vadd.f32 0.0, %v2038
      %2040 = vmatmul.bf16.gmra.mxu0 %v1739
      %v2041 = vpop.f32.mrf.mxu0
      %v2042 = vadd.f32 0.0, %v2041
      %v2043 = vpop.f32.mrf.mxu0
      %v2044 = vadd.f32 0.0, %v2043
      %2045 = vmatmul.bf16.gmra.mxu0 %v1740
      %v2046 = vpop.f32.mrf.mxu0
      %v2047 = vadd.f32 0.0, %v2046
      %v2048 = vpop.f32.mrf.mxu0
      %v2049 = vadd.f32 0.0, %v2048
      %2050 = vmatmul.bf16.gmra.mxu0 %v1741
      %v2051 = vpop.f32.mrf.mxu0
      %v2052 = vadd.f32 0.0, %v2051
      %v2053 = vpop.f32.mrf.mxu0
      %v2054 = vadd.f32 0.0, %v2053
      %2055 = vmatmul.bf16.gmra.mxu0 %v1742
      %v2056 = vpop.f32.mrf.mxu0
      %v2057 = vadd.f32 0.0, %v2056
      %v2058 = vpop.f32.mrf.mxu0
      %v2059 = vadd.f32 0.0, %v2058
      %2060 = vmatmul.bf16.gmra.mxu0 %v1743
      %v2061 = vpop.f32.mrf.mxu0
      %v2062 = vadd.f32 0.0, %v2061
      %v2063 = vpop.f32.mrf.mxu0
      %v2064 = vadd.f32 0.0, %v2063
      %2065 = vmatmul.bf16.gmra.mxu0 %v1744
      %v2066 = vpop.f32.mrf.mxu0
      %v2067 = vadd.f32 0.0, %v2066
      %v2068 = vpop.f32.mrf.mxu0
      %v2069 = vadd.f32 0.0, %v2068
      %2070 = vmatmul.bf16.gmra.mxu0 %v1745
      %v2071 = vpop.f32.mrf.mxu0
      %v2072 = vadd.f32 0.0, %v2071
      %v2073 = vpop.f32.mrf.mxu0
      %v2074 = vadd.f32 0.0, %v2073
      %2075 = vmatmul.bf16.gmra.mxu0 %v1746
      %v2076 = vpop.f32.mrf.mxu0
      %v2077 = vadd.f32 0.0, %v2076
      %v2078 = vpop.f32.mrf.mxu0
      %v2079 = vadd.f32 0.0, %v2078
      %2080 = vmatmul.bf16.gmra.mxu0 %v1747
      %v2081 = vpop.f32.mrf.mxu0
      %v2082 = vadd.f32 0.0, %v2081
      %v2083 = vpop.f32.mrf.mxu0
      %v2084 = vadd.f32 0.0, %v2083
      %2085 = vmatmul.bf16.gmra.mxu0 %v1952
      %v2086 = vpop.f32.mrf.mxu0
      %v2087 = vadd.f32 0.0, %v2086
      %v2088 = vpop.f32.mrf.mxu0
      %v2089 = vadd.f32 0.0, %v2088
      %2090 = vdwg.mxu0
      %v2091 = vadd.f32 %v1901, %v2012
      %v2092 = vadd.f32 %v1902, %v2014
      %v2093 = vadd.f32 %v1903, %v2017
      %v2094 = vadd.f32 %v1904, %v2019
      %v2095 = vadd.f32 %v1905, %v2022
      %v2096 = vadd.f32 %v1906, %v2024
      %v2097 = vadd.f32 %v1907, %v2027
      %v2098 = vadd.f32 %v1908, %v2029
      %v2099 = vadd.f32 %v1909, %v2032
      %v2100 = vadd.f32 %v1910, %v2034
      %v2101 = vadd.f32 %v1911, %v2037
      %v2102 = vadd.f32 %v1912, %v2039
      %v2103 = vadd.f32 %v1913, %v2042
      %v2104 = vadd.f32 %v1914, %v2044
      %v2105 = vadd.f32 %v1915, %v2047
      %v2106 = vadd.f32 %v1916, %v2049
      %v2107 = vadd.f32 %v1917, %v2052
      %v2108 = vadd.f32 %v1918, %v2054
      %v2109 = vadd.f32 %v1919, %v2057
      %v2110 = vadd.f32 %v1920, %v2059
      %v2111 = vadd.f32 %v1921, %v2062
      %v2112 = vadd.f32 %v1922, %v2064
      %v2113 = vadd.f32 %v1923, %v2067
      %v2114 = vadd.f32 %v1924, %v2069
      %v2115 = vadd.f32 %v1925, %v2072
      %v2116 = vadd.f32 %v1926, %v2074
      %v2117 = vadd.f32 %v1927, %v2077
      %v2118 = vadd.f32 %v1928, %v2079
      %v2119 = vadd.f32 %v1929, %v2082
      %v2120 = vadd.f32 %v1930, %v2084
      %v2121 = vadd.f32 %v1931, %v2087
      %v2122 = vadd.f32 %v1932, %v2089
      %s2123 = scalar_lea.vmem %s1, 448
      %v2124 = vld [vmem:[%s2123] sm:$0xf]
      %v2125 = vld [vmem:[%s2123 + $0x4] sm:$0xf]
      %v2126 = vld [vmem:[%s2123 + $0x8] sm:$0xf]
      %v2127 = vld [vmem:[%s2123 + $0xc] sm:$0xf]
      %v2128 = vld [vmem:[%s2123 + $0x10] sm:$0xf]
      %v2129 = vld [vmem:[%s2123 + $0x14] sm:$0xf]
      %v2130 = vld [vmem:[%s2123 + $0x18] sm:$0xf]
      %v2131 = vld [vmem:[%s2123 + $0x1c] sm:$0xf]
      %v2132 = vld [vmem:[%s2123 + $0x20] sm:$0xf]
      %v2133 = vld [vmem:[%s2123 + $0x24] sm:$0xf]
      %v2134 = vld [vmem:[%s2123 + $0x28] sm:$0xf]
      %v2135 = vld [vmem:[%s2123 + $0x2c] sm:$0xf]
      %v2136 = vld [vmem:[%s2123 + $0x30] sm:$0xf]
      %v2137 = vld [vmem:[%s2123 + $0x34] sm:$0xf]
      %v2138 = vld [vmem:[%s2123 + $0x38] sm:$0xf]
      %v2139 = vld [vmem:[%s2123 + $0x3c] sm:$0xf]
      %v2140 = vunpack.c.l.b16 %v1672
      %v2141 = vunpack.c.l.b16 %v1682
      %v2142 = vpack.c.b16 %v2141, %v2140
      %v2160 = vunpack.c.l.b16 %v2124
      %v2161 = vunpack.c.l.b16 %v2125
      %v2162 = vunpack.c.l.b16 %v2126
      %v2163 = vunpack.c.l.b16 %v2127
      %v2164 = vunpack.c.l.b16 %v2128
      %v2165 = vunpack.c.l.b16 %v2129
      %v2166 = vunpack.c.l.b16 %v2130
      %v2167 = vunpack.c.l.b16 %v2131
      %v2168 = vunpack.c.l.b16 %v2132
      %v2169 = vunpack.c.l.b16 %v2133
      %v2170 = vunpack.c.l.b16 %v2134
      %v2171 = vunpack.c.l.b16 %v2135
      %v2172 = vunpack.c.l.b16 %v2136
      %v2173 = vunpack.c.l.b16 %v2137
      %v2174 = vunpack.c.l.b16 %v2138
      %v2175 = vunpack.c.l.b16 %v2139
      %v2176 = vpack.c.b16 %v2161, %v2160
      %v2177 = vpack.c.b16 %v2163, %v2162
      %v2178 = vpack.c.b16 %v2165, %v2164
      %v2179 = vpack.c.b16 %v2167, %v2166
      %v2180 = vpack.c.b16 %v2169, %v2168
      %v2181 = vpack.c.b16 %v2171, %v2170
      %v2182 = vpack.c.b16 %v2173, %v2172
      %v2183 = vpack.c.b16 %v2175, %v2174
      %2192 = vmatpush.bf16.msra.mxu0 %v2183
      %2193 = vmatpush.bf16.msra.mxu0 %v2182
      %2194 = vmatpush.bf16.msra.mxu0 %v2181
      %2195 = vmatpush.bf16.msra.mxu0 %v2180
      %2196 = vmatpush.bf16.msra.mxu0 %v2179
      %2197 = vmatpush.bf16.msra.mxu0 %v2178
      %2198 = vmatpush.bf16.msra.mxu0 %v2177
      %2199 = vmatpush.bf16.msra.mxu0 %v2176
      %2200 = vmatmul.bf16.gmra.mxu0 %v1734
      %v2201 = vpop.f32.mrf.mxu0
      %v2202 = vadd.f32 0.0, %v2201
      %v2203 = vpop.f32.mrf.mxu0
      %v2204 = vadd.f32 0.0, %v2203
      %2205 = vmatmul.bf16.gmra.mxu0 %v1735
      %v2206 = vpop.f32.mrf.mxu0
      %v2207 = vadd.f32 0.0, %v2206
      %v2208 = vpop.f32.mrf.mxu0
      %v2209 = vadd.f32 0.0, %v2208
      %2210 = vmatmul.bf16.gmra.mxu0 %v1736
      %v2211 = vpop.f32.mrf.mxu0
      %v2212 = vadd.f32 0.0, %v2211
      %v2213 = vpop.f32.mrf.mxu0
      %v2214 = vadd.f32 0.0, %v2213
      %2215 = vmatmul.bf16.gmra.mxu0 %v1737
      %v2216 = vpop.f32.mrf.mxu0
      %v2217 = vadd.f32 0.0, %v2216
      %v2218 = vpop.f32.mrf.mxu0
      %v2219 = vadd.f32 0.0, %v2218
      %2220 = vmatmul.bf16.gmra.mxu0 %v1738
      %v2221 = vpop.f32.mrf.mxu0
      %v2222 = vadd.f32 0.0, %v2221
      %v2223 = vpop.f32.mrf.mxu0
      %v2224 = vadd.f32 0.0, %v2223
      %2225 = vmatmul.bf16.gmra.mxu0 %v1739
      %v2226 = vpop.f32.mrf.mxu0
      %v2227 = vadd.f32 0.0, %v2226
      %v2228 = vpop.f32.mrf.mxu0
      %v2229 = vadd.f32 0.0, %v2228
      %2230 = vmatmul.bf16.gmra.mxu0 %v1740
      %v2231 = vpop.f32.mrf.mxu0
      %v2232 = vadd.f32 0.0, %v2231
      %v2233 = vpop.f32.mrf.mxu0
      %v2234 = vadd.f32 0.0, %v2233
      %2235 = vmatmul.bf16.gmra.mxu0 %v1741
      %v2236 = vpop.f32.mrf.mxu0
      %v2237 = vadd.f32 0.0, %v2236
      %v2238 = vpop.f32.mrf.mxu0
      %v2239 = vadd.f32 0.0, %v2238
      %2240 = vmatmul.bf16.gmra.mxu0 %v1742
      %v2241 = vpop.f32.mrf.mxu0
      %v2242 = vadd.f32 0.0, %v2241
      %v2243 = vpop.f32.mrf.mxu0
      %v2244 = vadd.f32 0.0, %v2243
      %2245 = vmatmul.bf16.gmra.mxu0 %v1743
      %v2246 = vpop.f32.mrf.mxu0
      %v2247 = vadd.f32 0.0, %v2246
      %v2248 = vpop.f32.mrf.mxu0
      %v2249 = vadd.f32 0.0, %v2248
      %2250 = vmatmul.bf16.gmra.mxu0 %v1744
      %v2251 = vpop.f32.mrf.mxu0
      %v2252 = vadd.f32 0.0, %v2251
      %v2253 = vpop.f32.mrf.mxu0
      %v2254 = vadd.f32 0.0, %v2253
      %2255 = vmatmul.bf16.gmra.mxu0 %v1745
      %v2256 = vpop.f32.mrf.mxu0
      %v2257 = vadd.f32 0.0, %v2256
      %v2258 = vpop.f32.mrf.mxu0
      %v2259 = vadd.f32 0.0, %v2258
      %2260 = vmatmul.bf16.gmra.mxu0 %v1746
      %v2261 = vpop.f32.mrf.mxu0
      %v2262 = vadd.f32 0.0, %v2261
      %v2263 = vpop.f32.mrf.mxu0
      %v2264 = vadd.f32 0.0, %v2263
      %2265 = vmatmul.bf16.gmra.mxu0 %v1747
      %v2266 = vpop.f32.mrf.mxu0
      %v2267 = vadd.f32 0.0, %v2266
      %v2268 = vpop.f32.mrf.mxu0
      %v2269 = vadd.f32 0.0, %v2268
      %2270 = vmatmul.bf16.gmra.mxu0 %v1952
      %v2271 = vpop.f32.mrf.mxu0
      %v2272 = vadd.f32 0.0, %v2271
      %v2273 = vpop.f32.mrf.mxu0
      %v2274 = vadd.f32 0.0, %v2273
      %2275 = vmatmul.bf16.gmra.mxu0 %v2142
      %v2276 = vpop.f32.mrf.mxu0
      %v2277 = vadd.f32 0.0, %v2276
      %v2278 = vpop.f32.mrf.mxu0
      %v2279 = vadd.f32 0.0, %v2278
      %2280 = vdwg.mxu0
      %v2281 = vadd.f32 %v2091, %v2202
      %v2282 = vadd.f32 %v2092, %v2204
      %v2283 = vadd.f32 %v2093, %v2207
      %v2284 = vadd.f32 %v2094, %v2209
      %v2285 = vadd.f32 %v2095, %v2212
      %v2286 = vadd.f32 %v2096, %v2214
      %v2287 = vadd.f32 %v2097, %v2217
      %v2288 = vadd.f32 %v2098, %v2219
      %v2289 = vadd.f32 %v2099, %v2222
      %v2290 = vadd.f32 %v2100, %v2224
      %v2291 = vadd.f32 %v2101, %v2227
      %v2292 = vadd.f32 %v2102, %v2229
      %v2293 = vadd.f32 %v2103, %v2232
      %v2294 = vadd.f32 %v2104, %v2234
      %v2295 = vadd.f32 %v2105, %v2237
      %v2296 = vadd.f32 %v2106, %v2239
      %v2297 = vadd.f32 %v2107, %v2242
      %v2298 = vadd.f32 %v2108, %v2244
      %v2299 = vadd.f32 %v2109, %v2247
      %v2300 = vadd.f32 %v2110, %v2249
      %v2301 = vadd.f32 %v2111, %v2252
      %v2302 = vadd.f32 %v2112, %v2254
      %v2303 = vadd.f32 %v2113, %v2257
      %v2304 = vadd.f32 %v2114, %v2259
      %v2305 = vadd.f32 %v2115, %v2262
      %v2306 = vadd.f32 %v2116, %v2264
      %v2307 = vadd.f32 %v2117, %v2267
      %v2308 = vadd.f32 %v2118, %v2269
      %v2309 = vadd.f32 %v2119, %v2272
      %v2310 = vadd.f32 %v2120, %v2274
      %v2311 = vadd.f32 %v2121, %v2277
      %v2312 = vadd.f32 %v2122, %v2279
      %v2313 = vld [vmem:[#allocation2] sm:$0xe]
      %v2314 = vld [vmem:[#allocation2 + $0xc] sm:$0xe]
      %v2315 = vld [vmem:[#allocation2 + $0x18] sm:$0xe]
      %v2316 = vld [vmem:[#allocation2 + $0x24] sm:$0xe]
      %v2317 = vld [vmem:[#allocation2 + $0x30] sm:$0xe]
      %v2318 = vld [vmem:[#allocation2 + $0x3c] sm:$0xe]
      %v2319 = vld [vmem:[#allocation2 + $0x48] sm:$0xe]
      %v2320 = vld [vmem:[#allocation2 + $0x54] sm:$0xe]
      %v2321 = vld [vmem:[#allocation2 + $0x60] sm:$0xe]
      %v2322 = vld [vmem:[#allocation2 + $0x6c] sm:$0xe]
      %v2323 = vld [vmem:[#allocation2 + $0x78] sm:$0xe]
      %v2324 = vld [vmem:[#allocation2 + $0x84] sm:$0xe]
      %v2325 = vld [vmem:[#allocation2 + $0x90] sm:$0xe]
      %v2326 = vld [vmem:[#allocation2 + $0x9c] sm:$0xe]
      %v2327 = vld [vmem:[#allocation2 + $0xa8] sm:$0xe]
      %v2328 = vld [vmem:[#allocation2 + $0xb4] sm:$0xe]
      %v2329 = vld [vmem:[#allocation2 + $0xc0] sm:$0xe]
      %v2330 = vld [vmem:[#allocation2 + $0xcc] sm:$0xe]
      %vm2385 = vcmask 1042432
      %vm2386 = vcmask 1046532
      %vm2387 = vmor %vm2385, %vm2386
      %v2388 = vrot.slane %v2313, 5
      %v2389 = vrot.slane %v2388, 4
      %v2390 = vrot.slane %v1195, 5
      %v2391 = vsel %vm2387, %v2389, %v2390
      %v2392 = vrot.slane %v2390, 4
      %v2393 = vrot.slane %v1196, 5
      %v2394 = vsel %vm2387, %v2392, %v2393
      %v2395 = vrot.slane %v2314, 5
      %v2396 = vrot.slane %v2395, 4
      %v2397 = vrot.slane %v1198, 5
      %v2398 = vsel %vm2387, %v2396, %v2397
      %v2399 = vrot.slane %v2397, 4
      %v2400 = vrot.slane %v1199, 5
      %v2401 = vsel %vm2387, %v2399, %v2400
      %v2402 = vrot.slane %v2315, 5
      %v2403 = vrot.slane %v2402, 4
      %v2404 = vrot.slane %v1201, 5
      %v2405 = vsel %vm2387, %v2403, %v2404
      %v2406 = vrot.slane %v2404, 4
      %v2407 = vrot.slane %v1202, 5
      %v2408 = vsel %vm2387, %v2406, %v2407
      %v2409 = vrot.slane %v2316, 5
      %v2410 = vrot.slane %v2409, 4
      %v2411 = vrot.slane %v1204, 5
      %v2412 = vsel %vm2387, %v2410, %v2411
      %v2413 = vrot.slane %v2411, 4
      %v2414 = vrot.slane %v1205, 5
      %v2415 = vsel %vm2387, %v2413, %v2414
      %v2416 = vrot.slane %v2317, 5
      %v2417 = vrot.slane %v2416, 4
      %v2418 = vrot.slane %v1207, 5
      %v2419 = vsel %vm2387, %v2417, %v2418
      %v2420 = vrot.slane %v2418, 4
      %v2421 = vrot.slane %v1208, 5
      %v2422 = vsel %vm2387, %v2420, %v2421
      %v2423 = vrot.slane %v2318, 5
      %v2424 = vrot.slane %v2423, 4
      %v2425 = vrot.slane %v1210, 5
      %v2426 = vsel %vm2387, %v2424, %v2425
      %v2427 = vrot.slane %v2425, 4
      %v2428 = vrot.slane %v1211, 5
      %v2429 = vsel %vm2387, %v2427, %v2428
      %v2430 = vrot.slane %v2319, 5
      %v2431 = vrot.slane %v2430, 4
      %v2432 = vrot.slane %v1213, 5
      %v2433 = vsel %vm2387, %v2431, %v2432
      %v2434 = vrot.slane %v2432, 4
      %v2435 = vrot.slane %v1214, 5
      %v2436 = vsel %vm2387, %v2434, %v2435
      %v2437 = vrot.slane %v2320, 5
      %v2438 = vrot.slane %v2437, 4
      %v2439 = vrot.slane %v1216, 5
      %v2440 = vsel %vm2387, %v2438, %v2439
      %v2441 = vrot.slane %v2439, 4
      %v2442 = vrot.slane %v1217, 5
      %v2443 = vsel %vm2387, %v2441, %v2442
      %v2444 = vrot.slane %v2321, 5
      %v2445 = vrot.slane %v2444, 4
      %v2446 = vrot.slane %v1219, 5
      %v2447 = vsel %vm2387, %v2445, %v2446
      %v2448 = vrot.slane %v2446, 4
      %v2449 = vrot.slane %v1220, 5
      %v2450 = vsel %vm2387, %v2448, %v2449
      %v2451 = vrot.slane %v2322, 5
      %v2452 = vrot.slane %v2451, 4
      %v2453 = vrot.slane %v1222, 5
      %v2454 = vsel %vm2387, %v2452, %v2453
      %v2455 = vrot.slane %v2453, 4
      %v2456 = vrot.slane %v1223, 5
      %v2457 = vsel %vm2387, %v2455, %v2456
      %v2458 = vrot.slane %v2323, 5
      %v2459 = vrot.slane %v2458, 4
      %v2460 = vrot.slane %v1225, 5
      %v2461 = vsel %vm2387, %v2459, %v2460
      %v2462 = vrot.slane %v2460, 4
      %v2463 = vrot.slane %v1226, 5
      %v2464 = vsel %vm2387, %v2462, %v2463
      %v2465 = vrot.slane %v2324, 5
      %v2466 = vrot.slane %v2465, 4
      %v2467 = vrot.slane %v1228, 5
      %v2468 = vsel %vm2387, %v2466, %v2467
      %v2469 = vrot.slane %v2467, 4
      %v2470 = vrot.slane %v1229, 5
      %v2471 = vsel %vm2387, %v2469, %v2470
      %v2472 = vrot.slane %v2325, 5
      %v2473 = vrot.slane %v2472, 4
      %v2474 = vrot.slane %v1231, 5
      %v2475 = vsel %vm2387, %v2473, %v2474
      %v2476 = vrot.slane %v2474, 4
      %v2477 = vrot.slane %v1232, 5
      %v2478 = vsel %vm2387, %v2476, %v2477
      %v2479 = vrot.slane %v2326, 5
      %v2480 = vrot.slane %v2479, 4
      %v2481 = vrot.slane %v1234, 5
      %v2482 = vsel %vm2387, %v2480, %v2481
      %v2483 = vrot.slane %v2481, 4
      %v2484 = vrot.slane %v1235, 5
      %v2485 = vsel %vm2387, %v2483, %v2484
      %v2486 = vrot.slane %v2327, 5
      %v2487 = vrot.slane %v2486, 4
      %v2488 = vrot.slane %v1237, 5
      %v2489 = vsel %vm2387, %v2487, %v2488
      %v2490 = vrot.slane %v2488, 4
      %v2491 = vrot.slane %v1238, 5
      %v2492 = vsel %vm2387, %v2490, %v2491
      %v2493 = vrot.slane %v2328, 5
      %v2494 = vrot.slane %v2493, 4
      %v2495 = vrot.slane %v1240, 5
      %v2496 = vsel %vm2387, %v2494, %v2495
      %v2497 = vrot.slane %v2495, 4
      %v2498 = vrot.slane %v1241, 5
      %v2499 = vsel %vm2387, %v2497, %v2498
      %v2500 = vrot.slane %v2329, 5
      %v2501 = vrot.slane %v2500, 4
      %v2502 = vrot.slane %v1243, 5
      %v2503 = vsel %vm2387, %v2501, %v2502
      %v2504 = vrot.slane %v2502, 4
      %v2505 = vrot.slane %v1244, 5
      %v2506 = vsel %vm2387, %v2504, %v2505
      %v2507 = vrot.slane %v2330, 5
      %v2508 = vrot.slane %v2507, 4
      %v2509 = vrot.slane %v1246, 5
      %v2510 = vsel %vm2387, %v2508, %v2509
      %v2511 = vrot.slane %v2509, 4
      %v2512 = vrot.slane %v1247, 5
      %v2513 = vsel %vm2387, %v2511, %v2512
      %s2514 = scalar_lea.vmem %s1, 128
      %v2515 = vld [vmem:[%s2514] sm:$0xf]
      %v2516 = vld [vmem:[%s2514 + $0x4] sm:$0xf]
      %v2517 = vld [vmem:[%s2514 + $0x8] sm:$0xf]
      %v2518 = vld [vmem:[%s2514 + $0xc] sm:$0xf]
      %v2519 = vld [vmem:[%s2514 + $0x10] sm:$0xf]
      %v2520 = vld [vmem:[%s2514 + $0x14] sm:$0xf]
      %v2521 = vld [vmem:[%s2514 + $0x18] sm:$0xf]
      %v2522 = vld [vmem:[%s2514 + $0x1c] sm:$0xf]
      %v2523 = vld [vmem:[%s2514 + $0x20] sm:$0xf]
      %v2524 = vld [vmem:[%s2514 + $0x24] sm:$0xf]
      %v2525 = vld [vmem:[%s2514 + $0x28] sm:$0xf]
      %v2526 = vld [vmem:[%s2514 + $0x2c] sm:$0xf]
      %v2527 = vld [vmem:[%s2514 + $0x30] sm:$0xf]
      %v2528 = vld [vmem:[%s2514 + $0x34] sm:$0xf]
      %v2529 = vld [vmem:[%s2514 + $0x38] sm:$0xf]
      %v2530 = vld [vmem:[%s2514 + $0x3c] sm:$0xf]
      %v2531 = vunpack.c.l.b16 %v2391
      %v2532 = vunpack.c.l.b16 %v2394
      %v2533 = vunpack.c.l.b16 %v2398
      %v2534 = vunpack.c.l.b16 %v2401
      %v2535 = vunpack.c.l.b16 %v2405
      %v2536 = vunpack.c.l.b16 %v2408
      %v2537 = vunpack.c.l.b16 %v2412
      %v2538 = vunpack.c.l.b16 %v2415
      %v2539 = vunpack.c.l.b16 %v2419
      %v2540 = vunpack.c.l.b16 %v2422
      %v2541 = vunpack.c.l.b16 %v2426
      %v2542 = vunpack.c.l.b16 %v2429
      %v2543 = vunpack.c.l.b16 %v2433
      %v2544 = vunpack.c.l.b16 %v2436
      %v2545 = vunpack.c.l.b16 %v2440
      %v2546 = vunpack.c.l.b16 %v2443
      %v2547 = vunpack.c.l.b16 %v2447
      %v2548 = vunpack.c.l.b16 %v2450
      %v2549 = vunpack.c.l.b16 %v2454
      %v2550 = vunpack.c.l.b16 %v2457
      %v2551 = vunpack.c.l.b16 %v2461
      %v2552 = vunpack.c.l.b16 %v2464
      %v2553 = vunpack.c.l.b16 %v2468
      %v2554 = vunpack.c.l.b16 %v2471
      %v2555 = vunpack.c.l.b16 %v2475
      %v2556 = vunpack.c.l.b16 %v2478
      %v2557 = vunpack.c.l.b16 %v2482
      %v2558 = vunpack.c.l.b16 %v2485
      %v2559 = vunpack.c.l.b16 %v2489
      %v2560 = vunpack.c.l.b16 %v2492
      %v2561 = vunpack.c.l.b16 %v2496
      %v2562 = vunpack.c.l.b16 %v2499
      %v2563 = vpack.c.b16 %v2532, %v2531
      %v2564 = vpack.c.b16 %v2534, %v2533
      %v2565 = vpack.c.b16 %v2536, %v2535
      %v2566 = vpack.c.b16 %v2538, %v2537
      %v2567 = vpack.c.b16 %v2540, %v2539
      %v2568 = vpack.c.b16 %v2542, %v2541
      %v2569 = vpack.c.b16 %v2544, %v2543
      %v2570 = vpack.c.b16 %v2546, %v2545
      %v2571 = vpack.c.b16 %v2548, %v2547
      %v2572 = vpack.c.b16 %v2550, %v2549
      %v2573 = vpack.c.b16 %v2552, %v2551
      %v2574 = vpack.c.b16 %v2554, %v2553
      %v2575 = vpack.c.b16 %v2556, %v2555
      %v2576 = vpack.c.b16 %v2558, %v2557
      %v2577 = vpack.c.b16 %v2560, %v2559
      %v2578 = vpack.c.b16 %v2562, %v2561
      %v2611 = vunpack.c.l.b16 %v2515
      %v2612 = vunpack.c.l.b16 %v2516
      %v2613 = vunpack.c.l.b16 %v2517
      %v2614 = vunpack.c.l.b16 %v2518
      %v2615 = vunpack.c.l.b16 %v2519
      %v2616 = vunpack.c.l.b16 %v2520
      %v2617 = vunpack.c.l.b16 %v2521
      %v2618 = vunpack.c.l.b16 %v2522
      %v2619 = vunpack.c.l.b16 %v2523
      %v2620 = vunpack.c.l.b16 %v2524
      %v2621 = vunpack.c.l.b16 %v2525
      %v2622 = vunpack.c.l.b16 %v2526
      %v2623 = vunpack.c.l.b16 %v2527
      %v2624 = vunpack.c.l.b16 %v2528
      %v2625 = vunpack.c.l.b16 %v2529
      %v2626 = vunpack.c.l.b16 %v2530
      %v2627 = vpack.c.b16 %v2612, %v2611
      %v2628 = vpack.c.b16 %v2614, %v2613
      %v2629 = vpack.c.b16 %v2616, %v2615
      %v2630 = vpack.c.b16 %v2618, %v2617
      %v2631 = vpack.c.b16 %v2620, %v2619
      %v2632 = vpack.c.b16 %v2622, %v2621
      %v2633 = vpack.c.b16 %v2624, %v2623
      %v2634 = vpack.c.b16 %v2626, %v2625
      %2643 = vmatpush.bf16.msra.mxu0 %v2634
      %2644 = vmatpush.bf16.msra.mxu0 %v2633
      %2645 = vmatpush.bf16.msra.mxu0 %v2632
      %2646 = vmatpush.bf16.msra.mxu0 %v2631
      %2647 = vmatpush.bf16.msra.mxu0 %v2630
      %2648 = vmatpush.bf16.msra.mxu0 %v2629
      %2649 = vmatpush.bf16.msra.mxu0 %v2628
      %2650 = vmatpush.bf16.msra.mxu0 %v2627
      %2651 = vmatmul.bf16.gmra.mxu0 %v2563
      %v2652 = vpop.f32.mrf.mxu0
      %v2653 = vadd.f32 0.0, %v2652
      %v2654 = vpop.f32.mrf.mxu0
      %v2655 = vadd.f32 0.0, %v2654
      %2656 = vmatmul.bf16.gmra.mxu0 %v2564
      %v2657 = vpop.f32.mrf.mxu0
      %v2658 = vadd.f32 0.0, %v2657
      %v2659 = vpop.f32.mrf.mxu0
      %v2660 = vadd.f32 0.0, %v2659
      %2661 = vmatmul.bf16.gmra.mxu0 %v2565
      %v2662 = vpop.f32.mrf.mxu0
      %v2663 = vadd.f32 0.0, %v2662
      %v2664 = vpop.f32.mrf.mxu0
      %v2665 = vadd.f32 0.0, %v2664
      %2666 = vmatmul.bf16.gmra.mxu0 %v2566
      %v2667 = vpop.f32.mrf.mxu0
      %v2668 = vadd.f32 0.0, %v2667
      %v2669 = vpop.f32.mrf.mxu0
      %v2670 = vadd.f32 0.0, %v2669
      %2671 = vmatmul.bf16.gmra.mxu0 %v2567
      %v2672 = vpop.f32.mrf.mxu0
      %v2673 = vadd.f32 0.0, %v2672
      %v2674 = vpop.f32.mrf.mxu0
      %v2675 = vadd.f32 0.0, %v2674
      %2676 = vmatmul.bf16.gmra.mxu0 %v2568
      %v2677 = vpop.f32.mrf.mxu0
      %v2678 = vadd.f32 0.0, %v2677
      %v2679 = vpop.f32.mrf.mxu0
      %v2680 = vadd.f32 0.0, %v2679
      %2681 = vmatmul.bf16.gmra.mxu0 %v2569
      %v2682 = vpop.f32.mrf.mxu0
      %v2683 = vadd.f32 0.0, %v2682
      %v2684 = vpop.f32.mrf.mxu0
      %v2685 = vadd.f32 0.0, %v2684
      %2686 = vmatmul.bf16.gmra.mxu0 %v2570
      %v2687 = vpop.f32.mrf.mxu0
      %v2688 = vadd.f32 0.0, %v2687
      %v2689 = vpop.f32.mrf.mxu0
      %v2690 = vadd.f32 0.0, %v2689
      %2691 = vmatmul.bf16.gmra.mxu0 %v2571
      %v2692 = vpop.f32.mrf.mxu0
      %v2693 = vadd.f32 0.0, %v2692
      %v2694 = vpop.f32.mrf.mxu0
      %v2695 = vadd.f32 0.0, %v2694
      %2696 = vmatmul.bf16.gmra.mxu0 %v2572
      %v2697 = vpop.f32.mrf.mxu0
      %v2698 = vadd.f32 0.0, %v2697
      %v2699 = vpop.f32.mrf.mxu0
      %v2700 = vadd.f32 0.0, %v2699
      %2701 = vmatmul.bf16.gmra.mxu0 %v2573
      %v2702 = vpop.f32.mrf.mxu0
      %v2703 = vadd.f32 0.0, %v2702
      %v2704 = vpop.f32.mrf.mxu0
      %v2705 = vadd.f32 0.0, %v2704
      %2706 = vmatmul.bf16.gmra.mxu0 %v2574
      %v2707 = vpop.f32.mrf.mxu0
      %v2708 = vadd.f32 0.0, %v2707
      %v2709 = vpop.f32.mrf.mxu0
      %v2710 = vadd.f32 0.0, %v2709
      %2711 = vmatmul.bf16.gmra.mxu0 %v2575
      %v2712 = vpop.f32.mrf.mxu0
      %v2713 = vadd.f32 0.0, %v2712
      %v2714 = vpop.f32.mrf.mxu0
      %v2715 = vadd.f32 0.0, %v2714
      %2716 = vmatmul.bf16.gmra.mxu0 %v2576
      %v2717 = vpop.f32.mrf.mxu0
      %v2718 = vadd.f32 0.0, %v2717
      %v2719 = vpop.f32.mrf.mxu0
      %v2720 = vadd.f32 0.0, %v2719
      %2721 = vmatmul.bf16.gmra.mxu0 %v2577
      %v2722 = vpop.f32.mrf.mxu0
      %v2723 = vadd.f32 0.0, %v2722
      %v2724 = vpop.f32.mrf.mxu0
      %v2725 = vadd.f32 0.0, %v2724
      %2726 = vmatmul.bf16.gmra.mxu0 %v2578
      %v2727 = vpop.f32.mrf.mxu0
      %v2728 = vadd.f32 0.0, %v2727
      %v2729 = vpop.f32.mrf.mxu0
      %v2730 = vadd.f32 0.0, %v2729
      %2731 = vdwg.mxu0
      %v2732 = vadd.f32 %v2281, %v2653
      %v2733 = vadd.f32 %v2282, %v2655
      %v2734 = vadd.f32 %v2283, %v2658
      %v2735 = vadd.f32 %v2284, %v2660
      %v2736 = vadd.f32 %v2285, %v2663
      %v2737 = vadd.f32 %v2286, %v2665
      %v2738 = vadd.f32 %v2287, %v2668
      %v2739 = vadd.f32 %v2288, %v2670
      %v2740 = vadd.f32 %v2289, %v2673
      %v2741 = vadd.f32 %v2290, %v2675
      %v2742 = vadd.f32 %v2291, %v2678
      %v2743 = vadd.f32 %v2292, %v2680
      %v2744 = vadd.f32 %v2293, %v2683
      %v2745 = vadd.f32 %v2294, %v2685
      %v2746 = vadd.f32 %v2295, %v2688
      %v2747 = vadd.f32 %v2296, %v2690
      %v2748 = vadd.f32 %v2297, %v2693
      %v2749 = vadd.f32 %v2298, %v2695
      %v2750 = vadd.f32 %v2299, %v2698
      %v2751 = vadd.f32 %v2300, %v2700
      %v2752 = vadd.f32 %v2301, %v2703
      %v2753 = vadd.f32 %v2302, %v2705
      %v2754 = vadd.f32 %v2303, %v2708
      %v2755 = vadd.f32 %v2304, %v2710
      %v2756 = vadd.f32 %v2305, %v2713
      %v2757 = vadd.f32 %v2306, %v2715
      %v2758 = vadd.f32 %v2307, %v2718
      %v2759 = vadd.f32 %v2308, %v2720
      %v2760 = vadd.f32 %v2309, %v2723
      %v2761 = vadd.f32 %v2310, %v2725
      %v2762 = vadd.f32 %v2311, %v2728
      %v2763 = vadd.f32 %v2312, %v2730
      %s2764 = scalar_lea.vmem %s1, 320
      %v2765 = vld [vmem:[%s2764] sm:$0xf]
      %v2766 = vld [vmem:[%s2764 + $0x4] sm:$0xf]
      %v2767 = vld [vmem:[%s2764 + $0x8] sm:$0xf]
      %v2768 = vld [vmem:[%s2764 + $0xc] sm:$0xf]
      %v2769 = vld [vmem:[%s2764 + $0x10] sm:$0xf]
      %v2770 = vld [vmem:[%s2764 + $0x14] sm:$0xf]
      %v2771 = vld [vmem:[%s2764 + $0x18] sm:$0xf]
      %v2772 = vld [vmem:[%s2764 + $0x1c] sm:$0xf]
      %v2773 = vld [vmem:[%s2764 + $0x20] sm:$0xf]
      %v2774 = vld [vmem:[%s2764 + $0x24] sm:$0xf]
      %v2775 = vld [vmem:[%s2764 + $0x28] sm:$0xf]
      %v2776 = vld [vmem:[%s2764 + $0x2c] sm:$0xf]
      %v2777 = vld [vmem:[%s2764 + $0x30] sm:$0xf]
      %v2778 = vld [vmem:[%s2764 + $0x34] sm:$0xf]
      %v2779 = vld [vmem:[%s2764 + $0x38] sm:$0xf]
      %v2780 = vld [vmem:[%s2764 + $0x3c] sm:$0xf]
      %v2781 = vunpack.c.l.b16 %v2503
      %v2782 = vunpack.c.l.b16 %v2506
      %v2783 = vpack.c.b16 %v2782, %v2781
      %v2801 = vunpack.c.l.b16 %v2765
      %v2802 = vunpack.c.l.b16 %v2766
      %v2803 = vunpack.c.l.b16 %v2767
      %v2804 = vunpack.c.l.b16 %v2768
      %v2805 = vunpack.c.l.b16 %v2769
      %v2806 = vunpack.c.l.b16 %v2770
      %v2807 = vunpack.c.l.b16 %v2771
      %v2808 = vunpack.c.l.b16 %v2772
      %v2809 = vunpack.c.l.b16 %v2773
      %v2810 = vunpack.c.l.b16 %v2774
      %v2811 = vunpack.c.l.b16 %v2775
      %v2812 = vunpack.c.l.b16 %v2776
      %v2813 = vunpack.c.l.b16 %v2777
      %v2814 = vunpack.c.l.b16 %v2778
      %v2815 = vunpack.c.l.b16 %v2779
      %v2816 = vunpack.c.l.b16 %v2780
      %v2817 = vpack.c.b16 %v2802, %v2801
      %v2818 = vpack.c.b16 %v2804, %v2803
      %v2819 = vpack.c.b16 %v2806, %v2805
      %v2820 = vpack.c.b16 %v2808, %v2807
      %v2821 = vpack.c.b16 %v2810, %v2809
      %v2822 = vpack.c.b16 %v2812, %v2811
      %v2823 = vpack.c.b16 %v2814, %v2813
      %v2824 = vpack.c.b16 %v2816, %v2815
      %2833 = vmatpush.bf16.msra.mxu0 %v2824
      %2834 = vmatpush.bf16.msra.mxu0 %v2823
      %2835 = vmatpush.bf16.msra.mxu0 %v2822
      %2836 = vmatpush.bf16.msra.mxu0 %v2821
      %2837 = vmatpush.bf16.msra.mxu0 %v2820
      %2838 = vmatpush.bf16.msra.mxu0 %v2819
      %2839 = vmatpush.bf16.msra.mxu0 %v2818
      %2840 = vmatpush.bf16.msra.mxu0 %v2817
      %2841 = vmatmul.bf16.gmra.mxu0 %v2564
      %v2842 = vpop.f32.mrf.mxu0
      %v2843 = vadd.f32 0.0, %v2842
      %v2844 = vpop.f32.mrf.mxu0
      %v2845 = vadd.f32 0.0, %v2844
      %2846 = vmatmul.bf16.gmra.mxu0 %v2565
      %v2847 = vpop.f32.mrf.mxu0
      %v2848 = vadd.f32 0.0, %v2847
      %v2849 = vpop.f32.mrf.mxu0
      %v2850 = vadd.f32 0.0, %v2849
      %2851 = vmatmul.bf16.gmra.mxu0 %v2566
      %v2852 = vpop.f32.mrf.mxu0
      %v2853 = vadd.f32 0.0, %v2852
      %v2854 = vpop.f32.mrf.mxu0
      %v2855 = vadd.f32 0.0, %v2854
      %2856 = vmatmul.bf16.gmra.mxu0 %v2567
      %v2857 = vpop.f32.mrf.mxu0
      %v2858 = vadd.f32 0.0, %v2857
      %v2859 = vpop.f32.mrf.mxu0
      %v2860 = vadd.f32 0.0, %v2859
      %2861 = vmatmul.bf16.gmra.mxu0 %v2568
      %v2862 = vpop.f32.mrf.mxu0
      %v2863 = vadd.f32 0.0, %v2862
      %v2864 = vpop.f32.mrf.mxu0
      %v2865 = vadd.f32 0.0, %v2864
      %2866 = vmatmul.bf16.gmra.mxu0 %v2569
      %v2867 = vpop.f32.mrf.mxu0
      %v2868 = vadd.f32 0.0, %v2867
      %v2869 = vpop.f32.mrf.mxu0
      %v2870 = vadd.f32 0.0, %v2869
      %2871 = vmatmul.bf16.gmra.mxu0 %v2570
      %v2872 = vpop.f32.mrf.mxu0
      %v2873 = vadd.f32 0.0, %v2872
      %v2874 = vpop.f32.mrf.mxu0
      %v2875 = vadd.f32 0.0, %v2874
      %2876 = vmatmul.bf16.gmra.mxu0 %v2571
      %v2877 = vpop.f32.mrf.mxu0
      %v2878 = vadd.f32 0.0, %v2877
      %v2879 = vpop.f32.mrf.mxu0
      %v2880 = vadd.f32 0.0, %v2879
      %2881 = vmatmul.bf16.gmra.mxu0 %v2572
      %v2882 = vpop.f32.mrf.mxu0
      %v2883 = vadd.f32 0.0, %v2882
      %v2884 = vpop.f32.mrf.mxu0
      %v2885 = vadd.f32 0.0, %v2884
      %2886 = vmatmul.bf16.gmra.mxu0 %v2573
      %v2887 = vpop.f32.mrf.mxu0
      %v2888 = vadd.f32 0.0, %v2887
      %v2889 = vpop.f32.mrf.mxu0
      %v2890 = vadd.f32 0.0, %v2889
      %2891 = vmatmul.bf16.gmra.mxu0 %v2574
      %v2892 = vpop.f32.mrf.mxu0
      %v2893 = vadd.f32 0.0, %v2892
      %v2894 = vpop.f32.mrf.mxu0
      %v2895 = vadd.f32 0.0, %v2894
      %2896 = vmatmul.bf16.gmra.mxu0 %v2575
      %v2897 = vpop.f32.mrf.mxu0
      %v2898 = vadd.f32 0.0, %v2897
      %v2899 = vpop.f32.mrf.mxu0
      %v2900 = vadd.f32 0.0, %v2899
      %2901 = vmatmul.bf16.gmra.mxu0 %v2576
      %v2902 = vpop.f32.mrf.mxu0
      %v2903 = vadd.f32 0.0, %v2902
      %v2904 = vpop.f32.mrf.mxu0
      %v2905 = vadd.f32 0.0, %v2904
      %2906 = vmatmul.bf16.gmra.mxu0 %v2577
      %v2907 = vpop.f32.mrf.mxu0
      %v2908 = vadd.f32 0.0, %v2907
      %v2909 = vpop.f32.mrf.mxu0
      %v2910 = vadd.f32 0.0, %v2909
      %2911 = vmatmul.bf16.gmra.mxu0 %v2578
      %v2912 = vpop.f32.mrf.mxu0
      %v2913 = vadd.f32 0.0, %v2912
      %v2914 = vpop.f32.mrf.mxu0
      %v2915 = vadd.f32 0.0, %v2914
      %2916 = vmatmul.bf16.gmra.mxu0 %v2783
      %v2917 = vpop.f32.mrf.mxu0
      %v2918 = vadd.f32 0.0, %v2917
      %v2919 = vpop.f32.mrf.mxu0
      %v2920 = vadd.f32 0.0, %v2919
      %2921 = vdwg.mxu0
      %v2922 = vadd.f32 %v2732, %v2843
      %v2923 = vadd.f32 %v2733, %v2845
      %v2924 = vadd.f32 %v2734, %v2848
      %v2925 = vadd.f32 %v2735, %v2850
      %v2926 = vadd.f32 %v2736, %v2853
      %v2927 = vadd.f32 %v2737, %v2855
      %v2928 = vadd.f32 %v2738, %v2858
      %v2929 = vadd.f32 %v2739, %v2860
      %v2930 = vadd.f32 %v2740, %v2863
      %v2931 = vadd.f32 %v2741, %v2865
      %v2932 = vadd.f32 %v2742, %v2868
      %v2933 = vadd.f32 %v2743, %v2870
      %v2934 = vadd.f32 %v2744, %v2873
      %v2935 = vadd.f32 %v2745, %v2875
      %v2936 = vadd.f32 %v2746, %v2878
      %v2937 = vadd.f32 %v2747, %v2880
      %v2938 = vadd.f32 %v2748, %v2883
      %v2939 = vadd.f32 %v2749, %v2885
      %v2940 = vadd.f32 %v2750, %v2888
      %v2941 = vadd.f32 %v2751, %v2890
      %v2942 = vadd.f32 %v2752, %v2893
      %v2943 = vadd.f32 %v2753, %v2895
      %v2944 = vadd.f32 %v2754, %v2898
      %v2945 = vadd.f32 %v2755, %v2900
      %v2946 = vadd.f32 %v2756, %v2903
      %v2947 = vadd.f32 %v2757, %v2905
      %v2948 = vadd.f32 %v2758, %v2908
      %v2949 = vadd.f32 %v2759, %v2910
      %v2950 = vadd.f32 %v2760, %v2913
      %v2951 = vadd.f32 %v2761, %v2915
      %v2952 = vadd.f32 %v2762, %v2918
      %v2953 = vadd.f32 %v2763, %v2920
      %s2954 = scalar_lea.vmem %s1, 512
      %v2955 = vld [vmem:[%s2954] sm:$0xf]
      %v2956 = vld [vmem:[%s2954 + $0x4] sm:$0xf]
      %v2957 = vld [vmem:[%s2954 + $0x8] sm:$0xf]
      %v2958 = vld [vmem:[%s2954 + $0xc] sm:$0xf]
      %v2959 = vld [vmem:[%s2954 + $0x10] sm:$0xf]
      %v2960 = vld [vmem:[%s2954 + $0x14] sm:$0xf]
      %v2961 = vld [vmem:[%s2954 + $0x18] sm:$0xf]
      %v2962 = vld [vmem:[%s2954 + $0x1c] sm:$0xf]
      %v2963 = vld [vmem:[%s2954 + $0x20] sm:$0xf]
      %v2964 = vld [vmem:[%s2954 + $0x24] sm:$0xf]
      %v2965 = vld [vmem:[%s2954 + $0x28] sm:$0xf]
      %v2966 = vld [vmem:[%s2954 + $0x2c] sm:$0xf]
      %v2967 = vld [vmem:[%s2954 + $0x30] sm:$0xf]
      %v2968 = vld [vmem:[%s2954 + $0x34] sm:$0xf]
      %v2969 = vld [vmem:[%s2954 + $0x38] sm:$0xf]
      %v2970 = vld [vmem:[%s2954 + $0x3c] sm:$0xf]
      %v2971 = vunpack.c.l.b16 %v2510
      %v2972 = vunpack.c.l.b16 %v2513
      %v2973 = vpack.c.b16 %v2972, %v2971
      %v2991 = vunpack.c.l.b16 %v2955
      %v2992 = vunpack.c.l.b16 %v2956
      %v2993 = vunpack.c.l.b16 %v2957
      %v2994 = vunpack.c.l.b16 %v2958
      %v2995 = vunpack.c.l.b16 %v2959
      %v2996 = vunpack.c.l.b16 %v2960
      %v2997 = vunpack.c.l.b16 %v2961
      %v2998 = vunpack.c.l.b16 %v2962
      %v2999 = vunpack.c.l.b16 %v2963
      %v3000 = vunpack.c.l.b16 %v2964
      %v3001 = vunpack.c.l.b16 %v2965
      %v3002 = vunpack.c.l.b16 %v2966
      %v3003 = vunpack.c.l.b16 %v2967
      %v3004 = vunpack.c.l.b16 %v2968
      %v3005 = vunpack.c.l.b16 %v2969
      %v3006 = vunpack.c.l.b16 %v2970
      %v3007 = vpack.c.b16 %v2992, %v2991
      %v3008 = vpack.c.b16 %v2994, %v2993
      %v3009 = vpack.c.b16 %v2996, %v2995
      %v3010 = vpack.c.b16 %v2998, %v2997
      %v3011 = vpack.c.b16 %v3000, %v2999
      %v3012 = vpack.c.b16 %v3002, %v3001
      %v3013 = vpack.c.b16 %v3004, %v3003
      %v3014 = vpack.c.b16 %v3006, %v3005
      %3023 = vmatpush.bf16.msra.mxu0 %v3014
      %3024 = vmatpush.bf16.msra.mxu0 %v3013
      %3025 = vmatpush.bf16.msra.mxu0 %v3012
      %3026 = vmatpush.bf16.msra.mxu0 %v3011
      %3027 = vmatpush.bf16.msra.mxu0 %v3010
      %3028 = vmatpush.bf16.msra.mxu0 %v3009
      %3029 = vmatpush.bf16.msra.mxu0 %v3008
      %3030 = vmatpush.bf16.msra.mxu0 %v3007
      %3031 = vmatmul.bf16.gmra.mxu0 %v2565
      %v3032 = vpop.f32.mrf.mxu0
      %v3033 = vadd.f32 0.0, %v3032
      %v3034 = vpop.f32.mrf.mxu0
      %v3035 = vadd.f32 0.0, %v3034
      %3036 = vmatmul.bf16.gmra.mxu0 %v2566
      %v3037 = vpop.f32.mrf.mxu0
      %v3038 = vadd.f32 0.0, %v3037
      %v3039 = vpop.f32.mrf.mxu0
      %v3040 = vadd.f32 0.0, %v3039
      %3041 = vmatmul.bf16.gmra.mxu0 %v2567
      %v3042 = vpop.f32.mrf.mxu0
      %v3043 = vadd.f32 0.0, %v3042
      %v3044 = vpop.f32.mrf.mxu0
      %v3045 = vadd.f32 0.0, %v3044
      %3046 = vmatmul.bf16.gmra.mxu0 %v2568
      %v3047 = vpop.f32.mrf.mxu0
      %v3048 = vadd.f32 0.0, %v3047
      %v3049 = vpop.f32.mrf.mxu0
      %v3050 = vadd.f32 0.0, %v3049
      %3051 = vmatmul.bf16.gmra.mxu0 %v2569
      %v3052 = vpop.f32.mrf.mxu0
      %v3053 = vadd.f32 0.0, %v3052
      %v3054 = vpop.f32.mrf.mxu0
      %v3055 = vadd.f32 0.0, %v3054
      %3056 = vmatmul.bf16.gmra.mxu0 %v2570
      %v3057 = vpop.f32.mrf.mxu0
      %v3058 = vadd.f32 0.0, %v3057
      %v3059 = vpop.f32.mrf.mxu0
      %v3060 = vadd.f32 0.0, %v3059
      %3061 = vmatmul.bf16.gmra.mxu0 %v2571
      %v3062 = vpop.f32.mrf.mxu0
      %v3063 = vadd.f32 0.0, %v3062
      %v3064 = vpop.f32.mrf.mxu0
      %v3065 = vadd.f32 0.0, %v3064
      %3066 = vmatmul.bf16.gmra.mxu0 %v2572
      %v3067 = vpop.f32.mrf.mxu0
      %v3068 = vadd.f32 0.0, %v3067
      %v3069 = vpop.f32.mrf.mxu0
      %v3070 = vadd.f32 0.0, %v3069
      %3071 = vmatmul.bf16.gmra.mxu0 %v2573
      %v3072 = vpop.f32.mrf.mxu0
      %v3073 = vadd.f32 0.0, %v3072
      %v3074 = vpop.f32.mrf.mxu0
      %v3075 = vadd.f32 0.0, %v3074
      %3076 = vmatmul.bf16.gmra.mxu0 %v2574
      %v3077 = vpop.f32.mrf.mxu0
      %v3078 = vadd.f32 0.0, %v3077
      %v3079 = vpop.f32.mrf.mxu0
      %v3080 = vadd.f32 0.0, %v3079
      %3081 = vmatmul.bf16.gmra.mxu0 %v2575
      %v3082 = vpop.f32.mrf.mxu0
      %v3083 = vadd.f32 0.0, %v3082
      %v3084 = vpop.f32.mrf.mxu0
      %v3085 = vadd.f32 0.0, %v3084
      %3086 = vmatmul.bf16.gmra.mxu0 %v2576
      %v3087 = vpop.f32.mrf.mxu0
      %v3088 = vadd.f32 0.0, %v3087
      %v3089 = vpop.f32.mrf.mxu0
      %v3090 = vadd.f32 0.0, %v3089
      %3091 = vmatmul.bf16.gmra.mxu0 %v2577
      %v3092 = vpop.f32.mrf.mxu0
      %v3093 = vadd.f32 0.0, %v3092
      %v3094 = vpop.f32.mrf.mxu0
      %v3095 = vadd.f32 0.0, %v3094
      %3096 = vmatmul.bf16.gmra.mxu0 %v2578
      %v3097 = vpop.f32.mrf.mxu0
      %v3098 = vadd.f32 0.0, %v3097
      %v3099 = vpop.f32.mrf.mxu0
      %v3100 = vadd.f32 0.0, %v3099
      %3101 = vmatmul.bf16.gmra.mxu0 %v2783
      %v3102 = vpop.f32.mrf.mxu0
      %v3103 = vadd.f32 0.0, %v3102
      %v3104 = vpop.f32.mrf.mxu0
      %v3105 = vadd.f32 0.0, %v3104
      %3106 = vmatmul.bf16.gmra.mxu0 %v2973
      %v3107 = vpop.f32.mrf.mxu0
      %v3108 = vadd.f32 0.0, %v3107
      %v3109 = vpop.f32.mrf.mxu0
      %v3110 = vadd.f32 0.0, %v3109
      %3111 = vdwg.mxu0
      %v3112 = vadd.f32 %v2922, %v3033
      %v3113 = vadd.f32 %v2923, %v3035
      %v3114 = vadd.f32 %v2924, %v3038
      %v3115 = vadd.f32 %v2925, %v3040
      %v3116 = vadd.f32 %v2926, %v3043
      %v3117 = vadd.f32 %v2927, %v3045
      %v3118 = vadd.f32 %v2928, %v3048
      %v3119 = vadd.f32 %v2929, %v3050
      %v3120 = vadd.f32 %v2930, %v3053
      %v3121 = vadd.f32 %v2931, %v3055
      %v3122 = vadd.f32 %v2932, %v3058
      %v3123 = vadd.f32 %v2933, %v3060
      %v3124 = vadd.f32 %v2934, %v3063
      %v3125 = vadd.f32 %v2935, %v3065
      %v3126 = vadd.f32 %v2936, %v3068
      %v3127 = vadd.f32 %v2937, %v3070
      %v3128 = vadd.f32 %v2938, %v3073
      %v3129 = vadd.f32 %v2939, %v3075
      %v3130 = vadd.f32 %v2940, %v3078
      %v3131 = vadd.f32 %v2941, %v3080
      %v3132 = vadd.f32 %v2942, %v3083
      %v3133 = vadd.f32 %v2943, %v3085
      %v3134 = vadd.f32 %v2944, %v3088
      %v3135 = vadd.f32 %v2945, %v3090
      %v3136 = vadd.f32 %v2946, %v3093
      %v3137 = vadd.f32 %v2947, %v3095
      %v3138 = vadd.f32 %v2948, %v3098
      %v3139 = vadd.f32 %v2949, %v3100
      %v3140 = vadd.f32 %v2950, %v3103
      %v3141 = vadd.f32 %v2951, %v3105
      %v3142 = vadd.f32 %v2952, %v3108
      %v3143 = vadd.f32 %v2953, %v3110
      %v3144 = vld [vmem:[%s2] sm:$0x1]
      %v3146 = vperm.slane %v3144, 0
      %v3148 = vadd.f32 %v3112, %v3146
      %v3149 = vadd.f32 %v3113, %v3146
      %v3150 = vadd.f32 %v3114, %v3146
      %v3151 = vadd.f32 %v3115, %v3146
      %v3152 = vadd.f32 %v3116, %v3146
      %v3153 = vadd.f32 %v3117, %v3146
      %v3154 = vadd.f32 %v3118, %v3146
      %v3155 = vadd.f32 %v3119, %v3146
      %v3156 = vadd.f32 %v3120, %v3146
      %v3157 = vadd.f32 %v3121, %v3146
      %v3158 = vadd.f32 %v3122, %v3146
      %v3159 = vadd.f32 %v3123, %v3146
      %v3160 = vadd.f32 %v3124, %v3146
      %v3161 = vadd.f32 %v3125, %v3146
      %v3162 = vadd.f32 %v3126, %v3146
      %v3163 = vadd.f32 %v3127, %v3146
      %v3164 = vadd.f32 %v3128, %v3146
      %v3165 = vadd.f32 %v3129, %v3146
      %v3166 = vadd.f32 %v3130, %v3146
      %v3167 = vadd.f32 %v3131, %v3146
      %v3168 = vadd.f32 %v3132, %v3146
      %v3169 = vadd.f32 %v3133, %v3146
      %v3170 = vadd.f32 %v3134, %v3146
      %v3171 = vadd.f32 %v3135, %v3146
      %v3172 = vadd.f32 %v3136, %v3146
      %v3173 = vadd.f32 %v3137, %v3146
      %v3174 = vadd.f32 %v3138, %v3146
      %v3175 = vadd.f32 %v3139, %v3146
      %v3176 = vadd.f32 %v3140, %v3146
      %v3177 = vadd.f32 %v3141, %v3146
      %v3178 = vadd.f32 %v3142, %v3146
      %v3179 = vadd.f32 %v3143, %v3146
      %3180 = vst [vmem:[%s241] sm:$0xff] %v3148
      %3181 = vst [vmem:[%s241 + $0x8] sm:$0xff] %v3149
      %3182 = vst [vmem:[%s241 + $0x10] sm:$0xff] %v3150
      %3183 = vst [vmem:[%s241 + $0x18] sm:$0xff] %v3151
      %3184 = vst [vmem:[%s241 + $0x20] sm:$0xff] %v3152
      %3185 = vst [vmem:[%s241 + $0x28] sm:$0xff] %v3153
      %3186 = vst [vmem:[%s241 + $0x30] sm:$0xff] %v3154
      %3187 = vst [vmem:[%s241 + $0x38] sm:$0xff] %v3155
      %3188 = vst [vmem:[%s241 + $0x40] sm:$0xff] %v3156
      %3189 = vst [vmem:[%s241 + $0x48] sm:$0xff] %v3157
      %3190 = vst [vmem:[%s241 + $0x50] sm:$0xff] %v3158
      %3191 = vst [vmem:[%s241 + $0x58] sm:$0xff] %v3159
      %3192 = vst [vmem:[%s241 + $0x60] sm:$0xff] %v3160
      %3193 = vst [vmem:[%s241 + $0x68] sm:$0xff] %v3161
      %3194 = vst [vmem:[%s241 + $0x70] sm:$0xff] %v3162
      %3195 = vst [vmem:[%s241 + $0x78] sm:$0xff] %v3163
      %3196 = vst [vmem:[%s241 + $0x80] sm:$0xff] %v3164
      %3197 = vst [vmem:[%s241 + $0x88] sm:$0xff] %v3165
      %3198 = vst [vmem:[%s241 + $0x90] sm:$0xff] %v3166
      %3199 = vst [vmem:[%s241 + $0x98] sm:$0xff] %v3167
      %3200 = vst [vmem:[%s241 + $0xa0] sm:$0xff] %v3168
      %3201 = vst [vmem:[%s241 + $0xa8] sm:$0xff] %v3169
      %3202 = vst [vmem:[%s241 + $0xb0] sm:$0xff] %v3170
      %3203 = vst [vmem:[%s241 + $0xb8] sm:$0xff] %v3171
      %3204 = vst [vmem:[%s241 + $0xc0] sm:$0xff] %v3172
      %3205 = vst [vmem:[%s241 + $0xc8] sm:$0xff] %v3173
      %3206 = vst [vmem:[%s241 + $0xd0] sm:$0xff] %v3174
      %3207 = vst [vmem:[%s241 + $0xd8] sm:$0xff] %v3175
      %3208 = vst [vmem:[%s241 + $0xe0] sm:$0xff] %v3176
      %3209 = vst [vmem:[%s241 + $0xe8] sm:$0xff] %v3177
      %3210 = vst [vmem:[%s241 + $0xf0] sm:$0xff] %v3178
      %3211 = vst [vmem:[%s241 + $0xf8] sm:$0xff] %v3179
      %s3212 = smul.u32 16, %s21
      %p3213 = scmp.lt.s32.totalorder %s20, 1
      %s3214 = scalar_select %p3213, %s20, 1
      %p3215 = scmp.lt.s32.totalorder %s3212, 15
      %s3216 = scalar_select %p3215, %s3212, 15
      %s3217 = smul.addr %s3216, 2
      %s3218 = smul.addr %s3214, 32
      %s3219 = sadd.s32 %s3217, %s3218
      %s3220 = smul.addr %s3219, 8
      %s3221 = scalar_lea.vmem %s5, %s3220
      // Predicated region
      $region56: #{residual_block_forward.7} parent=35 // pred_check
        %p3222 = pneg %p139
      $region57: #{residual_block_forward.7} parent=35 // pred_check_branch
        %3224 = sbr.rel (%p3222) target = $region59
      $region58: #{residual_block_forward.7} parent=35 // pred_region
        %s3225 = smul.u32 16, %s21
      $region59: #{residual_block_forward.7} parent=35 // pred_fallthru
        _
    $region36: #{residual_block_forward.7} parent=5 // pred_fallthru
      _
    %p3226 = scmp.le.s32.totalorder 2, %s11
    // Predicated region
    $region60: #{residual_block_forward.7} parent=5 // pred_check
      %p3227 = pneg %p3226
    $region61: #{residual_block_forward.7} parent=5 // pred_check_branch
      %3229 = sbr.rel (%p3227) target = $region63
    $region62: #{residual_block_forward.7} parent=5 // pred_region
      %s3230 = ssub.s32 %s11, 2
      // Predicated region
      $region64: #{residual_block_forward.7} parent=62 // pred_check
        %p3231 = pneg %p145
      $region65: #{residual_block_forward.7} parent=62 // pred_check_branch
        %3233 = sbr.rel (%p3231) target = $region67
      $region66: #{residual_block_forward.7} parent=62 // pred_region
        %s3234 = smul.u32 16, %s23
        %p3235 = scmp.lt.s32.totalorder %s22, 1
        %s3236 = scalar_select %p3235, %s22, 1
        %p3237 = scmp.lt.s32.totalorder %s3234, 15
        %s3238 = scalar_select %p3237, %s3234, 15
        %s3239 = smul.addr %s3238, 2
        %s3240 = smul.addr %s3236, 32
        %s3241 = sadd.s32 %s3239, %s3240
        %s3242 = smul.addr %s3241, 8
        %s3243 = scalar_lea.vmem %s5, %s3242
      $region67: #{residual_block_forward.7} parent=62 // pred_fallthru
        _
    $region63: #{residual_block_forward.7} parent=5 // pred_fallthru
      _
  $region6: #{residual_block_forward.7} parent=0 // loop_footer
    %s15 = sadd.s32 1, %s11
  $region7: #{residual_block_forward.7} parent=0 // loop_footer_branch
    %10 = sbr.rel target = $region3
  $region8: #{residual_block_forward.7} parent=0 // loop_exit
    _
  %3244 = vsyncmov [#allocation3]
  %s3245 = vpop.sfrf %3244
  %p3246 = scmp.eq.s32.totalorder %s3245, 0
  %p3247 = pneg %p3246
  %3249 = shalt.err (%p3247)

</llo_original>
